<compile_context>
chip_gen: v7x
topology: tpu7x:2x2x1
jax: 0.10.0
libtpu: 0.0.40
codegen_flags: <defaults>
</compile_context>

<pallas_src>
import jax
import jax.numpy as jnp
from jax.experimental import pallas as pl
from jax.experimental.pallas import tpu as pltpu


def _make_kernel(M, compute_dtype):
    """Kernel body: all four DNM gates + LSTM combine for one (B_tile, H_tile) block."""

    def kernel(k_ref, qs_ref, xh_ref, c_ref, wq_ref, h_out_ref, c_out_ref):
        B_t, H_t = c_ref.shape
        D_p = xh_ref.shape[1]

        # Hoist the batch->sublane broadcast of xh once: JAX does not CSE
        # broadcast_in_dim, so doing it inside the gate/m loops would redo the
        # XLU broadcast 4*M times.
        xhb = jnp.broadcast_to(
            xh_ref[...][:, None, :], (B_t, H_t, D_p)).astype(compute_dtype)

        pre = []
        for g in range(4):                                   # gates: 0=f,1=i,2=g,3=o
            r = jnp.zeros((B_t, H_t), jnp.float32)
            # Per-m loop: only one (B_t, H_t, D_p) slab is live at a time.
            # TODO(synk): for large M switch to lax.fori_loop to bound live ranges.
            for m in range(M):
                w = wq_ref[g, 0, m].astype(compute_dtype)    # (H_t, D_p)
                q = wq_ref[g, 1, m].astype(compute_dtype)    # (H_t, D_p)
                z = xhb * w[None] - q[None]                  # (B_t, H_t, D_p)
                # prod_d sigmoid(z) == exp(sum_d logsigmoid(z)); stable
                # logsigmoid(z) = min(z,0) - log(1 + exp(-|z|))  (2 EUP/element).
                ls = jnp.minimum(z, 0.0) - jnp.log(1.0 + jnp.exp(-jnp.abs(z)))
                r = r + jnp.exp(jnp.sum(ls.astype(jnp.float32), axis=-1))
            pre.append(k_ref[g] * (r - qs_ref[g]))           # DNM soma

        f_t = jax.nn.sigmoid(pre[0])
        i_t = jax.nn.sigmoid(pre[1])
        g_t = jnp.tanh(pre[2])
        o_t = jax.nn.sigmoid(pre[3])
        c_next = f_t * c_ref[...] + i_t * g_t
        c_out_ref[...] = c_next
        h_out_ref[...] = o_t * jnp.tanh(c_next)

    return kernel


def _vmem_capacity_bytes():
    """Per-core VMEM capacity; falls back to the smallest production value (v7x)."""
    try:
        return int(pltpu.get_tpu_info().vmem_capacity_bytes)
    except Exception:
        return 64 * 1024 * 1024


def _pick_tiles(B, H, M, D_pad, param_bytes, compute_bytes, budget_bytes):
    """Largest legal (B_tile, H_tile) whose per-step working set fits the budget."""
    # Batch tiles: full B or a multiple of 8 dividing B (sublane-legal); cap at
    # 256 rows so per-step slab temporaries stay bounded.
    b_all = sorted({B} | {b for b in range(8, B, 8) if B % b == 0}, reverse=True)
    b_cands = [b for b in b_all if b <= 256] or [b_all[-1]]

    # H tiles: full H or a multiple of 128 dividing H (lane-dense output stores).
    h_cands = sorted({H} | {t for t in range(128, H, 128) if H % t == 0}, reverse=True)

    def step_bytes(bt, ht):
        wq = 2 * (4 * 2 * M * ht * D_pad * param_bytes)   # double-buffered WQ block
        xh = 2 * bt * D_pad * 4                           # double-buffered xh block
        small = 6 * bt * ht * 4                           # c_pre + h/c output blocks
        slabs = 4 * bt * ht * D_pad * compute_bytes       # xh broadcast + ~3 live temps
        upcast = 4 * ht * D_pad * 4                       # upcast copies of per-m W/Q
        return wq + xh + small + slabs + upcast

    fits = [(bt, ht) for bt in b_cands for ht in h_cands
            if step_bytes(bt, ht) <= budget_bytes]
    if fits:
        B_tile, H_tile = max(fits, key=lambda p: (p[0] * p[1], p[1]))
    else:   # nothing fits the soft budget: take the smallest legal tiles
        B_tile, H_tile = b_cands[-1], h_cands[-1]

    # Guarantee >=2 steps on a parallel grid axis when it stays lane-legal and
    # large: v7x shards 'parallel' axes across its two TensorCores.
    if H_tile == H and B // B_tile < 2:
        half = H // 2
        if half >= 512 and half % 128 == 0:
            H_tile = half
    return B_tile, H_tile


def lstm_cell_forward(x, h_pre, c_pre, W, Q, k, qs, *,
                      param_dtype=jnp.bfloat16,
                      compute_dtype=jnp.float32):
    """Pallas-backed LSTMCell forward.  W/Q: (4, H, M, D); k/qs: (4,)."""
    B, input_size = x.shape
    H = h_pre.shape[1]
    G, Hw, M, D = W.shape
    assert G == 4 and Hw == H and Q.shape == W.shape
    assert D == input_size + H

    D_pad = ((D + 127) // 128) * 128
    pad = D_pad - D

    # Pad D to a lane multiple.  Padded positions get W = 0, Q = -1e4 so
    # z = +1e4 there and logsigmoid(z) == 0 exactly (no effect on the product).
    Wp = jnp.pad(W.astype(jnp.float32), ((0, 0), (0, 0), (0, 0), (0, pad)))
    Qp = jnp.pad(Q.astype(jnp.float32), ((0, 0), (0, 0), (0, 0), (0, pad)),
                 constant_values=-1e4)

    # Pack W and Q into one array (gate, {W,Q}, M, H, D_pad): a single DMA per
    # grid step; bf16 storage halves HBM/VMEM traffic, compute upcasts.
    WQ = (jnp.stack([Wp, Qp], axis=1)            # (4, 2, H, M, Dp)
            .transpose(0, 1, 3, 2, 4)            # (4, 2, M, H, Dp)
            .astype(param_dtype))

    xh = jnp.concatenate([x, h_pre], axis=1).astype(jnp.float32)
    xh = jnp.pad(xh, ((0, 0), (0, pad)))
    c32 = c_pre.astype(jnp.float32)
    k32 = k.astype(jnp.float32)
    qs32 = qs.astype(jnp.float32)

    # Generation-aware VMEM sizing (v7x: 64 MiB, v5e/v6e: 128 MiB).
    cap = _vmem_capacity_bytes()
    vmem_limit = min(int(cap * 0.75), cap - 8 * 1024 * 1024)
    param_bytes = jnp.dtype(param_dtype).itemsize
    compute_bytes = jnp.dtype(compute_dtype).itemsize
    B_tile, H_tile = _pick_tiles(B, H, M, D_pad, param_bytes, compute_bytes,
                                 int(vmem_limit * 0.8))
    n_h, n_b = H // H_tile, B // B_tile

    work = 4 * B * M * H * D_pad
    cost = pl.CostEstimate(
        flops=int(6 * work),
        transcendentals=int(2 * work + 4 * B * M * H + 8 * B * H),
        bytes_accessed=int(WQ.size * WQ.dtype.itemsize
                           + xh.size * 4 * n_h + 3 * B * H * 4),
    )

    grid_spec = pltpu.PrefetchScalarGridSpec(
        num_scalar_prefetch=0,
        grid=(n_h, n_b),                                   # (H tiles, batch tiles)
        in_specs=[
            pl.BlockSpec(memory_space=pltpu.MemorySpace.SMEM),          # k  (4,)
            pl.BlockSpec(memory_space=pltpu.MemorySpace.SMEM),          # qs (4,)
            pl.BlockSpec((B_tile, D_pad), lambda hi, bi: (bi, 0)),      # xh
            pl.BlockSpec((B_tile, H_tile), lambda hi, bi: (bi, hi)),    # c_pre
            pl.BlockSpec((4, 2, M, H_tile, D_pad),
                         lambda hi, bi: (0, 0, 0, hi, 0)),              # packed W,Q
        ],
        out_specs=(pl.BlockSpec((B_tile, H_tile), lambda hi, bi: (bi, hi)),   # h_next
                   pl.BlockSpec((B_tile, H_tile), lambda hi, bi: (bi, hi))),  # c_next
    )

    h_next, c_next = pl.pallas_call(
        _make_kernel(M, compute_dtype),
        out_shape=(jax.ShapeDtypeStruct((B, H), jnp.float32),
                   jax.ShapeDtypeStruct((B, H), jnp.float32)),
        grid_spec=grid_spec,
        compiler_params=pltpu.CompilerParams(
            dimension_semantics=("parallel", "parallel"),   # megacore-shardable
            vmem_limit_bytes=vmem_limit),
        cost_estimate=cost,
    )(k32, qs32, xh, c32, WQ)
    return h_next, c_next


def lstm_cell_reference(x, h_pre, c_pre, W, Q, k, qs):
    """Pure-JAX reference mirroring the PyTorch forward exactly."""
    xh = jnp.concatenate([x, h_pre], axis=1)

    def dnm(g):
        z = xh[:, None, None, :] * W[g][None] - Q[g][None]   # (B, H, M, D)
        s = jax.nn.sigmoid(z)
        return k[g] * (jnp.sum(jnp.prod(s, axis=3), axis=2) - qs[g])

    f_t = jax.nn.sigmoid(dnm(0))
    i_t = jax.nn.sigmoid(dnm(1))
    g_t = jnp.tanh(dnm(2))
    o_t = jax.nn.sigmoid(dnm(3))
    c_next = f_t * c_pre + i_t * g_t
    h_next = o_t * jnp.tanh(c_next)
    return h_next, c_next


if __name__ == "__main__":
    B, input_size, hidden_dim, M = 4, 16, 32, 5
    D = input_size + hidden_dim

    key = jax.random.PRNGKey(0)
    kx, kh, kc, kw, kk, kqs = jax.random.split(key, 6)

    # Deterministic synthetic parameters (match torch init shapes/values):
    #   Synapse_W ~ U[0,1), Synapse_q = 0.1, k ~ U[0,1), qs ~ U[0,1)  (per gate)
    W = jax.random.uniform(kw, (4, hidden_dim, M, D), dtype=jnp.float32)
    Q = jnp.full((4, hidden_dim, M, D), 0.1, dtype=jnp.float32)
    k_param = jax.random.uniform(kk, (4,), dtype=jnp.float32)
    qs_param = jax.random.uniform(kqs, (4,), dtype=jnp.float32)

    x = jax.random.normal(kx, (B, input_size), dtype=jnp.float32)
    h_pre = jax.random.normal(kh, (B, hidden_dim), dtype=jnp.float32)
    c_pre = jax.random.normal(kc, (B, hidden_dim), dtype=jnp.float32)

    # The kernel stores W/Q in bf16 (HBM/VMEM savings); round-trip the params
    # through bf16 for BOTH kernel and reference so the check compares the
    # kernel math itself at tight tolerance.
    W_eff = W.astype(jnp.bfloat16).astype(jnp.float32)
    Q_eff = Q.astype(jnp.bfloat16).astype(jnp.float32)

    h_next, c_next = lstm_cell_forward(x, h_pre, c_pre, W_eff, Q_eff,
                                       k_param, qs_param)
    jax.block_until_ready((h_next, c_next))

    h_ref, c_ref = lstm_cell_reference(x, h_pre, c_pre, W_eff, Q_eff,
                                       k_param, qs_param)
    assert jnp.allclose(h_next, h_ref, rtol=1e-3, atol=1e-4), "h mismatch"
    assert jnp.allclose(c_next, c_ref, rtol=1e-3, atol=1e-4), "c mismatch"

    print("KERNEL_OK")
</pallas_src>

<mosaic_0001>
module attributes {stable_mosaic.version = 11 : i64} {
  func.func @kernel(%arg0: i32, %arg1: i32, %arg2: memref<4xf32, #tpu.memory_space<smem>>, %arg3: memref<4xf32, #tpu.memory_space<smem>>, %arg4: memref<4x128xf32, #tpu.memory_space<vmem>>, %arg5: memref<4x32xf32, #tpu.memory_space<vmem>>, %arg6: memref<4x2x5x32x128xbf16, #tpu.memory_space<vmem>>, %arg7: memref<4x32xf32, #tpu.memory_space<vmem>>, %arg8: memref<4x32xf32, #tpu.memory_space<vmem>>) attributes {dimension_semantics = [#tpu.dimension_semantics<parallel>, #tpu.dimension_semantics<parallel>], iteration_bounds = array<i64: 1, 1>, scalar_prefetch = 0 : i64, scratch_operands = 0 : i64, tpu.core_type = #tpu.core_type<tc>, window_params = [{transform_indices = @transform_0, window_bounds = array<i64: 4>}, {transform_indices = @transform_1, window_bounds = array<i64: 4>}, {transform_indices = @transform_2, window_bounds = array<i64: 4, 128>}, {transform_indices = @transform_3, window_bounds = array<i64: 4, 32>}, {transform_indices = @transform_4, window_bounds = array<i64: 4, 2, 5, 32, 128>}, {transform_indices = @transform_5, window_bounds = array<i64: 4, 32>}, {transform_indices = @transform_6, window_bounds = array<i64: 4, 32>}]} {
    %c0 = arith.constant 0 : index
    %c0_0 = arith.constant 0 : index
    %0 = vector.load %arg4[%c0, %c0_0] : memref<4x128xf32, #tpu.memory_space<vmem>>, vector<4x128xf32>
    %1 = vector.shape_cast %0 : vector<4x128xf32> to vector<4x1x128xf32>
    %2 = vector.shape_cast %1 : vector<4x1x128xf32> to vector<4x1x128xf32>
    %3 = vector.broadcast %2 : vector<4x1x128xf32> to vector<4x32x128xf32>
    %cst = arith.constant 0.000000e+00 : f32
    %4 = vector.broadcast %cst : f32 to vector<4x32xf32>
    %c0_1 = arith.constant 0 : index
    %c0_2 = arith.constant 0 : index
    %c0_3 = arith.constant 0 : index
    %c0_4 = arith.constant 0 : index
    %c0_5 = arith.constant 0 : index
    %5 = vector.load %arg6[%c0_1, %c0_2, %c0_3, %c0_4, %c0_5] : memref<4x2x5x32x128xbf16, #tpu.memory_space<vmem>>, vector<1x1x1x32x128xbf16>
    %6 = vector.shape_cast %5 : vector<1x1x1x32x128xbf16> to vector<32x128xbf16>
    %7 = arith.extf %6 : vector<32x128xbf16> to vector<32x128xf32>
    %c0_6 = arith.constant 0 : index
    %c1 = arith.constant 1 : index
    %c0_7 = arith.constant 0 : index
    %c0_8 = arith.constant 0 : index
    %c0_9 = arith.constant 0 : index
    %8 = vector.load %arg6[%c0_6, %c1, %c0_7, %c0_8, %c0_9] : memref<4x2x5x32x128xbf16, #tpu.memory_space<vmem>>, vector<1x1x1x32x128xbf16>
    %9 = vector.shape_cast %8 : vector<1x1x1x32x128xbf16> to vector<32x128xbf16>
    %10 = arith.extf %9 : vector<32x128xbf16> to vector<32x128xf32>
    %11 = vector.shape_cast %7 : vector<32x128xf32> to vector<1x32x128xf32>
    %12 = vector.broadcast %11 : vector<1x32x128xf32> to vector<4x32x128xf32>
    %13 = arith.mulf %3, %12 : vector<4x32x128xf32>
    %14 = vector.shape_cast %10 : vector<32x128xf32> to vector<1x32x128xf32>
    %15 = vector.broadcast %14 : vector<1x32x128xf32> to vector<4x32x128xf32>
    %16 = arith.subf %13, %15 : vector<4x32x128xf32>
    %cst_10 = arith.constant 0.000000e+00 : f32
    %17 = vector.broadcast %cst_10 : f32 to vector<4x32x128xf32>
    %18 = arith.minimumf %16, %17 : vector<4x32x128xf32>
    %19 = math.absf %16 : vector<4x32x128xf32>
    %cst_11 = arith.constant 0.000000e+00 : f32
    %20 = vector.broadcast %cst_11 : f32 to vector<4x32x128xf32>
    %21 = arith.subf %20, %19 : vector<4x32x128xf32>
    %22 = math.exp %21 : vector<4x32x128xf32>
    %cst_12 = arith.constant 1.000000e+00 : f32
    %23 = vector.broadcast %cst_12 : f32 to vector<4x32x128xf32>
    %24 = arith.addf %23, %22 : vector<4x32x128xf32>
    %25 = math.log %24 : vector<4x32x128xf32>
    %26 = arith.subf %18, %25 : vector<4x32x128xf32>
    %cst_13 = arith.constant dense<0.000000e+00> : vector<4x32xf32>
    %27 = vector.multi_reduction <add>, %26, %cst_13 [2] : vector<4x32x128xf32> to vector<4x32xf32>
    %28 = math.exp %27 : vector<4x32xf32>
    %29 = arith.addf %4, %28 : vector<4x32xf32>
    %c0_14 = arith.constant 0 : index
    %c0_15 = arith.constant 0 : index
    %c1_16 = arith.constant 1 : index
    %c0_17 = arith.constant 0 : index
    %c0_18 = arith.constant 0 : index
    %30 = vector.load %arg6[%c0_14, %c0_15, %c1_16, %c0_17, %c0_18] : memref<4x2x5x32x128xbf16, #tpu.memory_space<vmem>>, vector<1x1x1x32x128xbf16>
    %31 = vector.shape_cast %30 : vector<1x1x1x32x128xbf16> to vector<32x128xbf16>
    %32 = arith.extf %31 : vector<32x128xbf16> to vector<32x128xf32>
    %c0_19 = arith.constant 0 : index
    %c1_20 = arith.constant 1 : index
    %c1_21 = arith.constant 1 : index
    %c0_22 = arith.constant 0 : index
    %c0_23 = arith.constant 0 : index
    %33 = vector.load %arg6[%c0_19, %c1_20, %c1_21, %c0_22, %c0_23] : memref<4x2x5x32x128xbf16, #tpu.memory_space<vmem>>, vector<1x1x1x32x128xbf16>
    %34 = vector.shape_cast %33 : vector<1x1x1x32x128xbf16> to vector<32x128xbf16>
    %35 = arith.extf %34 : vector<32x128xbf16> to vector<32x128xf32>
    %36 = vector.shape_cast %32 : vector<32x128xf32> to vector<1x32x128xf32>
    %37 = vector.broadcast %36 : vector<1x32x128xf32> to vector<4x32x128xf32>
    %38 = arith.mulf %3, %37 : vector<4x32x128xf32>
    %39 = vector.shape_cast %35 : vector<32x128xf32> to vector<1x32x128xf32>
    %40 = vector.broadcast %39 : vector<1x32x128xf32> to vector<4x32x128xf32>
    %41 = arith.subf %38, %40 : vector<4x32x128xf32>
    %cst_24 = arith.constant 0.000000e+00 : f32
    %42 = vector.broadcast %cst_24 : f32 to vector<4x32x128xf32>
    %43 = arith.minimumf %41, %42 : vector<4x32x128xf32>
    %44 = math.absf %41 : vector<4x32x128xf32>
    %cst_25 = arith.constant 0.000000e+00 : f32
    %45 = vector.broadcast %cst_25 : f32 to vector<4x32x128xf32>
    %46 = arith.subf %45, %44 : vector<4x32x128xf32>
    %47 = math.exp %46 : vector<4x32x128xf32>
    %cst_26 = arith.constant 1.000000e+00 : f32
    %48 = vector.broadcast %cst_26 : f32 to vector<4x32x128xf32>
    %49 = arith.addf %48, %47 : vector<4x32x128xf32>
    %50 = math.log %49 : vector<4x32x128xf32>
    %51 = arith.subf %43, %50 : vector<4x32x128xf32>
    %cst_27 = arith.constant dense<0.000000e+00> : vector<4x32xf32>
    %52 = vector.multi_reduction <add>, %51, %cst_27 [2] : vector<4x32x128xf32> to vector<4x32xf32>
    %53 = math.exp %52 : vector<4x32xf32>
    %54 = arith.addf %29, %53 : vector<4x32xf32>
    %c0_28 = arith.constant 0 : index
    %c0_29 = arith.constant 0 : index
    %c2 = arith.constant 2 : index
    %c0_30 = arith.constant 0 : index
    %c0_31 = arith.constant 0 : index
    %55 = vector.load %arg6[%c0_28, %c0_29, %c2, %c0_30, %c0_31] : memref<4x2x5x32x128xbf16, #tpu.memory_space<vmem>>, vector<1x1x1x32x128xbf16>
    %56 = vector.shape_cast %55 : vector<1x1x1x32x128xbf16> to vector<32x128xbf16>
    %57 = arith.extf %56 : vector<32x128xbf16> to vector<32x128xf32>
    %c0_32 = arith.constant 0 : index
    %c1_33 = arith.constant 1 : index
    %c2_34 = arith.constant 2 : index
    %c0_35 = arith.constant 0 : index
    %c0_36 = arith.constant 0 : index
    %58 = vector.load %arg6[%c0_32, %c1_33, %c2_34, %c0_35, %c0_36] : memref<4x2x5x32x128xbf16, #tpu.memory_space<vmem>>, vector<1x1x1x32x128xbf16>
    %59 = vector.shape_cast %58 : vector<1x1x1x32x128xbf16> to vector<32x128xbf16>
    %60 = arith.extf %59 : vector<32x128xbf16> to vector<32x128xf32>
    %61 = vector.shape_cast %57 : vector<32x128xf32> to vector<1x32x128xf32>
    %62 = vector.broadcast %61 : vector<1x32x128xf32> to vector<4x32x128xf32>
    %63 = arith.mulf %3, %62 : vector<4x32x128xf32>
    %64 = vector.shape_cast %60 : vector<32x128xf32> to vector<1x32x128xf32>
    %65 = vector.broadcast %64 : vector<1x32x128xf32> to vector<4x32x128xf32>
    %66 = arith.subf %63, %65 : vector<4x32x128xf32>
    %cst_37 = arith.constant 0.000000e+00 : f32
    %67 = vector.broadcast %cst_37 : f32 to vector<4x32x128xf32>
    %68 = arith.minimumf %66, %67 : vector<4x32x128xf32>
    %69 = math.absf %66 : vector<4x32x128xf32>
    %cst_38 = arith.constant 0.000000e+00 : f32
    %70 = vector.broadcast %cst_38 : f32 to vector<4x32x128xf32>
    %71 = arith.subf %70, %69 : vector<4x32x128xf32>
    %72 = math.exp %71 : vector<4x32x128xf32>
    %cst_39 = arith.constant 1.000000e+00 : f32
    %73 = vector.broadcast %cst_39 : f32 to vector<4x32x128xf32>
    %74 = arith.addf %73, %72 : vector<4x32x128xf32>
    %75 = math.log %74 : vector<4x32x128xf32>
    %76 = arith.subf %68, %75 : vector<4x32x128xf32>
    %cst_40 = arith.constant dense<0.000000e+00> : vector<4x32xf32>
    %77 = vector.multi_reduction <add>, %76, %cst_40 [2] : vector<4x32x128xf32> to vector<4x32xf32>
    %78 = math.exp %77 : vector<4x32xf32>
    %79 = arith.addf %54, %78 : vector<4x32xf32>
    %c0_41 = arith.constant 0 : index
    %c0_42 = arith.constant 0 : index
    %c3 = arith.constant 3 : index
    %c0_43 = arith.constant 0 : index
    %c0_44 = arith.constant 0 : index
    %80 = vector.load %arg6[%c0_41, %c0_42, %c3, %c0_43, %c0_44] : memref<4x2x5x32x128xbf16, #tpu.memory_space<vmem>>, vector<1x1x1x32x128xbf16>
    %81 = vector.shape_cast %80 : vector<1x1x1x32x128xbf16> to vector<32x128xbf16>
    %82 = arith.extf %81 : vector<32x128xbf16> to vector<32x128xf32>
    %c0_45 = arith.constant 0 : index
    %c1_46 = arith.constant 1 : index
    %c3_47 = arith.constant 3 : index
    %c0_48 = arith.constant 0 : index
    %c0_49 = arith.constant 0 : index
    %83 = vector.load %arg6[%c0_45, %c1_46, %c3_47, %c0_48, %c0_49] : memref<4x2x5x32x128xbf16, #tpu.memory_space<vmem>>, vector<1x1x1x32x128xbf16>
    %84 = vector.shape_cast %83 : vector<1x1x1x32x128xbf16> to vector<32x128xbf16>
    %85 = arith.extf %84 : vector<32x128xbf16> to vector<32x128xf32>
    %86 = vector.shape_cast %82 : vector<32x128xf32> to vector<1x32x128xf32>
    %87 = vector.broadcast %86 : vector<1x32x128xf32> to vector<4x32x128xf32>
    %88 = arith.mulf %3, %87 : vector<4x32x128xf32>
    %89 = vector.shape_cast %85 : vector<32x128xf32> to vector<1x32x128xf32>
    %90 = vector.broadcast %89 : vector<1x32x128xf32> to vector<4x32x128xf32>
    %91 = arith.subf %88, %90 : vector<4x32x128xf32>
    %cst_50 = arith.constant 0.000000e+00 : f32
    %92 = vector.broadcast %cst_50 : f32 to vector<4x32x128xf32>
    %93 = arith.minimumf %91, %92 : vector<4x32x128xf32>
    %94 = math.absf %91 : vector<4x32x128xf32>
    %cst_51 = arith.constant 0.000000e+00 : f32
    %95 = vector.broadcast %cst_51 : f32 to vector<4x32x128xf32>
    %96 = arith.subf %95, %94 : vector<4x32x128xf32>
    %97 = math.exp %96 : vector<4x32x128xf32>
    %cst_52 = arith.constant 1.000000e+00 : f32
    %98 = vector.broadcast %cst_52 : f32 to vector<4x32x128xf32>
    %99 = arith.addf %98, %97 : vector<4x32x128xf32>
    %100 = math.log %99 : vector<4x32x128xf32>
    %101 = arith.subf %93, %100 : vector<4x32x128xf32>
    %cst_53 = arith.constant dense<0.000000e+00> : vector<4x32xf32>
    %102 = vector.multi_reduction <add>, %101, %cst_53 [2] : vector<4x32x128xf32> to vector<4x32xf32>
    %103 = math.exp %102 : vector<4x32xf32>
    %104 = arith.addf %79, %103 : vector<4x32xf32>
    %c0_54 = arith.constant 0 : index
    %c0_55 = arith.constant 0 : index
    %c4 = arith.constant 4 : index
    %c0_56 = arith.constant 0 : index
    %c0_57 = arith.constant 0 : index
    %105 = vector.load %arg6[%c0_54, %c0_55, %c4, %c0_56, %c0_57] : memref<4x2x5x32x128xbf16, #tpu.memory_space<vmem>>, vector<1x1x1x32x128xbf16>
    %106 = vector.shape_cast %105 : vector<1x1x1x32x128xbf16> to vector<32x128xbf16>
    %107 = arith.extf %106 : vector<32x128xbf16> to vector<32x128xf32>
    %c0_58 = arith.constant 0 : index
    %c1_59 = arith.constant 1 : index
    %c4_60 = arith.constant 4 : index
    %c0_61 = arith.constant 0 : index
    %c0_62 = arith.constant 0 : index
    %108 = vector.load %arg6[%c0_58, %c1_59, %c4_60, %c0_61, %c0_62] : memref<4x2x5x32x128xbf16, #tpu.memory_space<vmem>>, vector<1x1x1x32x128xbf16>
    %109 = vector.shape_cast %108 : vector<1x1x1x32x128xbf16> to vector<32x128xbf16>
    %110 = arith.extf %109 : vector<32x128xbf16> to vector<32x128xf32>
    %111 = vector.shape_cast %107 : vector<32x128xf32> to vector<1x32x128xf32>
    %112 = vector.broadcast %111 : vector<1x32x128xf32> to vector<4x32x128xf32>
    %113 = arith.mulf %3, %112 : vector<4x32x128xf32>
    %114 = vector.shape_cast %110 : vector<32x128xf32> to vector<1x32x128xf32>
    %115 = vector.broadcast %114 : vector<1x32x128xf32> to vector<4x32x128xf32>
    %116 = arith.subf %113, %115 : vector<4x32x128xf32>
    %cst_63 = arith.constant 0.000000e+00 : f32
    %117 = vector.broadcast %cst_63 : f32 to vector<4x32x128xf32>
    %118 = arith.minimumf %116, %117 : vector<4x32x128xf32>
    %119 = math.absf %116 : vector<4x32x128xf32>
    %cst_64 = arith.constant 0.000000e+00 : f32
    %120 = vector.broadcast %cst_64 : f32 to vector<4x32x128xf32>
    %121 = arith.subf %120, %119 : vector<4x32x128xf32>
    %122 = math.exp %121 : vector<4x32x128xf32>
    %cst_65 = arith.constant 1.000000e+00 : f32
    %123 = vector.broadcast %cst_65 : f32 to vector<4x32x128xf32>
    %124 = arith.addf %123, %122 : vector<4x32x128xf32>
    %125 = math.log %124 : vector<4x32x128xf32>
    %126 = arith.subf %118, %125 : vector<4x32x128xf32>
    %cst_66 = arith.constant dense<0.000000e+00> : vector<4x32xf32>
    %127 = vector.multi_reduction <add>, %126, %cst_66 [2] : vector<4x32x128xf32> to vector<4x32xf32>
    %128 = math.exp %127 : vector<4x32xf32>
    %129 = arith.addf %104, %128 : vector<4x32xf32>
    %c0_67 = arith.constant 0 : index
    %130 = memref.load %arg2[%c0_67] : memref<4xf32, #tpu.memory_space<smem>>
    %c0_68 = arith.constant 0 : index
    %131 = memref.load %arg3[%c0_68] : memref<4xf32, #tpu.memory_space<smem>>
    %132 = vector.broadcast %131 : f32 to vector<4x32xf32>
    %133 = arith.subf %129, %132 : vector<4x32xf32>
    %134 = vector.broadcast %130 : f32 to vector<4x32xf32>
    %135 = arith.mulf %134, %133 : vector<4x32xf32>
    %cst_69 = arith.constant 0.000000e+00 : f32
    %136 = vector.broadcast %cst_69 : f32 to vector<4x32xf32>
    %c1_70 = arith.constant 1 : index
    %c0_71 = arith.constant 0 : index
    %c0_72 = arith.constant 0 : index
    %c0_73 = arith.constant 0 : index
    %c0_74 = arith.constant 0 : index
    %137 = vector.load %arg6[%c1_70, %c0_71, %c0_72, %c0_73, %c0_74] : memref<4x2x5x32x128xbf16, #tpu.memory_space<vmem>>, vector<1x1x1x32x128xbf16>
    %138 = vector.shape_cast %137 : vector<1x1x1x32x128xbf16> to vector<32x128xbf16>
    %139 = arith.extf %138 : vector<32x128xbf16> to vector<32x128xf32>
    %c1_75 = arith.constant 1 : index
    %c1_76 = arith.constant 1 : index
    %c0_77 = arith.constant 0 : index
    %c0_78 = arith.constant 0 : index
    %c0_79 = arith.constant 0 : index
    %140 = vector.load %arg6[%c1_75, %c1_76, %c0_77, %c0_78, %c0_79] : memref<4x2x5x32x128xbf16, #tpu.memory_space<vmem>>, vector<1x1x1x32x128xbf16>
    %141 = vector.shape_cast %140 : vector<1x1x1x32x128xbf16> to vector<32x128xbf16>
    %142 = arith.extf %141 : vector<32x128xbf16> to vector<32x128xf32>
    %143 = vector.shape_cast %139 : vector<32x128xf32> to vector<1x32x128xf32>
    %144 = vector.broadcast %143 : vector<1x32x128xf32> to vector<4x32x128xf32>
    %145 = arith.mulf %3, %144 : vector<4x32x128xf32>
    %146 = vector.shape_cast %142 : vector<32x128xf32> to vector<1x32x128xf32>
    %147 = vector.broadcast %146 : vector<1x32x128xf32> to vector<4x32x128xf32>
    %148 = arith.subf %145, %147 : vector<4x32x128xf32>
    %cst_80 = arith.constant 0.000000e+00 : f32
    %149 = vector.broadcast %cst_80 : f32 to vector<4x32x128xf32>
    %150 = arith.minimumf %148, %149 : vector<4x32x128xf32>
    %151 = math.absf %148 : vector<4x32x128xf32>
    %cst_81 = arith.constant 0.000000e+00 : f32
    %152 = vector.broadcast %cst_81 : f32 to vector<4x32x128xf32>
    %153 = arith.subf %152, %151 : vector<4x32x128xf32>
    %154 = math.exp %153 : vector<4x32x128xf32>
    %cst_82 = arith.constant 1.000000e+00 : f32
    %155 = vector.broadcast %cst_82 : f32 to vector<4x32x128xf32>
    %156 = arith.addf %155, %154 : vector<4x32x128xf32>
    %157 = math.log %156 : vector<4x32x128xf32>
    %158 = arith.subf %150, %157 : vector<4x32x128xf32>
    %cst_83 = arith.constant dense<0.000000e+00> : vector<4x32xf32>
    %159 = vector.multi_reduction <add>, %158, %cst_83 [2] : vector<4x32x128xf32> to vector<4x32xf32>
    %160 = math.exp %159 : vector<4x32xf32>
    %161 = arith.addf %136, %160 : vector<4x32xf32>
    %c1_84 = arith.constant 1 : index
    %c0_85 = arith.constant 0 : index
    %c1_86 = arith.constant 1 : index
    %c0_87 = arith.constant 0 : index
    %c0_88 = arith.constant 0 : index
    %162 = vector.load %arg6[%c1_84, %c0_85, %c1_86, %c0_87, %c0_88] : memref<4x2x5x32x128xbf16, #tpu.memory_space<vmem>>, vector<1x1x1x32x128xbf16>
    %163 = vector.shape_cast %162 : vector<1x1x1x32x128xbf16> to vector<32x128xbf16>
    %164 = arith.extf %163 : vector<32x128xbf16> to vector<32x128xf32>
    %c1_89 = arith.constant 1 : index
    %c1_90 = arith.constant 1 : index
    %c1_91 = arith.constant 1 : index
    %c0_92 = arith.constant 0 : index
    %c0_93 = arith.constant 0 : index
    %165 = vector.load %arg6[%c1_89, %c1_90, %c1_91, %c0_92, %c0_93] : memref<4x2x5x32x128xbf16, #tpu.memory_space<vmem>>, vector<1x1x1x32x128xbf16>
    %166 = vector.shape_cast %165 : vector<1x1x1x32x128xbf16> to vector<32x128xbf16>
    %167 = arith.extf %166 : vector<32x128xbf16> to vector<32x128xf32>
    %168 = vector.shape_cast %164 : vector<32x128xf32> to vector<1x32x128xf32>
    %169 = vector.broadcast %168 : vector<1x32x128xf32> to vector<4x32x128xf32>
    %170 = arith.mulf %3, %169 : vector<4x32x128xf32>
    %171 = vector.shape_cast %167 : vector<32x128xf32> to vector<1x32x128xf32>
    %172 = vector.broadcast %171 : vector<1x32x128xf32> to vector<4x32x128xf32>
    %173 = arith.subf %170, %172 : vector<4x32x128xf32>
    %cst_94 = arith.constant 0.000000e+00 : f32
    %174 = vector.broadcast %cst_94 : f32 to vector<4x32x128xf32>
    %175 = arith.minimumf %173, %174 : vector<4x32x128xf32>
    %176 = math.absf %173 : vector<4x32x128xf32>
    %cst_95 = arith.constant 0.000000e+00 : f32
    %177 = vector.broadcast %cst_95 : f32 to vector<4x32x128xf32>
    %178 = arith.subf %177, %176 : vector<4x32x128xf32>
    %179 = math.exp %178 : vector<4x32x128xf32>
    %cst_96 = arith.constant 1.000000e+00 : f32
    %180 = vector.broadcast %cst_96 : f32 to vector<4x32x128xf32>
    %181 = arith.addf %180, %179 : vector<4x32x128xf32>
    %182 = math.log %181 : vector<4x32x128xf32>
    %183 = arith.subf %175, %182 : vector<4x32x128xf32>
    %cst_97 = arith.constant dense<0.000000e+00> : vector<4x32xf32>
    %184 = vector.multi_reduction <add>, %183, %cst_97 [2] : vector<4x32x128xf32> to vector<4x32xf32>
    %185 = math.exp %184 : vector<4x32xf32>
    %186 = arith.addf %161, %185 : vector<4x32xf32>
    %c1_98 = arith.constant 1 : index
    %c0_99 = arith.constant 0 : index
    %c2_100 = arith.constant 2 : index
    %c0_101 = arith.constant 0 : index
    %c0_102 = arith.constant 0 : index
    %187 = vector.load %arg6[%c1_98, %c0_99, %c2_100, %c0_101, %c0_102] : memref<4x2x5x32x128xbf16, #tpu.memory_space<vmem>>, vector<1x1x1x32x128xbf16>
    %188 = vector.shape_cast %187 : vector<1x1x1x32x128xbf16> to vector<32x128xbf16>
    %189 = arith.extf %188 : vector<32x128xbf16> to vector<32x128xf32>
    %c1_103 = arith.constant 1 : index
    %c1_104 = arith.constant 1 : index
    %c2_105 = arith.constant 2 : index
    %c0_106 = arith.constant 0 : index
    %c0_107 = arith.constant 0 : index
    %190 = vector.load %arg6[%c1_103, %c1_104, %c2_105, %c0_106, %c0_107] : memref<4x2x5x32x128xbf16, #tpu.memory_space<vmem>>, vector<1x1x1x32x128xbf16>
    %191 = vector.shape_cast %190 : vector<1x1x1x32x128xbf16> to vector<32x128xbf16>
    %192 = arith.extf %191 : vector<32x128xbf16> to vector<32x128xf32>
    %193 = vector.shape_cast %189 : vector<32x128xf32> to vector<1x32x128xf32>
    %194 = vector.broadcast %193 : vector<1x32x128xf32> to vector<4x32x128xf32>
    %195 = arith.mulf %3, %194 : vector<4x32x128xf32>
    %196 = vector.shape_cast %192 : vector<32x128xf32> to vector<1x32x128xf32>
    %197 = vector.broadcast %196 : vector<1x32x128xf32> to vector<4x32x128xf32>
    %198 = arith.subf %195, %197 : vector<4x32x128xf32>
    %cst_108 = arith.constant 0.000000e+00 : f32
    %199 = vector.broadcast %cst_108 : f32 to vector<4x32x128xf32>
    %200 = arith.minimumf %198, %199 : vector<4x32x128xf32>
    %201 = math.absf %198 : vector<4x32x128xf32>
    %cst_109 = arith.constant 0.000000e+00 : f32
    %202 = vector.broadcast %cst_109 : f32 to vector<4x32x128xf32>
    %203 = arith.subf %202, %201 : vector<4x32x128xf32>
    %204 = math.exp %203 : vector<4x32x128xf32>
    %cst_110 = arith.constant 1.000000e+00 : f32
    %205 = vector.broadcast %cst_110 : f32 to vector<4x32x128xf32>
    %206 = arith.addf %205, %204 : vector<4x32x128xf32>
    %207 = math.log %206 : vector<4x32x128xf32>
    %208 = arith.subf %200, %207 : vector<4x32x128xf32>
    %cst_111 = arith.constant dense<0.000000e+00> : vector<4x32xf32>
    %209 = vector.multi_reduction <add>, %208, %cst_111 [2] : vector<4x32x128xf32> to vector<4x32xf32>
    %210 = math.exp %209 : vector<4x32xf32>
    %211 = arith.addf %186, %210 : vector<4x32xf32>
    %c1_112 = arith.constant 1 : index
    %c0_113 = arith.constant 0 : index
    %c3_114 = arith.constant 3 : index
    %c0_115 = arith.constant 0 : index
    %c0_116 = arith.constant 0 : index
    %212 = vector.load %arg6[%c1_112, %c0_113, %c3_114, %c0_115, %c0_116] : memref<4x2x5x32x128xbf16, #tpu.memory_space<vmem>>, vector<1x1x1x32x128xbf16>
    %213 = vector.shape_cast %212 : vector<1x1x1x32x128xbf16> to vector<32x128xbf16>
    %214 = arith.extf %213 : vector<32x128xbf16> to vector<32x128xf32>
    %c1_117 = arith.constant 1 : index
    %c1_118 = arith.constant 1 : index
    %c3_119 = arith.constant 3 : index
    %c0_120 = arith.constant 0 : index
    %c0_121 = arith.constant 0 : index
    %215 = vector.load %arg6[%c1_117, %c1_118, %c3_119, %c0_120, %c0_121] : memref<4x2x5x32x128xbf16, #tpu.memory_space<vmem>>, vector<1x1x1x32x128xbf16>
    %216 = vector.shape_cast %215 : vector<1x1x1x32x128xbf16> to vector<32x128xbf16>
    %217 = arith.extf %216 : vector<32x128xbf16> to vector<32x128xf32>
    %218 = vector.shape_cast %214 : vector<32x128xf32> to vector<1x32x128xf32>
    %219 = vector.broadcast %218 : vector<1x32x128xf32> to vector<4x32x128xf32>
    %220 = arith.mulf %3, %219 : vector<4x32x128xf32>
    %221 = vector.shape_cast %217 : vector<32x128xf32> to vector<1x32x128xf32>
    %222 = vector.broadcast %221 : vector<1x32x128xf32> to vector<4x32x128xf32>
    %223 = arith.subf %220, %222 : vector<4x32x128xf32>
    %cst_122 = arith.constant 0.000000e+00 : f32
    %224 = vector.broadcast %cst_122 : f32 to vector<4x32x128xf32>
    %225 = arith.minimumf %223, %224 : vector<4x32x128xf32>
    %226 = math.absf %223 : vector<4x32x128xf32>
    %cst_123 = arith.constant 0.000000e+00 : f32
    %227 = vector.broadcast %cst_123 : f32 to vector<4x32x128xf32>
    %228 = arith.subf %227, %226 : vector<4x32x128xf32>
    %229 = math.exp %228 : vector<4x32x128xf32>
    %cst_124 = arith.constant 1.000000e+00 : f32
    %230 = vector.broadcast %cst_124 : f32 to vector<4x32x128xf32>
    %231 = arith.addf %230, %229 : vector<4x32x128xf32>
    %232 = math.log %231 : vector<4x32x128xf32>
    %233 = arith.subf %225, %232 : vector<4x32x128xf32>
    %cst_125 = arith.constant dense<0.000000e+00> : vector<4x32xf32>
    %234 = vector.multi_reduction <add>, %233, %cst_125 [2] : vector<4x32x128xf32> to vector<4x32xf32>
    %235 = math.exp %234 : vector<4x32xf32>
    %236 = arith.addf %211, %235 : vector<4x32xf32>
    %c1_126 = arith.constant 1 : index
    %c0_127 = arith.constant 0 : index
    %c4_128 = arith.constant 4 : index
    %c0_129 = arith.constant 0 : index
    %c0_130 = arith.constant 0 : index
    %237 = vector.load %arg6[%c1_126, %c0_127, %c4_128, %c0_129, %c0_130] : memref<4x2x5x32x128xbf16, #tpu.memory_space<vmem>>, vector<1x1x1x32x128xbf16>
    %238 = vector.shape_cast %237 : vector<1x1x1x32x128xbf16> to vector<32x128xbf16>
    %239 = arith.extf %238 : vector<32x128xbf16> to vector<32x128xf32>
    %c1_131 = arith.constant 1 : index
    %c1_132 = arith.constant 1 : index
    %c4_133 = arith.constant 4 : index
    %c0_134 = arith.constant 0 : index
    %c0_135 = arith.constant 0 : index
    %240 = vector.load %arg6[%c1_131, %c1_132, %c4_133, %c0_134, %c0_135] : memref<4x2x5x32x128xbf16, #tpu.memory_space<vmem>>, vector<1x1x1x32x128xbf16>
    %241 = vector.shape_cast %240 : vector<1x1x1x32x128xbf16> to vector<32x128xbf16>
    %242 = arith.extf %241 : vector<32x128xbf16> to vector<32x128xf32>
    %243 = vector.shape_cast %239 : vector<32x128xf32> to vector<1x32x128xf32>
    %244 = vector.broadcast %243 : vector<1x32x128xf32> to vector<4x32x128xf32>
    %245 = arith.mulf %3, %244 : vector<4x32x128xf32>
    %246 = vector.shape_cast %242 : vector<32x128xf32> to vector<1x32x128xf32>
    %247 = vector.broadcast %246 : vector<1x32x128xf32> to vector<4x32x128xf32>
    %248 = arith.subf %245, %247 : vector<4x32x128xf32>
    %cst_136 = arith.constant 0.000000e+00 : f32
    %249 = vector.broadcast %cst_136 : f32 to vector<4x32x128xf32>
    %250 = arith.minimumf %248, %249 : vector<4x32x128xf32>
    %251 = math.absf %248 : vector<4x32x128xf32>
    %cst_137 = arith.constant 0.000000e+00 : f32
    %252 = vector.broadcast %cst_137 : f32 to vector<4x32x128xf32>
    %253 = arith.subf %252, %251 : vector<4x32x128xf32>
    %254 = math.exp %253 : vector<4x32x128xf32>
    %cst_138 = arith.constant 1.000000e+00 : f32
    %255 = vector.broadcast %cst_138 : f32 to vector<4x32x128xf32>
    %256 = arith.addf %255, %254 : vector<4x32x128xf32>
    %257 = math.log %256 : vector<4x32x128xf32>
    %258 = arith.subf %250, %257 : vector<4x32x128xf32>
    %cst_139 = arith.constant dense<0.000000e+00> : vector<4x32xf32>
    %259 = vector.multi_reduction <add>, %258, %cst_139 [2] : vector<4x32x128xf32> to vector<4x32xf32>
    %260 = math.exp %259 : vector<4x32xf32>
    %261 = arith.addf %236, %260 : vector<4x32xf32>
    %c1_140 = arith.constant 1 : index
    %262 = memref.load %arg2[%c1_140] : memref<4xf32, #tpu.memory_space<smem>>
    %c1_141 = arith.constant 1 : index
    %263 = memref.load %arg3[%c1_141] : memref<4xf32, #tpu.memory_space<smem>>
    %264 = vector.broadcast %263 : f32 to vector<4x32xf32>
    %265 = arith.subf %261, %264 : vector<4x32xf32>
    %266 = vector.broadcast %262 : f32 to vector<4x32xf32>
    %267 = arith.mulf %266, %265 : vector<4x32xf32>
    %cst_142 = arith.constant 0.000000e+00 : f32
    %268 = vector.broadcast %cst_142 : f32 to vector<4x32xf32>
    %c2_143 = arith.constant 2 : index
    %c0_144 = arith.constant 0 : index
    %c0_145 = arith.constant 0 : index
    %c0_146 = arith.constant 0 : index
    %c0_147 = arith.constant 0 : index
    %269 = vector.load %arg6[%c2_143, %c0_144, %c0_145, %c0_146, %c0_147] : memref<4x2x5x32x128xbf16, #tpu.memory_space<vmem>>, vector<1x1x1x32x128xbf16>
    %270 = vector.shape_cast %269 : vector<1x1x1x32x128xbf16> to vector<32x128xbf16>
    %271 = arith.extf %270 : vector<32x128xbf16> to vector<32x128xf32>
    %c2_148 = arith.constant 2 : index
    %c1_149 = arith.constant 1 : index
    %c0_150 = arith.constant 0 : index
    %c0_151 = arith.constant 0 : index
    %c0_152 = arith.constant 0 : index
    %272 = vector.load %arg6[%c2_148, %c1_149, %c0_150, %c0_151, %c0_152] : memref<4x2x5x32x128xbf16, #tpu.memory_space<vmem>>, vector<1x1x1x32x128xbf16>
    %273 = vector.shape_cast %272 : vector<1x1x1x32x128xbf16> to vector<32x128xbf16>
    %274 = arith.extf %273 : vector<32x128xbf16> to vector<32x128xf32>
    %275 = vector.shape_cast %271 : vector<32x128xf32> to vector<1x32x128xf32>
    %276 = vector.broadcast %275 : vector<1x32x128xf32> to vector<4x32x128xf32>
    %277 = arith.mulf %3, %276 : vector<4x32x128xf32>
    %278 = vector.shape_cast %274 : vector<32x128xf32> to vector<1x32x128xf32>
    %279 = vector.broadcast %278 : vector<1x32x128xf32> to vector<4x32x128xf32>
    %280 = arith.subf %277, %279 : vector<4x32x128xf32>
    %cst_153 = arith.constant 0.000000e+00 : f32
    %281 = vector.broadcast %cst_153 : f32 to vector<4x32x128xf32>
    %282 = arith.minimumf %280, %281 : vector<4x32x128xf32>
    %283 = math.absf %280 : vector<4x32x128xf32>
    %cst_154 = arith.constant 0.000000e+00 : f32
    %284 = vector.broadcast %cst_154 : f32 to vector<4x32x128xf32>
    %285 = arith.subf %284, %283 : vector<4x32x128xf32>
    %286 = math.exp %285 : vector<4x32x128xf32>
    %cst_155 = arith.constant 1.000000e+00 : f32
    %287 = vector.broadcast %cst_155 : f32 to vector<4x32x128xf32>
    %288 = arith.addf %287, %286 : vector<4x32x128xf32>
    %289 = math.log %288 : vector<4x32x128xf32>
    %290 = arith.subf %282, %289 : vector<4x32x128xf32>
    %cst_156 = arith.constant dense<0.000000e+00> : vector<4x32xf32>
    %291 = vector.multi_reduction <add>, %290, %cst_156 [2] : vector<4x32x128xf32> to vector<4x32xf32>
    %292 = math.exp %291 : vector<4x32xf32>
    %293 = arith.addf %268, %292 : vector<4x32xf32>
    %c2_157 = arith.constant 2 : index
    %c0_158 = arith.constant 0 : index
    %c1_159 = arith.constant 1 : index
    %c0_160 = arith.constant 0 : index
    %c0_161 = arith.constant 0 : index
    %294 = vector.load %arg6[%c2_157, %c0_158, %c1_159, %c0_160, %c0_161] : memref<4x2x5x32x128xbf16, #tpu.memory_space<vmem>>, vector<1x1x1x32x128xbf16>
    %295 = vector.shape_cast %294 : vector<1x1x1x32x128xbf16> to vector<32x128xbf16>
    %296 = arith.extf %295 : vector<32x128xbf16> to vector<32x128xf32>
    %c2_162 = arith.constant 2 : index
    %c1_163 = arith.constant 1 : index
    %c1_164 = arith.constant 1 : index
    %c0_165 = arith.constant 0 : index
    %c0_166 = arith.constant 0 : index
    %297 = vector.load %arg6[%c2_162, %c1_163, %c1_164, %c0_165, %c0_166] : memref<4x2x5x32x128xbf16, #tpu.memory_space<vmem>>, vector<1x1x1x32x128xbf16>
    %298 = vector.shape_cast %297 : vector<1x1x1x32x128xbf16> to vector<32x128xbf16>
    %299 = arith.extf %298 : vector<32x128xbf16> to vector<32x128xf32>
    %300 = vector.shape_cast %296 : vector<32x128xf32> to vector<1x32x128xf32>
    %301 = vector.broadcast %300 : vector<1x32x128xf32> to vector<4x32x128xf32>
    %302 = arith.mulf %3, %301 : vector<4x32x128xf32>
    %303 = vector.shape_cast %299 : vector<32x128xf32> to vector<1x32x128xf32>
    %304 = vector.broadcast %303 : vector<1x32x128xf32> to vector<4x32x128xf32>
    %305 = arith.subf %302, %304 : vector<4x32x128xf32>
    %cst_167 = arith.constant 0.000000e+00 : f32
    %306 = vector.broadcast %cst_167 : f32 to vector<4x32x128xf32>
    %307 = arith.minimumf %305, %306 : vector<4x32x128xf32>
    %308 = math.absf %305 : vector<4x32x128xf32>
    %cst_168 = arith.constant 0.000000e+00 : f32
    %309 = vector.broadcast %cst_168 : f32 to vector<4x32x128xf32>
    %310 = arith.subf %309, %308 : vector<4x32x128xf32>
    %311 = math.exp %310 : vector<4x32x128xf32>
    %cst_169 = arith.constant 1.000000e+00 : f32
    %312 = vector.broadcast %cst_169 : f32 to vector<4x32x128xf32>
    %313 = arith.addf %312, %311 : vector<4x32x128xf32>
    %314 = math.log %313 : vector<4x32x128xf32>
    %315 = arith.subf %307, %314 : vector<4x32x128xf32>
    %cst_170 = arith.constant dense<0.000000e+00> : vector<4x32xf32>
    %316 = vector.multi_reduction <add>, %315, %cst_170 [2] : vector<4x32x128xf32> to vector<4x32xf32>
    %317 = math.exp %316 : vector<4x32xf32>
    %318 = arith.addf %293, %317 : vector<4x32xf32>
    %c2_171 = arith.constant 2 : index
    %c0_172 = arith.constant 0 : index
    %c2_173 = arith.constant 2 : index
    %c0_174 = arith.constant 0 : index
    %c0_175 = arith.constant 0 : index
    %319 = vector.load %arg6[%c2_171, %c0_172, %c2_173, %c0_174, %c0_175] : memref<4x2x5x32x128xbf16, #tpu.memory_space<vmem>>, vector<1x1x1x32x128xbf16>
    %320 = vector.shape_cast %319 : vector<1x1x1x32x128xbf16> to vector<32x128xbf16>
    %321 = arith.extf %320 : vector<32x128xbf16> to vector<32x128xf32>
    %c2_176 = arith.constant 2 : index
    %c1_177 = arith.constant 1 : index
    %c2_178 = arith.constant 2 : index
    %c0_179 = arith.constant 0 : index
    %c0_180 = arith.constant 0 : index
    %322 = vector.load %arg6[%c2_176, %c1_177, %c2_178, %c0_179, %c0_180] : memref<4x2x5x32x128xbf16, #tpu.memory_space<vmem>>, vector<1x1x1x32x128xbf16>
    %323 = vector.shape_cast %322 : vector<1x1x1x32x128xbf16> to vector<32x128xbf16>
    %324 = arith.extf %323 : vector<32x128xbf16> to vector<32x128xf32>
    %325 = vector.shape_cast %321 : vector<32x128xf32> to vector<1x32x128xf32>
    %326 = vector.broadcast %325 : vector<1x32x128xf32> to vector<4x32x128xf32>
    %327 = arith.mulf %3, %326 : vector<4x32x128xf32>
    %328 = vector.shape_cast %324 : vector<32x128xf32> to vector<1x32x128xf32>
    %329 = vector.broadcast %328 : vector<1x32x128xf32> to vector<4x32x128xf32>
    %330 = arith.subf %327, %329 : vector<4x32x128xf32>
    %cst_181 = arith.constant 0.000000e+00 : f32
    %331 = vector.broadcast %cst_181 : f32 to vector<4x32x128xf32>
    %332 = arith.minimumf %330, %331 : vector<4x32x128xf32>
    %333 = math.absf %330 : vector<4x32x128xf32>
    %cst_182 = arith.constant 0.000000e+00 : f32
    %334 = vector.broadcast %cst_182 : f32 to vector<4x32x128xf32>
    %335 = arith.subf %334, %333 : vector<4x32x128xf32>
    %336 = math.exp %335 : vector<4x32x128xf32>
    %cst_183 = arith.constant 1.000000e+00 : f32
    %337 = vector.broadcast %cst_183 : f32 to vector<4x32x128xf32>
    %338 = arith.addf %337, %336 : vector<4x32x128xf32>
    %339 = math.log %338 : vector<4x32x128xf32>
    %340 = arith.subf %332, %339 : vector<4x32x128xf32>
    %cst_184 = arith.constant dense<0.000000e+00> : vector<4x32xf32>
    %341 = vector.multi_reduction <add>, %340, %cst_184 [2] : vector<4x32x128xf32> to vector<4x32xf32>
    %342 = math.exp %341 : vector<4x32xf32>
    %343 = arith.addf %318, %342 : vector<4x32xf32>
    %c2_185 = arith.constant 2 : index
    %c0_186 = arith.constant 0 : index
    %c3_187 = arith.constant 3 : index
    %c0_188 = arith.constant 0 : index
    %c0_189 = arith.constant 0 : index
    %344 = vector.load %arg6[%c2_185, %c0_186, %c3_187, %c0_188, %c0_189] : memref<4x2x5x32x128xbf16, #tpu.memory_space<vmem>>, vector<1x1x1x32x128xbf16>
    %345 = vector.shape_cast %344 : vector<1x1x1x32x128xbf16> to vector<32x128xbf16>
    %346 = arith.extf %345 : vector<32x128xbf16> to vector<32x128xf32>
    %c2_190 = arith.constant 2 : index
    %c1_191 = arith.constant 1 : index
    %c3_192 = arith.constant 3 : index
    %c0_193 = arith.constant 0 : index
    %c0_194 = arith.constant 0 : index
    %347 = vector.load %arg6[%c2_190, %c1_191, %c3_192, %c0_193, %c0_194] : memref<4x2x5x32x128xbf16, #tpu.memory_space<vmem>>, vector<1x1x1x32x128xbf16>
    %348 = vector.shape_cast %347 : vector<1x1x1x32x128xbf16> to vector<32x128xbf16>
    %349 = arith.extf %348 : vector<32x128xbf16> to vector<32x128xf32>
    %350 = vector.shape_cast %346 : vector<32x128xf32> to vector<1x32x128xf32>
    %351 = vector.broadcast %350 : vector<1x32x128xf32> to vector<4x32x128xf32>
    %352 = arith.mulf %3, %351 : vector<4x32x128xf32>
    %353 = vector.shape_cast %349 : vector<32x128xf32> to vector<1x32x128xf32>
    %354 = vector.broadcast %353 : vector<1x32x128xf32> to vector<4x32x128xf32>
    %355 = arith.subf %352, %354 : vector<4x32x128xf32>
    %cst_195 = arith.constant 0.000000e+00 : f32
    %356 = vector.broadcast %cst_195 : f32 to vector<4x32x128xf32>
    %357 = arith.minimumf %355, %356 : vector<4x32x128xf32>
    %358 = math.absf %355 : vector<4x32x128xf32>
    %cst_196 = arith.constant 0.000000e+00 : f32
    %359 = vector.broadcast %cst_196 : f32 to vector<4x32x128xf32>
    %360 = arith.subf %359, %358 : vector<4x32x128xf32>
    %361 = math.exp %360 : vector<4x32x128xf32>
    %cst_197 = arith.constant 1.000000e+00 : f32
    %362 = vector.broadcast %cst_197 : f32 to vector<4x32x128xf32>
    %363 = arith.addf %362, %361 : vector<4x32x128xf32>
    %364 = math.log %363 : vector<4x32x128xf32>
    %365 = arith.subf %357, %364 : vector<4x32x128xf32>
    %cst_198 = arith.constant dense<0.000000e+00> : vector<4x32xf32>
    %366 = vector.multi_reduction <add>, %365, %cst_198 [2] : vector<4x32x128xf32> to vector<4x32xf32>
    %367 = math.exp %366 : vector<4x32xf32>
    %368 = arith.addf %343, %367 : vector<4x32xf32>
    %c2_199 = arith.constant 2 : index
    %c0_200 = arith.constant 0 : index
    %c4_201 = arith.constant 4 : index
    %c0_202 = arith.constant 0 : index
    %c0_203 = arith.constant 0 : index
    %369 = vector.load %arg6[%c2_199, %c0_200, %c4_201, %c0_202, %c0_203] : memref<4x2x5x32x128xbf16, #tpu.memory_space<vmem>>, vector<1x1x1x32x128xbf16>
    %370 = vector.shape_cast %369 : vector<1x1x1x32x128xbf16> to vector<32x128xbf16>
    %371 = arith.extf %370 : vector<32x128xbf16> to vector<32x128xf32>
    %c2_204 = arith.constant 2 : index
    %c1_205 = arith.constant 1 : index
    %c4_206 = arith.constant 4 : index
    %c0_207 = arith.constant 0 : index
    %c0_208 = arith.constant 0 : index
    %372 = vector.load %arg6[%c2_204, %c1_205, %c4_206, %c0_207, %c0_208] : memref<4x2x5x32x128xbf16, #tpu.memory_space<vmem>>, vector<1x1x1x32x128xbf16>
    %373 = vector.shape_cast %372 : vector<1x1x1x32x128xbf16> to vector<32x128xbf16>
    %374 = arith.extf %373 : vector<32x128xbf16> to vector<32x128xf32>
    %375 = vector.shape_cast %371 : vector<32x128xf32> to vector<1x32x128xf32>
    %376 = vector.broadcast %375 : vector<1x32x128xf32> to vector<4x32x128xf32>
    %377 = arith.mulf %3, %376 : vector<4x32x128xf32>
    %378 = vector.shape_cast %374 : vector<32x128xf32> to vector<1x32x128xf32>
    %379 = vector.broadcast %378 : vector<1x32x128xf32> to vector<4x32x128xf32>
    %380 = arith.subf %377, %379 : vector<4x32x128xf32>
    %cst_209 = arith.constant 0.000000e+00 : f32
    %381 = vector.broadcast %cst_209 : f32 to vector<4x32x128xf32>
    %382 = arith.minimumf %380, %381 : vector<4x32x128xf32>
    %383 = math.absf %380 : vector<4x32x128xf32>
    %cst_210 = arith.constant 0.000000e+00 : f32
    %384 = vector.broadcast %cst_210 : f32 to vector<4x32x128xf32>
    %385 = arith.subf %384, %383 : vector<4x32x128xf32>
    %386 = math.exp %385 : vector<4x32x128xf32>
    %cst_211 = arith.constant 1.000000e+00 : f32
    %387 = vector.broadcast %cst_211 : f32 to vector<4x32x128xf32>
    %388 = arith.addf %387, %386 : vector<4x32x128xf32>
    %389 = math.log %388 : vector<4x32x128xf32>
    %390 = arith.subf %382, %389 : vector<4x32x128xf32>
    %cst_212 = arith.constant dense<0.000000e+00> : vector<4x32xf32>
    %391 = vector.multi_reduction <add>, %390, %cst_212 [2] : vector<4x32x128xf32> to vector<4x32xf32>
    %392 = math.exp %391 : vector<4x32xf32>
    %393 = arith.addf %368, %392 : vector<4x32xf32>
    %c2_213 = arith.constant 2 : index
    %394 = memref.load %arg2[%c2_213] : memref<4xf32, #tpu.memory_space<smem>>
    %c2_214 = arith.constant 2 : index
    %395 = memref.load %arg3[%c2_214] : memref<4xf32, #tpu.memory_space<smem>>
    %396 = vector.broadcast %395 : f32 to vector<4x32xf32>
    %397 = arith.subf %393, %396 : vector<4x32xf32>
    %398 = vector.broadcast %394 : f32 to vector<4x32xf32>
    %399 = arith.mulf %398, %397 : vector<4x32xf32>
    %cst_215 = arith.constant 0.000000e+00 : f32
    %400 = vector.broadcast %cst_215 : f32 to vector<4x32xf32>
    %c3_216 = arith.constant 3 : index
    %c0_217 = arith.constant 0 : index
    %c0_218 = arith.constant 0 : index
    %c0_219 = arith.constant 0 : index
    %c0_220 = arith.constant 0 : index
    %401 = vector.load %arg6[%c3_216, %c0_217, %c0_218, %c0_219, %c0_220] : memref<4x2x5x32x128xbf16, #tpu.memory_space<vmem>>, vector<1x1x1x32x128xbf16>
    %402 = vector.shape_cast %401 : vector<1x1x1x32x128xbf16> to vector<32x128xbf16>
    %403 = arith.extf %402 : vector<32x128xbf16> to vector<32x128xf32>
    %c3_221 = arith.constant 3 : index
    %c1_222 = arith.constant 1 : index
    %c0_223 = arith.constant 0 : index
    %c0_224 = arith.constant 0 : index
    %c0_225 = arith.constant 0 : index
    %404 = vector.load %arg6[%c3_221, %c1_222, %c0_223, %c0_224, %c0_225] : memref<4x2x5x32x128xbf16, #tpu.memory_space<vmem>>, vector<1x1x1x32x128xbf16>
    %405 = vector.shape_cast %404 : vector<1x1x1x32x128xbf16> to vector<32x128xbf16>
    %406 = arith.extf %405 : vector<32x128xbf16> to vector<32x128xf32>
    %407 = vector.shape_cast %403 : vector<32x128xf32> to vector<1x32x128xf32>
    %408 = vector.broadcast %407 : vector<1x32x128xf32> to vector<4x32x128xf32>
    %409 = arith.mulf %3, %408 : vector<4x32x128xf32>
    %410 = vector.shape_cast %406 : vector<32x128xf32> to vector<1x32x128xf32>
    %411 = vector.broadcast %410 : vector<1x32x128xf32> to vector<4x32x128xf32>
    %412 = arith.subf %409, %411 : vector<4x32x128xf32>
    %cst_226 = arith.constant 0.000000e+00 : f32
    %413 = vector.broadcast %cst_226 : f32 to vector<4x32x128xf32>
    %414 = arith.minimumf %412, %413 : vector<4x32x128xf32>
    %415 = math.absf %412 : vector<4x32x128xf32>
    %cst_227 = arith.constant 0.000000e+00 : f32
    %416 = vector.broadcast %cst_227 : f32 to vector<4x32x128xf32>
    %417 = arith.subf %416, %415 : vector<4x32x128xf32>
    %418 = math.exp %417 : vector<4x32x128xf32>
    %cst_228 = arith.constant 1.000000e+00 : f32
    %419 = vector.broadcast %cst_228 : f32 to vector<4x32x128xf32>
    %420 = arith.addf %419, %418 : vector<4x32x128xf32>
    %421 = math.log %420 : vector<4x32x128xf32>
    %422 = arith.subf %414, %421 : vector<4x32x128xf32>
    %cst_229 = arith.constant dense<0.000000e+00> : vector<4x32xf32>
    %423 = vector.multi_reduction <add>, %422, %cst_229 [2] : vector<4x32x128xf32> to vector<4x32xf32>
    %424 = math.exp %423 : vector<4x32xf32>
    %425 = arith.addf %400, %424 : vector<4x32xf32>
    %c3_230 = arith.constant 3 : index
    %c0_231 = arith.constant 0 : index
    %c1_232 = arith.constant 1 : index
    %c0_233 = arith.constant 0 : index
    %c0_234 = arith.constant 0 : index
    %426 = vector.load %arg6[%c3_230, %c0_231, %c1_232, %c0_233, %c0_234] : memref<4x2x5x32x128xbf16, #tpu.memory_space<vmem>>, vector<1x1x1x32x128xbf16>
    %427 = vector.shape_cast %426 : vector<1x1x1x32x128xbf16> to vector<32x128xbf16>
    %428 = arith.extf %427 : vector<32x128xbf16> to vector<32x128xf32>
    %c3_235 = arith.constant 3 : index
    %c1_236 = arith.constant 1 : index
    %c1_237 = arith.constant 1 : index
    %c0_238 = arith.constant 0 : index
    %c0_239 = arith.constant 0 : index
    %429 = vector.load %arg6[%c3_235, %c1_236, %c1_237, %c0_238, %c0_239] : memref<4x2x5x32x128xbf16, #tpu.memory_space<vmem>>, vector<1x1x1x32x128xbf16>
    %430 = vector.shape_cast %429 : vector<1x1x1x32x128xbf16> to vector<32x128xbf16>
    %431 = arith.extf %430 : vector<32x128xbf16> to vector<32x128xf32>
    %432 = vector.shape_cast %428 : vector<32x128xf32> to vector<1x32x128xf32>
    %433 = vector.broadcast %432 : vector<1x32x128xf32> to vector<4x32x128xf32>
    %434 = arith.mulf %3, %433 : vector<4x32x128xf32>
    %435 = vector.shape_cast %431 : vector<32x128xf32> to vector<1x32x128xf32>
    %436 = vector.broadcast %435 : vector<1x32x128xf32> to vector<4x32x128xf32>
    %437 = arith.subf %434, %436 : vector<4x32x128xf32>
    %cst_240 = arith.constant 0.000000e+00 : f32
    %438 = vector.broadcast %cst_240 : f32 to vector<4x32x128xf32>
    %439 = arith.minimumf %437, %438 : vector<4x32x128xf32>
    %440 = math.absf %437 : vector<4x32x128xf32>
    %cst_241 = arith.constant 0.000000e+00 : f32
    %441 = vector.broadcast %cst_241 : f32 to vector<4x32x128xf32>
    %442 = arith.subf %441, %440 : vector<4x32x128xf32>
    %443 = math.exp %442 : vector<4x32x128xf32>
    %cst_242 = arith.constant 1.000000e+00 : f32
    %444 = vector.broadcast %cst_242 : f32 to vector<4x32x128xf32>
    %445 = arith.addf %444, %443 : vector<4x32x128xf32>
    %446 = math.log %445 : vector<4x32x128xf32>
    %447 = arith.subf %439, %446 : vector<4x32x128xf32>
    %cst_243 = arith.constant dense<0.000000e+00> : vector<4x32xf32>
    %448 = vector.multi_reduction <add>, %447, %cst_243 [2] : vector<4x32x128xf32> to vector<4x32xf32>
    %449 = math.exp %448 : vector<4x32xf32>
    %450 = arith.addf %425, %449 : vector<4x32xf32>
    %c3_244 = arith.constant 3 : index
    %c0_245 = arith.constant 0 : index
    %c2_246 = arith.constant 2 : index
    %c0_247 = arith.constant 0 : index
    %c0_248 = arith.constant 0 : index
    %451 = vector.load %arg6[%c3_244, %c0_245, %c2_246, %c0_247, %c0_248] : memref<4x2x5x32x128xbf16, #tpu.memory_space<vmem>>, vector<1x1x1x32x128xbf16>
    %452 = vector.shape_cast %451 : vector<1x1x1x32x128xbf16> to vector<32x128xbf16>
    %453 = arith.extf %452 : vector<32x128xbf16> to vector<32x128xf32>
    %c3_249 = arith.constant 3 : index
    %c1_250 = arith.constant 1 : index
    %c2_251 = arith.constant 2 : index
    %c0_252 = arith.constant 0 : index
    %c0_253 = arith.constant 0 : index
    %454 = vector.load %arg6[%c3_249, %c1_250, %c2_251, %c0_252, %c0_253] : memref<4x2x5x32x128xbf16, #tpu.memory_space<vmem>>, vector<1x1x1x32x128xbf16>
    %455 = vector.shape_cast %454 : vector<1x1x1x32x128xbf16> to vector<32x128xbf16>
    %456 = arith.extf %455 : vector<32x128xbf16> to vector<32x128xf32>
    %457 = vector.shape_cast %453 : vector<32x128xf32> to vector<1x32x128xf32>
    %458 = vector.broadcast %457 : vector<1x32x128xf32> to vector<4x32x128xf32>
    %459 = arith.mulf %3, %458 : vector<4x32x128xf32>
    %460 = vector.shape_cast %456 : vector<32x128xf32> to vector<1x32x128xf32>
    %461 = vector.broadcast %460 : vector<1x32x128xf32> to vector<4x32x128xf32>
    %462 = arith.subf %459, %461 : vector<4x32x128xf32>
    %cst_254 = arith.constant 0.000000e+00 : f32
    %463 = vector.broadcast %cst_254 : f32 to vector<4x32x128xf32>
    %464 = arith.minimumf %462, %463 : vector<4x32x128xf32>
    %465 = math.absf %462 : vector<4x32x128xf32>
    %cst_255 = arith.constant 0.000000e+00 : f32
    %466 = vector.broadcast %cst_255 : f32 to vector<4x32x128xf32>
    %467 = arith.subf %466, %465 : vector<4x32x128xf32>
    %468 = math.exp %467 : vector<4x32x128xf32>
    %cst_256 = arith.constant 1.000000e+00 : f32
    %469 = vector.broadcast %cst_256 : f32 to vector<4x32x128xf32>
    %470 = arith.addf %469, %468 : vector<4x32x128xf32>
    %471 = math.log %470 : vector<4x32x128xf32>
    %472 = arith.subf %464, %471 : vector<4x32x128xf32>
    %cst_257 = arith.constant dense<0.000000e+00> : vector<4x32xf32>
    %473 = vector.multi_reduction <add>, %472, %cst_257 [2] : vector<4x32x128xf32> to vector<4x32xf32>
    %474 = math.exp %473 : vector<4x32xf32>
    %475 = arith.addf %450, %474 : vector<4x32xf32>
    %c3_258 = arith.constant 3 : index
    %c0_259 = arith.constant 0 : index
    %c3_260 = arith.constant 3 : index
    %c0_261 = arith.constant 0 : index
    %c0_262 = arith.constant 0 : index
    %476 = vector.load %arg6[%c3_258, %c0_259, %c3_260, %c0_261, %c0_262] : memref<4x2x5x32x128xbf16, #tpu.memory_space<vmem>>, vector<1x1x1x32x128xbf16>
    %477 = vector.shape_cast %476 : vector<1x1x1x32x128xbf16> to vector<32x128xbf16>
    %478 = arith.extf %477 : vector<32x128xbf16> to vector<32x128xf32>
    %c3_263 = arith.constant 3 : index
    %c1_264 = arith.constant 1 : index
    %c3_265 = arith.constant 3 : index
    %c0_266 = arith.constant 0 : index
    %c0_267 = arith.constant 0 : index
    %479 = vector.load %arg6[%c3_263, %c1_264, %c3_265, %c0_266, %c0_267] : memref<4x2x5x32x128xbf16, #tpu.memory_space<vmem>>, vector<1x1x1x32x128xbf16>
    %480 = vector.shape_cast %479 : vector<1x1x1x32x128xbf16> to vector<32x128xbf16>
    %481 = arith.extf %480 : vector<32x128xbf16> to vector<32x128xf32>
    %482 = vector.shape_cast %478 : vector<32x128xf32> to vector<1x32x128xf32>
    %483 = vector.broadcast %482 : vector<1x32x128xf32> to vector<4x32x128xf32>
    %484 = arith.mulf %3, %483 : vector<4x32x128xf32>
    %485 = vector.shape_cast %481 : vector<32x128xf32> to vector<1x32x128xf32>
    %486 = vector.broadcast %485 : vector<1x32x128xf32> to vector<4x32x128xf32>
    %487 = arith.subf %484, %486 : vector<4x32x128xf32>
    %cst_268 = arith.constant 0.000000e+00 : f32
    %488 = vector.broadcast %cst_268 : f32 to vector<4x32x128xf32>
    %489 = arith.minimumf %487, %488 : vector<4x32x128xf32>
    %490 = math.absf %487 : vector<4x32x128xf32>
    %cst_269 = arith.constant 0.000000e+00 : f32
    %491 = vector.broadcast %cst_269 : f32 to vector<4x32x128xf32>
    %492 = arith.subf %491, %490 : vector<4x32x128xf32>
    %493 = math.exp %492 : vector<4x32x128xf32>
    %cst_270 = arith.constant 1.000000e+00 : f32
    %494 = vector.broadcast %cst_270 : f32 to vector<4x32x128xf32>
    %495 = arith.addf %494, %493 : vector<4x32x128xf32>
    %496 = math.log %495 : vector<4x32x128xf32>
    %497 = arith.subf %489, %496 : vector<4x32x128xf32>
    %cst_271 = arith.constant dense<0.000000e+00> : vector<4x32xf32>
    %498 = vector.multi_reduction <add>, %497, %cst_271 [2] : vector<4x32x128xf32> to vector<4x32xf32>
    %499 = math.exp %498 : vector<4x32xf32>
    %500 = arith.addf %475, %499 : vector<4x32xf32>
    %c3_272 = arith.constant 3 : index
    %c0_273 = arith.constant 0 : index
    %c4_274 = arith.constant 4 : index
    %c0_275 = arith.constant 0 : index
    %c0_276 = arith.constant 0 : index
    %501 = vector.load %arg6[%c3_272, %c0_273, %c4_274, %c0_275, %c0_276] : memref<4x2x5x32x128xbf16, #tpu.memory_space<vmem>>, vector<1x1x1x32x128xbf16>
    %502 = vector.shape_cast %501 : vector<1x1x1x32x128xbf16> to vector<32x128xbf16>
    %503 = arith.extf %502 : vector<32x128xbf16> to vector<32x128xf32>
    %c3_277 = arith.constant 3 : index
    %c1_278 = arith.constant 1 : index
    %c4_279 = arith.constant 4 : index
    %c0_280 = arith.constant 0 : index
    %c0_281 = arith.constant 0 : index
    %504 = vector.load %arg6[%c3_277, %c1_278, %c4_279, %c0_280, %c0_281] : memref<4x2x5x32x128xbf16, #tpu.memory_space<vmem>>, vector<1x1x1x32x128xbf16>
    %505 = vector.shape_cast %504 : vector<1x1x1x32x128xbf16> to vector<32x128xbf16>
    %506 = arith.extf %505 : vector<32x128xbf16> to vector<32x128xf32>
    %507 = vector.shape_cast %503 : vector<32x128xf32> to vector<1x32x128xf32>
    %508 = vector.broadcast %507 : vector<1x32x128xf32> to vector<4x32x128xf32>
    %509 = arith.mulf %3, %508 : vector<4x32x128xf32>
    %510 = vector.shape_cast %506 : vector<32x128xf32> to vector<1x32x128xf32>
    %511 = vector.broadcast %510 : vector<1x32x128xf32> to vector<4x32x128xf32>
    %512 = arith.subf %509, %511 : vector<4x32x128xf32>
    %cst_282 = arith.constant 0.000000e+00 : f32
    %513 = vector.broadcast %cst_282 : f32 to vector<4x32x128xf32>
    %514 = arith.minimumf %512, %513 : vector<4x32x128xf32>
    %515 = math.absf %512 : vector<4x32x128xf32>
    %cst_283 = arith.constant 0.000000e+00 : f32
    %516 = vector.broadcast %cst_283 : f32 to vector<4x32x128xf32>
    %517 = arith.subf %516, %515 : vector<4x32x128xf32>
    %518 = math.exp %517 : vector<4x32x128xf32>
    %cst_284 = arith.constant 1.000000e+00 : f32
    %519 = vector.broadcast %cst_284 : f32 to vector<4x32x128xf32>
    %520 = arith.addf %519, %518 : vector<4x32x128xf32>
    %521 = math.log %520 : vector<4x32x128xf32>
    %522 = arith.subf %514, %521 : vector<4x32x128xf32>
    %cst_285 = arith.constant dense<0.000000e+00> : vector<4x32xf32>
    %523 = vector.multi_reduction <add>, %522, %cst_285 [2] : vector<4x32x128xf32> to vector<4x32xf32>
    %524 = math.exp %523 : vector<4x32xf32>
    %525 = arith.addf %500, %524 : vector<4x32xf32>
    %c3_286 = arith.constant 3 : index
    %526 = memref.load %arg2[%c3_286] : memref<4xf32, #tpu.memory_space<smem>>
    %c3_287 = arith.constant 3 : index
    %527 = memref.load %arg3[%c3_287] : memref<4xf32, #tpu.memory_space<smem>>
    %528 = vector.broadcast %527 : f32 to vector<4x32xf32>
    %529 = arith.subf %525, %528 : vector<4x32xf32>
    %530 = vector.broadcast %526 : f32 to vector<4x32xf32>
    %531 = arith.mulf %530, %529 : vector<4x32xf32>
    %532 = arith.negf %135 : vector<4x32xf32>
    %533 = math.exp %532 : vector<4x32xf32>
    %cst_288 = arith.constant 1.000000e+00 : f32
    %534 = vector.broadcast %cst_288 : f32 to vector<4x32xf32>
    %535 = arith.addf %534, %533 : vector<4x32xf32>
    %536 = arith.divf %534, %535 : vector<4x32xf32>
    %537 = arith.negf %267 : vector<4x32xf32>
    %538 = math.exp %537 : vector<4x32xf32>
    %cst_289 = arith.constant 1.000000e+00 : f32
    %539 = vector.broadcast %cst_289 : f32 to vector<4x32xf32>
    %540 = arith.addf %539, %538 : vector<4x32xf32>
    %541 = arith.divf %539, %540 : vector<4x32xf32>
    %542 = math.tanh %399 : vector<4x32xf32>
    %543 = arith.negf %531 : vector<4x32xf32>
    %544 = math.exp %543 : vector<4x32xf32>
    %cst_290 = arith.constant 1.000000e+00 : f32
    %545 = vector.broadcast %cst_290 : f32 to vector<4x32xf32>
    %546 = arith.addf %545, %544 : vector<4x32xf32>
    %547 = arith.divf %545, %546 : vector<4x32xf32>
    %c0_291 = arith.constant 0 : index
    %c0_292 = arith.constant 0 : index
    %548 = vector.load %arg5[%c0_291, %c0_292] : memref<4x32xf32, #tpu.memory_space<vmem>>, vector<4x32xf32>
    %549 = arith.mulf %536, %548 : vector<4x32xf32>
    %550 = arith.mulf %541, %542 : vector<4x32xf32>
    %551 = arith.addf %549, %550 : vector<4x32xf32>
    %c0_293 = arith.constant 0 : index
    %c0_294 = arith.constant 0 : index
    %552 = vector.load %arg8[%c0_293, %c0_294] : memref<4x32xf32, #tpu.memory_space<vmem>>, vector<4x32xf32>
    tpu.vector_store %arg8[%c0_293, %c0_294], %551 {strides = array<i32>} : memref<4x32xf32, #tpu.memory_space<vmem>>, vector<4x32xf32>,
    %553 = math.tanh %551 : vector<4x32xf32>
    %554 = arith.mulf %547, %553 : vector<4x32xf32>
    %c0_295 = arith.constant 0 : index
    %c0_296 = arith.constant 0 : index
    %555 = vector.load %arg7[%c0_295, %c0_296] : memref<4x32xf32, #tpu.memory_space<vmem>>, vector<4x32xf32>
    tpu.vector_store %arg7[%c0_295, %c0_296], %554 {strides = array<i32>} : memref<4x32xf32, #tpu.memory_space<vmem>>, vector<4x32xf32>,
    return
  }
  func.func @transform_0(%arg0: i32, %arg1: i32) -> i32 {
    %c0_i32 = arith.constant 0 : i32
    %c0_i32_0 = arith.constant 0 : i32
    return %c0_i32 : i32
  }
  func.func @transform_1(%arg0: i32, %arg1: i32) -> i32 {
    %c0_i32 = arith.constant 0 : i32
    %c0_i32_0 = arith.constant 0 : i32
    return %c0_i32 : i32
  }
  func.func @transform_2(%arg0: i32, %arg1: i32) -> (i32, i32) {
    %c0_i32 = arith.constant 0 : i32
    %c0_i32_0 = arith.constant 0 : i32
    return %arg1, %c0_i32 : i32, i32
  }
  func.func @transform_3(%arg0: i32, %arg1: i32) -> (i32, i32) {
    %c0_i32 = arith.constant 0 : i32
    return %arg1, %arg0 : i32, i32
  }
  func.func @transform_4(%arg0: i32, %arg1: i32) -> (i32, i32, i32, i32, i32) {
    %c0_i32 = arith.constant 0 : i32
    %c0_i32_0 = arith.constant 0 : i32
    %c0_i32_1 = arith.constant 0 : i32
    %c0_i32_2 = arith.constant 0 : i32
    %c0_i32_3 = arith.constant 0 : i32
    return %c0_i32, %c0_i32_0, %c0_i32_1, %arg0, %c0_i32_2 : i32, i32, i32, i32, i32
  }
  func.func @transform_5(%arg0: i32, %arg1: i32) -> (i32, i32) {
    %c0_i32 = arith.constant 0 : i32
    return %arg1, %arg0 : i32, i32
  }
  func.func @transform_6(%arg0: i32, %arg1: i32) -> (i32, i32) {
    %c0_i32 = arith.constant 0 : i32
    return %arg1, %arg0 : i32, i32
  }
}

</mosaic_0001>

<llo_original>
// kernel: tpu_custom_call.1
$region0: #{tpu_custom_call.1}
  #allocation0 [shape = 'u32[]', space=smem, size = 0x4, offset = 0x4, fixed_abs, tag = 'smem constant byte address 0x4 - core index']
  #allocation1 [shape = 'u32[144,128]{1,0:T(1,128)}', space=vmem, size = 0x12000, scoped, tag = 'internal scratch']
  %s0 = inlined_call_operand.hbm [shape: f32[4], index: 0, kind: input, shape index: {}]
  %s1 = inlined_call_operand.vmem [shape: f32[4], index: 1, kind: input, shape index: {}]
  %s2 = inlined_call_operand.vmem [shape: f32[4,128], index: 2, kind: input, shape index: {}]
  %s3 = inlined_call_operand.vmem [shape: f32[4,32], index: 3, kind: input, shape index: {}]
  %s4 = inlined_call_operand.hbm [shape: bf16[4,2,5,32,128], index: 4, kind: input, shape index: {}]
  %s5 = inlined_call_operand.hbm [shape: f32[4,32], index: 5, kind: output, shape index: {0}]
  %s6 = inlined_call_operand.hbm [shape: f32[4,32], index: 6, kind: output, shape index: {1}]
  %7 = xla_tuple %s5, %s6
  %s8 = sld [smem:[#allocation0]]
  $region50: #{tpu_custom_call.1} parent=0
    _
  %s10 = ssub.s32 1, %s8
  %s11 = scalar_select 0, %s10, %s8
  $region1: #{tpu_custom_call.1} parent=0
    #allocation2 [shape = 'u8[512]{0}', space=smem, size = 0x200, scoped, tag = 'input window, operand 0, single buffered']
    #allocation3 [shape = 's32[1]{0}', space=sflag, size = 0x4, scoped, tag = 'scoped memory for tpu_custom_call.1']
    #allocation4 [shape = 's32[1]{0}', space=sflag, size = 0x4, scoped, tag = 'scoped memory for tpu_custom_call.1']
    #allocation5 [shape = 's32[1]{0}', space=sflag, size = 0x4, scoped, tag = 'scoped memory for tpu_custom_call.1']
    #allocation6 [shape = 's32[1]{0}', space=sflag, size = 0x4, scoped, tag = 'scoped memory for tpu_custom_call.1']
    #allocation7 [shape = 'u8[512]{0}', space=smem, size = 0x200, scoped, tag = 'input window, operand 1, single buffered']
    #allocation8 [shape = 'u8[327680]{0}', space=vmem, size = 0x50000, scoped, tag = 'input window, operand 4, single buffered']
    #allocation9 [shape = 'u8[2048]{0}', space=vmem, size = 0x800, scoped, tag = 'output window, operand 0, single buffered']
    #allocation10 [shape = 'u8[2048]{0}', space=vmem, size = 0x800, scoped, tag = 'output window, operand 1, single buffered']
    #allocation11 [shape = 's32[1]{0}', space=sflag, size = 0x4, scoped, tag = 'scoped memory for tpu_custom_call.1']
    %12 = vsyncpa [#allocation5], 0
    %13 = vsyncpa [#allocation6], 0
    %14 = vsyncpa [#allocation3], 0
    %15 = vsyncpa [#allocation4], 0
    %16 = vsyncpa [#allocation11], 0
    // Predicated region
    $region2: #{tpu_custom_call.1} parent=1 // pred_check
      _
    $region3: #{tpu_custom_call.1} parent=1 // pred_check_branch
      %18 = sbr.rel (0) target = $region5
    $region4: #{tpu_custom_call.1} parent=1 // pred_region
      %s20 = ssub.s32 16, 16
      %21 = vsyncadd [#allocation5], %s20
      %24 = dma.hbm_to_smem %s0, 16, [#allocation2], [#allocation5]
    $region5: #{tpu_custom_call.1} parent=1 // pred_fallthru
      _
    // Predicated region
    $region6: #{tpu_custom_call.1} parent=1 // pred_check
      _
    $region7: #{tpu_custom_call.1} parent=1 // pred_check_branch
      %26 = sbr.rel (0) target = $region9
    $region8: #{tpu_custom_call.1} parent=1 // pred_region
      %s28 = ssub.s32 16, 16
      %29 = vsyncadd [#allocation6], %s28
      %s31 = sshll.u32 %s1, 4
      %s32 = int_to_ptr.vmem [resolvable:$true] %s31
      %34 = dma.vmem_to_smem %s32, 16, [#allocation7], [#allocation6]
    $region9: #{tpu_custom_call.1} parent=1 // pred_fallthru
      _
    // Predicated region
    $region10: #{tpu_custom_call.1} parent=1 // pred_check
      _
    $region11: #{tpu_custom_call.1} parent=1 // pred_check_branch
      %36 = sbr.rel (0) target = $region13
    $region12: #{tpu_custom_call.1} parent=1 // pred_region
      _
    $region13: #{tpu_custom_call.1} parent=1 // pred_fallthru
      _
    // Predicated region
    $region14: #{tpu_custom_call.1} parent=1 // pred_check
      _
    $region15: #{tpu_custom_call.1} parent=1 // pred_check_branch
      %38 = sbr.rel (0) target = $region17
    $region16: #{tpu_custom_call.1} parent=1 // pred_region
      _
    $region17: #{tpu_custom_call.1} parent=1 // pred_fallthru
      _
    // Predicated region
    $region18: #{tpu_custom_call.1} parent=1 // pred_check
      _
    $region19: #{tpu_custom_call.1} parent=1 // pred_check_branch
      %40 = sbr.rel (0) target = $region21
    $region20: #{tpu_custom_call.1} parent=1 // pred_region
      %s42 = ssub.s32 10240, 10240
      %43 = vsyncadd [#allocation3], %s42
      %s44 = sshll.u32 [#allocation8], 4
      %s45 = int_to_ptr.vmem [resolvable:$true] %s44
      %50 = dma.hbm_to_vmem [thread:$0]  %s4, 10240, %s45, [#allocation3], 64, 64, 4
    $region21: #{tpu_custom_call.1} parent=1 // pred_fallthru
      _
    // Predicated region
    $region22: #{tpu_custom_call.1} parent=1 // pred_check
      _
    $region23: #{tpu_custom_call.1} parent=1 // pred_check_branch
      %52 = sbr.rel (0) target = $region25
    $region24: #{tpu_custom_call.1} parent=1 // pred_region
      %53 = dma.done [#allocation5], 16
    $region25: #{tpu_custom_call.1} parent=1 // pred_fallthru
      _
    // Predicated region
    $region26: #{tpu_custom_call.1} parent=1 // pred_check
      _
    $region27: #{tpu_custom_call.1} parent=1 // pred_check_branch
      %55 = sbr.rel (0) target = $region29
    $region28: #{tpu_custom_call.1} parent=1 // pred_region
      %56 = dma.done [#allocation6], 16
    $region29: #{tpu_custom_call.1} parent=1 // pred_fallthru
      _
    // Predicated region
    $region30: #{tpu_custom_call.1} parent=1 // pred_check
      _
    $region31: #{tpu_custom_call.1} parent=1 // pred_check_branch
      %58 = sbr.rel (0) target = $region33
    $region32: #{tpu_custom_call.1} parent=1 // pred_region
      %59 = dma.done [#allocation3], 10240
    $region33: #{tpu_custom_call.1} parent=1 // pred_fallthru
      _
    %60 = sfence
    %v61 = vld [vmem:[%s2] sm:$0xf]
    %v64 = vunpack.c.l.s4 1966171168
    %v65 = vunpack.c.0.s8 %v64
    %v66 = vlaneseq
    %v67 = vshrl.u32 %v66, 7
    %v68 = vsub.s32 %v65, %v67
    %v69 = vrot.slane %v61, %v68
    %v70 = vcombine.high %v69, %v69
    %v72 = vunpack.c.l.s4 1966171168
    %v73 = vunpack.c.0.s8 %v72
    %v74 = vlaneseq
    %v75 = vshrl.u32 %v74, 7
    %v76 = vsub.s32 %v73, %v75
    %v77 = vrot.slane %v69, %v76
    %v79 = vunpack.c.l.s4 1966171168
    %v80 = vunpack.c.0.s8 %v79
    %v81 = vlaneseq
    %v82 = vshrl.u32 %v81, 7
    %v83 = vsub.s32 %v80, %v82
    %v84 = vrot.slane %v70, %v83
    %v85 = vcombine.high %v77, %v77
    %v86 = vcombine.high %v84, %v84
    %v87 = vlaneseq
    %v88 = vshrl.u32 %v87, 7
    %v89 = vsub.s32 0, %v88
    %v90 = vrot.slane %v77, %v89
    %v91 = vlaneseq
    %v92 = vshrl.u32 %v91, 7
    %v93 = vsub.s32 0, %v92
    %v94 = vrot.slane %v84, %v93
    %v95 = vlaneseq
    %v96 = vshrl.u32 %v95, 7
    %v97 = vsub.s32 0, %v96
    %v98 = vrot.slane %v85, %v97
    %v99 = vlaneseq
    %v100 = vshrl.u32 %v99, 7
    %v101 = vsub.s32 0, %v100
    %v102 = vrot.slane %v86, %v101
    %v107 = vld [vmem:[#allocation8] sm:$0xf]
    %v108 = vld [vmem:[#allocation8 + $0x4] sm:$0xf]
    %v109 = vld [vmem:[#allocation8 + $0x8] sm:$0xf]
    %v110 = vld [vmem:[#allocation8 + $0xc] sm:$0xf]
    %v111 = vunpack.c.l.bf16 %v107
    %v112 = vunpack.c.l.bf16 %v108
    %v113 = vunpack.c.l.bf16 %v109
    %v114 = vunpack.c.l.bf16 %v110
    %s115 = scalar_lea.vmem [#allocation8], 80
    %v116 = vld [vmem:[%s115] sm:$0xf]
    %v117 = vld [vmem:[%s115 + $0x4] sm:$0xf]
    %v118 = vld [vmem:[%s115 + $0x8] sm:$0xf]
    %v119 = vld [vmem:[%s115 + $0xc] sm:$0xf]
    %v120 = vunpack.c.l.bf16 %v116
    %v121 = vunpack.c.l.bf16 %v117
    %v122 = vunpack.c.l.bf16 %v118
    %v123 = vunpack.c.l.bf16 %v119
    %v124 = vmul.f32 %v90, %v111
    %v125 = vmul.f32 %v90, %v112
    %v126 = vmul.f32 %v90, %v113
    %v127 = vmul.f32 %v90, %v114
    %v128 = vmul.f32 %v94, %v111
    %v129 = vmul.f32 %v94, %v112
    %v130 = vmul.f32 %v94, %v113
    %v131 = vmul.f32 %v94, %v114
    %v132 = vmul.f32 %v98, %v111
    %v133 = vmul.f32 %v98, %v112
    %v134 = vmul.f32 %v98, %v113
    %v135 = vmul.f32 %v98, %v114
    %v136 = vmul.f32 %v102, %v111
    %v137 = vmul.f32 %v102, %v112
    %v138 = vmul.f32 %v102, %v113
    %v139 = vmul.f32 %v102, %v114
    %v140 = vsub.f32 %v124, %v120
    %v141 = vsub.f32 %v125, %v121
    %v142 = vsub.f32 %v126, %v122
    %v143 = vsub.f32 %v127, %v123
    %v144 = vsub.f32 %v128, %v120
    %v145 = vsub.f32 %v129, %v121
    %v146 = vsub.f32 %v130, %v122
    %v147 = vsub.f32 %v131, %v123
    %v148 = vsub.f32 %v132, %v120
    %v149 = vsub.f32 %v133, %v121
    %v150 = vsub.f32 %v134, %v122
    %v151 = vsub.f32 %v135, %v123
    %v152 = vsub.f32 %v136, %v120
    %v153 = vsub.f32 %v137, %v121
    %v154 = vsub.f32 %v138, %v122
    %v155 = vsub.f32 %v139, %v123
    %v156 = vmin.f32 %v140, 0.0
    %v157 = vmin.f32 %v141, 0.0
    %v158 = vmin.f32 %v142, 0.0
    %v159 = vmin.f32 %v143, 0.0
    %v160 = vmin.f32 %v144, 0.0
    %v161 = vmin.f32 %v145, 0.0
    %v162 = vmin.f32 %v146, 0.0
    %v163 = vmin.f32 %v147, 0.0
    %v164 = vmin.f32 %v148, 0.0
    %v165 = vmin.f32 %v149, 0.0
    %v166 = vmin.f32 %v150, 0.0
    %v167 = vmin.f32 %v151, 0.0
    %v168 = vmin.f32 %v152, 0.0
    %v169 = vmin.f32 %v153, 0.0
    %v170 = vmin.f32 %v154, 0.0
    %v171 = vmin.f32 %v155, 0.0
    %v172 = vand.u32 2147483647, %v140
    %v173 = vand.u32 2147483647, %v141
    %v174 = vand.u32 2147483647, %v142
    %v175 = vand.u32 2147483647, %v143
    %v176 = vand.u32 2147483647, %v144
    %v177 = vand.u32 2147483647, %v145
    %v178 = vand.u32 2147483647, %v146
    %v179 = vand.u32 2147483647, %v147
    %v180 = vand.u32 2147483647, %v148
    %v181 = vand.u32 2147483647, %v149
    %v182 = vand.u32 2147483647, %v150
    %v183 = vand.u32 2147483647, %v151
    %v184 = vand.u32 2147483647, %v152
    %v185 = vand.u32 2147483647, %v153
    %v186 = vand.u32 2147483647, %v154
    %v187 = vand.u32 2147483647, %v155
    %v188 = vsub.f32 0.0, %v172
    %v189 = vsub.f32 0.0, %v173
    %v190 = vsub.f32 0.0, %v174
    %v191 = vsub.f32 0.0, %v175
    %v192 = vsub.f32 0.0, %v176
    %v193 = vsub.f32 0.0, %v177
    %v194 = vsub.f32 0.0, %v178
    %v195 = vsub.f32 0.0, %v179
    %v196 = vsub.f32 0.0, %v180
    %v197 = vsub.f32 0.0, %v181
    %v198 = vsub.f32 0.0, %v182
    %v199 = vsub.f32 0.0, %v183
    %v200 = vsub.f32 0.0, %v184
    %v201 = vsub.f32 0.0, %v185
    %v202 = vsub.f32 0.0, %v186
    %v203 = vsub.f32 0.0, %v187
    %v204 = vmul.f32 %v188, 1.442695
    %v205 = vpow.pop %v204
    %v206 = vmul.f32 %v189, 1.442695
    %v207 = vpow.pop %v206
    %v208 = vmul.f32 %v190, 1.442695
    %v209 = vpow.pop %v208
    %v210 = vmul.f32 %v191, 1.442695
    %v211 = vpow.pop %v210
    %v212 = vmul.f32 %v192, 1.442695
    %v213 = vpow.pop %v212
    %v214 = vmul.f32 %v193, 1.442695
    %v215 = vpow.pop %v214
    %v216 = vmul.f32 %v194, 1.442695
    %v217 = vpow.pop %v216
    %v218 = vmul.f32 %v195, 1.442695
    %v219 = vpow.pop %v218
    %v220 = vmul.f32 %v196, 1.442695
    %v221 = vpow.pop %v220
    %v222 = vmul.f32 %v197, 1.442695
    %v223 = vpow.pop %v222
    %v224 = vmul.f32 %v198, 1.442695
    %v225 = vpow.pop %v224
    %v226 = vmul.f32 %v199, 1.442695
    %v227 = vpow.pop %v226
    %v228 = vmul.f32 %v200, 1.442695
    %v229 = vpow.pop %v228
    %v230 = vmul.f32 %v201, 1.442695
    %v231 = vpow.pop %v230
    %v232 = vmul.f32 %v202, 1.442695
    %v233 = vpow.pop %v232
    %v234 = vmul.f32 %v203, 1.442695
    %v235 = vpow.pop %v234
    %v236 = vadd.f32 %v205, 1.0
    %v237 = vadd.f32 %v207, 1.0
    %v238 = vadd.f32 %v209, 1.0
    %v239 = vadd.f32 %v211, 1.0
    %v240 = vadd.f32 %v213, 1.0
    %v241 = vadd.f32 %v215, 1.0
    %v242 = vadd.f32 %v217, 1.0
    %v243 = vadd.f32 %v219, 1.0
    %v244 = vadd.f32 %v221, 1.0
    %v245 = vadd.f32 %v223, 1.0
    %v246 = vadd.f32 %v225, 1.0
    %v247 = vadd.f32 %v227, 1.0
    %v248 = vadd.f32 %v229, 1.0
    %v249 = vadd.f32 %v231, 1.0
    %v250 = vadd.f32 %v233, 1.0
    %v251 = vadd.f32 %v235, 1.0
    %v252 = vlog2.pop %v236
    %v253 = vmul.f32 %v252, 0.6931472
    %v254 = vlog2.pop %v237
    %v255 = vmul.f32 %v254, 0.6931472
    %v256 = vlog2.pop %v238
    %v257 = vmul.f32 %v256, 0.6931472
    %v258 = vlog2.pop %v239
    %v259 = vmul.f32 %v258, 0.6931472
    %v260 = vlog2.pop %v240
    %v261 = vmul.f32 %v260, 0.6931472
    %v262 = vlog2.pop %v241
    %v263 = vmul.f32 %v262, 0.6931472
    %v264 = vlog2.pop %v242
    %v265 = vmul.f32 %v264, 0.6931472
    %v266 = vlog2.pop %v243
    %v267 = vmul.f32 %v266, 0.6931472
    %v268 = vlog2.pop %v244
    %v269 = vmul.f32 %v268, 0.6931472
    %v270 = vlog2.pop %v245
    %v271 = vmul.f32 %v270, 0.6931472
    %v272 = vlog2.pop %v246
    %v273 = vmul.f32 %v272, 0.6931472
    %v274 = vlog2.pop %v247
    %v275 = vmul.f32 %v274, 0.6931472
    %v276 = vlog2.pop %v248
    %v277 = vmul.f32 %v276, 0.6931472
    %v278 = vlog2.pop %v249
    %v279 = vmul.f32 %v278, 0.6931472
    %v280 = vlog2.pop %v250
    %v281 = vmul.f32 %v280, 0.6931472
    %v282 = vlog2.pop %v251
    %v283 = vmul.f32 %v282, 0.6931472
    %v284 = vsub.f32 %v156, %v253
    %v285 = vsub.f32 %v157, %v255
    %v286 = vsub.f32 %v158, %v257
    %v287 = vsub.f32 %v159, %v259
    %v288 = vsub.f32 %v160, %v261
    %v289 = vsub.f32 %v161, %v263
    %v290 = vsub.f32 %v162, %v265
    %v291 = vsub.f32 %v163, %v267
    %v292 = vsub.f32 %v164, %v269
    %v293 = vsub.f32 %v165, %v271
    %v294 = vsub.f32 %v166, %v273
    %v295 = vsub.f32 %v167, %v275
    %v296 = vsub.f32 %v168, %v277
    %v297 = vsub.f32 %v169, %v279
    %v298 = vsub.f32 %v170, %v281
    %v299 = vsub.f32 %v171, %v283
    %300 = vadd.xlane.f32.xlu0 %v284
    %v301 = vpop.xlane.xlu0 %300
    %302 = vadd.xlane.f32.xlu0 %v285
    %v303 = vpop.xlane.xlu0 %302
    %304 = vadd.xlane.f32.xlu0 %v286
    %v305 = vpop.xlane.xlu0 %304
    %306 = vadd.xlane.f32.xlu0 %v287
    %v307 = vpop.xlane.xlu0 %306
    %308 = vadd.xlane.f32.xlu0 %v288
    %v309 = vpop.xlane.xlu0 %308
    %310 = vadd.xlane.f32.xlu0 %v289
    %v311 = vpop.xlane.xlu0 %310
    %312 = vadd.xlane.f32.xlu0 %v290
    %v313 = vpop.xlane.xlu0 %312
    %314 = vadd.xlane.f32.xlu0 %v291
    %v315 = vpop.xlane.xlu0 %314
    %316 = vadd.xlane.f32.xlu0 %v292
    %v317 = vpop.xlane.xlu0 %316
    %318 = vadd.xlane.f32.xlu0 %v293
    %v319 = vpop.xlane.xlu0 %318
    %320 = vadd.xlane.f32.xlu0 %v294
    %v321 = vpop.xlane.xlu0 %320
    %322 = vadd.xlane.f32.xlu0 %v295
    %v323 = vpop.xlane.xlu0 %322
    %324 = vadd.xlane.f32.xlu0 %v296
    %v325 = vpop.xlane.xlu0 %324
    %326 = vadd.xlane.f32.xlu0 %v297
    %v327 = vpop.xlane.xlu0 %326
    %328 = vadd.xlane.f32.xlu0 %v298
    %v329 = vpop.xlane.xlu0 %328
    %330 = vadd.xlane.f32.xlu0 %v299
    %v331 = vpop.xlane.xlu0 %330
    %v332 = vmul.f32 %v301, 1.442695
    %v333 = vpow.pop %v332
    %v334 = vmul.f32 %v303, 1.442695
    %v335 = vpow.pop %v334
    %v336 = vmul.f32 %v305, 1.442695
    %v337 = vpow.pop %v336
    %v338 = vmul.f32 %v307, 1.442695
    %v339 = vpow.pop %v338
    %v340 = vmul.f32 %v309, 1.442695
    %v341 = vpow.pop %v340
    %v342 = vmul.f32 %v311, 1.442695
    %v343 = vpow.pop %v342
    %v344 = vmul.f32 %v313, 1.442695
    %v345 = vpow.pop %v344
    %v346 = vmul.f32 %v315, 1.442695
    %v347 = vpow.pop %v346
    %v348 = vmul.f32 %v317, 1.442695
    %v349 = vpow.pop %v348
    %v350 = vmul.f32 %v319, 1.442695
    %v351 = vpow.pop %v350
    %v352 = vmul.f32 %v321, 1.442695
    %v353 = vpow.pop %v352
    %v354 = vmul.f32 %v323, 1.442695
    %v355 = vpow.pop %v354
    %v356 = vmul.f32 %v325, 1.442695
    %v357 = vpow.pop %v356
    %v358 = vmul.f32 %v327, 1.442695
    %v359 = vpow.pop %v358
    %v360 = vmul.f32 %v329, 1.442695
    %v361 = vpow.pop %v360
    %v362 = vmul.f32 %v331, 1.442695
    %v363 = vpow.pop %v362
    %v364 = vadd.f32 %v333, 0.0
    %v365 = vadd.f32 %v335, 0.0
    %v366 = vadd.f32 %v337, 0.0
    %v367 = vadd.f32 %v339, 0.0
    %v368 = vadd.f32 %v341, 0.0
    %v369 = vadd.f32 %v343, 0.0
    %v370 = vadd.f32 %v345, 0.0
    %v371 = vadd.f32 %v347, 0.0
    %v372 = vadd.f32 %v349, 0.0
    %v373 = vadd.f32 %v351, 0.0
    %v374 = vadd.f32 %v353, 0.0
    %v375 = vadd.f32 %v355, 0.0
    %v376 = vadd.f32 %v357, 0.0
    %v377 = vadd.f32 %v359, 0.0
    %v378 = vadd.f32 %v361, 0.0
    %v379 = vadd.f32 %v363, 0.0
    %s380 = scalar_lea.vmem [#allocation8], 16
    %v381 = vld [vmem:[%s380] sm:$0xf]
    %v382 = vld [vmem:[%s380 + $0x4] sm:$0xf]
    %v383 = vld [vmem:[%s380 + $0x8] sm:$0xf]
    %v384 = vld [vmem:[%s380 + $0xc] sm:$0xf]
    %v385 = vunpack.c.l.bf16 %v381
    %v386 = vunpack.c.l.bf16 %v382
    %v387 = vunpack.c.l.bf16 %v383
    %v388 = vunpack.c.l.bf16 %v384
    %s389 = scalar_lea.vmem [#allocation8], 96
    %v390 = vld [vmem:[%s389] sm:$0xf]
    %v391 = vld [vmem:[%s389 + $0x4] sm:$0xf]
    %v392 = vld [vmem:[%s389 + $0x8] sm:$0xf]
    %v393 = vld [vmem:[%s389 + $0xc] sm:$0xf]
    %v394 = vunpack.c.l.bf16 %v390
    %v395 = vunpack.c.l.bf16 %v391
    %v396 = vunpack.c.l.bf16 %v392
    %v397 = vunpack.c.l.bf16 %v393
    %v398 = vmul.f32 %v90, %v385
    %v399 = vmul.f32 %v90, %v386
    %v400 = vmul.f32 %v90, %v387
    %v401 = vmul.f32 %v90, %v388
    %v402 = vmul.f32 %v94, %v385
    %v403 = vmul.f32 %v94, %v386
    %v404 = vmul.f32 %v94, %v387
    %v405 = vmul.f32 %v94, %v388
    %v406 = vmul.f32 %v98, %v385
    %v407 = vmul.f32 %v98, %v386
    %v408 = vmul.f32 %v98, %v387
    %v409 = vmul.f32 %v98, %v388
    %v410 = vmul.f32 %v102, %v385
    %v411 = vmul.f32 %v102, %v386
    %v412 = vmul.f32 %v102, %v387
    %v413 = vmul.f32 %v102, %v388
    %v414 = vsub.f32 %v398, %v394
    %v415 = vsub.f32 %v399, %v395
    %v416 = vsub.f32 %v400, %v396
    %v417 = vsub.f32 %v401, %v397
    %v418 = vsub.f32 %v402, %v394
    %v419 = vsub.f32 %v403, %v395
    %v420 = vsub.f32 %v404, %v396
    %v421 = vsub.f32 %v405, %v397
    %v422 = vsub.f32 %v406, %v394
    %v423 = vsub.f32 %v407, %v395
    %v424 = vsub.f32 %v408, %v396
    %v425 = vsub.f32 %v409, %v397
    %v426 = vsub.f32 %v410, %v394
    %v427 = vsub.f32 %v411, %v395
    %v428 = vsub.f32 %v412, %v396
    %v429 = vsub.f32 %v413, %v397
    %v430 = vmin.f32 %v414, 0.0
    %v431 = vmin.f32 %v415, 0.0
    %v432 = vmin.f32 %v416, 0.0
    %v433 = vmin.f32 %v417, 0.0
    %v434 = vmin.f32 %v418, 0.0
    %v435 = vmin.f32 %v419, 0.0
    %v436 = vmin.f32 %v420, 0.0
    %v437 = vmin.f32 %v421, 0.0
    %v438 = vmin.f32 %v422, 0.0
    %v439 = vmin.f32 %v423, 0.0
    %v440 = vmin.f32 %v424, 0.0
    %v441 = vmin.f32 %v425, 0.0
    %v442 = vmin.f32 %v426, 0.0
    %v443 = vmin.f32 %v427, 0.0
    %v444 = vmin.f32 %v428, 0.0
    %v445 = vmin.f32 %v429, 0.0
    %v446 = vand.u32 2147483647, %v414
    %v447 = vand.u32 2147483647, %v415
    %v448 = vand.u32 2147483647, %v416
    %v449 = vand.u32 2147483647, %v417
    %v450 = vand.u32 2147483647, %v418
    %v451 = vand.u32 2147483647, %v419
    %v452 = vand.u32 2147483647, %v420
    %v453 = vand.u32 2147483647, %v421
    %v454 = vand.u32 2147483647, %v422
    %v455 = vand.u32 2147483647, %v423
    %v456 = vand.u32 2147483647, %v424
    %v457 = vand.u32 2147483647, %v425
    %v458 = vand.u32 2147483647, %v426
    %v459 = vand.u32 2147483647, %v427
    %v460 = vand.u32 2147483647, %v428
    %v461 = vand.u32 2147483647, %v429
    %v462 = vsub.f32 0.0, %v446
    %v463 = vsub.f32 0.0, %v447
    %v464 = vsub.f32 0.0, %v448
    %v465 = vsub.f32 0.0, %v449
    %v466 = vsub.f32 0.0, %v450
    %v467 = vsub.f32 0.0, %v451
    %v468 = vsub.f32 0.0, %v452
    %v469 = vsub.f32 0.0, %v453
    %v470 = vsub.f32 0.0, %v454
    %v471 = vsub.f32 0.0, %v455
    %v472 = vsub.f32 0.0, %v456
    %v473 = vsub.f32 0.0, %v457
    %v474 = vsub.f32 0.0, %v458
    %v475 = vsub.f32 0.0, %v459
    %v476 = vsub.f32 0.0, %v460
    %v477 = vsub.f32 0.0, %v461
    %v478 = vmul.f32 %v462, 1.442695
    %v479 = vpow.pop %v478
    %v480 = vmul.f32 %v463, 1.442695
    %v481 = vpow.pop %v480
    %v482 = vmul.f32 %v464, 1.442695
    %v483 = vpow.pop %v482
    %v484 = vmul.f32 %v465, 1.442695
    %v485 = vpow.pop %v484
    %v486 = vmul.f32 %v466, 1.442695
    %v487 = vpow.pop %v486
    %v488 = vmul.f32 %v467, 1.442695
    %v489 = vpow.pop %v488
    %v490 = vmul.f32 %v468, 1.442695
    %v491 = vpow.pop %v490
    %v492 = vmul.f32 %v469, 1.442695
    %v493 = vpow.pop %v492
    %v494 = vmul.f32 %v470, 1.442695
    %v495 = vpow.pop %v494
    %v496 = vmul.f32 %v471, 1.442695
    %v497 = vpow.pop %v496
    %v498 = vmul.f32 %v472, 1.442695
    %v499 = vpow.pop %v498
    %v500 = vmul.f32 %v473, 1.442695
    %v501 = vpow.pop %v500
    %v502 = vmul.f32 %v474, 1.442695
    %v503 = vpow.pop %v502
    %v504 = vmul.f32 %v475, 1.442695
    %v505 = vpow.pop %v504
    %v506 = vmul.f32 %v476, 1.442695
    %v507 = vpow.pop %v506
    %v508 = vmul.f32 %v477, 1.442695
    %v509 = vpow.pop %v508
    %v510 = vadd.f32 %v479, 1.0
    %v511 = vadd.f32 %v481, 1.0
    %v512 = vadd.f32 %v483, 1.0
    %v513 = vadd.f32 %v485, 1.0
    %v514 = vadd.f32 %v487, 1.0
    %v515 = vadd.f32 %v489, 1.0
    %v516 = vadd.f32 %v491, 1.0
    %v517 = vadd.f32 %v493, 1.0
    %v518 = vadd.f32 %v495, 1.0
    %v519 = vadd.f32 %v497, 1.0
    %v520 = vadd.f32 %v499, 1.0
    %v521 = vadd.f32 %v501, 1.0
    %v522 = vadd.f32 %v503, 1.0
    %v523 = vadd.f32 %v505, 1.0
    %v524 = vadd.f32 %v507, 1.0
    %v525 = vadd.f32 %v509, 1.0
    %v526 = vlog2.pop %v510
    %v527 = vmul.f32 %v526, 0.6931472
    %v528 = vlog2.pop %v511
    %v529 = vmul.f32 %v528, 0.6931472
    %v530 = vlog2.pop %v512
    %v531 = vmul.f32 %v530, 0.6931472
    %v532 = vlog2.pop %v513
    %v533 = vmul.f32 %v532, 0.6931472
    %v534 = vlog2.pop %v514
    %v535 = vmul.f32 %v534, 0.6931472
    %v536 = vlog2.pop %v515
    %v537 = vmul.f32 %v536, 0.6931472
    %v538 = vlog2.pop %v516
    %v539 = vmul.f32 %v538, 0.6931472
    %v540 = vlog2.pop %v517
    %v541 = vmul.f32 %v540, 0.6931472
    %v542 = vlog2.pop %v518
    %v543 = vmul.f32 %v542, 0.6931472
    %v544 = vlog2.pop %v519
    %v545 = vmul.f32 %v544, 0.6931472
    %v546 = vlog2.pop %v520
    %v547 = vmul.f32 %v546, 0.6931472
    %v548 = vlog2.pop %v521
    %v549 = vmul.f32 %v548, 0.6931472
    %v550 = vlog2.pop %v522
    %v551 = vmul.f32 %v550, 0.6931472
    %v552 = vlog2.pop %v523
    %v553 = vmul.f32 %v552, 0.6931472
    %v554 = vlog2.pop %v524
    %v555 = vmul.f32 %v554, 0.6931472
    %v556 = vlog2.pop %v525
    %v557 = vmul.f32 %v556, 0.6931472
    %v558 = vsub.f32 %v430, %v527
    %v559 = vsub.f32 %v431, %v529
    %v560 = vsub.f32 %v432, %v531
    %v561 = vsub.f32 %v433, %v533
    %v562 = vsub.f32 %v434, %v535
    %v563 = vsub.f32 %v435, %v537
    %v564 = vsub.f32 %v436, %v539
    %v565 = vsub.f32 %v437, %v541
    %v566 = vsub.f32 %v438, %v543
    %v567 = vsub.f32 %v439, %v545
    %v568 = vsub.f32 %v440, %v547
    %v569 = vsub.f32 %v441, %v549
    %v570 = vsub.f32 %v442, %v551
    %v571 = vsub.f32 %v443, %v553
    %v572 = vsub.f32 %v444, %v555
    %v573 = vsub.f32 %v445, %v557
    %574 = vadd.xlane.f32.xlu0 %v558
    %v575 = vpop.xlane.xlu0 %574
    %576 = vadd.xlane.f32.xlu0 %v559
    %v577 = vpop.xlane.xlu0 %576
    %578 = vadd.xlane.f32.xlu0 %v560
    %v579 = vpop.xlane.xlu0 %578
    %580 = vadd.xlane.f32.xlu0 %v561
    %v581 = vpop.xlane.xlu0 %580
    %582 = vadd.xlane.f32.xlu0 %v562
    %v583 = vpop.xlane.xlu0 %582
    %584 = vadd.xlane.f32.xlu0 %v563
    %v585 = vpop.xlane.xlu0 %584
    %586 = vadd.xlane.f32.xlu0 %v564
    %v587 = vpop.xlane.xlu0 %586
    %588 = vadd.xlane.f32.xlu0 %v565
    %v589 = vpop.xlane.xlu0 %588
    %590 = vadd.xlane.f32.xlu0 %v566
    %v591 = vpop.xlane.xlu0 %590
    %592 = vadd.xlane.f32.xlu0 %v567
    %v593 = vpop.xlane.xlu0 %592
    %594 = vadd.xlane.f32.xlu0 %v568
    %v595 = vpop.xlane.xlu0 %594
    %596 = vadd.xlane.f32.xlu0 %v569
    %v597 = vpop.xlane.xlu0 %596
    %598 = vadd.xlane.f32.xlu0 %v570
    %v599 = vpop.xlane.xlu0 %598
    %600 = vadd.xlane.f32.xlu0 %v571
    %v601 = vpop.xlane.xlu0 %600
    %602 = vadd.xlane.f32.xlu0 %v572
    %v603 = vpop.xlane.xlu0 %602
    %604 = vadd.xlane.f32.xlu0 %v573
    %v605 = vpop.xlane.xlu0 %604
    %v606 = vmul.f32 %v575, 1.442695
    %v607 = vpow.pop %v606
    %v608 = vmul.f32 %v577, 1.442695
    %v609 = vpow.pop %v608
    %v610 = vmul.f32 %v579, 1.442695
    %v611 = vpow.pop %v610
    %v612 = vmul.f32 %v581, 1.442695
    %v613 = vpow.pop %v612
    %v614 = vmul.f32 %v583, 1.442695
    %v615 = vpow.pop %v614
    %v616 = vmul.f32 %v585, 1.442695
    %v617 = vpow.pop %v616
    %v618 = vmul.f32 %v587, 1.442695
    %v619 = vpow.pop %v618
    %v620 = vmul.f32 %v589, 1.442695
    %v621 = vpow.pop %v620
    %v622 = vmul.f32 %v591, 1.442695
    %v623 = vpow.pop %v622
    %v624 = vmul.f32 %v593, 1.442695
    %v625 = vpow.pop %v624
    %v626 = vmul.f32 %v595, 1.442695
    %v627 = vpow.pop %v626
    %v628 = vmul.f32 %v597, 1.442695
    %v629 = vpow.pop %v628
    %v630 = vmul.f32 %v599, 1.442695
    %v631 = vpow.pop %v630
    %v632 = vmul.f32 %v601, 1.442695
    %v633 = vpow.pop %v632
    %v634 = vmul.f32 %v603, 1.442695
    %v635 = vpow.pop %v634
    %v636 = vmul.f32 %v605, 1.442695
    %v637 = vpow.pop %v636
    %v638 = vadd.f32 %v364, %v607
    %v639 = vadd.f32 %v365, %v609
    %v640 = vadd.f32 %v366, %v611
    %v641 = vadd.f32 %v367, %v613
    %v642 = vadd.f32 %v368, %v615
    %v643 = vadd.f32 %v369, %v617
    %v644 = vadd.f32 %v370, %v619
    %v645 = vadd.f32 %v371, %v621
    %v646 = vadd.f32 %v372, %v623
    %v647 = vadd.f32 %v373, %v625
    %v648 = vadd.f32 %v374, %v627
    %v649 = vadd.f32 %v375, %v629
    %v650 = vadd.f32 %v376, %v631
    %v651 = vadd.f32 %v377, %v633
    %v652 = vadd.f32 %v378, %v635
    %v653 = vadd.f32 %v379, %v637
    %s654 = scalar_lea.vmem [#allocation8], 32
    %v655 = vld [vmem:[%s654] sm:$0xf]
    %v656 = vld [vmem:[%s654 + $0x4] sm:$0xf]
    %v657 = vld [vmem:[%s654 + $0x8] sm:$0xf]
    %v658 = vld [vmem:[%s654 + $0xc] sm:$0xf]
    %v659 = vunpack.c.l.bf16 %v655
    %v660 = vunpack.c.l.bf16 %v656
    %v661 = vunpack.c.l.bf16 %v657
    %v662 = vunpack.c.l.bf16 %v658
    %s663 = scalar_lea.vmem [#allocation8], 112
    %v664 = vld [vmem:[%s663] sm:$0xf]
    %v665 = vld [vmem:[%s663 + $0x4] sm:$0xf]
    %v666 = vld [vmem:[%s663 + $0x8] sm:$0xf]
    %v667 = vld [vmem:[%s663 + $0xc] sm:$0xf]
    %v668 = vunpack.c.l.bf16 %v664
    %v669 = vunpack.c.l.bf16 %v665
    %v670 = vunpack.c.l.bf16 %v666
    %v671 = vunpack.c.l.bf16 %v667
    %v672 = vmul.f32 %v90, %v659
    %v673 = vmul.f32 %v90, %v660
    %v674 = vmul.f32 %v90, %v661
    %v675 = vmul.f32 %v90, %v662
    %v676 = vmul.f32 %v94, %v659
    %v677 = vmul.f32 %v94, %v660
    %v678 = vmul.f32 %v94, %v661
    %v679 = vmul.f32 %v94, %v662
    %v680 = vmul.f32 %v98, %v659
    %v681 = vmul.f32 %v98, %v660
    %v682 = vmul.f32 %v98, %v661
    %v683 = vmul.f32 %v98, %v662
    %v684 = vmul.f32 %v102, %v659
    %v685 = vmul.f32 %v102, %v660
    %v686 = vmul.f32 %v102, %v661
    %v687 = vmul.f32 %v102, %v662
    %v688 = vsub.f32 %v672, %v668
    %v689 = vsub.f32 %v673, %v669
    %v690 = vsub.f32 %v674, %v670
    %v691 = vsub.f32 %v675, %v671
    %v692 = vsub.f32 %v676, %v668
    %v693 = vsub.f32 %v677, %v669
    %v694 = vsub.f32 %v678, %v670
    %v695 = vsub.f32 %v679, %v671
    %v696 = vsub.f32 %v680, %v668
    %v697 = vsub.f32 %v681, %v669
    %v698 = vsub.f32 %v682, %v670
    %v699 = vsub.f32 %v683, %v671
    %v700 = vsub.f32 %v684, %v668
    %v701 = vsub.f32 %v685, %v669
    %v702 = vsub.f32 %v686, %v670
    %v703 = vsub.f32 %v687, %v671
    %v704 = vmin.f32 %v688, 0.0
    %v705 = vmin.f32 %v689, 0.0
    %v706 = vmin.f32 %v690, 0.0
    %v707 = vmin.f32 %v691, 0.0
    %v708 = vmin.f32 %v692, 0.0
    %v709 = vmin.f32 %v693, 0.0
    %v710 = vmin.f32 %v694, 0.0
    %v711 = vmin.f32 %v695, 0.0
    %v712 = vmin.f32 %v696, 0.0
    %v713 = vmin.f32 %v697, 0.0
    %v714 = vmin.f32 %v698, 0.0
    %v715 = vmin.f32 %v699, 0.0
    %v716 = vmin.f32 %v700, 0.0
    %v717 = vmin.f32 %v701, 0.0
    %v718 = vmin.f32 %v702, 0.0
    %v719 = vmin.f32 %v703, 0.0
    %v720 = vand.u32 2147483647, %v688
    %v721 = vand.u32 2147483647, %v689
    %v722 = vand.u32 2147483647, %v690
    %v723 = vand.u32 2147483647, %v691
    %v724 = vand.u32 2147483647, %v692
    %v725 = vand.u32 2147483647, %v693
    %v726 = vand.u32 2147483647, %v694
    %v727 = vand.u32 2147483647, %v695
    %v728 = vand.u32 2147483647, %v696
    %v729 = vand.u32 2147483647, %v697
    %v730 = vand.u32 2147483647, %v698
    %v731 = vand.u32 2147483647, %v699
    %v732 = vand.u32 2147483647, %v700
    %v733 = vand.u32 2147483647, %v701
    %v734 = vand.u32 2147483647, %v702
    %v735 = vand.u32 2147483647, %v703
    %v736 = vsub.f32 0.0, %v720
    %v737 = vsub.f32 0.0, %v721
    %v738 = vsub.f32 0.0, %v722
    %v739 = vsub.f32 0.0, %v723
    %v740 = vsub.f32 0.0, %v724
    %v741 = vsub.f32 0.0, %v725
    %v742 = vsub.f32 0.0, %v726
    %v743 = vsub.f32 0.0, %v727
    %v744 = vsub.f32 0.0, %v728
    %v745 = vsub.f32 0.0, %v729
    %v746 = vsub.f32 0.0, %v730
    %v747 = vsub.f32 0.0, %v731
    %v748 = vsub.f32 0.0, %v732
    %v749 = vsub.f32 0.0, %v733
    %v750 = vsub.f32 0.0, %v734
    %v751 = vsub.f32 0.0, %v735
    %v752 = vmul.f32 %v736, 1.442695
    %v753 = vpow.pop %v752
    %v754 = vmul.f32 %v737, 1.442695
    %v755 = vpow.pop %v754
    %v756 = vmul.f32 %v738, 1.442695
    %v757 = vpow.pop %v756
    %v758 = vmul.f32 %v739, 1.442695
    %v759 = vpow.pop %v758
    %v760 = vmul.f32 %v740, 1.442695
    %v761 = vpow.pop %v760
    %v762 = vmul.f32 %v741, 1.442695
    %v763 = vpow.pop %v762
    %v764 = vmul.f32 %v742, 1.442695
    %v765 = vpow.pop %v764
    %v766 = vmul.f32 %v743, 1.442695
    %v767 = vpow.pop %v766
    %v768 = vmul.f32 %v744, 1.442695
    %v769 = vpow.pop %v768
    %v770 = vmul.f32 %v745, 1.442695
    %v771 = vpow.pop %v770
    %v772 = vmul.f32 %v746, 1.442695
    %v773 = vpow.pop %v772
    %v774 = vmul.f32 %v747, 1.442695
    %v775 = vpow.pop %v774
    %v776 = vmul.f32 %v748, 1.442695
    %v777 = vpow.pop %v776
    %v778 = vmul.f32 %v749, 1.442695
    %v779 = vpow.pop %v778
    %v780 = vmul.f32 %v750, 1.442695
    %v781 = vpow.pop %v780
    %v782 = vmul.f32 %v751, 1.442695
    %v783 = vpow.pop %v782
    %v784 = vadd.f32 %v753, 1.0
    %v785 = vadd.f32 %v755, 1.0
    %v786 = vadd.f32 %v757, 1.0
    %v787 = vadd.f32 %v759, 1.0
    %v788 = vadd.f32 %v761, 1.0
    %v789 = vadd.f32 %v763, 1.0
    %v790 = vadd.f32 %v765, 1.0
    %v791 = vadd.f32 %v767, 1.0
    %v792 = vadd.f32 %v769, 1.0
    %v793 = vadd.f32 %v771, 1.0
    %v794 = vadd.f32 %v773, 1.0
    %v795 = vadd.f32 %v775, 1.0
    %v796 = vadd.f32 %v777, 1.0
    %v797 = vadd.f32 %v779, 1.0
    %v798 = vadd.f32 %v781, 1.0
    %v799 = vadd.f32 %v783, 1.0
    %v800 = vlog2.pop %v784
    %v801 = vmul.f32 %v800, 0.6931472
    %v802 = vlog2.pop %v785
    %v803 = vmul.f32 %v802, 0.6931472
    %v804 = vlog2.pop %v786
    %v805 = vmul.f32 %v804, 0.6931472
    %v806 = vlog2.pop %v787
    %v807 = vmul.f32 %v806, 0.6931472
    %v808 = vlog2.pop %v788
    %v809 = vmul.f32 %v808, 0.6931472
    %v810 = vlog2.pop %v789
    %v811 = vmul.f32 %v810, 0.6931472
    %v812 = vlog2.pop %v790
    %v813 = vmul.f32 %v812, 0.6931472
    %v814 = vlog2.pop %v791
    %v815 = vmul.f32 %v814, 0.6931472
    %v816 = vlog2.pop %v792
    %v817 = vmul.f32 %v816, 0.6931472
    %v818 = vlog2.pop %v793
    %v819 = vmul.f32 %v818, 0.6931472
    %v820 = vlog2.pop %v794
    %v821 = vmul.f32 %v820, 0.6931472
    %v822 = vlog2.pop %v795
    %v823 = vmul.f32 %v822, 0.6931472
    %v824 = vlog2.pop %v796
    %v825 = vmul.f32 %v824, 0.6931472
    %v826 = vlog2.pop %v797
    %v827 = vmul.f32 %v826, 0.6931472
    %v828 = vlog2.pop %v798
    %v829 = vmul.f32 %v828, 0.6931472
    %v830 = vlog2.pop %v799
    %v831 = vmul.f32 %v830, 0.6931472
    %v832 = vsub.f32 %v704, %v801
    %v833 = vsub.f32 %v705, %v803
    %v834 = vsub.f32 %v706, %v805
    %v835 = vsub.f32 %v707, %v807
    %v836 = vsub.f32 %v708, %v809
    %v837 = vsub.f32 %v709, %v811
    %v838 = vsub.f32 %v710, %v813
    %v839 = vsub.f32 %v711, %v815
    %v840 = vsub.f32 %v712, %v817
    %v841 = vsub.f32 %v713, %v819
    %v842 = vsub.f32 %v714, %v821
    %v843 = vsub.f32 %v715, %v823
    %v844 = vsub.f32 %v716, %v825
    %v845 = vsub.f32 %v717, %v827
    %v846 = vsub.f32 %v718, %v829
    %v847 = vsub.f32 %v719, %v831
    %848 = vadd.xlane.f32.xlu0 %v832
    %v849 = vpop.xlane.xlu0 %848
    %850 = vadd.xlane.f32.xlu0 %v833
    %v851 = vpop.xlane.xlu0 %850
    %852 = vadd.xlane.f32.xlu0 %v834
    %v853 = vpop.xlane.xlu0 %852
    %854 = vadd.xlane.f32.xlu0 %v835
    %v855 = vpop.xlane.xlu0 %854
    %856 = vadd.xlane.f32.xlu0 %v836
    %v857 = vpop.xlane.xlu0 %856
    %858 = vadd.xlane.f32.xlu0 %v837
    %v859 = vpop.xlane.xlu0 %858
    %860 = vadd.xlane.f32.xlu0 %v838
    %v861 = vpop.xlane.xlu0 %860
    %862 = vadd.xlane.f32.xlu0 %v839
    %v863 = vpop.xlane.xlu0 %862
    %864 = vadd.xlane.f32.xlu0 %v840
    %v865 = vpop.xlane.xlu0 %864
    %866 = vadd.xlane.f32.xlu0 %v841
    %v867 = vpop.xlane.xlu0 %866
    %868 = vadd.xlane.f32.xlu0 %v842
    %v869 = vpop.xlane.xlu0 %868
    %870 = vadd.xlane.f32.xlu0 %v843
    %v871 = vpop.xlane.xlu0 %870
    %872 = vadd.xlane.f32.xlu0 %v844
    %v873 = vpop.xlane.xlu0 %872
    %874 = vadd.xlane.f32.xlu0 %v845
    %v875 = vpop.xlane.xlu0 %874
    %876 = vadd.xlane.f32.xlu0 %v846
    %v877 = vpop.xlane.xlu0 %876
    %878 = vadd.xlane.f32.xlu0 %v847
    %v879 = vpop.xlane.xlu0 %878
    %v880 = vmul.f32 %v849, 1.442695
    %v881 = vpow.pop %v880
    %v882 = vmul.f32 %v851, 1.442695
    %v883 = vpow.pop %v882
    %v884 = vmul.f32 %v853, 1.442695
    %v885 = vpow.pop %v884
    %v886 = vmul.f32 %v855, 1.442695
    %v887 = vpow.pop %v886
    %v888 = vmul.f32 %v857, 1.442695
    %v889 = vpow.pop %v888
    %v890 = vmul.f32 %v859, 1.442695
    %v891 = vpow.pop %v890
    %v892 = vmul.f32 %v861, 1.442695
    %v893 = vpow.pop %v892
    %v894 = vmul.f32 %v863, 1.442695
    %v895 = vpow.pop %v894
    %v896 = vmul.f32 %v865, 1.442695
    %v897 = vpow.pop %v896
    %v898 = vmul.f32 %v867, 1.442695
    %v899 = vpow.pop %v898
    %v900 = vmul.f32 %v869, 1.442695
    %v901 = vpow.pop %v900
    %v902 = vmul.f32 %v871, 1.442695
    %v903 = vpow.pop %v902
    %v904 = vmul.f32 %v873, 1.442695
    %v905 = vpow.pop %v904
    %v906 = vmul.f32 %v875, 1.442695
    %v907 = vpow.pop %v906
    %v908 = vmul.f32 %v877, 1.442695
    %v909 = vpow.pop %v908
    %v910 = vmul.f32 %v879, 1.442695
    %v911 = vpow.pop %v910
    %v912 = vadd.f32 %v638, %v881
    %v913 = vadd.f32 %v639, %v883
    %v914 = vadd.f32 %v640, %v885
    %v915 = vadd.f32 %v641, %v887
    %v916 = vadd.f32 %v642, %v889
    %v917 = vadd.f32 %v643, %v891
    %v918 = vadd.f32 %v644, %v893
    %v919 = vadd.f32 %v645, %v895
    %v920 = vadd.f32 %v646, %v897
    %v921 = vadd.f32 %v647, %v899
    %v922 = vadd.f32 %v648, %v901
    %v923 = vadd.f32 %v649, %v903
    %v924 = vadd.f32 %v650, %v905
    %v925 = vadd.f32 %v651, %v907
    %v926 = vadd.f32 %v652, %v909
    %v927 = vadd.f32 %v653, %v911
    %s928 = scalar_lea.vmem [#allocation8], 48
    %v929 = vld [vmem:[%s928] sm:$0xf]
    %v930 = vld [vmem:[%s928 + $0x4] sm:$0xf]
    %v931 = vld [vmem:[%s928 + $0x8] sm:$0xf]
    %v932 = vld [vmem:[%s928 + $0xc] sm:$0xf]
    %v933 = vunpack.c.l.bf16 %v929
    %v934 = vunpack.c.l.bf16 %v930
    %v935 = vunpack.c.l.bf16 %v931
    %v936 = vunpack.c.l.bf16 %v932
    %s937 = scalar_lea.vmem [#allocation8], 128
    %v938 = vld [vmem:[%s937] sm:$0xf]
    %v939 = vld [vmem:[%s937 + $0x4] sm:$0xf]
    %v940 = vld [vmem:[%s937 + $0x8] sm:$0xf]
    %v941 = vld [vmem:[%s937 + $0xc] sm:$0xf]
    %v942 = vunpack.c.l.bf16 %v938
    %v943 = vunpack.c.l.bf16 %v939
    %v944 = vunpack.c.l.bf16 %v940
    %v945 = vunpack.c.l.bf16 %v941
    %v946 = vmul.f32 %v90, %v933
    %v947 = vmul.f32 %v90, %v934
    %v948 = vmul.f32 %v90, %v935
    %v949 = vmul.f32 %v90, %v936
    %v950 = vmul.f32 %v94, %v933
    %v951 = vmul.f32 %v94, %v934
    %v952 = vmul.f32 %v94, %v935
    %v953 = vmul.f32 %v94, %v936
    %v954 = vmul.f32 %v98, %v933
    %v955 = vmul.f32 %v98, %v934
    %v956 = vmul.f32 %v98, %v935
    %v957 = vmul.f32 %v98, %v936
    %v958 = vmul.f32 %v102, %v933
    %v959 = vmul.f32 %v102, %v934
    %v960 = vmul.f32 %v102, %v935
    %v961 = vmul.f32 %v102, %v936
    %v962 = vsub.f32 %v946, %v942
    %v963 = vsub.f32 %v947, %v943
    %v964 = vsub.f32 %v948, %v944
    %v965 = vsub.f32 %v949, %v945
    %v966 = vsub.f32 %v950, %v942
    %v967 = vsub.f32 %v951, %v943
    %v968 = vsub.f32 %v952, %v944
    %v969 = vsub.f32 %v953, %v945
    %v970 = vsub.f32 %v954, %v942
    %v971 = vsub.f32 %v955, %v943
    %v972 = vsub.f32 %v956, %v944
    %v973 = vsub.f32 %v957, %v945
    %v974 = vsub.f32 %v958, %v942
    %v975 = vsub.f32 %v959, %v943
    %v976 = vsub.f32 %v960, %v944
    %v977 = vsub.f32 %v961, %v945
    %v978 = vmin.f32 %v962, 0.0
    %v979 = vmin.f32 %v963, 0.0
    %v980 = vmin.f32 %v964, 0.0
    %v981 = vmin.f32 %v965, 0.0
    %v982 = vmin.f32 %v966, 0.0
    %v983 = vmin.f32 %v967, 0.0
    %v984 = vmin.f32 %v968, 0.0
    %v985 = vmin.f32 %v969, 0.0
    %v986 = vmin.f32 %v970, 0.0
    %v987 = vmin.f32 %v971, 0.0
    %v988 = vmin.f32 %v972, 0.0
    %v989 = vmin.f32 %v973, 0.0
    %v990 = vmin.f32 %v974, 0.0
    %v991 = vmin.f32 %v975, 0.0
    %v992 = vmin.f32 %v976, 0.0
    %v993 = vmin.f32 %v977, 0.0
    %v994 = vand.u32 2147483647, %v962
    %v995 = vand.u32 2147483647, %v963
    %v996 = vand.u32 2147483647, %v964
    %v997 = vand.u32 2147483647, %v965
    %v998 = vand.u32 2147483647, %v966
    %v999 = vand.u32 2147483647, %v967
    %v1000 = vand.u32 2147483647, %v968
    %v1001 = vand.u32 2147483647, %v969
    %v1002 = vand.u32 2147483647, %v970
    %v1003 = vand.u32 2147483647, %v971
    %v1004 = vand.u32 2147483647, %v972
    %v1005 = vand.u32 2147483647, %v973
    %v1006 = vand.u32 2147483647, %v974
    %v1007 = vand.u32 2147483647, %v975
    %v1008 = vand.u32 2147483647, %v976
    %v1009 = vand.u32 2147483647, %v977
    %v1010 = vsub.f32 0.0, %v994
    %v1011 = vsub.f32 0.0, %v995
    %v1012 = vsub.f32 0.0, %v996
    %v1013 = vsub.f32 0.0, %v997
    %v1014 = vsub.f32 0.0, %v998
    %v1015 = vsub.f32 0.0, %v999
    %v1016 = vsub.f32 0.0, %v1000
    %v1017 = vsub.f32 0.0, %v1001
    %v1018 = vsub.f32 0.0, %v1002
    %v1019 = vsub.f32 0.0, %v1003
    %v1020 = vsub.f32 0.0, %v1004
    %v1021 = vsub.f32 0.0, %v1005
    %v1022 = vsub.f32 0.0, %v1006
    %v1023 = vsub.f32 0.0, %v1007
    %v1024 = vsub.f32 0.0, %v1008
    %v1025 = vsub.f32 0.0, %v1009
    %v1026 = vmul.f32 %v1010, 1.442695
    %v1027 = vpow.pop %v1026
    %v1028 = vmul.f32 %v1011, 1.442695
    %v1029 = vpow.pop %v1028
    %v1030 = vmul.f32 %v1012, 1.442695
    %v1031 = vpow.pop %v1030
    %v1032 = vmul.f32 %v1013, 1.442695
    %v1033 = vpow.pop %v1032
    %v1034 = vmul.f32 %v1014, 1.442695
    %v1035 = vpow.pop %v1034
    %v1036 = vmul.f32 %v1015, 1.442695
    %v1037 = vpow.pop %v1036
    %v1038 = vmul.f32 %v1016, 1.442695
    %v1039 = vpow.pop %v1038
    %v1040 = vmul.f32 %v1017, 1.442695
    %v1041 = vpow.pop %v1040
    %v1042 = vmul.f32 %v1018, 1.442695
    %v1043 = vpow.pop %v1042
    %v1044 = vmul.f32 %v1019, 1.442695
    %v1045 = vpow.pop %v1044
    %v1046 = vmul.f32 %v1020, 1.442695
    %v1047 = vpow.pop %v1046
    %v1048 = vmul.f32 %v1021, 1.442695
    %v1049 = vpow.pop %v1048
    %v1050 = vmul.f32 %v1022, 1.442695
    %v1051 = vpow.pop %v1050
    %v1052 = vmul.f32 %v1023, 1.442695
    %v1053 = vpow.pop %v1052
    %v1054 = vmul.f32 %v1024, 1.442695
    %v1055 = vpow.pop %v1054
    %v1056 = vmul.f32 %v1025, 1.442695
    %v1057 = vpow.pop %v1056
    %v1058 = vadd.f32 %v1027, 1.0
    %v1059 = vadd.f32 %v1029, 1.0
    %v1060 = vadd.f32 %v1031, 1.0
    %v1061 = vadd.f32 %v1033, 1.0
    %v1062 = vadd.f32 %v1035, 1.0
    %v1063 = vadd.f32 %v1037, 1.0
    %v1064 = vadd.f32 %v1039, 1.0
    %v1065 = vadd.f32 %v1041, 1.0
    %v1066 = vadd.f32 %v1043, 1.0
    %v1067 = vadd.f32 %v1045, 1.0
    %v1068 = vadd.f32 %v1047, 1.0
    %v1069 = vadd.f32 %v1049, 1.0
    %v1070 = vadd.f32 %v1051, 1.0
    %v1071 = vadd.f32 %v1053, 1.0
    %v1072 = vadd.f32 %v1055, 1.0
    %v1073 = vadd.f32 %v1057, 1.0
    %v1074 = vlog2.pop %v1058
    %v1075 = vmul.f32 %v1074, 0.6931472
    %v1076 = vlog2.pop %v1059
    %v1077 = vmul.f32 %v1076, 0.6931472
    %v1078 = vlog2.pop %v1060
    %v1079 = vmul.f32 %v1078, 0.6931472
    %v1080 = vlog2.pop %v1061
    %v1081 = vmul.f32 %v1080, 0.6931472
    %v1082 = vlog2.pop %v1062
    %v1083 = vmul.f32 %v1082, 0.6931472
    %v1084 = vlog2.pop %v1063
    %v1085 = vmul.f32 %v1084, 0.6931472
    %v1086 = vlog2.pop %v1064
    %v1087 = vmul.f32 %v1086, 0.6931472
    %v1088 = vlog2.pop %v1065
    %v1089 = vmul.f32 %v1088, 0.6931472
    %v1090 = vlog2.pop %v1066
    %v1091 = vmul.f32 %v1090, 0.6931472
    %v1092 = vlog2.pop %v1067
    %v1093 = vmul.f32 %v1092, 0.6931472
    %v1094 = vlog2.pop %v1068
    %v1095 = vmul.f32 %v1094, 0.6931472
    %v1096 = vlog2.pop %v1069
    %v1097 = vmul.f32 %v1096, 0.6931472
    %v1098 = vlog2.pop %v1070
    %v1099 = vmul.f32 %v1098, 0.6931472
    %v1100 = vlog2.pop %v1071
    %v1101 = vmul.f32 %v1100, 0.6931472
    %v1102 = vlog2.pop %v1072
    %v1103 = vmul.f32 %v1102, 0.6931472
    %v1104 = vlog2.pop %v1073
    %v1105 = vmul.f32 %v1104, 0.6931472
    %v1106 = vsub.f32 %v978, %v1075
    %v1107 = vsub.f32 %v979, %v1077
    %v1108 = vsub.f32 %v980, %v1079
    %v1109 = vsub.f32 %v981, %v1081
    %v1110 = vsub.f32 %v982, %v1083
    %v1111 = vsub.f32 %v983, %v1085
    %v1112 = vsub.f32 %v984, %v1087
    %v1113 = vsub.f32 %v985, %v1089
    %v1114 = vsub.f32 %v986, %v1091
    %v1115 = vsub.f32 %v987, %v1093
    %v1116 = vsub.f32 %v988, %v1095
    %v1117 = vsub.f32 %v989, %v1097
    %v1118 = vsub.f32 %v990, %v1099
    %v1119 = vsub.f32 %v991, %v1101
    %v1120 = vsub.f32 %v992, %v1103
    %v1121 = vsub.f32 %v993, %v1105
    %1122 = vadd.xlane.f32.xlu0 %v1106
    %v1123 = vpop.xlane.xlu0 %1122
    %1124 = vadd.xlane.f32.xlu0 %v1107
    %v1125 = vpop.xlane.xlu0 %1124
    %1126 = vadd.xlane.f32.xlu0 %v1108
    %v1127 = vpop.xlane.xlu0 %1126
    %1128 = vadd.xlane.f32.xlu0 %v1109
    %v1129 = vpop.xlane.xlu0 %1128
    %1130 = vadd.xlane.f32.xlu0 %v1110
    %v1131 = vpop.xlane.xlu0 %1130
    %1132 = vadd.xlane.f32.xlu0 %v1111
    %v1133 = vpop.xlane.xlu0 %1132
    %1134 = vadd.xlane.f32.xlu0 %v1112
    %v1135 = vpop.xlane.xlu0 %1134
    %1136 = vadd.xlane.f32.xlu0 %v1113
    %v1137 = vpop.xlane.xlu0 %1136
    %1138 = vadd.xlane.f32.xlu0 %v1114
    %v1139 = vpop.xlane.xlu0 %1138
    %1140 = vadd.xlane.f32.xlu0 %v1115
    %v1141 = vpop.xlane.xlu0 %1140
    %1142 = vadd.xlane.f32.xlu0 %v1116
    %v1143 = vpop.xlane.xlu0 %1142
    %1144 = vadd.xlane.f32.xlu0 %v1117
    %v1145 = vpop.xlane.xlu0 %1144
    %1146 = vadd.xlane.f32.xlu0 %v1118
    %v1147 = vpop.xlane.xlu0 %1146
    %1148 = vadd.xlane.f32.xlu0 %v1119
    %v1149 = vpop.xlane.xlu0 %1148
    %1150 = vadd.xlane.f32.xlu0 %v1120
    %v1151 = vpop.xlane.xlu0 %1150
    %1152 = vadd.xlane.f32.xlu0 %v1121
    %v1153 = vpop.xlane.xlu0 %1152
    %v1154 = vmul.f32 %v1123, 1.442695
    %v1155 = vpow.pop %v1154
    %v1156 = vmul.f32 %v1125, 1.442695
    %v1157 = vpow.pop %v1156
    %v1158 = vmul.f32 %v1127, 1.442695
    %v1159 = vpow.pop %v1158
    %v1160 = vmul.f32 %v1129, 1.442695
    %v1161 = vpow.pop %v1160
    %v1162 = vmul.f32 %v1131, 1.442695
    %v1163 = vpow.pop %v1162
    %v1164 = vmul.f32 %v1133, 1.442695
    %v1165 = vpow.pop %v1164
    %v1166 = vmul.f32 %v1135, 1.442695
    %v1167 = vpow.pop %v1166
    %v1168 = vmul.f32 %v1137, 1.442695
    %v1169 = vpow.pop %v1168
    %v1170 = vmul.f32 %v1139, 1.442695
    %v1171 = vpow.pop %v1170
    %v1172 = vmul.f32 %v1141, 1.442695
    %v1173 = vpow.pop %v1172
    %v1174 = vmul.f32 %v1143, 1.442695
    %v1175 = vpow.pop %v1174
    %v1176 = vmul.f32 %v1145, 1.442695
    %v1177 = vpow.pop %v1176
    %v1178 = vmul.f32 %v1147, 1.442695
    %v1179 = vpow.pop %v1178
    %v1180 = vmul.f32 %v1149, 1.442695
    %v1181 = vpow.pop %v1180
    %v1182 = vmul.f32 %v1151, 1.442695
    %v1183 = vpow.pop %v1182
    %v1184 = vmul.f32 %v1153, 1.442695
    %v1185 = vpow.pop %v1184
    %v1186 = vadd.f32 %v912, %v1155
    %v1187 = vadd.f32 %v913, %v1157
    %v1188 = vadd.f32 %v914, %v1159
    %v1189 = vadd.f32 %v915, %v1161
    %v1190 = vadd.f32 %v916, %v1163
    %v1191 = vadd.f32 %v917, %v1165
    %v1192 = vadd.f32 %v918, %v1167
    %v1193 = vadd.f32 %v919, %v1169
    %v1194 = vadd.f32 %v920, %v1171
    %v1195 = vadd.f32 %v921, %v1173
    %v1196 = vadd.f32 %v922, %v1175
    %v1197 = vadd.f32 %v923, %v1177
    %v1198 = vadd.f32 %v924, %v1179
    %v1199 = vadd.f32 %v925, %v1181
    %v1200 = vadd.f32 %v926, %v1183
    %v1201 = vadd.f32 %v927, %v1185
    %s1202 = scalar_lea.vmem [#allocation8], 64
    %v1203 = vld [vmem:[%s1202] sm:$0xf]
    %v1204 = vld [vmem:[%s1202 + $0x4] sm:$0xf]
    %v1205 = vld [vmem:[%s1202 + $0x8] sm:$0xf]
    %v1206 = vld [vmem:[%s1202 + $0xc] sm:$0xf]
    %v1207 = vunpack.c.l.bf16 %v1203
    %v1208 = vunpack.c.l.bf16 %v1204
    %v1209 = vunpack.c.l.bf16 %v1205
    %v1210 = vunpack.c.l.bf16 %v1206
    %s1211 = scalar_lea.vmem [#allocation8], 144
    %v1212 = vld [vmem:[%s1211] sm:$0xf]
    %v1213 = vld [vmem:[%s1211 + $0x4] sm:$0xf]
    %v1214 = vld [vmem:[%s1211 + $0x8] sm:$0xf]
    %v1215 = vld [vmem:[%s1211 + $0xc] sm:$0xf]
    %v1216 = vunpack.c.l.bf16 %v1212
    %v1217 = vunpack.c.l.bf16 %v1213
    %v1218 = vunpack.c.l.bf16 %v1214
    %v1219 = vunpack.c.l.bf16 %v1215
    %v1220 = vmul.f32 %v90, %v1207
    %v1221 = vmul.f32 %v90, %v1208
    %v1222 = vmul.f32 %v90, %v1209
    %v1223 = vmul.f32 %v90, %v1210
    %v1224 = vmul.f32 %v94, %v1207
    %v1225 = vmul.f32 %v94, %v1208
    %v1226 = vmul.f32 %v94, %v1209
    %v1227 = vmul.f32 %v94, %v1210
    %v1228 = vmul.f32 %v98, %v1207
    %v1229 = vmul.f32 %v98, %v1208
    %v1230 = vmul.f32 %v98, %v1209
    %v1231 = vmul.f32 %v98, %v1210
    %v1232 = vmul.f32 %v102, %v1207
    %v1233 = vmul.f32 %v102, %v1208
    %v1234 = vmul.f32 %v102, %v1209
    %v1235 = vmul.f32 %v102, %v1210
    %v1236 = vsub.f32 %v1220, %v1216
    %v1237 = vsub.f32 %v1221, %v1217
    %v1238 = vsub.f32 %v1222, %v1218
    %v1239 = vsub.f32 %v1223, %v1219
    %v1240 = vsub.f32 %v1224, %v1216
    %v1241 = vsub.f32 %v1225, %v1217
    %v1242 = vsub.f32 %v1226, %v1218
    %v1243 = vsub.f32 %v1227, %v1219
    %v1244 = vsub.f32 %v1228, %v1216
    %v1245 = vsub.f32 %v1229, %v1217
    %v1246 = vsub.f32 %v1230, %v1218
    %v1247 = vsub.f32 %v1231, %v1219
    %v1248 = vsub.f32 %v1232, %v1216
    %v1249 = vsub.f32 %v1233, %v1217
    %v1250 = vsub.f32 %v1234, %v1218
    %v1251 = vsub.f32 %v1235, %v1219
    %v1252 = vmin.f32 %v1236, 0.0
    %v1253 = vmin.f32 %v1237, 0.0
    %v1254 = vmin.f32 %v1238, 0.0
    %v1255 = vmin.f32 %v1239, 0.0
    %v1256 = vmin.f32 %v1240, 0.0
    %v1257 = vmin.f32 %v1241, 0.0
    %v1258 = vmin.f32 %v1242, 0.0
    %v1259 = vmin.f32 %v1243, 0.0
    %v1260 = vmin.f32 %v1244, 0.0
    %v1261 = vmin.f32 %v1245, 0.0
    %v1262 = vmin.f32 %v1246, 0.0
    %v1263 = vmin.f32 %v1247, 0.0
    %v1264 = vmin.f32 %v1248, 0.0
    %v1265 = vmin.f32 %v1249, 0.0
    %v1266 = vmin.f32 %v1250, 0.0
    %v1267 = vmin.f32 %v1251, 0.0
    %v1268 = vand.u32 2147483647, %v1236
    %v1269 = vand.u32 2147483647, %v1237
    %v1270 = vand.u32 2147483647, %v1238
    %v1271 = vand.u32 2147483647, %v1239
    %v1272 = vand.u32 2147483647, %v1240
    %v1273 = vand.u32 2147483647, %v1241
    %v1274 = vand.u32 2147483647, %v1242
    %v1275 = vand.u32 2147483647, %v1243
    %v1276 = vand.u32 2147483647, %v1244
    %v1277 = vand.u32 2147483647, %v1245
    %v1278 = vand.u32 2147483647, %v1246
    %v1279 = vand.u32 2147483647, %v1247
    %v1280 = vand.u32 2147483647, %v1248
    %v1281 = vand.u32 2147483647, %v1249
    %v1282 = vand.u32 2147483647, %v1250
    %v1283 = vand.u32 2147483647, %v1251
    %v1284 = vsub.f32 0.0, %v1268
    %v1285 = vsub.f32 0.0, %v1269
    %v1286 = vsub.f32 0.0, %v1270
    %v1287 = vsub.f32 0.0, %v1271
    %v1288 = vsub.f32 0.0, %v1272
    %v1289 = vsub.f32 0.0, %v1273
    %v1290 = vsub.f32 0.0, %v1274
    %v1291 = vsub.f32 0.0, %v1275
    %v1292 = vsub.f32 0.0, %v1276
    %v1293 = vsub.f32 0.0, %v1277
    %v1294 = vsub.f32 0.0, %v1278
    %v1295 = vsub.f32 0.0, %v1279
    %v1296 = vsub.f32 0.0, %v1280
    %v1297 = vsub.f32 0.0, %v1281
    %v1298 = vsub.f32 0.0, %v1282
    %v1299 = vsub.f32 0.0, %v1283
    %v1300 = vmul.f32 %v1284, 1.442695
    %v1301 = vpow.pop %v1300
    %v1302 = vmul.f32 %v1285, 1.442695
    %v1303 = vpow.pop %v1302
    %v1304 = vmul.f32 %v1286, 1.442695
    %v1305 = vpow.pop %v1304
    %v1306 = vmul.f32 %v1287, 1.442695
    %v1307 = vpow.pop %v1306
    %v1308 = vmul.f32 %v1288, 1.442695
    %v1309 = vpow.pop %v1308
    %v1310 = vmul.f32 %v1289, 1.442695
    %v1311 = vpow.pop %v1310
    %v1312 = vmul.f32 %v1290, 1.442695
    %v1313 = vpow.pop %v1312
    %v1314 = vmul.f32 %v1291, 1.442695
    %v1315 = vpow.pop %v1314
    %v1316 = vmul.f32 %v1292, 1.442695
    %v1317 = vpow.pop %v1316
    %v1318 = vmul.f32 %v1293, 1.442695
    %v1319 = vpow.pop %v1318
    %v1320 = vmul.f32 %v1294, 1.442695
    %v1321 = vpow.pop %v1320
    %v1322 = vmul.f32 %v1295, 1.442695
    %v1323 = vpow.pop %v1322
    %v1324 = vmul.f32 %v1296, 1.442695
    %v1325 = vpow.pop %v1324
    %v1326 = vmul.f32 %v1297, 1.442695
    %v1327 = vpow.pop %v1326
    %v1328 = vmul.f32 %v1298, 1.442695
    %v1329 = vpow.pop %v1328
    %v1330 = vmul.f32 %v1299, 1.442695
    %v1331 = vpow.pop %v1330
    %v1332 = vadd.f32 %v1301, 1.0
    %v1333 = vadd.f32 %v1303, 1.0
    %v1334 = vadd.f32 %v1305, 1.0
    %v1335 = vadd.f32 %v1307, 1.0
    %v1336 = vadd.f32 %v1309, 1.0
    %v1337 = vadd.f32 %v1311, 1.0
    %v1338 = vadd.f32 %v1313, 1.0
    %v1339 = vadd.f32 %v1315, 1.0
    %v1340 = vadd.f32 %v1317, 1.0
    %v1341 = vadd.f32 %v1319, 1.0
    %v1342 = vadd.f32 %v1321, 1.0
    %v1343 = vadd.f32 %v1323, 1.0
    %v1344 = vadd.f32 %v1325, 1.0
    %v1345 = vadd.f32 %v1327, 1.0
    %v1346 = vadd.f32 %v1329, 1.0
    %v1347 = vadd.f32 %v1331, 1.0
    %v1348 = vlog2.pop %v1332
    %v1349 = vmul.f32 %v1348, 0.6931472
    %v1350 = vlog2.pop %v1333
    %v1351 = vmul.f32 %v1350, 0.6931472
    %v1352 = vlog2.pop %v1334
    %v1353 = vmul.f32 %v1352, 0.6931472
    %v1354 = vlog2.pop %v1335
    %v1355 = vmul.f32 %v1354, 0.6931472
    %v1356 = vlog2.pop %v1336
    %v1357 = vmul.f32 %v1356, 0.6931472
    %v1358 = vlog2.pop %v1337
    %v1359 = vmul.f32 %v1358, 0.6931472
    %v1360 = vlog2.pop %v1338
    %v1361 = vmul.f32 %v1360, 0.6931472
    %v1362 = vlog2.pop %v1339
    %v1363 = vmul.f32 %v1362, 0.6931472
    %v1364 = vlog2.pop %v1340
    %v1365 = vmul.f32 %v1364, 0.6931472
    %v1366 = vlog2.pop %v1341
    %v1367 = vmul.f32 %v1366, 0.6931472
    %v1368 = vlog2.pop %v1342
    %v1369 = vmul.f32 %v1368, 0.6931472
    %v1370 = vlog2.pop %v1343
    %v1371 = vmul.f32 %v1370, 0.6931472
    %v1372 = vlog2.pop %v1344
    %v1373 = vmul.f32 %v1372, 0.6931472
    %v1374 = vlog2.pop %v1345
    %v1375 = vmul.f32 %v1374, 0.6931472
    %v1376 = vlog2.pop %v1346
    %v1377 = vmul.f32 %v1376, 0.6931472
    %v1378 = vlog2.pop %v1347
    %v1379 = vmul.f32 %v1378, 0.6931472
    %v1380 = vsub.f32 %v1252, %v1349
    %v1381 = vsub.f32 %v1253, %v1351
    %v1382 = vsub.f32 %v1254, %v1353
    %v1383 = vsub.f32 %v1255, %v1355
    %v1384 = vsub.f32 %v1256, %v1357
    %v1385 = vsub.f32 %v1257, %v1359
    %v1386 = vsub.f32 %v1258, %v1361
    %v1387 = vsub.f32 %v1259, %v1363
    %v1388 = vsub.f32 %v1260, %v1365
    %v1389 = vsub.f32 %v1261, %v1367
    %v1390 = vsub.f32 %v1262, %v1369
    %v1391 = vsub.f32 %v1263, %v1371
    %v1392 = vsub.f32 %v1264, %v1373
    %v1393 = vsub.f32 %v1265, %v1375
    %v1394 = vsub.f32 %v1266, %v1377
    %v1395 = vsub.f32 %v1267, %v1379
    %1396 = vadd.xlane.f32.xlu0 %v1380
    %v1397 = vpop.xlane.xlu0 %1396
    %1398 = vadd.xlane.f32.xlu0 %v1381
    %v1399 = vpop.xlane.xlu0 %1398
    %1400 = vadd.xlane.f32.xlu0 %v1382
    %v1401 = vpop.xlane.xlu0 %1400
    %1402 = vadd.xlane.f32.xlu0 %v1383
    %v1403 = vpop.xlane.xlu0 %1402
    %1404 = vadd.xlane.f32.xlu0 %v1384
    %v1405 = vpop.xlane.xlu0 %1404
    %1406 = vadd.xlane.f32.xlu0 %v1385
    %v1407 = vpop.xlane.xlu0 %1406
    %1408 = vadd.xlane.f32.xlu0 %v1386
    %v1409 = vpop.xlane.xlu0 %1408
    %1410 = vadd.xlane.f32.xlu0 %v1387
    %v1411 = vpop.xlane.xlu0 %1410
    %1412 = vadd.xlane.f32.xlu0 %v1388
    %v1413 = vpop.xlane.xlu0 %1412
    %1414 = vadd.xlane.f32.xlu0 %v1389
    %v1415 = vpop.xlane.xlu0 %1414
    %1416 = vadd.xlane.f32.xlu0 %v1390
    %v1417 = vpop.xlane.xlu0 %1416
    %1418 = vadd.xlane.f32.xlu0 %v1391
    %v1419 = vpop.xlane.xlu0 %1418
    %1420 = vadd.xlane.f32.xlu0 %v1392
    %v1421 = vpop.xlane.xlu0 %1420
    %1422 = vadd.xlane.f32.xlu0 %v1393
    %v1423 = vpop.xlane.xlu0 %1422
    %1424 = vadd.xlane.f32.xlu0 %v1394
    %v1425 = vpop.xlane.xlu0 %1424
    %1426 = vadd.xlane.f32.xlu0 %v1395
    %v1427 = vpop.xlane.xlu0 %1426
    %v1428 = vmul.f32 %v1397, 1.442695
    %v1429 = vpow.pop %v1428
    %v1430 = vmul.f32 %v1399, 1.442695
    %v1431 = vpow.pop %v1430
    %v1432 = vmul.f32 %v1401, 1.442695
    %v1433 = vpow.pop %v1432
    %v1434 = vmul.f32 %v1403, 1.442695
    %v1435 = vpow.pop %v1434
    %v1436 = vmul.f32 %v1405, 1.442695
    %v1437 = vpow.pop %v1436
    %v1438 = vmul.f32 %v1407, 1.442695
    %v1439 = vpow.pop %v1438
    %v1440 = vmul.f32 %v1409, 1.442695
    %v1441 = vpow.pop %v1440
    %v1442 = vmul.f32 %v1411, 1.442695
    %v1443 = vpow.pop %v1442
    %v1444 = vmul.f32 %v1413, 1.442695
    %v1445 = vpow.pop %v1444
    %v1446 = vmul.f32 %v1415, 1.442695
    %v1447 = vpow.pop %v1446
    %v1448 = vmul.f32 %v1417, 1.442695
    %v1449 = vpow.pop %v1448
    %v1450 = vmul.f32 %v1419, 1.442695
    %v1451 = vpow.pop %v1450
    %v1452 = vmul.f32 %v1421, 1.442695
    %v1453 = vpow.pop %v1452
    %v1454 = vmul.f32 %v1423, 1.442695
    %v1455 = vpow.pop %v1454
    %v1456 = vmul.f32 %v1425, 1.442695
    %v1457 = vpow.pop %v1456
    %v1458 = vmul.f32 %v1427, 1.442695
    %v1459 = vpow.pop %v1458
    %v1460 = vadd.f32 %v1186, %v1429
    %v1461 = vadd.f32 %v1187, %v1431
    %v1462 = vadd.f32 %v1188, %v1433
    %v1463 = vadd.f32 %v1189, %v1435
    %v1464 = vadd.f32 %v1190, %v1437
    %v1465 = vadd.f32 %v1191, %v1439
    %v1466 = vadd.f32 %v1192, %v1441
    %v1467 = vadd.f32 %v1193, %v1443
    %v1468 = vadd.f32 %v1194, %v1445
    %v1469 = vadd.f32 %v1195, %v1447
    %v1470 = vadd.f32 %v1196, %v1449
    %v1471 = vadd.f32 %v1197, %v1451
    %v1472 = vadd.f32 %v1198, %v1453
    %v1473 = vadd.f32 %v1199, %v1455
    %v1474 = vadd.f32 %v1200, %v1457
    %v1475 = vadd.f32 %v1201, %v1459
    %s1476 = sld [smem:[#allocation2]]
    %s1477 = sld [smem:[#allocation7]]
    %v1478 = vstv %s1477
    %v1479 = vsub.f32 %v1460, %v1478
    %v1480 = vsub.f32 %v1461, %v1478
    %v1481 = vsub.f32 %v1462, %v1478
    %v1482 = vsub.f32 %v1463, %v1478
    %v1483 = vsub.f32 %v1464, %v1478
    %v1484 = vsub.f32 %v1465, %v1478
    %v1485 = vsub.f32 %v1466, %v1478
    %v1486 = vsub.f32 %v1467, %v1478
    %v1487 = vsub.f32 %v1468, %v1478
    %v1488 = vsub.f32 %v1469, %v1478
    %v1489 = vsub.f32 %v1470, %v1478
    %v1490 = vsub.f32 %v1471, %v1478
    %v1491 = vsub.f32 %v1472, %v1478
    %v1492 = vsub.f32 %v1473, %v1478
    %v1493 = vsub.f32 %v1474, %v1478
    %v1494 = vsub.f32 %v1475, %v1478
    %v1495 = vstv %s1476
    %v1496 = vmul.f32 %v1495, %v1479
    %v1497 = vmul.f32 %v1495, %v1480
    %v1498 = vmul.f32 %v1495, %v1481
    %v1499 = vmul.f32 %v1495, %v1482
    %v1500 = vmul.f32 %v1495, %v1483
    %v1501 = vmul.f32 %v1495, %v1484
    %v1502 = vmul.f32 %v1495, %v1485
    %v1503 = vmul.f32 %v1495, %v1486
    %v1504 = vmul.f32 %v1495, %v1487
    %v1505 = vmul.f32 %v1495, %v1488
    %v1506 = vmul.f32 %v1495, %v1489
    %v1507 = vmul.f32 %v1495, %v1490
    %v1508 = vmul.f32 %v1495, %v1491
    %v1509 = vmul.f32 %v1495, %v1492
    %v1510 = vmul.f32 %v1495, %v1493
    %v1511 = vmul.f32 %v1495, %v1494
    %s1512 = scalar_lea.vmem [#allocation8], 160
    %v1513 = vld [vmem:[%s1512] sm:$0xf]
    %v1514 = vld [vmem:[%s1512 + $0x4] sm:$0xf]
    %v1515 = vld [vmem:[%s1512 + $0x8] sm:$0xf]
    %v1516 = vld [vmem:[%s1512 + $0xc] sm:$0xf]
    %v1517 = vunpack.c.l.bf16 %v1513
    %v1518 = vunpack.c.l.bf16 %v1514
    %v1519 = vunpack.c.l.bf16 %v1515
    %v1520 = vunpack.c.l.bf16 %v1516
    %s1521 = scalar_lea.vmem [#allocation8], 240
    %v1522 = vld [vmem:[%s1521] sm:$0xf]
    %v1523 = vld [vmem:[%s1521 + $0x4] sm:$0xf]
    %v1524 = vld [vmem:[%s1521 + $0x8] sm:$0xf]
    %v1525 = vld [vmem:[%s1521 + $0xc] sm:$0xf]
    %v1526 = vunpack.c.l.bf16 %v1522
    %v1527 = vunpack.c.l.bf16 %v1523
    %v1528 = vunpack.c.l.bf16 %v1524
    %v1529 = vunpack.c.l.bf16 %v1525
    %v1530 = vmul.f32 %v90, %v1517
    %v1531 = vmul.f32 %v90, %v1518
    %v1532 = vmul.f32 %v90, %v1519
    %v1533 = vmul.f32 %v90, %v1520
    %v1534 = vmul.f32 %v94, %v1517
    %v1535 = vmul.f32 %v94, %v1518
    %v1536 = vmul.f32 %v94, %v1519
    %v1537 = vmul.f32 %v94, %v1520
    %v1538 = vmul.f32 %v98, %v1517
    %v1539 = vmul.f32 %v98, %v1518
    %v1540 = vmul.f32 %v98, %v1519
    %v1541 = vmul.f32 %v98, %v1520
    %v1542 = vmul.f32 %v102, %v1517
    %v1543 = vmul.f32 %v102, %v1518
    %v1544 = vmul.f32 %v102, %v1519
    %v1545 = vmul.f32 %v102, %v1520
    %v1546 = vsub.f32 %v1530, %v1526
    %v1547 = vsub.f32 %v1531, %v1527
    %v1548 = vsub.f32 %v1532, %v1528
    %v1549 = vsub.f32 %v1533, %v1529
    %v1550 = vsub.f32 %v1534, %v1526
    %v1551 = vsub.f32 %v1535, %v1527
    %v1552 = vsub.f32 %v1536, %v1528
    %v1553 = vsub.f32 %v1537, %v1529
    %v1554 = vsub.f32 %v1538, %v1526
    %v1555 = vsub.f32 %v1539, %v1527
    %v1556 = vsub.f32 %v1540, %v1528
    %v1557 = vsub.f32 %v1541, %v1529
    %v1558 = vsub.f32 %v1542, %v1526
    %v1559 = vsub.f32 %v1543, %v1527
    %v1560 = vsub.f32 %v1544, %v1528
    %v1561 = vsub.f32 %v1545, %v1529
    %v1562 = vmin.f32 %v1546, 0.0
    %v1563 = vmin.f32 %v1547, 0.0
    %v1564 = vmin.f32 %v1548, 0.0
    %v1565 = vmin.f32 %v1549, 0.0
    %v1566 = vmin.f32 %v1550, 0.0
    %v1567 = vmin.f32 %v1551, 0.0
    %v1568 = vmin.f32 %v1552, 0.0
    %v1569 = vmin.f32 %v1553, 0.0
    %v1570 = vmin.f32 %v1554, 0.0
    %v1571 = vmin.f32 %v1555, 0.0
    %v1572 = vmin.f32 %v1556, 0.0
    %v1573 = vmin.f32 %v1557, 0.0
    %v1574 = vmin.f32 %v1558, 0.0
    %v1575 = vmin.f32 %v1559, 0.0
    %v1576 = vmin.f32 %v1560, 0.0
    %v1577 = vmin.f32 %v1561, 0.0
    %v1578 = vand.u32 2147483647, %v1546
    %v1579 = vand.u32 2147483647, %v1547
    %v1580 = vand.u32 2147483647, %v1548
    %v1581 = vand.u32 2147483647, %v1549
    %v1582 = vand.u32 2147483647, %v1550
    %v1583 = vand.u32 2147483647, %v1551
    %v1584 = vand.u32 2147483647, %v1552
    %v1585 = vand.u32 2147483647, %v1553
    %v1586 = vand.u32 2147483647, %v1554
    %v1587 = vand.u32 2147483647, %v1555
    %v1588 = vand.u32 2147483647, %v1556
    %v1589 = vand.u32 2147483647, %v1557
    %v1590 = vand.u32 2147483647, %v1558
    %v1591 = vand.u32 2147483647, %v1559
    %v1592 = vand.u32 2147483647, %v1560
    %v1593 = vand.u32 2147483647, %v1561
    %v1594 = vsub.f32 0.0, %v1578
    %v1595 = vsub.f32 0.0, %v1579
    %v1596 = vsub.f32 0.0, %v1580
    %v1597 = vsub.f32 0.0, %v1581
    %v1598 = vsub.f32 0.0, %v1582
    %v1599 = vsub.f32 0.0, %v1583
    %v1600 = vsub.f32 0.0, %v1584
    %v1601 = vsub.f32 0.0, %v1585
    %v1602 = vsub.f32 0.0, %v1586
    %v1603 = vsub.f32 0.0, %v1587
    %v1604 = vsub.f32 0.0, %v1588
    %v1605 = vsub.f32 0.0, %v1589
    %v1606 = vsub.f32 0.0, %v1590
    %v1607 = vsub.f32 0.0, %v1591
    %v1608 = vsub.f32 0.0, %v1592
    %v1609 = vsub.f32 0.0, %v1593
    %v1610 = vmul.f32 %v1594, 1.442695
    %v1611 = vpow.pop %v1610
    %v1612 = vmul.f32 %v1595, 1.442695
    %v1613 = vpow.pop %v1612
    %v1614 = vmul.f32 %v1596, 1.442695
    %v1615 = vpow.pop %v1614
    %v1616 = vmul.f32 %v1597, 1.442695
    %v1617 = vpow.pop %v1616
    %v1618 = vmul.f32 %v1598, 1.442695
    %v1619 = vpow.pop %v1618
    %v1620 = vmul.f32 %v1599, 1.442695
    %v1621 = vpow.pop %v1620
    %v1622 = vmul.f32 %v1600, 1.442695
    %v1623 = vpow.pop %v1622
    %v1624 = vmul.f32 %v1601, 1.442695
    %v1625 = vpow.pop %v1624
    %v1626 = vmul.f32 %v1602, 1.442695
    %v1627 = vpow.pop %v1626
    %v1628 = vmul.f32 %v1603, 1.442695
    %v1629 = vpow.pop %v1628
    %v1630 = vmul.f32 %v1604, 1.442695
    %v1631 = vpow.pop %v1630
    %v1632 = vmul.f32 %v1605, 1.442695
    %v1633 = vpow.pop %v1632
    %v1634 = vmul.f32 %v1606, 1.442695
    %v1635 = vpow.pop %v1634
    %v1636 = vmul.f32 %v1607, 1.442695
    %v1637 = vpow.pop %v1636
    %v1638 = vmul.f32 %v1608, 1.442695
    %v1639 = vpow.pop %v1638
    %v1640 = vmul.f32 %v1609, 1.442695
    %v1641 = vpow.pop %v1640
    %v1642 = vadd.f32 %v1611, 1.0
    %v1643 = vadd.f32 %v1613, 1.0
    %v1644 = vadd.f32 %v1615, 1.0
    %v1645 = vadd.f32 %v1617, 1.0
    %v1646 = vadd.f32 %v1619, 1.0
    %v1647 = vadd.f32 %v1621, 1.0
    %v1648 = vadd.f32 %v1623, 1.0
    %v1649 = vadd.f32 %v1625, 1.0
    %v1650 = vadd.f32 %v1627, 1.0
    %v1651 = vadd.f32 %v1629, 1.0
    %v1652 = vadd.f32 %v1631, 1.0
    %v1653 = vadd.f32 %v1633, 1.0
    %v1654 = vadd.f32 %v1635, 1.0
    %v1655 = vadd.f32 %v1637, 1.0
    %v1656 = vadd.f32 %v1639, 1.0
    %v1657 = vadd.f32 %v1641, 1.0
    %v1658 = vlog2.pop %v1642
    %v1659 = vmul.f32 %v1658, 0.6931472
    %v1660 = vlog2.pop %v1643
    %v1661 = vmul.f32 %v1660, 0.6931472
    %v1662 = vlog2.pop %v1644
    %v1663 = vmul.f32 %v1662, 0.6931472
    %v1664 = vlog2.pop %v1645
    %v1665 = vmul.f32 %v1664, 0.6931472
    %v1666 = vlog2.pop %v1646
    %v1667 = vmul.f32 %v1666, 0.6931472
    %v1668 = vlog2.pop %v1647
    %v1669 = vmul.f32 %v1668, 0.6931472
    %v1670 = vlog2.pop %v1648
    %v1671 = vmul.f32 %v1670, 0.6931472
    %v1672 = vlog2.pop %v1649
    %v1673 = vmul.f32 %v1672, 0.6931472
    %v1674 = vlog2.pop %v1650
    %v1675 = vmul.f32 %v1674, 0.6931472
    %v1676 = vlog2.pop %v1651
    %v1677 = vmul.f32 %v1676, 0.6931472
    %v1678 = vlog2.pop %v1652
    %v1679 = vmul.f32 %v1678, 0.6931472
    %v1680 = vlog2.pop %v1653
    %v1681 = vmul.f32 %v1680, 0.6931472
    %v1682 = vlog2.pop %v1654
    %v1683 = vmul.f32 %v1682, 0.6931472
    %v1684 = vlog2.pop %v1655
    %v1685 = vmul.f32 %v1684, 0.6931472
    %v1686 = vlog2.pop %v1656
    %v1687 = vmul.f32 %v1686, 0.6931472
    %v1688 = vlog2.pop %v1657
    %v1689 = vmul.f32 %v1688, 0.6931472
    %v1690 = vsub.f32 %v1562, %v1659
    %v1691 = vsub.f32 %v1563, %v1661
    %v1692 = vsub.f32 %v1564, %v1663
    %v1693 = vsub.f32 %v1565, %v1665
    %v1694 = vsub.f32 %v1566, %v1667
    %v1695 = vsub.f32 %v1567, %v1669
    %v1696 = vsub.f32 %v1568, %v1671
    %v1697 = vsub.f32 %v1569, %v1673
    %v1698 = vsub.f32 %v1570, %v1675
    %v1699 = vsub.f32 %v1571, %v1677
    %v1700 = vsub.f32 %v1572, %v1679
    %v1701 = vsub.f32 %v1573, %v1681
    %v1702 = vsub.f32 %v1574, %v1683
    %v1703 = vsub.f32 %v1575, %v1685
    %v1704 = vsub.f32 %v1576, %v1687
    %v1705 = vsub.f32 %v1577, %v1689
    %1706 = vadd.xlane.f32.xlu0 %v1690
    %v1707 = vpop.xlane.xlu0 %1706
    %1708 = vadd.xlane.f32.xlu0 %v1691
    %v1709 = vpop.xlane.xlu0 %1708
    %1710 = vadd.xlane.f32.xlu0 %v1692
    %v1711 = vpop.xlane.xlu0 %1710
    %1712 = vadd.xlane.f32.xlu0 %v1693
    %v1713 = vpop.xlane.xlu0 %1712
    %1714 = vadd.xlane.f32.xlu0 %v1694
    %v1715 = vpop.xlane.xlu0 %1714
    %1716 = vadd.xlane.f32.xlu0 %v1695
    %v1717 = vpop.xlane.xlu0 %1716
    %1718 = vadd.xlane.f32.xlu0 %v1696
    %v1719 = vpop.xlane.xlu0 %1718
    %1720 = vadd.xlane.f32.xlu0 %v1697
    %v1721 = vpop.xlane.xlu0 %1720
    %1722 = vadd.xlane.f32.xlu0 %v1698
    %v1723 = vpop.xlane.xlu0 %1722
    %1724 = vadd.xlane.f32.xlu0 %v1699
    %v1725 = vpop.xlane.xlu0 %1724
    %1726 = vadd.xlane.f32.xlu0 %v1700
    %v1727 = vpop.xlane.xlu0 %1726
    %1728 = vadd.xlane.f32.xlu0 %v1701
    %v1729 = vpop.xlane.xlu0 %1728
    %1730 = vadd.xlane.f32.xlu0 %v1702
    %v1731 = vpop.xlane.xlu0 %1730
    %1732 = vadd.xlane.f32.xlu0 %v1703
    %v1733 = vpop.xlane.xlu0 %1732
    %1734 = vadd.xlane.f32.xlu0 %v1704
    %v1735 = vpop.xlane.xlu0 %1734
    %1736 = vadd.xlane.f32.xlu0 %v1705
    %v1737 = vpop.xlane.xlu0 %1736
    %v1738 = vmul.f32 %v1707, 1.442695
    %v1739 = vpow.pop %v1738
    %v1740 = vmul.f32 %v1709, 1.442695
    %v1741 = vpow.pop %v1740
    %v1742 = vmul.f32 %v1711, 1.442695
    %v1743 = vpow.pop %v1742
    %v1744 = vmul.f32 %v1713, 1.442695
    %v1745 = vpow.pop %v1744
    %v1746 = vmul.f32 %v1715, 1.442695
    %v1747 = vpow.pop %v1746
    %v1748 = vmul.f32 %v1717, 1.442695
    %v1749 = vpow.pop %v1748
    %v1750 = vmul.f32 %v1719, 1.442695
    %v1751 = vpow.pop %v1750
    %v1752 = vmul.f32 %v1721, 1.442695
    %v1753 = vpow.pop %v1752
    %v1754 = vmul.f32 %v1723, 1.442695
    %v1755 = vpow.pop %v1754
    %v1756 = vmul.f32 %v1725, 1.442695
    %v1757 = vpow.pop %v1756
    %v1758 = vmul.f32 %v1727, 1.442695
    %v1759 = vpow.pop %v1758
    %v1760 = vmul.f32 %v1729, 1.442695
    %v1761 = vpow.pop %v1760
    %v1762 = vmul.f32 %v1731, 1.442695
    %v1763 = vpow.pop %v1762
    %v1764 = vmul.f32 %v1733, 1.442695
    %v1765 = vpow.pop %v1764
    %v1766 = vmul.f32 %v1735, 1.442695
    %v1767 = vpow.pop %v1766
    %v1768 = vmul.f32 %v1737, 1.442695
    %v1769 = vpow.pop %v1768
    %v1770 = vadd.f32 %v1739, 0.0
    %v1771 = vadd.f32 %v1741, 0.0
    %v1772 = vadd.f32 %v1743, 0.0
    %v1773 = vadd.f32 %v1745, 0.0
    %v1774 = vadd.f32 %v1747, 0.0
    %v1775 = vadd.f32 %v1749, 0.0
    %v1776 = vadd.f32 %v1751, 0.0
    %v1777 = vadd.f32 %v1753, 0.0
    %v1778 = vadd.f32 %v1755, 0.0
    %v1779 = vadd.f32 %v1757, 0.0
    %v1780 = vadd.f32 %v1759, 0.0
    %v1781 = vadd.f32 %v1761, 0.0
    %v1782 = vadd.f32 %v1763, 0.0
    %v1783 = vadd.f32 %v1765, 0.0
    %v1784 = vadd.f32 %v1767, 0.0
    %v1785 = vadd.f32 %v1769, 0.0
    %s1786 = scalar_lea.vmem [#allocation8], 176
    %v1787 = vld [vmem:[%s1786] sm:$0xf]
    %v1788 = vld [vmem:[%s1786 + $0x4] sm:$0xf]
    %v1789 = vld [vmem:[%s1786 + $0x8] sm:$0xf]
    %v1790 = vld [vmem:[%s1786 + $0xc] sm:$0xf]
    %v1791 = vunpack.c.l.bf16 %v1787
    %v1792 = vunpack.c.l.bf16 %v1788
    %v1793 = vunpack.c.l.bf16 %v1789
    %v1794 = vunpack.c.l.bf16 %v1790
    %s1795 = scalar_lea.vmem [#allocation8], 256
    %v1796 = vld [vmem:[%s1795] sm:$0xf]
    %v1797 = vld [vmem:[%s1795 + $0x4] sm:$0xf]
    %v1798 = vld [vmem:[%s1795 + $0x8] sm:$0xf]
    %v1799 = vld [vmem:[%s1795 + $0xc] sm:$0xf]
    %v1800 = vunpack.c.l.bf16 %v1796
    %v1801 = vunpack.c.l.bf16 %v1797
    %v1802 = vunpack.c.l.bf16 %v1798
    %v1803 = vunpack.c.l.bf16 %v1799
    %v1804 = vmul.f32 %v90, %v1791
    %v1805 = vmul.f32 %v90, %v1792
    %v1806 = vmul.f32 %v90, %v1793
    %v1807 = vmul.f32 %v90, %v1794
    %v1808 = vmul.f32 %v94, %v1791
    %v1809 = vmul.f32 %v94, %v1792
    %v1810 = vmul.f32 %v94, %v1793
    %v1811 = vmul.f32 %v94, %v1794
    %v1812 = vmul.f32 %v98, %v1791
    %v1813 = vmul.f32 %v98, %v1792
    %v1814 = vmul.f32 %v98, %v1793
    %v1815 = vmul.f32 %v98, %v1794
    %v1816 = vmul.f32 %v102, %v1791
    %v1817 = vmul.f32 %v102, %v1792
    %v1818 = vmul.f32 %v102, %v1793
    %v1819 = vmul.f32 %v102, %v1794
    %v1820 = vsub.f32 %v1804, %v1800
    %v1821 = vsub.f32 %v1805, %v1801
    %v1822 = vsub.f32 %v1806, %v1802
    %v1823 = vsub.f32 %v1807, %v1803
    %v1824 = vsub.f32 %v1808, %v1800
    %v1825 = vsub.f32 %v1809, %v1801
    %v1826 = vsub.f32 %v1810, %v1802
    %v1827 = vsub.f32 %v1811, %v1803
    %v1828 = vsub.f32 %v1812, %v1800
    %v1829 = vsub.f32 %v1813, %v1801
    %v1830 = vsub.f32 %v1814, %v1802
    %v1831 = vsub.f32 %v1815, %v1803
    %v1832 = vsub.f32 %v1816, %v1800
    %v1833 = vsub.f32 %v1817, %v1801
    %v1834 = vsub.f32 %v1818, %v1802
    %v1835 = vsub.f32 %v1819, %v1803
    %v1836 = vmin.f32 %v1820, 0.0
    %v1837 = vmin.f32 %v1821, 0.0
    %v1838 = vmin.f32 %v1822, 0.0
    %v1839 = vmin.f32 %v1823, 0.0
    %v1840 = vmin.f32 %v1824, 0.0
    %v1841 = vmin.f32 %v1825, 0.0
    %v1842 = vmin.f32 %v1826, 0.0
    %v1843 = vmin.f32 %v1827, 0.0
    %v1844 = vmin.f32 %v1828, 0.0
    %v1845 = vmin.f32 %v1829, 0.0
    %v1846 = vmin.f32 %v1830, 0.0
    %v1847 = vmin.f32 %v1831, 0.0
    %v1848 = vmin.f32 %v1832, 0.0
    %v1849 = vmin.f32 %v1833, 0.0
    %v1850 = vmin.f32 %v1834, 0.0
    %v1851 = vmin.f32 %v1835, 0.0
    %v1852 = vand.u32 2147483647, %v1820
    %v1853 = vand.u32 2147483647, %v1821
    %v1854 = vand.u32 2147483647, %v1822
    %v1855 = vand.u32 2147483647, %v1823
    %v1856 = vand.u32 2147483647, %v1824
    %v1857 = vand.u32 2147483647, %v1825
    %v1858 = vand.u32 2147483647, %v1826
    %v1859 = vand.u32 2147483647, %v1827
    %v1860 = vand.u32 2147483647, %v1828
    %v1861 = vand.u32 2147483647, %v1829
    %v1862 = vand.u32 2147483647, %v1830
    %v1863 = vand.u32 2147483647, %v1831
    %v1864 = vand.u32 2147483647, %v1832
    %v1865 = vand.u32 2147483647, %v1833
    %v1866 = vand.u32 2147483647, %v1834
    %v1867 = vand.u32 2147483647, %v1835
    %v1868 = vsub.f32 0.0, %v1852
    %v1869 = vsub.f32 0.0, %v1853
    %v1870 = vsub.f32 0.0, %v1854
    %v1871 = vsub.f32 0.0, %v1855
    %v1872 = vsub.f32 0.0, %v1856
    %v1873 = vsub.f32 0.0, %v1857
    %v1874 = vsub.f32 0.0, %v1858
    %v1875 = vsub.f32 0.0, %v1859
    %v1876 = vsub.f32 0.0, %v1860
    %v1877 = vsub.f32 0.0, %v1861
    %v1878 = vsub.f32 0.0, %v1862
    %v1879 = vsub.f32 0.0, %v1863
    %v1880 = vsub.f32 0.0, %v1864
    %v1881 = vsub.f32 0.0, %v1865
    %v1882 = vsub.f32 0.0, %v1866
    %v1883 = vsub.f32 0.0, %v1867
    %v1884 = vmul.f32 %v1868, 1.442695
    %v1885 = vpow.pop %v1884
    %v1886 = vmul.f32 %v1869, 1.442695
    %v1887 = vpow.pop %v1886
    %v1888 = vmul.f32 %v1870, 1.442695
    %v1889 = vpow.pop %v1888
    %v1890 = vmul.f32 %v1871, 1.442695
    %v1891 = vpow.pop %v1890
    %v1892 = vmul.f32 %v1872, 1.442695
    %v1893 = vpow.pop %v1892
    %v1894 = vmul.f32 %v1873, 1.442695
    %v1895 = vpow.pop %v1894
    %v1896 = vmul.f32 %v1874, 1.442695
    %v1897 = vpow.pop %v1896
    %v1898 = vmul.f32 %v1875, 1.442695
    %v1899 = vpow.pop %v1898
    %v1900 = vmul.f32 %v1876, 1.442695
    %v1901 = vpow.pop %v1900
    %v1902 = vmul.f32 %v1877, 1.442695
    %v1903 = vpow.pop %v1902
    %v1904 = vmul.f32 %v1878, 1.442695
    %v1905 = vpow.pop %v1904
    %v1906 = vmul.f32 %v1879, 1.442695
    %v1907 = vpow.pop %v1906
    %v1908 = vmul.f32 %v1880, 1.442695
    %v1909 = vpow.pop %v1908
    %v1910 = vmul.f32 %v1881, 1.442695
    %v1911 = vpow.pop %v1910
    %v1912 = vmul.f32 %v1882, 1.442695
    %v1913 = vpow.pop %v1912
    %v1914 = vmul.f32 %v1883, 1.442695
    %v1915 = vpow.pop %v1914
    %v1916 = vadd.f32 %v1885, 1.0
    %v1917 = vadd.f32 %v1887, 1.0
    %v1918 = vadd.f32 %v1889, 1.0
    %v1919 = vadd.f32 %v1891, 1.0
    %v1920 = vadd.f32 %v1893, 1.0
    %v1921 = vadd.f32 %v1895, 1.0
    %v1922 = vadd.f32 %v1897, 1.0
    %v1923 = vadd.f32 %v1899, 1.0
    %v1924 = vadd.f32 %v1901, 1.0
    %v1925 = vadd.f32 %v1903, 1.0
    %v1926 = vadd.f32 %v1905, 1.0
    %v1927 = vadd.f32 %v1907, 1.0
    %v1928 = vadd.f32 %v1909, 1.0
    %v1929 = vadd.f32 %v1911, 1.0
    %v1930 = vadd.f32 %v1913, 1.0
    %v1931 = vadd.f32 %v1915, 1.0
    %v1932 = vlog2.pop %v1916
    %v1933 = vmul.f32 %v1932, 0.6931472
    %v1934 = vlog2.pop %v1917
    %v1935 = vmul.f32 %v1934, 0.6931472
    %v1936 = vlog2.pop %v1918
    %v1937 = vmul.f32 %v1936, 0.6931472
    %v1938 = vlog2.pop %v1919
    %v1939 = vmul.f32 %v1938, 0.6931472
    %v1940 = vlog2.pop %v1920
    %v1941 = vmul.f32 %v1940, 0.6931472
    %v1942 = vlog2.pop %v1921
    %v1943 = vmul.f32 %v1942, 0.6931472
    %v1944 = vlog2.pop %v1922
    %v1945 = vmul.f32 %v1944, 0.6931472
    %v1946 = vlog2.pop %v1923
    %v1947 = vmul.f32 %v1946, 0.6931472
    %v1948 = vlog2.pop %v1924
    %v1949 = vmul.f32 %v1948, 0.6931472
    %v1950 = vlog2.pop %v1925
    %v1951 = vmul.f32 %v1950, 0.6931472
    %v1952 = vlog2.pop %v1926
    %v1953 = vmul.f32 %v1952, 0.6931472
    %v1954 = vlog2.pop %v1927
    %v1955 = vmul.f32 %v1954, 0.6931472
    %v1956 = vlog2.pop %v1928
    %v1957 = vmul.f32 %v1956, 0.6931472
    %v1958 = vlog2.pop %v1929
    %v1959 = vmul.f32 %v1958, 0.6931472
    %v1960 = vlog2.pop %v1930
    %v1961 = vmul.f32 %v1960, 0.6931472
    %v1962 = vlog2.pop %v1931
    %v1963 = vmul.f32 %v1962, 0.6931472
    %v1964 = vsub.f32 %v1836, %v1933
    %v1965 = vsub.f32 %v1837, %v1935
    %v1966 = vsub.f32 %v1838, %v1937
    %v1967 = vsub.f32 %v1839, %v1939
    %v1968 = vsub.f32 %v1840, %v1941
    %v1969 = vsub.f32 %v1841, %v1943
    %v1970 = vsub.f32 %v1842, %v1945
    %v1971 = vsub.f32 %v1843, %v1947
    %v1972 = vsub.f32 %v1844, %v1949
    %v1973 = vsub.f32 %v1845, %v1951
    %v1974 = vsub.f32 %v1846, %v1953
    %v1975 = vsub.f32 %v1847, %v1955
    %v1976 = vsub.f32 %v1848, %v1957
    %v1977 = vsub.f32 %v1849, %v1959
    %v1978 = vsub.f32 %v1850, %v1961
    %v1979 = vsub.f32 %v1851, %v1963
    %1980 = vadd.xlane.f32.xlu0 %v1964
    %v1981 = vpop.xlane.xlu0 %1980
    %1982 = vadd.xlane.f32.xlu0 %v1965
    %v1983 = vpop.xlane.xlu0 %1982
    %1984 = vadd.xlane.f32.xlu0 %v1966
    %v1985 = vpop.xlane.xlu0 %1984
    %1986 = vadd.xlane.f32.xlu0 %v1967
    %v1987 = vpop.xlane.xlu0 %1986
    %1988 = vadd.xlane.f32.xlu0 %v1968
    %v1989 = vpop.xlane.xlu0 %1988
    %1990 = vadd.xlane.f32.xlu0 %v1969
    %v1991 = vpop.xlane.xlu0 %1990
    %1992 = vadd.xlane.f32.xlu0 %v1970
    %v1993 = vpop.xlane.xlu0 %1992
    %1994 = vadd.xlane.f32.xlu0 %v1971
    %v1995 = vpop.xlane.xlu0 %1994
    %1996 = vadd.xlane.f32.xlu0 %v1972
    %v1997 = vpop.xlane.xlu0 %1996
    %1998 = vadd.xlane.f32.xlu0 %v1973
    %v1999 = vpop.xlane.xlu0 %1998
    %2000 = vadd.xlane.f32.xlu0 %v1974
    %v2001 = vpop.xlane.xlu0 %2000
    %2002 = vadd.xlane.f32.xlu0 %v1975
    %v2003 = vpop.xlane.xlu0 %2002
    %2004 = vadd.xlane.f32.xlu0 %v1976
    %v2005 = vpop.xlane.xlu0 %2004
    %2006 = vadd.xlane.f32.xlu0 %v1977
    %v2007 = vpop.xlane.xlu0 %2006
    %2008 = vadd.xlane.f32.xlu0 %v1978
    %v2009 = vpop.xlane.xlu0 %2008
    %2010 = vadd.xlane.f32.xlu0 %v1979
    %v2011 = vpop.xlane.xlu0 %2010
    %v2012 = vmul.f32 %v1981, 1.442695
    %v2013 = vpow.pop %v2012
    %v2014 = vmul.f32 %v1983, 1.442695
    %v2015 = vpow.pop %v2014
    %v2016 = vmul.f32 %v1985, 1.442695
    %v2017 = vpow.pop %v2016
    %v2018 = vmul.f32 %v1987, 1.442695
    %v2019 = vpow.pop %v2018
    %v2020 = vmul.f32 %v1989, 1.442695
    %v2021 = vpow.pop %v2020
    %v2022 = vmul.f32 %v1991, 1.442695
    %v2023 = vpow.pop %v2022
    %v2024 = vmul.f32 %v1993, 1.442695
    %v2025 = vpow.pop %v2024
    %v2026 = vmul.f32 %v1995, 1.442695
    %v2027 = vpow.pop %v2026
    %v2028 = vmul.f32 %v1997, 1.442695
    %v2029 = vpow.pop %v2028
    %v2030 = vmul.f32 %v1999, 1.442695
    %v2031 = vpow.pop %v2030
    %v2032 = vmul.f32 %v2001, 1.442695
    %v2033 = vpow.pop %v2032
    %v2034 = vmul.f32 %v2003, 1.442695
    %v2035 = vpow.pop %v2034
    %v2036 = vmul.f32 %v2005, 1.442695
    %v2037 = vpow.pop %v2036
    %v2038 = vmul.f32 %v2007, 1.442695
    %v2039 = vpow.pop %v2038
    %v2040 = vmul.f32 %v2009, 1.442695
    %v2041 = vpow.pop %v2040
    %v2042 = vmul.f32 %v2011, 1.442695
    %v2043 = vpow.pop %v2042
    %v2044 = vadd.f32 %v1770, %v2013
    %v2045 = vadd.f32 %v1771, %v2015
    %v2046 = vadd.f32 %v1772, %v2017
    %v2047 = vadd.f32 %v1773, %v2019
    %v2048 = vadd.f32 %v1774, %v2021
    %v2049 = vadd.f32 %v1775, %v2023
    %v2050 = vadd.f32 %v1776, %v2025
    %v2051 = vadd.f32 %v1777, %v2027
    %v2052 = vadd.f32 %v1778, %v2029
    %v2053 = vadd.f32 %v1779, %v2031
    %v2054 = vadd.f32 %v1780, %v2033
    %v2055 = vadd.f32 %v1781, %v2035
    %v2056 = vadd.f32 %v1782, %v2037
    %v2057 = vadd.f32 %v1783, %v2039
    %v2058 = vadd.f32 %v1784, %v2041
    %v2059 = vadd.f32 %v1785, %v2043
    %s2060 = scalar_lea.vmem [#allocation8], 192
    %v2061 = vld [vmem:[%s2060] sm:$0xf]
    %v2062 = vld [vmem:[%s2060 + $0x4] sm:$0xf]
    %v2063 = vld [vmem:[%s2060 + $0x8] sm:$0xf]
    %v2064 = vld [vmem:[%s2060 + $0xc] sm:$0xf]
    %v2065 = vunpack.c.l.bf16 %v2061
    %v2066 = vunpack.c.l.bf16 %v2062
    %v2067 = vunpack.c.l.bf16 %v2063
    %v2068 = vunpack.c.l.bf16 %v2064
    %s2069 = scalar_lea.vmem [#allocation8], 272
    %v2070 = vld [vmem:[%s2069] sm:$0xf]
    %v2071 = vld [vmem:[%s2069 + $0x4] sm:$0xf]
    %v2072 = vld [vmem:[%s2069 + $0x8] sm:$0xf]
    %v2073 = vld [vmem:[%s2069 + $0xc] sm:$0xf]
    %v2074 = vunpack.c.l.bf16 %v2070
    %v2075 = vunpack.c.l.bf16 %v2071
    %v2076 = vunpack.c.l.bf16 %v2072
    %v2077 = vunpack.c.l.bf16 %v2073
    %v2078 = vmul.f32 %v90, %v2065
    %v2079 = vmul.f32 %v90, %v2066
    %v2080 = vmul.f32 %v90, %v2067
    %v2081 = vmul.f32 %v90, %v2068
    %v2082 = vmul.f32 %v94, %v2065
    %v2083 = vmul.f32 %v94, %v2066
    %v2084 = vmul.f32 %v94, %v2067
    %v2085 = vmul.f32 %v94, %v2068
    %v2086 = vmul.f32 %v98, %v2065
    %v2087 = vmul.f32 %v98, %v2066
    %v2088 = vmul.f32 %v98, %v2067
    %v2089 = vmul.f32 %v98, %v2068
    %v2090 = vmul.f32 %v102, %v2065
    %v2091 = vmul.f32 %v102, %v2066
    %v2092 = vmul.f32 %v102, %v2067
    %v2093 = vmul.f32 %v102, %v2068
    %v2094 = vsub.f32 %v2078, %v2074
    %v2095 = vsub.f32 %v2079, %v2075
    %v2096 = vsub.f32 %v2080, %v2076
    %v2097 = vsub.f32 %v2081, %v2077
    %v2098 = vsub.f32 %v2082, %v2074
    %v2099 = vsub.f32 %v2083, %v2075
    %v2100 = vsub.f32 %v2084, %v2076
    %v2101 = vsub.f32 %v2085, %v2077
    %v2102 = vsub.f32 %v2086, %v2074
    %v2103 = vsub.f32 %v2087, %v2075
    %v2104 = vsub.f32 %v2088, %v2076
    %v2105 = vsub.f32 %v2089, %v2077
    %v2106 = vsub.f32 %v2090, %v2074
    %v2107 = vsub.f32 %v2091, %v2075
    %v2108 = vsub.f32 %v2092, %v2076
    %v2109 = vsub.f32 %v2093, %v2077
    %v2110 = vmin.f32 %v2094, 0.0
    %v2111 = vmin.f32 %v2095, 0.0
    %v2112 = vmin.f32 %v2096, 0.0
    %v2113 = vmin.f32 %v2097, 0.0
    %v2114 = vmin.f32 %v2098, 0.0
    %v2115 = vmin.f32 %v2099, 0.0
    %v2116 = vmin.f32 %v2100, 0.0
    %v2117 = vmin.f32 %v2101, 0.0
    %v2118 = vmin.f32 %v2102, 0.0
    %v2119 = vmin.f32 %v2103, 0.0
    %v2120 = vmin.f32 %v2104, 0.0
    %v2121 = vmin.f32 %v2105, 0.0
    %v2122 = vmin.f32 %v2106, 0.0
    %v2123 = vmin.f32 %v2107, 0.0
    %v2124 = vmin.f32 %v2108, 0.0
    %v2125 = vmin.f32 %v2109, 0.0
    %v2126 = vand.u32 2147483647, %v2094
    %v2127 = vand.u32 2147483647, %v2095
    %v2128 = vand.u32 2147483647, %v2096
    %v2129 = vand.u32 2147483647, %v2097
    %v2130 = vand.u32 2147483647, %v2098
    %v2131 = vand.u32 2147483647, %v2099
    %v2132 = vand.u32 2147483647, %v2100
    %v2133 = vand.u32 2147483647, %v2101
    %v2134 = vand.u32 2147483647, %v2102
    %v2135 = vand.u32 2147483647, %v2103
    %v2136 = vand.u32 2147483647, %v2104
    %v2137 = vand.u32 2147483647, %v2105
    %v2138 = vand.u32 2147483647, %v2106
    %v2139 = vand.u32 2147483647, %v2107
    %v2140 = vand.u32 2147483647, %v2108
    %v2141 = vand.u32 2147483647, %v2109
    %v2142 = vsub.f32 0.0, %v2126
    %v2143 = vsub.f32 0.0, %v2127
    %v2144 = vsub.f32 0.0, %v2128
    %v2145 = vsub.f32 0.0, %v2129
    %v2146 = vsub.f32 0.0, %v2130
    %v2147 = vsub.f32 0.0, %v2131
    %v2148 = vsub.f32 0.0, %v2132
    %v2149 = vsub.f32 0.0, %v2133
    %v2150 = vsub.f32 0.0, %v2134
    %v2151 = vsub.f32 0.0, %v2135
    %v2152 = vsub.f32 0.0, %v2136
    %v2153 = vsub.f32 0.0, %v2137
    %v2154 = vsub.f32 0.0, %v2138
    %v2155 = vsub.f32 0.0, %v2139
    %v2156 = vsub.f32 0.0, %v2140
    %v2157 = vsub.f32 0.0, %v2141
    %v2158 = vmul.f32 %v2142, 1.442695
    %v2159 = vpow.pop %v2158
    %v2160 = vmul.f32 %v2143, 1.442695
    %v2161 = vpow.pop %v2160
    %v2162 = vmul.f32 %v2144, 1.442695
    %v2163 = vpow.pop %v2162
    %v2164 = vmul.f32 %v2145, 1.442695
    %v2165 = vpow.pop %v2164
    %v2166 = vmul.f32 %v2146, 1.442695
    %v2167 = vpow.pop %v2166
    %v2168 = vmul.f32 %v2147, 1.442695
    %v2169 = vpow.pop %v2168
    %v2170 = vmul.f32 %v2148, 1.442695
    %v2171 = vpow.pop %v2170
    %v2172 = vmul.f32 %v2149, 1.442695
    %v2173 = vpow.pop %v2172
    %v2174 = vmul.f32 %v2150, 1.442695
    %v2175 = vpow.pop %v2174
    %v2176 = vmul.f32 %v2151, 1.442695
    %v2177 = vpow.pop %v2176
    %v2178 = vmul.f32 %v2152, 1.442695
    %v2179 = vpow.pop %v2178
    %v2180 = vmul.f32 %v2153, 1.442695
    %v2181 = vpow.pop %v2180
    %v2182 = vmul.f32 %v2154, 1.442695
    %v2183 = vpow.pop %v2182
    %v2184 = vmul.f32 %v2155, 1.442695
    %v2185 = vpow.pop %v2184
    %v2186 = vmul.f32 %v2156, 1.442695
    %v2187 = vpow.pop %v2186
    %v2188 = vmul.f32 %v2157, 1.442695
    %v2189 = vpow.pop %v2188
    %v2190 = vadd.f32 %v2159, 1.0
    %v2191 = vadd.f32 %v2161, 1.0
    %v2192 = vadd.f32 %v2163, 1.0
    %v2193 = vadd.f32 %v2165, 1.0
    %v2194 = vadd.f32 %v2167, 1.0
    %v2195 = vadd.f32 %v2169, 1.0
    %v2196 = vadd.f32 %v2171, 1.0
    %v2197 = vadd.f32 %v2173, 1.0
    %v2198 = vadd.f32 %v2175, 1.0
    %v2199 = vadd.f32 %v2177, 1.0
    %v2200 = vadd.f32 %v2179, 1.0
    %v2201 = vadd.f32 %v2181, 1.0
    %v2202 = vadd.f32 %v2183, 1.0
    %v2203 = vadd.f32 %v2185, 1.0
    %v2204 = vadd.f32 %v2187, 1.0
    %v2205 = vadd.f32 %v2189, 1.0
    %v2206 = vlog2.pop %v2190
    %v2207 = vmul.f32 %v2206, 0.6931472
    %v2208 = vlog2.pop %v2191
    %v2209 = vmul.f32 %v2208, 0.6931472
    %v2210 = vlog2.pop %v2192
    %v2211 = vmul.f32 %v2210, 0.6931472
    %v2212 = vlog2.pop %v2193
    %v2213 = vmul.f32 %v2212, 0.6931472
    %v2214 = vlog2.pop %v2194
    %v2215 = vmul.f32 %v2214, 0.6931472
    %v2216 = vlog2.pop %v2195
    %v2217 = vmul.f32 %v2216, 0.6931472
    %v2218 = vlog2.pop %v2196
    %v2219 = vmul.f32 %v2218, 0.6931472
    %v2220 = vlog2.pop %v2197
    %v2221 = vmul.f32 %v2220, 0.6931472
    %v2222 = vlog2.pop %v2198
    %v2223 = vmul.f32 %v2222, 0.6931472
    %v2224 = vlog2.pop %v2199
    %v2225 = vmul.f32 %v2224, 0.6931472
    %v2226 = vlog2.pop %v2200
    %v2227 = vmul.f32 %v2226, 0.6931472
    %v2228 = vlog2.pop %v2201
    %v2229 = vmul.f32 %v2228, 0.6931472
    %v2230 = vlog2.pop %v2202
    %v2231 = vmul.f32 %v2230, 0.6931472
    %v2232 = vlog2.pop %v2203
    %v2233 = vmul.f32 %v2232, 0.6931472
    %v2234 = vlog2.pop %v2204
    %v2235 = vmul.f32 %v2234, 0.6931472
    %v2236 = vlog2.pop %v2205
    %v2237 = vmul.f32 %v2236, 0.6931472
    %v2238 = vsub.f32 %v2110, %v2207
    %v2239 = vsub.f32 %v2111, %v2209
    %v2240 = vsub.f32 %v2112, %v2211
    %v2241 = vsub.f32 %v2113, %v2213
    %v2242 = vsub.f32 %v2114, %v2215
    %v2243 = vsub.f32 %v2115, %v2217
    %v2244 = vsub.f32 %v2116, %v2219
    %v2245 = vsub.f32 %v2117, %v2221
    %v2246 = vsub.f32 %v2118, %v2223
    %v2247 = vsub.f32 %v2119, %v2225
    %v2248 = vsub.f32 %v2120, %v2227
    %v2249 = vsub.f32 %v2121, %v2229
    %v2250 = vsub.f32 %v2122, %v2231
    %v2251 = vsub.f32 %v2123, %v2233
    %v2252 = vsub.f32 %v2124, %v2235
    %v2253 = vsub.f32 %v2125, %v2237
    %2254 = vadd.xlane.f32.xlu0 %v2238
    %v2255 = vpop.xlane.xlu0 %2254
    %2256 = vadd.xlane.f32.xlu0 %v2239
    %v2257 = vpop.xlane.xlu0 %2256
    %2258 = vadd.xlane.f32.xlu0 %v2240
    %v2259 = vpop.xlane.xlu0 %2258
    %2260 = vadd.xlane.f32.xlu0 %v2241
    %v2261 = vpop.xlane.xlu0 %2260
    %2262 = vadd.xlane.f32.xlu0 %v2242
    %v2263 = vpop.xlane.xlu0 %2262
    %2264 = vadd.xlane.f32.xlu0 %v2243
    %v2265 = vpop.xlane.xlu0 %2264
    %2266 = vadd.xlane.f32.xlu0 %v2244
    %v2267 = vpop.xlane.xlu0 %2266
    %2268 = vadd.xlane.f32.xlu0 %v2245
    %v2269 = vpop.xlane.xlu0 %2268
    %2270 = vadd.xlane.f32.xlu0 %v2246
    %v2271 = vpop.xlane.xlu0 %2270
    %2272 = vadd.xlane.f32.xlu0 %v2247
    %v2273 = vpop.xlane.xlu0 %2272
    %2274 = vadd.xlane.f32.xlu0 %v2248
    %v2275 = vpop.xlane.xlu0 %2274
    %2276 = vadd.xlane.f32.xlu0 %v2249
    %v2277 = vpop.xlane.xlu0 %2276
    %2278 = vadd.xlane.f32.xlu0 %v2250
    %v2279 = vpop.xlane.xlu0 %2278
    %2280 = vadd.xlane.f32.xlu0 %v2251
    %v2281 = vpop.xlane.xlu0 %2280
    %2282 = vadd.xlane.f32.xlu0 %v2252
    %v2283 = vpop.xlane.xlu0 %2282
    %2284 = vadd.xlane.f32.xlu0 %v2253
    %v2285 = vpop.xlane.xlu0 %2284
    %v2286 = vmul.f32 %v2255, 1.442695
    %v2287 = vpow.pop %v2286
    %v2288 = vmul.f32 %v2257, 1.442695
    %v2289 = vpow.pop %v2288
    %v2290 = vmul.f32 %v2259, 1.442695
    %v2291 = vpow.pop %v2290
    %v2292 = vmul.f32 %v2261, 1.442695
    %v2293 = vpow.pop %v2292
    %v2294 = vmul.f32 %v2263, 1.442695
    %v2295 = vpow.pop %v2294
    %v2296 = vmul.f32 %v2265, 1.442695
    %v2297 = vpow.pop %v2296
    %v2298 = vmul.f32 %v2267, 1.442695
    %v2299 = vpow.pop %v2298
    %v2300 = vmul.f32 %v2269, 1.442695
    %v2301 = vpow.pop %v2300
    %v2302 = vmul.f32 %v2271, 1.442695
    %v2303 = vpow.pop %v2302
    %v2304 = vmul.f32 %v2273, 1.442695
    %v2305 = vpow.pop %v2304
    %v2306 = vmul.f32 %v2275, 1.442695
    %v2307 = vpow.pop %v2306
    %v2308 = vmul.f32 %v2277, 1.442695
    %v2309 = vpow.pop %v2308
    %v2310 = vmul.f32 %v2279, 1.442695
    %v2311 = vpow.pop %v2310
    %v2312 = vmul.f32 %v2281, 1.442695
    %v2313 = vpow.pop %v2312
    %v2314 = vmul.f32 %v2283, 1.442695
    %v2315 = vpow.pop %v2314
    %v2316 = vmul.f32 %v2285, 1.442695
    %v2317 = vpow.pop %v2316
    %v2318 = vadd.f32 %v2044, %v2287
    %v2319 = vadd.f32 %v2045, %v2289
    %v2320 = vadd.f32 %v2046, %v2291
    %v2321 = vadd.f32 %v2047, %v2293
    %v2322 = vadd.f32 %v2048, %v2295
    %v2323 = vadd.f32 %v2049, %v2297
    %v2324 = vadd.f32 %v2050, %v2299
    %v2325 = vadd.f32 %v2051, %v2301
    %v2326 = vadd.f32 %v2052, %v2303
    %v2327 = vadd.f32 %v2053, %v2305
    %v2328 = vadd.f32 %v2054, %v2307
    %v2329 = vadd.f32 %v2055, %v2309
    %v2330 = vadd.f32 %v2056, %v2311
    %v2331 = vadd.f32 %v2057, %v2313
    %v2332 = vadd.f32 %v2058, %v2315
    %v2333 = vadd.f32 %v2059, %v2317
    %s2334 = scalar_lea.vmem [#allocation8], 208
    %v2335 = vld [vmem:[%s2334] sm:$0xf]
    %v2336 = vld [vmem:[%s2334 + $0x4] sm:$0xf]
    %v2337 = vld [vmem:[%s2334 + $0x8] sm:$0xf]
    %v2338 = vld [vmem:[%s2334 + $0xc] sm:$0xf]
    %v2339 = vunpack.c.l.bf16 %v2335
    %v2340 = vunpack.c.l.bf16 %v2336
    %v2341 = vunpack.c.l.bf16 %v2337
    %v2342 = vunpack.c.l.bf16 %v2338
    %s2343 = scalar_lea.vmem [#allocation8], 288
    %v2344 = vld [vmem:[%s2343] sm:$0xf]
    %v2345 = vld [vmem:[%s2343 + $0x4] sm:$0xf]
    %v2346 = vld [vmem:[%s2343 + $0x8] sm:$0xf]
    %v2347 = vld [vmem:[%s2343 + $0xc] sm:$0xf]
    %v2348 = vunpack.c.l.bf16 %v2344
    %v2349 = vunpack.c.l.bf16 %v2345
    %v2350 = vunpack.c.l.bf16 %v2346
    %v2351 = vunpack.c.l.bf16 %v2347
    %v2352 = vmul.f32 %v90, %v2339
    %v2353 = vmul.f32 %v90, %v2340
    %v2354 = vmul.f32 %v90, %v2341
    %v2355 = vmul.f32 %v90, %v2342
    %v2356 = vmul.f32 %v94, %v2339
    %v2357 = vmul.f32 %v94, %v2340
    %v2358 = vmul.f32 %v94, %v2341
    %v2359 = vmul.f32 %v94, %v2342
    %v2360 = vmul.f32 %v98, %v2339
    %v2361 = vmul.f32 %v98, %v2340
    %v2362 = vmul.f32 %v98, %v2341
    %v2363 = vmul.f32 %v98, %v2342
    %v2364 = vmul.f32 %v102, %v2339
    %v2365 = vmul.f32 %v102, %v2340
    %v2366 = vmul.f32 %v102, %v2341
    %v2367 = vmul.f32 %v102, %v2342
    %v2368 = vsub.f32 %v2352, %v2348
    %v2369 = vsub.f32 %v2353, %v2349
    %v2370 = vsub.f32 %v2354, %v2350
    %v2371 = vsub.f32 %v2355, %v2351
    %v2372 = vsub.f32 %v2356, %v2348
    %v2373 = vsub.f32 %v2357, %v2349
    %v2374 = vsub.f32 %v2358, %v2350
    %v2375 = vsub.f32 %v2359, %v2351
    %v2376 = vsub.f32 %v2360, %v2348
    %v2377 = vsub.f32 %v2361, %v2349
    %v2378 = vsub.f32 %v2362, %v2350
    %v2379 = vsub.f32 %v2363, %v2351
    %v2380 = vsub.f32 %v2364, %v2348
    %v2381 = vsub.f32 %v2365, %v2349
    %v2382 = vsub.f32 %v2366, %v2350
    %v2383 = vsub.f32 %v2367, %v2351
    %v2384 = vmin.f32 %v2368, 0.0
    %v2385 = vmin.f32 %v2369, 0.0
    %v2386 = vmin.f32 %v2370, 0.0
    %v2387 = vmin.f32 %v2371, 0.0
    %v2388 = vmin.f32 %v2372, 0.0
    %v2389 = vmin.f32 %v2373, 0.0
    %v2390 = vmin.f32 %v2374, 0.0
    %v2391 = vmin.f32 %v2375, 0.0
    %v2392 = vmin.f32 %v2376, 0.0
    %v2393 = vmin.f32 %v2377, 0.0
    %v2394 = vmin.f32 %v2378, 0.0
    %v2395 = vmin.f32 %v2379, 0.0
    %v2396 = vmin.f32 %v2380, 0.0
    %v2397 = vmin.f32 %v2381, 0.0
    %v2398 = vmin.f32 %v2382, 0.0
    %v2399 = vmin.f32 %v2383, 0.0
    %v2400 = vand.u32 2147483647, %v2368
    %v2401 = vand.u32 2147483647, %v2369
    %v2402 = vand.u32 2147483647, %v2370
    %v2403 = vand.u32 2147483647, %v2371
    %v2404 = vand.u32 2147483647, %v2372
    %v2405 = vand.u32 2147483647, %v2373
    %v2406 = vand.u32 2147483647, %v2374
    %v2407 = vand.u32 2147483647, %v2375
    %v2408 = vand.u32 2147483647, %v2376
    %v2409 = vand.u32 2147483647, %v2377
    %v2410 = vand.u32 2147483647, %v2378
    %v2411 = vand.u32 2147483647, %v2379
    %v2412 = vand.u32 2147483647, %v2380
    %v2413 = vand.u32 2147483647, %v2381
    %v2414 = vand.u32 2147483647, %v2382
    %v2415 = vand.u32 2147483647, %v2383
    %v2416 = vsub.f32 0.0, %v2400
    %v2417 = vsub.f32 0.0, %v2401
    %v2418 = vsub.f32 0.0, %v2402
    %v2419 = vsub.f32 0.0, %v2403
    %v2420 = vsub.f32 0.0, %v2404
    %v2421 = vsub.f32 0.0, %v2405
    %v2422 = vsub.f32 0.0, %v2406
    %v2423 = vsub.f32 0.0, %v2407
    %v2424 = vsub.f32 0.0, %v2408
    %v2425 = vsub.f32 0.0, %v2409
    %v2426 = vsub.f32 0.0, %v2410
    %v2427 = vsub.f32 0.0, %v2411
    %v2428 = vsub.f32 0.0, %v2412
    %v2429 = vsub.f32 0.0, %v2413
    %v2430 = vsub.f32 0.0, %v2414
    %v2431 = vsub.f32 0.0, %v2415
    %v2432 = vmul.f32 %v2416, 1.442695
    %v2433 = vpow.pop %v2432
    %v2434 = vmul.f32 %v2417, 1.442695
    %v2435 = vpow.pop %v2434
    %v2436 = vmul.f32 %v2418, 1.442695
    %v2437 = vpow.pop %v2436
    %v2438 = vmul.f32 %v2419, 1.442695
    %v2439 = vpow.pop %v2438
    %v2440 = vmul.f32 %v2420, 1.442695
    %v2441 = vpow.pop %v2440
    %v2442 = vmul.f32 %v2421, 1.442695
    %v2443 = vpow.pop %v2442
    %v2444 = vmul.f32 %v2422, 1.442695
    %v2445 = vpow.pop %v2444
    %v2446 = vmul.f32 %v2423, 1.442695
    %v2447 = vpow.pop %v2446
    %v2448 = vmul.f32 %v2424, 1.442695
    %v2449 = vpow.pop %v2448
    %v2450 = vmul.f32 %v2425, 1.442695
    %v2451 = vpow.pop %v2450
    %v2452 = vmul.f32 %v2426, 1.442695
    %v2453 = vpow.pop %v2452
    %v2454 = vmul.f32 %v2427, 1.442695
    %v2455 = vpow.pop %v2454
    %v2456 = vmul.f32 %v2428, 1.442695
    %v2457 = vpow.pop %v2456
    %v2458 = vmul.f32 %v2429, 1.442695
    %v2459 = vpow.pop %v2458
    %v2460 = vmul.f32 %v2430, 1.442695
    %v2461 = vpow.pop %v2460
    %v2462 = vmul.f32 %v2431, 1.442695
    %v2463 = vpow.pop %v2462
    %v2464 = vadd.f32 %v2433, 1.0
    %v2465 = vadd.f32 %v2435, 1.0
    %v2466 = vadd.f32 %v2437, 1.0
    %v2467 = vadd.f32 %v2439, 1.0
    %v2468 = vadd.f32 %v2441, 1.0
    %v2469 = vadd.f32 %v2443, 1.0
    %v2470 = vadd.f32 %v2445, 1.0
    %v2471 = vadd.f32 %v2447, 1.0
    %v2472 = vadd.f32 %v2449, 1.0
    %v2473 = vadd.f32 %v2451, 1.0
    %v2474 = vadd.f32 %v2453, 1.0
    %v2475 = vadd.f32 %v2455, 1.0
    %v2476 = vadd.f32 %v2457, 1.0
    %v2477 = vadd.f32 %v2459, 1.0
    %v2478 = vadd.f32 %v2461, 1.0
    %v2479 = vadd.f32 %v2463, 1.0
    %v2480 = vlog2.pop %v2464
    %v2481 = vmul.f32 %v2480, 0.6931472
    %v2482 = vlog2.pop %v2465
    %v2483 = vmul.f32 %v2482, 0.6931472
    %v2484 = vlog2.pop %v2466
    %v2485 = vmul.f32 %v2484, 0.6931472
    %v2486 = vlog2.pop %v2467
    %v2487 = vmul.f32 %v2486, 0.6931472
    %v2488 = vlog2.pop %v2468
    %v2489 = vmul.f32 %v2488, 0.6931472
    %v2490 = vlog2.pop %v2469
    %v2491 = vmul.f32 %v2490, 0.6931472
    %v2492 = vlog2.pop %v2470
    %v2493 = vmul.f32 %v2492, 0.6931472
    %v2494 = vlog2.pop %v2471
    %v2495 = vmul.f32 %v2494, 0.6931472
    %v2496 = vlog2.pop %v2472
    %v2497 = vmul.f32 %v2496, 0.6931472
    %v2498 = vlog2.pop %v2473
    %v2499 = vmul.f32 %v2498, 0.6931472
    %v2500 = vlog2.pop %v2474
    %v2501 = vmul.f32 %v2500, 0.6931472
    %v2502 = vlog2.pop %v2475
    %v2503 = vmul.f32 %v2502, 0.6931472
    %v2504 = vlog2.pop %v2476
    %v2505 = vmul.f32 %v2504, 0.6931472
    %v2506 = vlog2.pop %v2477
    %v2507 = vmul.f32 %v2506, 0.6931472
    %v2508 = vlog2.pop %v2478
    %v2509 = vmul.f32 %v2508, 0.6931472
    %v2510 = vlog2.pop %v2479
    %v2511 = vmul.f32 %v2510, 0.6931472
    %v2512 = vsub.f32 %v2384, %v2481
    %v2513 = vsub.f32 %v2385, %v2483
    %v2514 = vsub.f32 %v2386, %v2485
    %v2515 = vsub.f32 %v2387, %v2487
    %v2516 = vsub.f32 %v2388, %v2489
    %v2517 = vsub.f32 %v2389, %v2491
    %v2518 = vsub.f32 %v2390, %v2493
    %v2519 = vsub.f32 %v2391, %v2495
    %v2520 = vsub.f32 %v2392, %v2497
    %v2521 = vsub.f32 %v2393, %v2499
    %v2522 = vsub.f32 %v2394, %v2501
    %v2523 = vsub.f32 %v2395, %v2503
    %v2524 = vsub.f32 %v2396, %v2505
    %v2525 = vsub.f32 %v2397, %v2507
    %v2526 = vsub.f32 %v2398, %v2509
    %v2527 = vsub.f32 %v2399, %v2511
    %2528 = vadd.xlane.f32.xlu0 %v2512
    %v2529 = vpop.xlane.xlu0 %2528
    %2530 = vadd.xlane.f32.xlu0 %v2513
    %v2531 = vpop.xlane.xlu0 %2530
    %2532 = vadd.xlane.f32.xlu0 %v2514
    %v2533 = vpop.xlane.xlu0 %2532
    %2534 = vadd.xlane.f32.xlu0 %v2515
    %v2535 = vpop.xlane.xlu0 %2534
    %2536 = vadd.xlane.f32.xlu0 %v2516
    %v2537 = vpop.xlane.xlu0 %2536
    %2538 = vadd.xlane.f32.xlu0 %v2517
    %v2539 = vpop.xlane.xlu0 %2538
    %2540 = vadd.xlane.f32.xlu0 %v2518
    %v2541 = vpop.xlane.xlu0 %2540
    %2542 = vadd.xlane.f32.xlu0 %v2519
    %v2543 = vpop.xlane.xlu0 %2542
    %2544 = vadd.xlane.f32.xlu0 %v2520
    %v2545 = vpop.xlane.xlu0 %2544
    %2546 = vadd.xlane.f32.xlu0 %v2521
    %v2547 = vpop.xlane.xlu0 %2546
    %2548 = vadd.xlane.f32.xlu0 %v2522
    %v2549 = vpop.xlane.xlu0 %2548
    %2550 = vadd.xlane.f32.xlu0 %v2523
    %v2551 = vpop.xlane.xlu0 %2550
    %2552 = vadd.xlane.f32.xlu0 %v2524
    %v2553 = vpop.xlane.xlu0 %2552
    %2554 = vadd.xlane.f32.xlu0 %v2525
    %v2555 = vpop.xlane.xlu0 %2554
    %2556 = vadd.xlane.f32.xlu0 %v2526
    %v2557 = vpop.xlane.xlu0 %2556
    %2558 = vadd.xlane.f32.xlu0 %v2527
    %v2559 = vpop.xlane.xlu0 %2558
    %v2560 = vmul.f32 %v2529, 1.442695
    %v2561 = vpow.pop %v2560
    %v2562 = vmul.f32 %v2531, 1.442695
    %v2563 = vpow.pop %v2562
    %v2564 = vmul.f32 %v2533, 1.442695
    %v2565 = vpow.pop %v2564
    %v2566 = vmul.f32 %v2535, 1.442695
    %v2567 = vpow.pop %v2566
    %v2568 = vmul.f32 %v2537, 1.442695
    %v2569 = vpow.pop %v2568
    %v2570 = vmul.f32 %v2539, 1.442695
    %v2571 = vpow.pop %v2570
    %v2572 = vmul.f32 %v2541, 1.442695
    %v2573 = vpow.pop %v2572
    %v2574 = vmul.f32 %v2543, 1.442695
    %v2575 = vpow.pop %v2574
    %v2576 = vmul.f32 %v2545, 1.442695
    %v2577 = vpow.pop %v2576
    %v2578 = vmul.f32 %v2547, 1.442695
    %v2579 = vpow.pop %v2578
    %v2580 = vmul.f32 %v2549, 1.442695
    %v2581 = vpow.pop %v2580
    %v2582 = vmul.f32 %v2551, 1.442695
    %v2583 = vpow.pop %v2582
    %v2584 = vmul.f32 %v2553, 1.442695
    %v2585 = vpow.pop %v2584
    %v2586 = vmul.f32 %v2555, 1.442695
    %v2587 = vpow.pop %v2586
    %v2588 = vmul.f32 %v2557, 1.442695
    %v2589 = vpow.pop %v2588
    %v2590 = vmul.f32 %v2559, 1.442695
    %v2591 = vpow.pop %v2590
    %v2592 = vadd.f32 %v2318, %v2561
    %v2593 = vadd.f32 %v2319, %v2563
    %v2594 = vadd.f32 %v2320, %v2565
    %v2595 = vadd.f32 %v2321, %v2567
    %v2596 = vadd.f32 %v2322, %v2569
    %v2597 = vadd.f32 %v2323, %v2571
    %v2598 = vadd.f32 %v2324, %v2573
    %v2599 = vadd.f32 %v2325, %v2575
    %v2600 = vadd.f32 %v2326, %v2577
    %v2601 = vadd.f32 %v2327, %v2579
    %v2602 = vadd.f32 %v2328, %v2581
    %v2603 = vadd.f32 %v2329, %v2583
    %v2604 = vadd.f32 %v2330, %v2585
    %v2605 = vadd.f32 %v2331, %v2587
    %v2606 = vadd.f32 %v2332, %v2589
    %v2607 = vadd.f32 %v2333, %v2591
    %s2608 = scalar_lea.vmem [#allocation8], 224
    %v2609 = vld [vmem:[%s2608] sm:$0xf]
    %v2610 = vld [vmem:[%s2608 + $0x4] sm:$0xf]
    %v2611 = vld [vmem:[%s2608 + $0x8] sm:$0xf]
    %v2612 = vld [vmem:[%s2608 + $0xc] sm:$0xf]
    %v2613 = vunpack.c.l.bf16 %v2609
    %v2614 = vunpack.c.l.bf16 %v2610
    %v2615 = vunpack.c.l.bf16 %v2611
    %v2616 = vunpack.c.l.bf16 %v2612
    %s2617 = scalar_lea.vmem [#allocation8], 304
    %v2618 = vld [vmem:[%s2617] sm:$0xf]
    %v2619 = vld [vmem:[%s2617 + $0x4] sm:$0xf]
    %v2620 = vld [vmem:[%s2617 + $0x8] sm:$0xf]
    %v2621 = vld [vmem:[%s2617 + $0xc] sm:$0xf]
    %v2622 = vunpack.c.l.bf16 %v2618
    %v2623 = vunpack.c.l.bf16 %v2619
    %v2624 = vunpack.c.l.bf16 %v2620
    %v2625 = vunpack.c.l.bf16 %v2621
    %v2626 = vmul.f32 %v90, %v2613
    %v2627 = vmul.f32 %v90, %v2614
    %v2628 = vmul.f32 %v90, %v2615
    %v2629 = vmul.f32 %v90, %v2616
    %v2630 = vmul.f32 %v94, %v2613
    %v2631 = vmul.f32 %v94, %v2614
    %v2632 = vmul.f32 %v94, %v2615
    %v2633 = vmul.f32 %v94, %v2616
    %v2634 = vmul.f32 %v98, %v2613
    %v2635 = vmul.f32 %v98, %v2614
    %v2636 = vmul.f32 %v98, %v2615
    %v2637 = vmul.f32 %v98, %v2616
    %v2638 = vmul.f32 %v102, %v2613
    %v2639 = vmul.f32 %v102, %v2614
    %v2640 = vmul.f32 %v102, %v2615
    %v2641 = vmul.f32 %v102, %v2616
    %v2642 = vsub.f32 %v2626, %v2622
    %v2643 = vsub.f32 %v2627, %v2623
    %v2644 = vsub.f32 %v2628, %v2624
    %v2645 = vsub.f32 %v2629, %v2625
    %v2646 = vsub.f32 %v2630, %v2622
    %v2647 = vsub.f32 %v2631, %v2623
    %v2648 = vsub.f32 %v2632, %v2624
    %v2649 = vsub.f32 %v2633, %v2625
    %v2650 = vsub.f32 %v2634, %v2622
    %v2651 = vsub.f32 %v2635, %v2623
    %v2652 = vsub.f32 %v2636, %v2624
    %v2653 = vsub.f32 %v2637, %v2625
    %v2654 = vsub.f32 %v2638, %v2622
    %v2655 = vsub.f32 %v2639, %v2623
    %v2656 = vsub.f32 %v2640, %v2624
    %v2657 = vsub.f32 %v2641, %v2625
    %v2658 = vmin.f32 %v2642, 0.0
    %v2659 = vmin.f32 %v2643, 0.0
    %v2660 = vmin.f32 %v2644, 0.0
    %v2661 = vmin.f32 %v2645, 0.0
    %v2662 = vmin.f32 %v2646, 0.0
    %v2663 = vmin.f32 %v2647, 0.0
    %v2664 = vmin.f32 %v2648, 0.0
    %v2665 = vmin.f32 %v2649, 0.0
    %v2666 = vmin.f32 %v2650, 0.0
    %v2667 = vmin.f32 %v2651, 0.0
    %v2668 = vmin.f32 %v2652, 0.0
    %v2669 = vmin.f32 %v2653, 0.0
    %v2670 = vmin.f32 %v2654, 0.0
    %v2671 = vmin.f32 %v2655, 0.0
    %v2672 = vmin.f32 %v2656, 0.0
    %v2673 = vmin.f32 %v2657, 0.0
    %v2674 = vand.u32 2147483647, %v2642
    %v2675 = vand.u32 2147483647, %v2643
    %v2676 = vand.u32 2147483647, %v2644
    %v2677 = vand.u32 2147483647, %v2645
    %v2678 = vand.u32 2147483647, %v2646
    %v2679 = vand.u32 2147483647, %v2647
    %v2680 = vand.u32 2147483647, %v2648
    %v2681 = vand.u32 2147483647, %v2649
    %v2682 = vand.u32 2147483647, %v2650
    %v2683 = vand.u32 2147483647, %v2651
    %v2684 = vand.u32 2147483647, %v2652
    %v2685 = vand.u32 2147483647, %v2653
    %v2686 = vand.u32 2147483647, %v2654
    %v2687 = vand.u32 2147483647, %v2655
    %v2688 = vand.u32 2147483647, %v2656
    %v2689 = vand.u32 2147483647, %v2657
    %v2690 = vsub.f32 0.0, %v2674
    %v2691 = vsub.f32 0.0, %v2675
    %v2692 = vsub.f32 0.0, %v2676
    %v2693 = vsub.f32 0.0, %v2677
    %v2694 = vsub.f32 0.0, %v2678
    %v2695 = vsub.f32 0.0, %v2679
    %v2696 = vsub.f32 0.0, %v2680
    %v2697 = vsub.f32 0.0, %v2681
    %v2698 = vsub.f32 0.0, %v2682
    %v2699 = vsub.f32 0.0, %v2683
    %v2700 = vsub.f32 0.0, %v2684
    %v2701 = vsub.f32 0.0, %v2685
    %v2702 = vsub.f32 0.0, %v2686
    %v2703 = vsub.f32 0.0, %v2687
    %v2704 = vsub.f32 0.0, %v2688
    %v2705 = vsub.f32 0.0, %v2689
    %v2706 = vmul.f32 %v2690, 1.442695
    %v2707 = vpow.pop %v2706
    %v2708 = vmul.f32 %v2691, 1.442695
    %v2709 = vpow.pop %v2708
    %v2710 = vmul.f32 %v2692, 1.442695
    %v2711 = vpow.pop %v2710
    %v2712 = vmul.f32 %v2693, 1.442695
    %v2713 = vpow.pop %v2712
    %v2714 = vmul.f32 %v2694, 1.442695
    %v2715 = vpow.pop %v2714
    %v2716 = vmul.f32 %v2695, 1.442695
    %v2717 = vpow.pop %v2716
    %v2718 = vmul.f32 %v2696, 1.442695
    %v2719 = vpow.pop %v2718
    %v2720 = vmul.f32 %v2697, 1.442695
    %v2721 = vpow.pop %v2720
    %v2722 = vmul.f32 %v2698, 1.442695
    %v2723 = vpow.pop %v2722
    %v2724 = vmul.f32 %v2699, 1.442695
    %v2725 = vpow.pop %v2724
    %v2726 = vmul.f32 %v2700, 1.442695
    %v2727 = vpow.pop %v2726
    %v2728 = vmul.f32 %v2701, 1.442695
    %v2729 = vpow.pop %v2728
    %v2730 = vmul.f32 %v2702, 1.442695
    %v2731 = vpow.pop %v2730
    %v2732 = vmul.f32 %v2703, 1.442695
    %v2733 = vpow.pop %v2732
    %v2734 = vmul.f32 %v2704, 1.442695
    %v2735 = vpow.pop %v2734
    %v2736 = vmul.f32 %v2705, 1.442695
    %v2737 = vpow.pop %v2736
    %v2738 = vadd.f32 %v2707, 1.0
    %v2739 = vadd.f32 %v2709, 1.0
    %v2740 = vadd.f32 %v2711, 1.0
    %v2741 = vadd.f32 %v2713, 1.0
    %v2742 = vadd.f32 %v2715, 1.0
    %v2743 = vadd.f32 %v2717, 1.0
    %v2744 = vadd.f32 %v2719, 1.0
    %v2745 = vadd.f32 %v2721, 1.0
    %v2746 = vadd.f32 %v2723, 1.0
    %v2747 = vadd.f32 %v2725, 1.0
    %v2748 = vadd.f32 %v2727, 1.0
    %v2749 = vadd.f32 %v2729, 1.0
    %v2750 = vadd.f32 %v2731, 1.0
    %v2751 = vadd.f32 %v2733, 1.0
    %v2752 = vadd.f32 %v2735, 1.0
    %v2753 = vadd.f32 %v2737, 1.0
    %v2754 = vlog2.pop %v2738
    %v2755 = vmul.f32 %v2754, 0.6931472
    %v2756 = vlog2.pop %v2739
    %v2757 = vmul.f32 %v2756, 0.6931472
    %v2758 = vlog2.pop %v2740
    %v2759 = vmul.f32 %v2758, 0.6931472
    %v2760 = vlog2.pop %v2741
    %v2761 = vmul.f32 %v2760, 0.6931472
    %v2762 = vlog2.pop %v2742
    %v2763 = vmul.f32 %v2762, 0.6931472
    %v2764 = vlog2.pop %v2743
    %v2765 = vmul.f32 %v2764, 0.6931472
    %v2766 = vlog2.pop %v2744
    %v2767 = vmul.f32 %v2766, 0.6931472
    %v2768 = vlog2.pop %v2745
    %v2769 = vmul.f32 %v2768, 0.6931472
    %v2770 = vlog2.pop %v2746
    %v2771 = vmul.f32 %v2770, 0.6931472
    %v2772 = vlog2.pop %v2747
    %v2773 = vmul.f32 %v2772, 0.6931472
    %v2774 = vlog2.pop %v2748
    %v2775 = vmul.f32 %v2774, 0.6931472
    %v2776 = vlog2.pop %v2749
    %v2777 = vmul.f32 %v2776, 0.6931472
    %v2778 = vlog2.pop %v2750
    %v2779 = vmul.f32 %v2778, 0.6931472
    %v2780 = vlog2.pop %v2751
    %v2781 = vmul.f32 %v2780, 0.6931472
    %v2782 = vlog2.pop %v2752
    %v2783 = vmul.f32 %v2782, 0.6931472
    %v2784 = vlog2.pop %v2753
    %v2785 = vmul.f32 %v2784, 0.6931472
    %v2786 = vsub.f32 %v2658, %v2755
    %v2787 = vsub.f32 %v2659, %v2757
    %v2788 = vsub.f32 %v2660, %v2759
    %v2789 = vsub.f32 %v2661, %v2761
    %v2790 = vsub.f32 %v2662, %v2763
    %v2791 = vsub.f32 %v2663, %v2765
    %v2792 = vsub.f32 %v2664, %v2767
    %v2793 = vsub.f32 %v2665, %v2769
    %v2794 = vsub.f32 %v2666, %v2771
    %v2795 = vsub.f32 %v2667, %v2773
    %v2796 = vsub.f32 %v2668, %v2775
    %v2797 = vsub.f32 %v2669, %v2777
    %v2798 = vsub.f32 %v2670, %v2779
    %v2799 = vsub.f32 %v2671, %v2781
    %v2800 = vsub.f32 %v2672, %v2783
    %v2801 = vsub.f32 %v2673, %v2785
    %2802 = vadd.xlane.f32.xlu0 %v2786
    %v2803 = vpop.xlane.xlu0 %2802
    %2804 = vadd.xlane.f32.xlu0 %v2787
    %v2805 = vpop.xlane.xlu0 %2804
    %2806 = vadd.xlane.f32.xlu0 %v2788
    %v2807 = vpop.xlane.xlu0 %2806
    %2808 = vadd.xlane.f32.xlu0 %v2789
    %v2809 = vpop.xlane.xlu0 %2808
    %2810 = vadd.xlane.f32.xlu0 %v2790
    %v2811 = vpop.xlane.xlu0 %2810
    %2812 = vadd.xlane.f32.xlu0 %v2791
    %v2813 = vpop.xlane.xlu0 %2812
    %2814 = vadd.xlane.f32.xlu0 %v2792
    %v2815 = vpop.xlane.xlu0 %2814
    %2816 = vadd.xlane.f32.xlu0 %v2793
    %v2817 = vpop.xlane.xlu0 %2816
    %2818 = vadd.xlane.f32.xlu0 %v2794
    %v2819 = vpop.xlane.xlu0 %2818
    %2820 = vadd.xlane.f32.xlu0 %v2795
    %v2821 = vpop.xlane.xlu0 %2820
    %2822 = vadd.xlane.f32.xlu0 %v2796
    %v2823 = vpop.xlane.xlu0 %2822
    %2824 = vadd.xlane.f32.xlu0 %v2797
    %v2825 = vpop.xlane.xlu0 %2824
    %2826 = vadd.xlane.f32.xlu0 %v2798
    %v2827 = vpop.xlane.xlu0 %2826
    %2828 = vadd.xlane.f32.xlu0 %v2799
    %v2829 = vpop.xlane.xlu0 %2828
    %2830 = vadd.xlane.f32.xlu0 %v2800
    %v2831 = vpop.xlane.xlu0 %2830
    %2832 = vadd.xlane.f32.xlu0 %v2801
    %v2833 = vpop.xlane.xlu0 %2832
    %v2834 = vmul.f32 %v2803, 1.442695
    %v2835 = vpow.pop %v2834
    %v2836 = vmul.f32 %v2805, 1.442695
    %v2837 = vpow.pop %v2836
    %v2838 = vmul.f32 %v2807, 1.442695
    %v2839 = vpow.pop %v2838
    %v2840 = vmul.f32 %v2809, 1.442695
    %v2841 = vpow.pop %v2840
    %v2842 = vmul.f32 %v2811, 1.442695
    %v2843 = vpow.pop %v2842
    %v2844 = vmul.f32 %v2813, 1.442695
    %v2845 = vpow.pop %v2844
    %v2846 = vmul.f32 %v2815, 1.442695
    %v2847 = vpow.pop %v2846
    %v2848 = vmul.f32 %v2817, 1.442695
    %v2849 = vpow.pop %v2848
    %v2850 = vmul.f32 %v2819, 1.442695
    %v2851 = vpow.pop %v2850
    %v2852 = vmul.f32 %v2821, 1.442695
    %v2853 = vpow.pop %v2852
    %v2854 = vmul.f32 %v2823, 1.442695
    %v2855 = vpow.pop %v2854
    %v2856 = vmul.f32 %v2825, 1.442695
    %v2857 = vpow.pop %v2856
    %v2858 = vmul.f32 %v2827, 1.442695
    %v2859 = vpow.pop %v2858
    %v2860 = vmul.f32 %v2829, 1.442695
    %v2861 = vpow.pop %v2860
    %v2862 = vmul.f32 %v2831, 1.442695
    %v2863 = vpow.pop %v2862
    %v2864 = vmul.f32 %v2833, 1.442695
    %v2865 = vpow.pop %v2864
    %v2866 = vadd.f32 %v2592, %v2835
    %v2867 = vadd.f32 %v2593, %v2837
    %v2868 = vadd.f32 %v2594, %v2839
    %v2869 = vadd.f32 %v2595, %v2841
    %v2870 = vadd.f32 %v2596, %v2843
    %v2871 = vadd.f32 %v2597, %v2845
    %v2872 = vadd.f32 %v2598, %v2847
    %v2873 = vadd.f32 %v2599, %v2849
    %v2874 = vadd.f32 %v2600, %v2851
    %v2875 = vadd.f32 %v2601, %v2853
    %v2876 = vadd.f32 %v2602, %v2855
    %v2877 = vadd.f32 %v2603, %v2857
    %v2878 = vadd.f32 %v2604, %v2859
    %v2879 = vadd.f32 %v2605, %v2861
    %v2880 = vadd.f32 %v2606, %v2863
    %v2881 = vadd.f32 %v2607, %v2865
    %s2882 = sld [smem:[#allocation2 + $0x1]]
    %s2883 = sld [smem:[#allocation7 + $0x1]]
    %v2884 = vstv %s2883
    %v2885 = vsub.f32 %v2866, %v2884
    %v2886 = vsub.f32 %v2867, %v2884
    %v2887 = vsub.f32 %v2868, %v2884
    %v2888 = vsub.f32 %v2869, %v2884
    %v2889 = vsub.f32 %v2870, %v2884
    %v2890 = vsub.f32 %v2871, %v2884
    %v2891 = vsub.f32 %v2872, %v2884
    %v2892 = vsub.f32 %v2873, %v2884
    %v2893 = vsub.f32 %v2874, %v2884
    %v2894 = vsub.f32 %v2875, %v2884
    %v2895 = vsub.f32 %v2876, %v2884
    %v2896 = vsub.f32 %v2877, %v2884
    %v2897 = vsub.f32 %v2878, %v2884
    %v2898 = vsub.f32 %v2879, %v2884
    %v2899 = vsub.f32 %v2880, %v2884
    %v2900 = vsub.f32 %v2881, %v2884
    %v2901 = vstv %s2882
    %v2902 = vmul.f32 %v2901, %v2885
    %v2903 = vmul.f32 %v2901, %v2886
    %v2904 = vmul.f32 %v2901, %v2887
    %v2905 = vmul.f32 %v2901, %v2888
    %v2906 = vmul.f32 %v2901, %v2889
    %v2907 = vmul.f32 %v2901, %v2890
    %v2908 = vmul.f32 %v2901, %v2891
    %v2909 = vmul.f32 %v2901, %v2892
    %v2910 = vmul.f32 %v2901, %v2893
    %v2911 = vmul.f32 %v2901, %v2894
    %v2912 = vmul.f32 %v2901, %v2895
    %v2913 = vmul.f32 %v2901, %v2896
    %v2914 = vmul.f32 %v2901, %v2897
    %v2915 = vmul.f32 %v2901, %v2898
    %v2916 = vmul.f32 %v2901, %v2899
    %v2917 = vmul.f32 %v2901, %v2900
    %s2918 = scalar_lea.vmem [#allocation8], 320
    %v2919 = vld [vmem:[%s2918] sm:$0xf]
    %v2920 = vld [vmem:[%s2918 + $0x4] sm:$0xf]
    %v2921 = vld [vmem:[%s2918 + $0x8] sm:$0xf]
    %v2922 = vld [vmem:[%s2918 + $0xc] sm:$0xf]
    %v2923 = vunpack.c.l.bf16 %v2919
    %v2924 = vunpack.c.l.bf16 %v2920
    %v2925 = vunpack.c.l.bf16 %v2921
    %v2926 = vunpack.c.l.bf16 %v2922
    %s2927 = scalar_lea.vmem [#allocation8], 400
    %v2928 = vld [vmem:[%s2927] sm:$0xf]
    %v2929 = vld [vmem:[%s2927 + $0x4] sm:$0xf]
    %v2930 = vld [vmem:[%s2927 + $0x8] sm:$0xf]
    %v2931 = vld [vmem:[%s2927 + $0xc] sm:$0xf]
    %v2932 = vunpack.c.l.bf16 %v2928
    %v2933 = vunpack.c.l.bf16 %v2929
    %v2934 = vunpack.c.l.bf16 %v2930
    %v2935 = vunpack.c.l.bf16 %v2931
    %v2936 = vmul.f32 %v90, %v2923
    %v2937 = vmul.f32 %v90, %v2924
    %v2938 = vmul.f32 %v90, %v2925
    %v2939 = vmul.f32 %v90, %v2926
    %v2940 = vmul.f32 %v94, %v2923
    %v2941 = vmul.f32 %v94, %v2924
    %v2942 = vmul.f32 %v94, %v2925
    %v2943 = vmul.f32 %v94, %v2926
    %v2944 = vmul.f32 %v98, %v2923
    %v2945 = vmul.f32 %v98, %v2924
    %v2946 = vmul.f32 %v98, %v2925
    %v2947 = vmul.f32 %v98, %v2926
    %v2948 = vmul.f32 %v102, %v2923
    %v2949 = vmul.f32 %v102, %v2924
    %v2950 = vmul.f32 %v102, %v2925
    %v2951 = vmul.f32 %v102, %v2926
    %v2952 = vsub.f32 %v2936, %v2932
    %v2953 = vsub.f32 %v2937, %v2933
    %v2954 = vsub.f32 %v2938, %v2934
    %v2955 = vsub.f32 %v2939, %v2935
    %v2956 = vsub.f32 %v2940, %v2932
    %v2957 = vsub.f32 %v2941, %v2933
    %v2958 = vsub.f32 %v2942, %v2934
    %v2959 = vsub.f32 %v2943, %v2935
    %v2960 = vsub.f32 %v2944, %v2932
    %v2961 = vsub.f32 %v2945, %v2933
    %v2962 = vsub.f32 %v2946, %v2934
    %v2963 = vsub.f32 %v2947, %v2935
    %v2964 = vsub.f32 %v2948, %v2932
    %v2965 = vsub.f32 %v2949, %v2933
    %v2966 = vsub.f32 %v2950, %v2934
    %v2967 = vsub.f32 %v2951, %v2935
    %v2968 = vmin.f32 %v2952, 0.0
    %v2969 = vmin.f32 %v2953, 0.0
    %v2970 = vmin.f32 %v2954, 0.0
    %v2971 = vmin.f32 %v2955, 0.0
    %v2972 = vmin.f32 %v2956, 0.0
    %v2973 = vmin.f32 %v2957, 0.0
    %v2974 = vmin.f32 %v2958, 0.0
    %v2975 = vmin.f32 %v2959, 0.0
    %v2976 = vmin.f32 %v2960, 0.0
    %v2977 = vmin.f32 %v2961, 0.0
    %v2978 = vmin.f32 %v2962, 0.0
    %v2979 = vmin.f32 %v2963, 0.0
    %v2980 = vmin.f32 %v2964, 0.0
    %v2981 = vmin.f32 %v2965, 0.0
    %v2982 = vmin.f32 %v2966, 0.0
    %v2983 = vmin.f32 %v2967, 0.0
    %v2984 = vand.u32 2147483647, %v2952
    %v2985 = vand.u32 2147483647, %v2953
    %v2986 = vand.u32 2147483647, %v2954
    %v2987 = vand.u32 2147483647, %v2955
    %v2988 = vand.u32 2147483647, %v2956
    %v2989 = vand.u32 2147483647, %v2957
    %v2990 = vand.u32 2147483647, %v2958
    %v2991 = vand.u32 2147483647, %v2959
    %v2992 = vand.u32 2147483647, %v2960
    %v2993 = vand.u32 2147483647, %v2961
    %v2994 = vand.u32 2147483647, %v2962
    %v2995 = vand.u32 2147483647, %v2963
    %v2996 = vand.u32 2147483647, %v2964
    %v2997 = vand.u32 2147483647, %v2965
    %v2998 = vand.u32 2147483647, %v2966
    %v2999 = vand.u32 2147483647, %v2967
    %v3000 = vsub.f32 0.0, %v2984
    %v3001 = vsub.f32 0.0, %v2985
    %v3002 = vsub.f32 0.0, %v2986
    %v3003 = vsub.f32 0.0, %v2987
    %v3004 = vsub.f32 0.0, %v2988
    %v3005 = vsub.f32 0.0, %v2989
    %v3006 = vsub.f32 0.0, %v2990
    %v3007 = vsub.f32 0.0, %v2991
    %v3008 = vsub.f32 0.0, %v2992
    %v3009 = vsub.f32 0.0, %v2993
    %v3010 = vsub.f32 0.0, %v2994
    %v3011 = vsub.f32 0.0, %v2995
    %v3012 = vsub.f32 0.0, %v2996
    %v3013 = vsub.f32 0.0, %v2997
    %v3014 = vsub.f32 0.0, %v2998
    %v3015 = vsub.f32 0.0, %v2999
    %v3016 = vmul.f32 %v3000, 1.442695
    %v3017 = vpow.pop %v3016
    %v3018 = vmul.f32 %v3001, 1.442695
    %v3019 = vpow.pop %v3018
    %v3020 = vmul.f32 %v3002, 1.442695
    %v3021 = vpow.pop %v3020
    %v3022 = vmul.f32 %v3003, 1.442695
    %v3023 = vpow.pop %v3022
    %v3024 = vmul.f32 %v3004, 1.442695
    %v3025 = vpow.pop %v3024
    %v3026 = vmul.f32 %v3005, 1.442695
    %v3027 = vpow.pop %v3026
    %v3028 = vmul.f32 %v3006, 1.442695
    %v3029 = vpow.pop %v3028
    %v3030 = vmul.f32 %v3007, 1.442695
    %v3031 = vpow.pop %v3030
    %v3032 = vmul.f32 %v3008, 1.442695
    %v3033 = vpow.pop %v3032
    %v3034 = vmul.f32 %v3009, 1.442695
    %v3035 = vpow.pop %v3034
    %v3036 = vmul.f32 %v3010, 1.442695
    %v3037 = vpow.pop %v3036
    %v3038 = vmul.f32 %v3011, 1.442695
    %v3039 = vpow.pop %v3038
    %v3040 = vmul.f32 %v3012, 1.442695
    %v3041 = vpow.pop %v3040
    %v3042 = vmul.f32 %v3013, 1.442695
    %v3043 = vpow.pop %v3042
    %v3044 = vmul.f32 %v3014, 1.442695
    %v3045 = vpow.pop %v3044
    %v3046 = vmul.f32 %v3015, 1.442695
    %v3047 = vpow.pop %v3046
    %v3048 = vadd.f32 %v3017, 1.0
    %v3049 = vadd.f32 %v3019, 1.0
    %v3050 = vadd.f32 %v3021, 1.0
    %v3051 = vadd.f32 %v3023, 1.0
    %v3052 = vadd.f32 %v3025, 1.0
    %v3053 = vadd.f32 %v3027, 1.0
    %v3054 = vadd.f32 %v3029, 1.0
    %v3055 = vadd.f32 %v3031, 1.0
    %v3056 = vadd.f32 %v3033, 1.0
    %v3057 = vadd.f32 %v3035, 1.0
    %v3058 = vadd.f32 %v3037, 1.0
    %v3059 = vadd.f32 %v3039, 1.0
    %v3060 = vadd.f32 %v3041, 1.0
    %v3061 = vadd.f32 %v3043, 1.0
    %v3062 = vadd.f32 %v3045, 1.0
    %v3063 = vadd.f32 %v3047, 1.0
    %v3064 = vlog2.pop %v3048
    %v3065 = vmul.f32 %v3064, 0.6931472
    %v3066 = vlog2.pop %v3049
    %v3067 = vmul.f32 %v3066, 0.6931472
    %v3068 = vlog2.pop %v3050
    %v3069 = vmul.f32 %v3068, 0.6931472
    %v3070 = vlog2.pop %v3051
    %v3071 = vmul.f32 %v3070, 0.6931472
    %v3072 = vlog2.pop %v3052
    %v3073 = vmul.f32 %v3072, 0.6931472
    %v3074 = vlog2.pop %v3053
    %v3075 = vmul.f32 %v3074, 0.6931472
    %v3076 = vlog2.pop %v3054
    %v3077 = vmul.f32 %v3076, 0.6931472
    %v3078 = vlog2.pop %v3055
    %v3079 = vmul.f32 %v3078, 0.6931472
    %v3080 = vlog2.pop %v3056
    %v3081 = vmul.f32 %v3080, 0.6931472
    %v3082 = vlog2.pop %v3057
    %v3083 = vmul.f32 %v3082, 0.6931472
    %v3084 = vlog2.pop %v3058
    %v3085 = vmul.f32 %v3084, 0.6931472
    %v3086 = vlog2.pop %v3059
    %v3087 = vmul.f32 %v3086, 0.6931472
    %v3088 = vlog2.pop %v3060
    %v3089 = vmul.f32 %v3088, 0.6931472
    %v3090 = vlog2.pop %v3061
    %v3091 = vmul.f32 %v3090, 0.6931472
    %v3092 = vlog2.pop %v3062
    %v3093 = vmul.f32 %v3092, 0.6931472
    %v3094 = vlog2.pop %v3063
    %v3095 = vmul.f32 %v3094, 0.6931472
    %v3096 = vsub.f32 %v2968, %v3065
    %v3097 = vsub.f32 %v2969, %v3067
    %v3098 = vsub.f32 %v2970, %v3069
    %v3099 = vsub.f32 %v2971, %v3071
    %v3100 = vsub.f32 %v2972, %v3073
    %v3101 = vsub.f32 %v2973, %v3075
    %v3102 = vsub.f32 %v2974, %v3077
    %v3103 = vsub.f32 %v2975, %v3079
    %v3104 = vsub.f32 %v2976, %v3081
    %v3105 = vsub.f32 %v2977, %v3083
    %v3106 = vsub.f32 %v2978, %v3085
    %v3107 = vsub.f32 %v2979, %v3087
    %v3108 = vsub.f32 %v2980, %v3089
    %v3109 = vsub.f32 %v2981, %v3091
    %v3110 = vsub.f32 %v2982, %v3093
    %v3111 = vsub.f32 %v2983, %v3095
    %3112 = vadd.xlane.f32.xlu0 %v3096
    %v3113 = vpop.xlane.xlu0 %3112
    %3114 = vadd.xlane.f32.xlu0 %v3097
    %v3115 = vpop.xlane.xlu0 %3114
    %3116 = vadd.xlane.f32.xlu0 %v3098
    %v3117 = vpop.xlane.xlu0 %3116
    %3118 = vadd.xlane.f32.xlu0 %v3099
    %v3119 = vpop.xlane.xlu0 %3118
    %3120 = vadd.xlane.f32.xlu0 %v3100
    %v3121 = vpop.xlane.xlu0 %3120
    %3122 = vadd.xlane.f32.xlu0 %v3101
    %v3123 = vpop.xlane.xlu0 %3122
    %3124 = vadd.xlane.f32.xlu0 %v3102
    %v3125 = vpop.xlane.xlu0 %3124
    %3126 = vadd.xlane.f32.xlu0 %v3103
    %v3127 = vpop.xlane.xlu0 %3126
    %3128 = vadd.xlane.f32.xlu0 %v3104
    %v3129 = vpop.xlane.xlu0 %3128
    %3130 = vadd.xlane.f32.xlu0 %v3105
    %v3131 = vpop.xlane.xlu0 %3130
    %3132 = vadd.xlane.f32.xlu0 %v3106
    %v3133 = vpop.xlane.xlu0 %3132
    %3134 = vadd.xlane.f32.xlu0 %v3107
    %v3135 = vpop.xlane.xlu0 %3134
    %3136 = vadd.xlane.f32.xlu0 %v3108
    %v3137 = vpop.xlane.xlu0 %3136
    %3138 = vadd.xlane.f32.xlu0 %v3109
    %v3139 = vpop.xlane.xlu0 %3138
    %3140 = vadd.xlane.f32.xlu0 %v3110
    %v3141 = vpop.xlane.xlu0 %3140
    %3142 = vadd.xlane.f32.xlu0 %v3111
    %v3143 = vpop.xlane.xlu0 %3142
    %v3144 = vmul.f32 %v3113, 1.442695
    %v3145 = vpow.pop %v3144
    %v3146 = vmul.f32 %v3115, 1.442695
    %v3147 = vpow.pop %v3146
    %v3148 = vmul.f32 %v3117, 1.442695
    %v3149 = vpow.pop %v3148
    %v3150 = vmul.f32 %v3119, 1.442695
    %v3151 = vpow.pop %v3150
    %v3152 = vmul.f32 %v3121, 1.442695
    %v3153 = vpow.pop %v3152
    %v3154 = vmul.f32 %v3123, 1.442695
    %v3155 = vpow.pop %v3154
    %v3156 = vmul.f32 %v3125, 1.442695
    %v3157 = vpow.pop %v3156
    %v3158 = vmul.f32 %v3127, 1.442695
    %v3159 = vpow.pop %v3158
    %v3160 = vmul.f32 %v3129, 1.442695
    %v3161 = vpow.pop %v3160
    %v3162 = vmul.f32 %v3131, 1.442695
    %v3163 = vpow.pop %v3162
    %v3164 = vmul.f32 %v3133, 1.442695
    %v3165 = vpow.pop %v3164
    %v3166 = vmul.f32 %v3135, 1.442695
    %v3167 = vpow.pop %v3166
    %v3168 = vmul.f32 %v3137, 1.442695
    %v3169 = vpow.pop %v3168
    %v3170 = vmul.f32 %v3139, 1.442695
    %v3171 = vpow.pop %v3170
    %v3172 = vmul.f32 %v3141, 1.442695
    %v3173 = vpow.pop %v3172
    %v3174 = vmul.f32 %v3143, 1.442695
    %v3175 = vpow.pop %v3174
    %v3176 = vadd.f32 %v3145, 0.0
    %v3177 = vadd.f32 %v3147, 0.0
    %v3178 = vadd.f32 %v3149, 0.0
    %v3179 = vadd.f32 %v3151, 0.0
    %v3180 = vadd.f32 %v3153, 0.0
    %v3181 = vadd.f32 %v3155, 0.0
    %v3182 = vadd.f32 %v3157, 0.0
    %v3183 = vadd.f32 %v3159, 0.0
    %v3184 = vadd.f32 %v3161, 0.0
    %v3185 = vadd.f32 %v3163, 0.0
    %v3186 = vadd.f32 %v3165, 0.0
    %v3187 = vadd.f32 %v3167, 0.0
    %v3188 = vadd.f32 %v3169, 0.0
    %v3189 = vadd.f32 %v3171, 0.0
    %v3190 = vadd.f32 %v3173, 0.0
    %v3191 = vadd.f32 %v3175, 0.0
    %s3192 = scalar_lea.vmem [#allocation8], 336
    %v3193 = vld [vmem:[%s3192] sm:$0xf]
    %v3194 = vld [vmem:[%s3192 + $0x4] sm:$0xf]
    %v3195 = vld [vmem:[%s3192 + $0x8] sm:$0xf]
    %v3196 = vld [vmem:[%s3192 + $0xc] sm:$0xf]
    %v3197 = vunpack.c.l.bf16 %v3193
    %v3198 = vunpack.c.l.bf16 %v3194
    %v3199 = vunpack.c.l.bf16 %v3195
    %v3200 = vunpack.c.l.bf16 %v3196
    %s3201 = scalar_lea.vmem [#allocation8], 416
    %v3202 = vld [vmem:[%s3201] sm:$0xf]
    %v3203 = vld [vmem:[%s3201 + $0x4] sm:$0xf]
    %v3204 = vld [vmem:[%s3201 + $0x8] sm:$0xf]
    %v3205 = vld [vmem:[%s3201 + $0xc] sm:$0xf]
    %v3206 = vunpack.c.l.bf16 %v3202
    %v3207 = vunpack.c.l.bf16 %v3203
    %v3208 = vunpack.c.l.bf16 %v3204
    %v3209 = vunpack.c.l.bf16 %v3205
    %v3210 = vmul.f32 %v90, %v3197
    %v3211 = vmul.f32 %v90, %v3198
    %v3212 = vmul.f32 %v90, %v3199
    %v3213 = vmul.f32 %v90, %v3200
    %v3214 = vmul.f32 %v94, %v3197
    %v3215 = vmul.f32 %v94, %v3198
    %v3216 = vmul.f32 %v94, %v3199
    %v3217 = vmul.f32 %v94, %v3200
    %v3218 = vmul.f32 %v98, %v3197
    %v3219 = vmul.f32 %v98, %v3198
    %v3220 = vmul.f32 %v98, %v3199
    %v3221 = vmul.f32 %v98, %v3200
    %v3222 = vmul.f32 %v102, %v3197
    %v3223 = vmul.f32 %v102, %v3198
    %v3224 = vmul.f32 %v102, %v3199
    %v3225 = vmul.f32 %v102, %v3200
    %v3226 = vsub.f32 %v3210, %v3206
    %v3227 = vsub.f32 %v3211, %v3207
    %v3228 = vsub.f32 %v3212, %v3208
    %v3229 = vsub.f32 %v3213, %v3209
    %v3230 = vsub.f32 %v3214, %v3206
    %v3231 = vsub.f32 %v3215, %v3207
    %v3232 = vsub.f32 %v3216, %v3208
    %v3233 = vsub.f32 %v3217, %v3209
    %v3234 = vsub.f32 %v3218, %v3206
    %v3235 = vsub.f32 %v3219, %v3207
    %v3236 = vsub.f32 %v3220, %v3208
    %v3237 = vsub.f32 %v3221, %v3209
    %v3238 = vsub.f32 %v3222, %v3206
    %v3239 = vsub.f32 %v3223, %v3207
    %v3240 = vsub.f32 %v3224, %v3208
    %v3241 = vsub.f32 %v3225, %v3209
    %v3242 = vmin.f32 %v3226, 0.0
    %v3243 = vmin.f32 %v3227, 0.0
    %v3244 = vmin.f32 %v3228, 0.0
    %v3245 = vmin.f32 %v3229, 0.0
    %v3246 = vmin.f32 %v3230, 0.0
    %v3247 = vmin.f32 %v3231, 0.0
    %v3248 = vmin.f32 %v3232, 0.0
    %v3249 = vmin.f32 %v3233, 0.0
    %v3250 = vmin.f32 %v3234, 0.0
    %v3251 = vmin.f32 %v3235, 0.0
    %v3252 = vmin.f32 %v3236, 0.0
    %v3253 = vmin.f32 %v3237, 0.0
    %v3254 = vmin.f32 %v3238, 0.0
    %v3255 = vmin.f32 %v3239, 0.0
    %v3256 = vmin.f32 %v3240, 0.0
    %v3257 = vmin.f32 %v3241, 0.0
    %v3258 = vand.u32 2147483647, %v3226
    %v3259 = vand.u32 2147483647, %v3227
    %v3260 = vand.u32 2147483647, %v3228
    %v3261 = vand.u32 2147483647, %v3229
    %v3262 = vand.u32 2147483647, %v3230
    %v3263 = vand.u32 2147483647, %v3231
    %v3264 = vand.u32 2147483647, %v3232
    %v3265 = vand.u32 2147483647, %v3233
    %v3266 = vand.u32 2147483647, %v3234
    %v3267 = vand.u32 2147483647, %v3235
    %v3268 = vand.u32 2147483647, %v3236
    %v3269 = vand.u32 2147483647, %v3237
    %v3270 = vand.u32 2147483647, %v3238
    %v3271 = vand.u32 2147483647, %v3239
    %v3272 = vand.u32 2147483647, %v3240
    %v3273 = vand.u32 2147483647, %v3241
    %v3274 = vsub.f32 0.0, %v3258
    %v3275 = vsub.f32 0.0, %v3259
    %v3276 = vsub.f32 0.0, %v3260
    %v3277 = vsub.f32 0.0, %v3261
    %v3278 = vsub.f32 0.0, %v3262
    %v3279 = vsub.f32 0.0, %v3263
    %v3280 = vsub.f32 0.0, %v3264
    %v3281 = vsub.f32 0.0, %v3265
    %v3282 = vsub.f32 0.0, %v3266
    %v3283 = vsub.f32 0.0, %v3267
    %v3284 = vsub.f32 0.0, %v3268
    %v3285 = vsub.f32 0.0, %v3269
    %v3286 = vsub.f32 0.0, %v3270
    %v3287 = vsub.f32 0.0, %v3271
    %v3288 = vsub.f32 0.0, %v3272
    %v3289 = vsub.f32 0.0, %v3273
    %v3290 = vmul.f32 %v3274, 1.442695
    %v3291 = vpow.pop %v3290
    %v3292 = vmul.f32 %v3275, 1.442695
    %v3293 = vpow.pop %v3292
    %v3294 = vmul.f32 %v3276, 1.442695
    %v3295 = vpow.pop %v3294
    %v3296 = vmul.f32 %v3277, 1.442695
    %v3297 = vpow.pop %v3296
    %v3298 = vmul.f32 %v3278, 1.442695
    %v3299 = vpow.pop %v3298
    %v3300 = vmul.f32 %v3279, 1.442695
    %v3301 = vpow.pop %v3300
    %v3302 = vmul.f32 %v3280, 1.442695
    %v3303 = vpow.pop %v3302
    %v3304 = vmul.f32 %v3281, 1.442695
    %v3305 = vpow.pop %v3304
    %v3306 = vmul.f32 %v3282, 1.442695
    %v3307 = vpow.pop %v3306
    %v3308 = vmul.f32 %v3283, 1.442695
    %v3309 = vpow.pop %v3308
    %v3310 = vmul.f32 %v3284, 1.442695
    %v3311 = vpow.pop %v3310
    %v3312 = vmul.f32 %v3285, 1.442695
    %v3313 = vpow.pop %v3312
    %v3314 = vmul.f32 %v3286, 1.442695
    %v3315 = vpow.pop %v3314
    %v3316 = vmul.f32 %v3287, 1.442695
    %v3317 = vpow.pop %v3316
    %v3318 = vmul.f32 %v3288, 1.442695
    %v3319 = vpow.pop %v3318
    %v3320 = vmul.f32 %v3289, 1.442695
    %v3321 = vpow.pop %v3320
    %v3322 = vadd.f32 %v3291, 1.0
    %v3323 = vadd.f32 %v3293, 1.0
    %v3324 = vadd.f32 %v3295, 1.0
    %v3325 = vadd.f32 %v3297, 1.0
    %v3326 = vadd.f32 %v3299, 1.0
    %v3327 = vadd.f32 %v3301, 1.0
    %v3328 = vadd.f32 %v3303, 1.0
    %v3329 = vadd.f32 %v3305, 1.0
    %v3330 = vadd.f32 %v3307, 1.0
    %v3331 = vadd.f32 %v3309, 1.0
    %v3332 = vadd.f32 %v3311, 1.0
    %v3333 = vadd.f32 %v3313, 1.0
    %v3334 = vadd.f32 %v3315, 1.0
    %v3335 = vadd.f32 %v3317, 1.0
    %v3336 = vadd.f32 %v3319, 1.0
    %v3337 = vadd.f32 %v3321, 1.0
    %v3338 = vlog2.pop %v3322
    %v3339 = vmul.f32 %v3338, 0.6931472
    %v3340 = vlog2.pop %v3323
    %v3341 = vmul.f32 %v3340, 0.6931472
    %v3342 = vlog2.pop %v3324
    %v3343 = vmul.f32 %v3342, 0.6931472
    %v3344 = vlog2.pop %v3325
    %v3345 = vmul.f32 %v3344, 0.6931472
    %v3346 = vlog2.pop %v3326
    %v3347 = vmul.f32 %v3346, 0.6931472
    %v3348 = vlog2.pop %v3327
    %v3349 = vmul.f32 %v3348, 0.6931472
    %v3350 = vlog2.pop %v3328
    %v3351 = vmul.f32 %v3350, 0.6931472
    %v3352 = vlog2.pop %v3329
    %v3353 = vmul.f32 %v3352, 0.6931472
    %v3354 = vlog2.pop %v3330
    %v3355 = vmul.f32 %v3354, 0.6931472
    %v3356 = vlog2.pop %v3331
    %v3357 = vmul.f32 %v3356, 0.6931472
    %v3358 = vlog2.pop %v3332
    %v3359 = vmul.f32 %v3358, 0.6931472
    %v3360 = vlog2.pop %v3333
    %v3361 = vmul.f32 %v3360, 0.6931472
    %v3362 = vlog2.pop %v3334
    %v3363 = vmul.f32 %v3362, 0.6931472
    %v3364 = vlog2.pop %v3335
    %v3365 = vmul.f32 %v3364, 0.6931472
    %v3366 = vlog2.pop %v3336
    %v3367 = vmul.f32 %v3366, 0.6931472
    %v3368 = vlog2.pop %v3337
    %v3369 = vmul.f32 %v3368, 0.6931472
    %v3370 = vsub.f32 %v3242, %v3339
    %v3371 = vsub.f32 %v3243, %v3341
    %v3372 = vsub.f32 %v3244, %v3343
    %v3373 = vsub.f32 %v3245, %v3345
    %v3374 = vsub.f32 %v3246, %v3347
    %v3375 = vsub.f32 %v3247, %v3349
    %v3376 = vsub.f32 %v3248, %v3351
    %v3377 = vsub.f32 %v3249, %v3353
    %v3378 = vsub.f32 %v3250, %v3355
    %v3379 = vsub.f32 %v3251, %v3357
    %v3380 = vsub.f32 %v3252, %v3359
    %v3381 = vsub.f32 %v3253, %v3361
    %v3382 = vsub.f32 %v3254, %v3363
    %v3383 = vsub.f32 %v3255, %v3365
    %v3384 = vsub.f32 %v3256, %v3367
    %v3385 = vsub.f32 %v3257, %v3369
    %3386 = vadd.xlane.f32.xlu0 %v3370
    %v3387 = vpop.xlane.xlu0 %3386
    %3388 = vadd.xlane.f32.xlu0 %v3371
    %v3389 = vpop.xlane.xlu0 %3388
    %3390 = vadd.xlane.f32.xlu0 %v3372
    %v3391 = vpop.xlane.xlu0 %3390
    %3392 = vadd.xlane.f32.xlu0 %v3373
    %v3393 = vpop.xlane.xlu0 %3392
    %3394 = vadd.xlane.f32.xlu0 %v3374
    %v3395 = vpop.xlane.xlu0 %3394
    %3396 = vadd.xlane.f32.xlu0 %v3375
    %v3397 = vpop.xlane.xlu0 %3396
    %3398 = vadd.xlane.f32.xlu0 %v3376
    %v3399 = vpop.xlane.xlu0 %3398
    %3400 = vadd.xlane.f32.xlu0 %v3377
    %v3401 = vpop.xlane.xlu0 %3400
    %3402 = vadd.xlane.f32.xlu0 %v3378
    %v3403 = vpop.xlane.xlu0 %3402
    %3404 = vadd.xlane.f32.xlu0 %v3379
    %v3405 = vpop.xlane.xlu0 %3404
    %3406 = vadd.xlane.f32.xlu0 %v3380
    %v3407 = vpop.xlane.xlu0 %3406
    %3408 = vadd.xlane.f32.xlu0 %v3381
    %v3409 = vpop.xlane.xlu0 %3408
    %3410 = vadd.xlane.f32.xlu0 %v3382
    %v3411 = vpop.xlane.xlu0 %3410
    %3412 = vadd.xlane.f32.xlu0 %v3383
    %v3413 = vpop.xlane.xlu0 %3412
    %3414 = vadd.xlane.f32.xlu0 %v3384
    %v3415 = vpop.xlane.xlu0 %3414
    %3416 = vadd.xlane.f32.xlu0 %v3385
    %v3417 = vpop.xlane.xlu0 %3416
    %v3418 = vmul.f32 %v3387, 1.442695
    %v3419 = vpow.pop %v3418
    %v3420 = vmul.f32 %v3389, 1.442695
    %v3421 = vpow.pop %v3420
    %v3422 = vmul.f32 %v3391, 1.442695
    %v3423 = vpow.pop %v3422
    %v3424 = vmul.f32 %v3393, 1.442695
    %v3425 = vpow.pop %v3424
    %v3426 = vmul.f32 %v3395, 1.442695
    %v3427 = vpow.pop %v3426
    %v3428 = vmul.f32 %v3397, 1.442695
    %v3429 = vpow.pop %v3428
    %v3430 = vmul.f32 %v3399, 1.442695
    %v3431 = vpow.pop %v3430
    %v3432 = vmul.f32 %v3401, 1.442695
    %v3433 = vpow.pop %v3432
    %v3434 = vmul.f32 %v3403, 1.442695
    %v3435 = vpow.pop %v3434
    %v3436 = vmul.f32 %v3405, 1.442695
    %v3437 = vpow.pop %v3436
    %v3438 = vmul.f32 %v3407, 1.442695
    %v3439 = vpow.pop %v3438
    %v3440 = vmul.f32 %v3409, 1.442695
    %v3441 = vpow.pop %v3440
    %v3442 = vmul.f32 %v3411, 1.442695
    %v3443 = vpow.pop %v3442
    %v3444 = vmul.f32 %v3413, 1.442695
    %v3445 = vpow.pop %v3444
    %v3446 = vmul.f32 %v3415, 1.442695
    %v3447 = vpow.pop %v3446
    %v3448 = vmul.f32 %v3417, 1.442695
    %v3449 = vpow.pop %v3448
    %v3450 = vadd.f32 %v3176, %v3419
    %v3451 = vadd.f32 %v3177, %v3421
    %v3452 = vadd.f32 %v3178, %v3423
    %v3453 = vadd.f32 %v3179, %v3425
    %v3454 = vadd.f32 %v3180, %v3427
    %v3455 = vadd.f32 %v3181, %v3429
    %v3456 = vadd.f32 %v3182, %v3431
    %v3457 = vadd.f32 %v3183, %v3433
    %v3458 = vadd.f32 %v3184, %v3435
    %v3459 = vadd.f32 %v3185, %v3437
    %v3460 = vadd.f32 %v3186, %v3439
    %v3461 = vadd.f32 %v3187, %v3441
    %v3462 = vadd.f32 %v3188, %v3443
    %v3463 = vadd.f32 %v3189, %v3445
    %v3464 = vadd.f32 %v3190, %v3447
    %v3465 = vadd.f32 %v3191, %v3449
    %s3466 = scalar_lea.vmem [#allocation8], 352
    %v3467 = vld [vmem:[%s3466] sm:$0xf]
    %v3468 = vld [vmem:[%s3466 + $0x4] sm:$0xf]
    %v3469 = vld [vmem:[%s3466 + $0x8] sm:$0xf]
    %v3470 = vld [vmem:[%s3466 + $0xc] sm:$0xf]
    %v3471 = vunpack.c.l.bf16 %v3467
    %v3472 = vunpack.c.l.bf16 %v3468
    %v3473 = vunpack.c.l.bf16 %v3469
    %v3474 = vunpack.c.l.bf16 %v3470
    %s3475 = scalar_lea.vmem [#allocation8], 432
    %v3476 = vld [vmem:[%s3475] sm:$0xf]
    %v3477 = vld [vmem:[%s3475 + $0x4] sm:$0xf]
    %v3478 = vld [vmem:[%s3475 + $0x8] sm:$0xf]
    %v3479 = vld [vmem:[%s3475 + $0xc] sm:$0xf]
    %v3480 = vunpack.c.l.bf16 %v3476
    %v3481 = vunpack.c.l.bf16 %v3477
    %v3482 = vunpack.c.l.bf16 %v3478
    %v3483 = vunpack.c.l.bf16 %v3479
    %v3484 = vmul.f32 %v90, %v3471
    %v3485 = vmul.f32 %v90, %v3472
    %v3486 = vmul.f32 %v90, %v3473
    %v3487 = vmul.f32 %v90, %v3474
    %v3488 = vmul.f32 %v94, %v3471
    %v3489 = vmul.f32 %v94, %v3472
    %v3490 = vmul.f32 %v94, %v3473
    %v3491 = vmul.f32 %v94, %v3474
    %v3492 = vmul.f32 %v98, %v3471
    %v3493 = vmul.f32 %v98, %v3472
    %v3494 = vmul.f32 %v98, %v3473
    %v3495 = vmul.f32 %v98, %v3474
    %v3496 = vmul.f32 %v102, %v3471
    %v3497 = vmul.f32 %v102, %v3472
    %v3498 = vmul.f32 %v102, %v3473
    %v3499 = vmul.f32 %v102, %v3474
    %v3500 = vsub.f32 %v3484, %v3480
    %v3501 = vsub.f32 %v3485, %v3481
    %v3502 = vsub.f32 %v3486, %v3482
    %v3503 = vsub.f32 %v3487, %v3483
    %v3504 = vsub.f32 %v3488, %v3480
    %v3505 = vsub.f32 %v3489, %v3481
    %v3506 = vsub.f32 %v3490, %v3482
    %v3507 = vsub.f32 %v3491, %v3483
    %v3508 = vsub.f32 %v3492, %v3480
    %v3509 = vsub.f32 %v3493, %v3481
    %v3510 = vsub.f32 %v3494, %v3482
    %v3511 = vsub.f32 %v3495, %v3483
    %v3512 = vsub.f32 %v3496, %v3480
    %v3513 = vsub.f32 %v3497, %v3481
    %v3514 = vsub.f32 %v3498, %v3482
    %v3515 = vsub.f32 %v3499, %v3483
    %v3516 = vmin.f32 %v3500, 0.0
    %v3517 = vmin.f32 %v3501, 0.0
    %v3518 = vmin.f32 %v3502, 0.0
    %v3519 = vmin.f32 %v3503, 0.0
    %v3520 = vmin.f32 %v3504, 0.0
    %v3521 = vmin.f32 %v3505, 0.0
    %v3522 = vmin.f32 %v3506, 0.0
    %v3523 = vmin.f32 %v3507, 0.0
    %v3524 = vmin.f32 %v3508, 0.0
    %v3525 = vmin.f32 %v3509, 0.0
    %v3526 = vmin.f32 %v3510, 0.0
    %v3527 = vmin.f32 %v3511, 0.0
    %v3528 = vmin.f32 %v3512, 0.0
    %v3529 = vmin.f32 %v3513, 0.0
    %v3530 = vmin.f32 %v3514, 0.0
    %v3531 = vmin.f32 %v3515, 0.0
    %v3532 = vand.u32 2147483647, %v3500
    %v3533 = vand.u32 2147483647, %v3501
    %v3534 = vand.u32 2147483647, %v3502
    %v3535 = vand.u32 2147483647, %v3503
    %v3536 = vand.u32 2147483647, %v3504
    %v3537 = vand.u32 2147483647, %v3505
    %v3538 = vand.u32 2147483647, %v3506
    %v3539 = vand.u32 2147483647, %v3507
    %v3540 = vand.u32 2147483647, %v3508
    %v3541 = vand.u32 2147483647, %v3509
    %v3542 = vand.u32 2147483647, %v3510
    %v3543 = vand.u32 2147483647, %v3511
    %v3544 = vand.u32 2147483647, %v3512
    %v3545 = vand.u32 2147483647, %v3513
    %v3546 = vand.u32 2147483647, %v3514
    %v3547 = vand.u32 2147483647, %v3515
    %v3548 = vsub.f32 0.0, %v3532
    %v3549 = vsub.f32 0.0, %v3533
    %v3550 = vsub.f32 0.0, %v3534
    %v3551 = vsub.f32 0.0, %v3535
    %v3552 = vsub.f32 0.0, %v3536
    %v3553 = vsub.f32 0.0, %v3537
    %v3554 = vsub.f32 0.0, %v3538
    %v3555 = vsub.f32 0.0, %v3539
    %v3556 = vsub.f32 0.0, %v3540
    %v3557 = vsub.f32 0.0, %v3541
    %v3558 = vsub.f32 0.0, %v3542
    %v3559 = vsub.f32 0.0, %v3543
    %v3560 = vsub.f32 0.0, %v3544
    %v3561 = vsub.f32 0.0, %v3545
    %v3562 = vsub.f32 0.0, %v3546
    %v3563 = vsub.f32 0.0, %v3547
    %v3564 = vmul.f32 %v3548, 1.442695
    %v3565 = vpow.pop %v3564
    %v3566 = vmul.f32 %v3549, 1.442695
    %v3567 = vpow.pop %v3566
    %v3568 = vmul.f32 %v3550, 1.442695
    %v3569 = vpow.pop %v3568
    %v3570 = vmul.f32 %v3551, 1.442695
    %v3571 = vpow.pop %v3570
    %v3572 = vmul.f32 %v3552, 1.442695
    %v3573 = vpow.pop %v3572
    %v3574 = vmul.f32 %v3553, 1.442695
    %v3575 = vpow.pop %v3574
    %v3576 = vmul.f32 %v3554, 1.442695
    %v3577 = vpow.pop %v3576
    %v3578 = vmul.f32 %v3555, 1.442695
    %v3579 = vpow.pop %v3578
    %v3580 = vmul.f32 %v3556, 1.442695
    %v3581 = vpow.pop %v3580
    %v3582 = vmul.f32 %v3557, 1.442695
    %v3583 = vpow.pop %v3582
    %v3584 = vmul.f32 %v3558, 1.442695
    %v3585 = vpow.pop %v3584
    %v3586 = vmul.f32 %v3559, 1.442695
    %v3587 = vpow.pop %v3586
    %v3588 = vmul.f32 %v3560, 1.442695
    %v3589 = vpow.pop %v3588
    %v3590 = vmul.f32 %v3561, 1.442695
    %v3591 = vpow.pop %v3590
    %v3592 = vmul.f32 %v3562, 1.442695
    %v3593 = vpow.pop %v3592
    %v3594 = vmul.f32 %v3563, 1.442695
    %v3595 = vpow.pop %v3594
    %v3596 = vadd.f32 %v3565, 1.0
    %v3597 = vadd.f32 %v3567, 1.0
    %v3598 = vadd.f32 %v3569, 1.0
    %v3599 = vadd.f32 %v3571, 1.0
    %v3600 = vadd.f32 %v3573, 1.0
    %v3601 = vadd.f32 %v3575, 1.0
    %v3602 = vadd.f32 %v3577, 1.0
    %v3603 = vadd.f32 %v3579, 1.0
    %v3604 = vadd.f32 %v3581, 1.0
    %v3605 = vadd.f32 %v3583, 1.0
    %v3606 = vadd.f32 %v3585, 1.0
    %v3607 = vadd.f32 %v3587, 1.0
    %v3608 = vadd.f32 %v3589, 1.0
    %v3609 = vadd.f32 %v3591, 1.0
    %v3610 = vadd.f32 %v3593, 1.0
    %v3611 = vadd.f32 %v3595, 1.0
    %v3612 = vlog2.pop %v3596
    %v3613 = vmul.f32 %v3612, 0.6931472
    %v3614 = vlog2.pop %v3597
    %v3615 = vmul.f32 %v3614, 0.6931472
    %v3616 = vlog2.pop %v3598
    %v3617 = vmul.f32 %v3616, 0.6931472
    %v3618 = vlog2.pop %v3599
    %v3619 = vmul.f32 %v3618, 0.6931472
    %v3620 = vlog2.pop %v3600
    %v3621 = vmul.f32 %v3620, 0.6931472
    %v3622 = vlog2.pop %v3601
    %v3623 = vmul.f32 %v3622, 0.6931472
    %v3624 = vlog2.pop %v3602
    %v3625 = vmul.f32 %v3624, 0.6931472
    %v3626 = vlog2.pop %v3603
    %v3627 = vmul.f32 %v3626, 0.6931472
    %v3628 = vlog2.pop %v3604
    %v3629 = vmul.f32 %v3628, 0.6931472
    %v3630 = vlog2.pop %v3605
    %v3631 = vmul.f32 %v3630, 0.6931472
    %v3632 = vlog2.pop %v3606
    %v3633 = vmul.f32 %v3632, 0.6931472
    %v3634 = vlog2.pop %v3607
    %v3635 = vmul.f32 %v3634, 0.6931472
    %v3636 = vlog2.pop %v3608
    %v3637 = vmul.f32 %v3636, 0.6931472
    %v3638 = vlog2.pop %v3609
    %v3639 = vmul.f32 %v3638, 0.6931472
    %v3640 = vlog2.pop %v3610
    %v3641 = vmul.f32 %v3640, 0.6931472
    %v3642 = vlog2.pop %v3611
    %v3643 = vmul.f32 %v3642, 0.6931472
    %v3644 = vsub.f32 %v3516, %v3613
    %v3645 = vsub.f32 %v3517, %v3615
    %v3646 = vsub.f32 %v3518, %v3617
    %v3647 = vsub.f32 %v3519, %v3619
    %v3648 = vsub.f32 %v3520, %v3621
    %v3649 = vsub.f32 %v3521, %v3623
    %v3650 = vsub.f32 %v3522, %v3625
    %v3651 = vsub.f32 %v3523, %v3627
    %v3652 = vsub.f32 %v3524, %v3629
    %v3653 = vsub.f32 %v3525, %v3631
    %v3654 = vsub.f32 %v3526, %v3633
    %v3655 = vsub.f32 %v3527, %v3635
    %v3656 = vsub.f32 %v3528, %v3637
    %v3657 = vsub.f32 %v3529, %v3639
    %v3658 = vsub.f32 %v3530, %v3641
    %v3659 = vsub.f32 %v3531, %v3643
    %3660 = vadd.xlane.f32.xlu0 %v3644
    %v3661 = vpop.xlane.xlu0 %3660
    %3662 = vadd.xlane.f32.xlu0 %v3645
    %v3663 = vpop.xlane.xlu0 %3662
    %3664 = vadd.xlane.f32.xlu0 %v3646
    %v3665 = vpop.xlane.xlu0 %3664
    %3666 = vadd.xlane.f32.xlu0 %v3647
    %v3667 = vpop.xlane.xlu0 %3666
    %3668 = vadd.xlane.f32.xlu0 %v3648
    %v3669 = vpop.xlane.xlu0 %3668
    %3670 = vadd.xlane.f32.xlu0 %v3649
    %v3671 = vpop.xlane.xlu0 %3670
    %3672 = vadd.xlane.f32.xlu0 %v3650
    %v3673 = vpop.xlane.xlu0 %3672
    %3674 = vadd.xlane.f32.xlu0 %v3651
    %v3675 = vpop.xlane.xlu0 %3674
    %3676 = vadd.xlane.f32.xlu0 %v3652
    %v3677 = vpop.xlane.xlu0 %3676
    %3678 = vadd.xlane.f32.xlu0 %v3653
    %v3679 = vpop.xlane.xlu0 %3678
    %3680 = vadd.xlane.f32.xlu0 %v3654
    %v3681 = vpop.xlane.xlu0 %3680
    %3682 = vadd.xlane.f32.xlu0 %v3655
    %v3683 = vpop.xlane.xlu0 %3682
    %3684 = vadd.xlane.f32.xlu0 %v3656
    %v3685 = vpop.xlane.xlu0 %3684
    %3686 = vadd.xlane.f32.xlu0 %v3657
    %v3687 = vpop.xlane.xlu0 %3686
    %3688 = vadd.xlane.f32.xlu0 %v3658
    %v3689 = vpop.xlane.xlu0 %3688
    %3690 = vadd.xlane.f32.xlu0 %v3659
    %v3691 = vpop.xlane.xlu0 %3690
    %v3692 = vmul.f32 %v3661, 1.442695
    %v3693 = vpow.pop %v3692
    %v3694 = vmul.f32 %v3663, 1.442695
    %v3695 = vpow.pop %v3694
    %v3696 = vmul.f32 %v3665, 1.442695
    %v3697 = vpow.pop %v3696
    %v3698 = vmul.f32 %v3667, 1.442695
    %v3699 = vpow.pop %v3698
    %v3700 = vmul.f32 %v3669, 1.442695
    %v3701 = vpow.pop %v3700
    %v3702 = vmul.f32 %v3671, 1.442695
    %v3703 = vpow.pop %v3702
    %v3704 = vmul.f32 %v3673, 1.442695
    %v3705 = vpow.pop %v3704
    %v3706 = vmul.f32 %v3675, 1.442695
    %v3707 = vpow.pop %v3706
    %v3708 = vmul.f32 %v3677, 1.442695
    %v3709 = vpow.pop %v3708
    %v3710 = vmul.f32 %v3679, 1.442695
    %v3711 = vpow.pop %v3710
    %v3712 = vmul.f32 %v3681, 1.442695
    %v3713 = vpow.pop %v3712
    %v3714 = vmul.f32 %v3683, 1.442695
    %v3715 = vpow.pop %v3714
    %v3716 = vmul.f32 %v3685, 1.442695
    %v3717 = vpow.pop %v3716
    %v3718 = vmul.f32 %v3687, 1.442695
    %v3719 = vpow.pop %v3718
    %v3720 = vmul.f32 %v3689, 1.442695
    %v3721 = vpow.pop %v3720
    %v3722 = vmul.f32 %v3691, 1.442695
    %v3723 = vpow.pop %v3722
    %v3724 = vadd.f32 %v3450, %v3693
    %v3725 = vadd.f32 %v3451, %v3695
    %v3726 = vadd.f32 %v3452, %v3697
    %v3727 = vadd.f32 %v3453, %v3699
    %v3728 = vadd.f32 %v3454, %v3701
    %v3729 = vadd.f32 %v3455, %v3703
    %v3730 = vadd.f32 %v3456, %v3705
    %v3731 = vadd.f32 %v3457, %v3707
    %v3732 = vadd.f32 %v3458, %v3709
    %v3733 = vadd.f32 %v3459, %v3711
    %v3734 = vadd.f32 %v3460, %v3713
    %v3735 = vadd.f32 %v3461, %v3715
    %v3736 = vadd.f32 %v3462, %v3717
    %v3737 = vadd.f32 %v3463, %v3719
    %v3738 = vadd.f32 %v3464, %v3721
    %v3739 = vadd.f32 %v3465, %v3723
    %s3740 = scalar_lea.vmem [#allocation8], 368
    %v3741 = vld [vmem:[%s3740] sm:$0xf]
    %v3742 = vld [vmem:[%s3740 + $0x4] sm:$0xf]
    %v3743 = vld [vmem:[%s3740 + $0x8] sm:$0xf]
    %v3744 = vld [vmem:[%s3740 + $0xc] sm:$0xf]
    %v3745 = vunpack.c.l.bf16 %v3741
    %v3746 = vunpack.c.l.bf16 %v3742
    %v3747 = vunpack.c.l.bf16 %v3743
    %v3748 = vunpack.c.l.bf16 %v3744
    %s3749 = scalar_lea.vmem [#allocation8], 448
    %v3750 = vld [vmem:[%s3749] sm:$0xf]
    %v3751 = vld [vmem:[%s3749 + $0x4] sm:$0xf]
    %v3752 = vld [vmem:[%s3749 + $0x8] sm:$0xf]
    %v3753 = vld [vmem:[%s3749 + $0xc] sm:$0xf]
    %v3754 = vunpack.c.l.bf16 %v3750
    %v3755 = vunpack.c.l.bf16 %v3751
    %v3756 = vunpack.c.l.bf16 %v3752
    %v3757 = vunpack.c.l.bf16 %v3753
    %v3758 = vmul.f32 %v90, %v3745
    %v3759 = vmul.f32 %v90, %v3746
    %v3760 = vmul.f32 %v90, %v3747
    %v3761 = vmul.f32 %v90, %v3748
    %v3762 = vmul.f32 %v94, %v3745
    %v3763 = vmul.f32 %v94, %v3746
    %v3764 = vmul.f32 %v94, %v3747
    %v3765 = vmul.f32 %v94, %v3748
    %v3766 = vmul.f32 %v98, %v3745
    %v3767 = vmul.f32 %v98, %v3746
    %v3768 = vmul.f32 %v98, %v3747
    %v3769 = vmul.f32 %v98, %v3748
    %v3770 = vmul.f32 %v102, %v3745
    %v3771 = vmul.f32 %v102, %v3746
    %v3772 = vmul.f32 %v102, %v3747
    %v3773 = vmul.f32 %v102, %v3748
    %v3774 = vsub.f32 %v3758, %v3754
    %v3775 = vsub.f32 %v3759, %v3755
    %v3776 = vsub.f32 %v3760, %v3756
    %v3777 = vsub.f32 %v3761, %v3757
    %v3778 = vsub.f32 %v3762, %v3754
    %v3779 = vsub.f32 %v3763, %v3755
    %v3780 = vsub.f32 %v3764, %v3756
    %v3781 = vsub.f32 %v3765, %v3757
    %v3782 = vsub.f32 %v3766, %v3754
    %v3783 = vsub.f32 %v3767, %v3755
    %v3784 = vsub.f32 %v3768, %v3756
    %v3785 = vsub.f32 %v3769, %v3757
    %v3786 = vsub.f32 %v3770, %v3754
    %v3787 = vsub.f32 %v3771, %v3755
    %v3788 = vsub.f32 %v3772, %v3756
    %v3789 = vsub.f32 %v3773, %v3757
    %v3790 = vmin.f32 %v3774, 0.0
    %v3791 = vmin.f32 %v3775, 0.0
    %v3792 = vmin.f32 %v3776, 0.0
    %v3793 = vmin.f32 %v3777, 0.0
    %v3794 = vmin.f32 %v3778, 0.0
    %v3795 = vmin.f32 %v3779, 0.0
    %v3796 = vmin.f32 %v3780, 0.0
    %v3797 = vmin.f32 %v3781, 0.0
    %v3798 = vmin.f32 %v3782, 0.0
    %v3799 = vmin.f32 %v3783, 0.0
    %v3800 = vmin.f32 %v3784, 0.0
    %v3801 = vmin.f32 %v3785, 0.0
    %v3802 = vmin.f32 %v3786, 0.0
    %v3803 = vmin.f32 %v3787, 0.0
    %v3804 = vmin.f32 %v3788, 0.0
    %v3805 = vmin.f32 %v3789, 0.0
    %v3806 = vand.u32 2147483647, %v3774
    %v3807 = vand.u32 2147483647, %v3775
    %v3808 = vand.u32 2147483647, %v3776
    %v3809 = vand.u32 2147483647, %v3777
    %v3810 = vand.u32 2147483647, %v3778
    %v3811 = vand.u32 2147483647, %v3779
    %v3812 = vand.u32 2147483647, %v3780
    %v3813 = vand.u32 2147483647, %v3781
    %v3814 = vand.u32 2147483647, %v3782
    %v3815 = vand.u32 2147483647, %v3783
    %v3816 = vand.u32 2147483647, %v3784
    %v3817 = vand.u32 2147483647, %v3785
    %v3818 = vand.u32 2147483647, %v3786
    %v3819 = vand.u32 2147483647, %v3787
    %v3820 = vand.u32 2147483647, %v3788
    %v3821 = vand.u32 2147483647, %v3789
    %v3822 = vsub.f32 0.0, %v3806
    %v3823 = vsub.f32 0.0, %v3807
    %v3824 = vsub.f32 0.0, %v3808
    %v3825 = vsub.f32 0.0, %v3809
    %v3826 = vsub.f32 0.0, %v3810
    %v3827 = vsub.f32 0.0, %v3811
    %v3828 = vsub.f32 0.0, %v3812
    %v3829 = vsub.f32 0.0, %v3813
    %v3830 = vsub.f32 0.0, %v3814
    %v3831 = vsub.f32 0.0, %v3815
    %v3832 = vsub.f32 0.0, %v3816
    %v3833 = vsub.f32 0.0, %v3817
    %v3834 = vsub.f32 0.0, %v3818
    %v3835 = vsub.f32 0.0, %v3819
    %v3836 = vsub.f32 0.0, %v3820
    %v3837 = vsub.f32 0.0, %v3821
    %v3838 = vmul.f32 %v3822, 1.442695
    %v3839 = vpow.pop %v3838
    %v3840 = vmul.f32 %v3823, 1.442695
    %v3841 = vpow.pop %v3840
    %v3842 = vmul.f32 %v3824, 1.442695
    %v3843 = vpow.pop %v3842
    %v3844 = vmul.f32 %v3825, 1.442695
    %v3845 = vpow.pop %v3844
    %v3846 = vmul.f32 %v3826, 1.442695
    %v3847 = vpow.pop %v3846
    %v3848 = vmul.f32 %v3827, 1.442695
    %v3849 = vpow.pop %v3848
    %v3850 = vmul.f32 %v3828, 1.442695
    %v3851 = vpow.pop %v3850
    %v3852 = vmul.f32 %v3829, 1.442695
    %v3853 = vpow.pop %v3852
    %v3854 = vmul.f32 %v3830, 1.442695
    %v3855 = vpow.pop %v3854
    %v3856 = vmul.f32 %v3831, 1.442695
    %v3857 = vpow.pop %v3856
    %v3858 = vmul.f32 %v3832, 1.442695
    %v3859 = vpow.pop %v3858
    %v3860 = vmul.f32 %v3833, 1.442695
    %v3861 = vpow.pop %v3860
    %v3862 = vmul.f32 %v3834, 1.442695
    %v3863 = vpow.pop %v3862
    %v3864 = vmul.f32 %v3835, 1.442695
    %v3865 = vpow.pop %v3864
    %v3866 = vmul.f32 %v3836, 1.442695
    %v3867 = vpow.pop %v3866
    %v3868 = vmul.f32 %v3837, 1.442695
    %v3869 = vpow.pop %v3868
    %v3870 = vadd.f32 %v3839, 1.0
    %v3871 = vadd.f32 %v3841, 1.0
    %v3872 = vadd.f32 %v3843, 1.0
    %v3873 = vadd.f32 %v3845, 1.0
    %v3874 = vadd.f32 %v3847, 1.0
    %v3875 = vadd.f32 %v3849, 1.0
    %v3876 = vadd.f32 %v3851, 1.0
    %v3877 = vadd.f32 %v3853, 1.0
    %v3878 = vadd.f32 %v3855, 1.0
    %v3879 = vadd.f32 %v3857, 1.0
    %v3880 = vadd.f32 %v3859, 1.0
    %v3881 = vadd.f32 %v3861, 1.0
    %v3882 = vadd.f32 %v3863, 1.0
    %v3883 = vadd.f32 %v3865, 1.0
    %v3884 = vadd.f32 %v3867, 1.0
    %v3885 = vadd.f32 %v3869, 1.0
    %v3886 = vlog2.pop %v3870
    %v3887 = vmul.f32 %v3886, 0.6931472
    %v3888 = vlog2.pop %v3871
    %v3889 = vmul.f32 %v3888, 0.6931472
    %v3890 = vlog2.pop %v3872
    %v3891 = vmul.f32 %v3890, 0.6931472
    %v3892 = vlog2.pop %v3873
    %v3893 = vmul.f32 %v3892, 0.6931472
    %v3894 = vlog2.pop %v3874
    %v3895 = vmul.f32 %v3894, 0.6931472
    %v3896 = vlog2.pop %v3875
    %v3897 = vmul.f32 %v3896, 0.6931472
    %v3898 = vlog2.pop %v3876
    %v3899 = vmul.f32 %v3898, 0.6931472
    %v3900 = vlog2.pop %v3877
    %v3901 = vmul.f32 %v3900, 0.6931472
    %v3902 = vlog2.pop %v3878
    %v3903 = vmul.f32 %v3902, 0.6931472
    %v3904 = vlog2.pop %v3879
    %v3905 = vmul.f32 %v3904, 0.6931472
    %v3906 = vlog2.pop %v3880
    %v3907 = vmul.f32 %v3906, 0.6931472
    %v3908 = vlog2.pop %v3881
    %v3909 = vmul.f32 %v3908, 0.6931472
    %v3910 = vlog2.pop %v3882
    %v3911 = vmul.f32 %v3910, 0.6931472
    %v3912 = vlog2.pop %v3883
    %v3913 = vmul.f32 %v3912, 0.6931472
    %v3914 = vlog2.pop %v3884
    %v3915 = vmul.f32 %v3914, 0.6931472
    %v3916 = vlog2.pop %v3885
    %v3917 = vmul.f32 %v3916, 0.6931472
    %v3918 = vsub.f32 %v3790, %v3887
    %v3919 = vsub.f32 %v3791, %v3889
    %v3920 = vsub.f32 %v3792, %v3891
    %v3921 = vsub.f32 %v3793, %v3893
    %v3922 = vsub.f32 %v3794, %v3895
    %v3923 = vsub.f32 %v3795, %v3897
    %v3924 = vsub.f32 %v3796, %v3899
    %v3925 = vsub.f32 %v3797, %v3901
    %v3926 = vsub.f32 %v3798, %v3903
    %v3927 = vsub.f32 %v3799, %v3905
    %v3928 = vsub.f32 %v3800, %v3907
    %v3929 = vsub.f32 %v3801, %v3909
    %v3930 = vsub.f32 %v3802, %v3911
    %v3931 = vsub.f32 %v3803, %v3913
    %v3932 = vsub.f32 %v3804, %v3915
    %v3933 = vsub.f32 %v3805, %v3917
    %3934 = vadd.xlane.f32.xlu0 %v3918
    %v3935 = vpop.xlane.xlu0 %3934
    %3936 = vadd.xlane.f32.xlu0 %v3919
    %v3937 = vpop.xlane.xlu0 %3936
    %3938 = vadd.xlane.f32.xlu0 %v3920
    %v3939 = vpop.xlane.xlu0 %3938
    %3940 = vadd.xlane.f32.xlu0 %v3921
    %v3941 = vpop.xlane.xlu0 %3940
    %3942 = vadd.xlane.f32.xlu0 %v3922
    %v3943 = vpop.xlane.xlu0 %3942
    %3944 = vadd.xlane.f32.xlu0 %v3923
    %v3945 = vpop.xlane.xlu0 %3944
    %3946 = vadd.xlane.f32.xlu0 %v3924
    %v3947 = vpop.xlane.xlu0 %3946
    %3948 = vadd.xlane.f32.xlu0 %v3925
    %v3949 = vpop.xlane.xlu0 %3948
    %3950 = vadd.xlane.f32.xlu0 %v3926
    %v3951 = vpop.xlane.xlu0 %3950
    %3952 = vadd.xlane.f32.xlu0 %v3927
    %v3953 = vpop.xlane.xlu0 %3952
    %3954 = vadd.xlane.f32.xlu0 %v3928
    %v3955 = vpop.xlane.xlu0 %3954
    %3956 = vadd.xlane.f32.xlu0 %v3929
    %v3957 = vpop.xlane.xlu0 %3956
    %3958 = vadd.xlane.f32.xlu0 %v3930
    %v3959 = vpop.xlane.xlu0 %3958
    %3960 = vadd.xlane.f32.xlu0 %v3931
    %v3961 = vpop.xlane.xlu0 %3960
    %3962 = vadd.xlane.f32.xlu0 %v3932
    %v3963 = vpop.xlane.xlu0 %3962
    %3964 = vadd.xlane.f32.xlu0 %v3933
    %v3965 = vpop.xlane.xlu0 %3964
    %v3966 = vmul.f32 %v3935, 1.442695
    %v3967 = vpow.pop %v3966
    %v3968 = vmul.f32 %v3937, 1.442695
    %v3969 = vpow.pop %v3968
    %v3970 = vmul.f32 %v3939, 1.442695
    %v3971 = vpow.pop %v3970
    %v3972 = vmul.f32 %v3941, 1.442695
    %v3973 = vpow.pop %v3972
    %v3974 = vmul.f32 %v3943, 1.442695
    %v3975 = vpow.pop %v3974
    %v3976 = vmul.f32 %v3945, 1.442695
    %v3977 = vpow.pop %v3976
    %v3978 = vmul.f32 %v3947, 1.442695
    %v3979 = vpow.pop %v3978
    %v3980 = vmul.f32 %v3949, 1.442695
    %v3981 = vpow.pop %v3980
    %v3982 = vmul.f32 %v3951, 1.442695
    %v3983 = vpow.pop %v3982
    %v3984 = vmul.f32 %v3953, 1.442695
    %v3985 = vpow.pop %v3984
    %v3986 = vmul.f32 %v3955, 1.442695
    %v3987 = vpow.pop %v3986
    %v3988 = vmul.f32 %v3957, 1.442695
    %v3989 = vpow.pop %v3988
    %v3990 = vmul.f32 %v3959, 1.442695
    %v3991 = vpow.pop %v3990
    %v3992 = vmul.f32 %v3961, 1.442695
    %v3993 = vpow.pop %v3992
    %v3994 = vmul.f32 %v3963, 1.442695
    %v3995 = vpow.pop %v3994
    %v3996 = vmul.f32 %v3965, 1.442695
    %v3997 = vpow.pop %v3996
    %v3998 = vadd.f32 %v3724, %v3967
    %v3999 = vadd.f32 %v3725, %v3969
    %v4000 = vadd.f32 %v3726, %v3971
    %v4001 = vadd.f32 %v3727, %v3973
    %v4002 = vadd.f32 %v3728, %v3975
    %v4003 = vadd.f32 %v3729, %v3977
    %v4004 = vadd.f32 %v3730, %v3979
    %v4005 = vadd.f32 %v3731, %v3981
    %v4006 = vadd.f32 %v3732, %v3983
    %v4007 = vadd.f32 %v3733, %v3985
    %v4008 = vadd.f32 %v3734, %v3987
    %v4009 = vadd.f32 %v3735, %v3989
    %v4010 = vadd.f32 %v3736, %v3991
    %v4011 = vadd.f32 %v3737, %v3993
    %v4012 = vadd.f32 %v3738, %v3995
    %v4013 = vadd.f32 %v3739, %v3997
    %s4014 = scalar_lea.vmem [#allocation8], 384
    %v4015 = vld [vmem:[%s4014] sm:$0xf]
    %v4016 = vld [vmem:[%s4014 + $0x4] sm:$0xf]
    %v4017 = vld [vmem:[%s4014 + $0x8] sm:$0xf]
    %v4018 = vld [vmem:[%s4014 + $0xc] sm:$0xf]
    %v4019 = vunpack.c.l.bf16 %v4015
    %v4020 = vunpack.c.l.bf16 %v4016
    %v4021 = vunpack.c.l.bf16 %v4017
    %v4022 = vunpack.c.l.bf16 %v4018
    %s4023 = scalar_lea.vmem [#allocation8], 464
    %v4024 = vld [vmem:[%s4023] sm:$0xf]
    %v4025 = vld [vmem:[%s4023 + $0x4] sm:$0xf]
    %v4026 = vld [vmem:[%s4023 + $0x8] sm:$0xf]
    %v4027 = vld [vmem:[%s4023 + $0xc] sm:$0xf]
    %v4028 = vunpack.c.l.bf16 %v4024
    %v4029 = vunpack.c.l.bf16 %v4025
    %v4030 = vunpack.c.l.bf16 %v4026
    %v4031 = vunpack.c.l.bf16 %v4027
    %v4032 = vmul.f32 %v90, %v4019
    %v4033 = vmul.f32 %v90, %v4020
    %v4034 = vmul.f32 %v90, %v4021
    %v4035 = vmul.f32 %v90, %v4022
    %v4036 = vmul.f32 %v94, %v4019
    %v4037 = vmul.f32 %v94, %v4020
    %v4038 = vmul.f32 %v94, %v4021
    %v4039 = vmul.f32 %v94, %v4022
    %v4040 = vmul.f32 %v98, %v4019
    %v4041 = vmul.f32 %v98, %v4020
    %v4042 = vmul.f32 %v98, %v4021
    %v4043 = vmul.f32 %v98, %v4022
    %v4044 = vmul.f32 %v102, %v4019
    %v4045 = vmul.f32 %v102, %v4020
    %v4046 = vmul.f32 %v102, %v4021
    %v4047 = vmul.f32 %v102, %v4022
    %v4048 = vsub.f32 %v4032, %v4028
    %v4049 = vsub.f32 %v4033, %v4029
    %v4050 = vsub.f32 %v4034, %v4030
    %v4051 = vsub.f32 %v4035, %v4031
    %v4052 = vsub.f32 %v4036, %v4028
    %v4053 = vsub.f32 %v4037, %v4029
    %v4054 = vsub.f32 %v4038, %v4030
    %v4055 = vsub.f32 %v4039, %v4031
    %v4056 = vsub.f32 %v4040, %v4028
    %v4057 = vsub.f32 %v4041, %v4029
    %v4058 = vsub.f32 %v4042, %v4030
    %v4059 = vsub.f32 %v4043, %v4031
    %v4060 = vsub.f32 %v4044, %v4028
    %v4061 = vsub.f32 %v4045, %v4029
    %v4062 = vsub.f32 %v4046, %v4030
    %v4063 = vsub.f32 %v4047, %v4031
    %v4064 = vmin.f32 %v4048, 0.0
    %v4065 = vmin.f32 %v4049, 0.0
    %v4066 = vmin.f32 %v4050, 0.0
    %v4067 = vmin.f32 %v4051, 0.0
    %v4068 = vmin.f32 %v4052, 0.0
    %v4069 = vmin.f32 %v4053, 0.0
    %v4070 = vmin.f32 %v4054, 0.0
    %v4071 = vmin.f32 %v4055, 0.0
    %v4072 = vmin.f32 %v4056, 0.0
    %v4073 = vmin.f32 %v4057, 0.0
    %v4074 = vmin.f32 %v4058, 0.0
    %v4075 = vmin.f32 %v4059, 0.0
    %v4076 = vmin.f32 %v4060, 0.0
    %v4077 = vmin.f32 %v4061, 0.0
    %v4078 = vmin.f32 %v4062, 0.0
    %v4079 = vmin.f32 %v4063, 0.0
    %v4080 = vand.u32 2147483647, %v4048
    %v4081 = vand.u32 2147483647, %v4049
    %v4082 = vand.u32 2147483647, %v4050
    %v4083 = vand.u32 2147483647, %v4051
    %v4084 = vand.u32 2147483647, %v4052
    %v4085 = vand.u32 2147483647, %v4053
    %v4086 = vand.u32 2147483647, %v4054
    %v4087 = vand.u32 2147483647, %v4055
    %v4088 = vand.u32 2147483647, %v4056
    %v4089 = vand.u32 2147483647, %v4057
    %v4090 = vand.u32 2147483647, %v4058
    %v4091 = vand.u32 2147483647, %v4059
    %v4092 = vand.u32 2147483647, %v4060
    %v4093 = vand.u32 2147483647, %v4061
    %v4094 = vand.u32 2147483647, %v4062
    %v4095 = vand.u32 2147483647, %v4063
    %v4096 = vsub.f32 0.0, %v4080
    %v4097 = vsub.f32 0.0, %v4081
    %v4098 = vsub.f32 0.0, %v4082
    %v4099 = vsub.f32 0.0, %v4083
    %v4100 = vsub.f32 0.0, %v4084
    %v4101 = vsub.f32 0.0, %v4085
    %v4102 = vsub.f32 0.0, %v4086
    %v4103 = vsub.f32 0.0, %v4087
    %v4104 = vsub.f32 0.0, %v4088
    %v4105 = vsub.f32 0.0, %v4089
    %v4106 = vsub.f32 0.0, %v4090
    %v4107 = vsub.f32 0.0, %v4091
    %v4108 = vsub.f32 0.0, %v4092
    %v4109 = vsub.f32 0.0, %v4093
    %v4110 = vsub.f32 0.0, %v4094
    %v4111 = vsub.f32 0.0, %v4095
    %v4112 = vmul.f32 %v4096, 1.442695
    %v4113 = vpow.pop %v4112
    %v4114 = vmul.f32 %v4097, 1.442695
    %v4115 = vpow.pop %v4114
    %v4116 = vmul.f32 %v4098, 1.442695
    %v4117 = vpow.pop %v4116
    %v4118 = vmul.f32 %v4099, 1.442695
    %v4119 = vpow.pop %v4118
    %v4120 = vmul.f32 %v4100, 1.442695
    %v4121 = vpow.pop %v4120
    %v4122 = vmul.f32 %v4101, 1.442695
    %v4123 = vpow.pop %v4122
    %v4124 = vmul.f32 %v4102, 1.442695
    %v4125 = vpow.pop %v4124
    %v4126 = vmul.f32 %v4103, 1.442695
    %v4127 = vpow.pop %v4126
    %v4128 = vmul.f32 %v4104, 1.442695
    %v4129 = vpow.pop %v4128
    %v4130 = vmul.f32 %v4105, 1.442695
    %v4131 = vpow.pop %v4130
    %v4132 = vmul.f32 %v4106, 1.442695
    %v4133 = vpow.pop %v4132
    %v4134 = vmul.f32 %v4107, 1.442695
    %v4135 = vpow.pop %v4134
    %v4136 = vmul.f32 %v4108, 1.442695
    %v4137 = vpow.pop %v4136
    %v4138 = vmul.f32 %v4109, 1.442695
    %v4139 = vpow.pop %v4138
    %v4140 = vmul.f32 %v4110, 1.442695
    %v4141 = vpow.pop %v4140
    %v4142 = vmul.f32 %v4111, 1.442695
    %v4143 = vpow.pop %v4142
    %v4144 = vadd.f32 %v4113, 1.0
    %v4145 = vadd.f32 %v4115, 1.0
    %v4146 = vadd.f32 %v4117, 1.0
    %v4147 = vadd.f32 %v4119, 1.0
    %v4148 = vadd.f32 %v4121, 1.0
    %v4149 = vadd.f32 %v4123, 1.0
    %v4150 = vadd.f32 %v4125, 1.0
    %v4151 = vadd.f32 %v4127, 1.0
    %v4152 = vadd.f32 %v4129, 1.0
    %v4153 = vadd.f32 %v4131, 1.0
    %v4154 = vadd.f32 %v4133, 1.0
    %v4155 = vadd.f32 %v4135, 1.0
    %v4156 = vadd.f32 %v4137, 1.0
    %v4157 = vadd.f32 %v4139, 1.0
    %v4158 = vadd.f32 %v4141, 1.0
    %v4159 = vadd.f32 %v4143, 1.0
    %v4160 = vlog2.pop %v4144
    %v4161 = vmul.f32 %v4160, 0.6931472
    %v4162 = vlog2.pop %v4145
    %v4163 = vmul.f32 %v4162, 0.6931472
    %v4164 = vlog2.pop %v4146
    %v4165 = vmul.f32 %v4164, 0.6931472
    %v4166 = vlog2.pop %v4147
    %v4167 = vmul.f32 %v4166, 0.6931472
    %v4168 = vlog2.pop %v4148
    %v4169 = vmul.f32 %v4168, 0.6931472
    %v4170 = vlog2.pop %v4149
    %v4171 = vmul.f32 %v4170, 0.6931472
    %v4172 = vlog2.pop %v4150
    %v4173 = vmul.f32 %v4172, 0.6931472
    %v4174 = vlog2.pop %v4151
    %v4175 = vmul.f32 %v4174, 0.6931472
    %v4176 = vlog2.pop %v4152
    %v4177 = vmul.f32 %v4176, 0.6931472
    %v4178 = vlog2.pop %v4153
    %v4179 = vmul.f32 %v4178, 0.6931472
    %v4180 = vlog2.pop %v4154
    %v4181 = vmul.f32 %v4180, 0.6931472
    %v4182 = vlog2.pop %v4155
    %v4183 = vmul.f32 %v4182, 0.6931472
    %v4184 = vlog2.pop %v4156
    %v4185 = vmul.f32 %v4184, 0.6931472
    %v4186 = vlog2.pop %v4157
    %v4187 = vmul.f32 %v4186, 0.6931472
    %v4188 = vlog2.pop %v4158
    %v4189 = vmul.f32 %v4188, 0.6931472
    %v4190 = vlog2.pop %v4159
    %v4191 = vmul.f32 %v4190, 0.6931472
    %v4192 = vsub.f32 %v4064, %v4161
    %v4193 = vsub.f32 %v4065, %v4163
    %v4194 = vsub.f32 %v4066, %v4165
    %v4195 = vsub.f32 %v4067, %v4167
    %v4196 = vsub.f32 %v4068, %v4169
    %v4197 = vsub.f32 %v4069, %v4171
    %v4198 = vsub.f32 %v4070, %v4173
    %v4199 = vsub.f32 %v4071, %v4175
    %v4200 = vsub.f32 %v4072, %v4177
    %v4201 = vsub.f32 %v4073, %v4179
    %v4202 = vsub.f32 %v4074, %v4181
    %v4203 = vsub.f32 %v4075, %v4183
    %v4204 = vsub.f32 %v4076, %v4185
    %v4205 = vsub.f32 %v4077, %v4187
    %v4206 = vsub.f32 %v4078, %v4189
    %v4207 = vsub.f32 %v4079, %v4191
    %4208 = vadd.xlane.f32.xlu0 %v4192
    %v4209 = vpop.xlane.xlu0 %4208
    %4210 = vadd.xlane.f32.xlu0 %v4193
    %v4211 = vpop.xlane.xlu0 %4210
    %4212 = vadd.xlane.f32.xlu0 %v4194
    %v4213 = vpop.xlane.xlu0 %4212
    %4214 = vadd.xlane.f32.xlu0 %v4195
    %v4215 = vpop.xlane.xlu0 %4214
    %4216 = vadd.xlane.f32.xlu0 %v4196
    %v4217 = vpop.xlane.xlu0 %4216
    %4218 = vadd.xlane.f32.xlu0 %v4197
    %v4219 = vpop.xlane.xlu0 %4218
    %4220 = vadd.xlane.f32.xlu0 %v4198
    %v4221 = vpop.xlane.xlu0 %4220
    %4222 = vadd.xlane.f32.xlu0 %v4199
    %v4223 = vpop.xlane.xlu0 %4222
    %4224 = vadd.xlane.f32.xlu0 %v4200
    %v4225 = vpop.xlane.xlu0 %4224
    %4226 = vadd.xlane.f32.xlu0 %v4201
    %v4227 = vpop.xlane.xlu0 %4226
    %4228 = vadd.xlane.f32.xlu0 %v4202
    %v4229 = vpop.xlane.xlu0 %4228
    %4230 = vadd.xlane.f32.xlu0 %v4203
    %v4231 = vpop.xlane.xlu0 %4230
    %4232 = vadd.xlane.f32.xlu0 %v4204
    %v4233 = vpop.xlane.xlu0 %4232
    %4234 = vadd.xlane.f32.xlu0 %v4205
    %v4235 = vpop.xlane.xlu0 %4234
    %4236 = vadd.xlane.f32.xlu0 %v4206
    %v4237 = vpop.xlane.xlu0 %4236
    %4238 = vadd.xlane.f32.xlu0 %v4207
    %v4239 = vpop.xlane.xlu0 %4238
    %v4240 = vmul.f32 %v4209, 1.442695
    %v4241 = vpow.pop %v4240
    %v4242 = vmul.f32 %v4211, 1.442695
    %v4243 = vpow.pop %v4242
    %v4244 = vmul.f32 %v4213, 1.442695
    %v4245 = vpow.pop %v4244
    %v4246 = vmul.f32 %v4215, 1.442695
    %v4247 = vpow.pop %v4246
    %v4248 = vmul.f32 %v4217, 1.442695
    %v4249 = vpow.pop %v4248
    %v4250 = vmul.f32 %v4219, 1.442695
    %v4251 = vpow.pop %v4250
    %v4252 = vmul.f32 %v4221, 1.442695
    %v4253 = vpow.pop %v4252
    %v4254 = vmul.f32 %v4223, 1.442695
    %v4255 = vpow.pop %v4254
    %v4256 = vmul.f32 %v4225, 1.442695
    %v4257 = vpow.pop %v4256
    %v4258 = vmul.f32 %v4227, 1.442695
    %v4259 = vpow.pop %v4258
    %v4260 = vmul.f32 %v4229, 1.442695
    %v4261 = vpow.pop %v4260
    %v4262 = vmul.f32 %v4231, 1.442695
    %v4263 = vpow.pop %v4262
    %v4264 = vmul.f32 %v4233, 1.442695
    %v4265 = vpow.pop %v4264
    %v4266 = vmul.f32 %v4235, 1.442695
    %v4267 = vpow.pop %v4266
    %v4268 = vmul.f32 %v4237, 1.442695
    %v4269 = vpow.pop %v4268
    %v4270 = vmul.f32 %v4239, 1.442695
    %v4271 = vpow.pop %v4270
    %v4272 = vadd.f32 %v3998, %v4241
    %v4273 = vadd.f32 %v3999, %v4243
    %v4274 = vadd.f32 %v4000, %v4245
    %v4275 = vadd.f32 %v4001, %v4247
    %v4276 = vadd.f32 %v4002, %v4249
    %v4277 = vadd.f32 %v4003, %v4251
    %v4278 = vadd.f32 %v4004, %v4253
    %v4279 = vadd.f32 %v4005, %v4255
    %v4280 = vadd.f32 %v4006, %v4257
    %v4281 = vadd.f32 %v4007, %v4259
    %v4282 = vadd.f32 %v4008, %v4261
    %v4283 = vadd.f32 %v4009, %v4263
    %v4284 = vadd.f32 %v4010, %v4265
    %v4285 = vadd.f32 %v4011, %v4267
    %v4286 = vadd.f32 %v4012, %v4269
    %v4287 = vadd.f32 %v4013, %v4271
    %s4288 = sld [smem:[#allocation2 + $0x2]]
    %s4289 = sld [smem:[#allocation7 + $0x2]]
    %v4290 = vstv %s4289
    %v4291 = vsub.f32 %v4272, %v4290
    %v4292 = vsub.f32 %v4273, %v4290
    %v4293 = vsub.f32 %v4274, %v4290
    %v4294 = vsub.f32 %v4275, %v4290
    %v4295 = vsub.f32 %v4276, %v4290
    %v4296 = vsub.f32 %v4277, %v4290
    %v4297 = vsub.f32 %v4278, %v4290
    %v4298 = vsub.f32 %v4279, %v4290
    %v4299 = vsub.f32 %v4280, %v4290
    %v4300 = vsub.f32 %v4281, %v4290
    %v4301 = vsub.f32 %v4282, %v4290
    %v4302 = vsub.f32 %v4283, %v4290
    %v4303 = vsub.f32 %v4284, %v4290
    %v4304 = vsub.f32 %v4285, %v4290
    %v4305 = vsub.f32 %v4286, %v4290
    %v4306 = vsub.f32 %v4287, %v4290
    %v4307 = vstv %s4288
    %v4308 = vmul.f32 %v4307, %v4291
    %v4309 = vmul.f32 %v4307, %v4292
    %v4310 = vmul.f32 %v4307, %v4293
    %v4311 = vmul.f32 %v4307, %v4294
    %v4312 = vmul.f32 %v4307, %v4295
    %v4313 = vmul.f32 %v4307, %v4296
    %v4314 = vmul.f32 %v4307, %v4297
    %v4315 = vmul.f32 %v4307, %v4298
    %v4316 = vmul.f32 %v4307, %v4299
    %v4317 = vmul.f32 %v4307, %v4300
    %v4318 = vmul.f32 %v4307, %v4301
    %v4319 = vmul.f32 %v4307, %v4302
    %v4320 = vmul.f32 %v4307, %v4303
    %v4321 = vmul.f32 %v4307, %v4304
    %v4322 = vmul.f32 %v4307, %v4305
    %v4323 = vmul.f32 %v4307, %v4306
    %s4324 = scalar_lea.vmem [#allocation8], 480
    %v4325 = vld [vmem:[%s4324] sm:$0xf]
    %v4326 = vld [vmem:[%s4324 + $0x4] sm:$0xf]
    %v4327 = vld [vmem:[%s4324 + $0x8] sm:$0xf]
    %v4328 = vld [vmem:[%s4324 + $0xc] sm:$0xf]
    %v4329 = vunpack.c.l.bf16 %v4325
    %v4330 = vunpack.c.l.bf16 %v4326
    %v4331 = vunpack.c.l.bf16 %v4327
    %v4332 = vunpack.c.l.bf16 %v4328
    %s4333 = scalar_lea.vmem [#allocation8], 560
    %v4334 = vld [vmem:[%s4333] sm:$0xf]
    %v4335 = vld [vmem:[%s4333 + $0x4] sm:$0xf]
    %v4336 = vld [vmem:[%s4333 + $0x8] sm:$0xf]
    %v4337 = vld [vmem:[%s4333 + $0xc] sm:$0xf]
    %v4338 = vunpack.c.l.bf16 %v4334
    %v4339 = vunpack.c.l.bf16 %v4335
    %v4340 = vunpack.c.l.bf16 %v4336
    %v4341 = vunpack.c.l.bf16 %v4337
    %v4342 = vmul.f32 %v90, %v4329
    %v4343 = vmul.f32 %v90, %v4330
    %v4344 = vmul.f32 %v90, %v4331
    %v4345 = vmul.f32 %v90, %v4332
    %v4346 = vmul.f32 %v94, %v4329
    %v4347 = vmul.f32 %v94, %v4330
    %v4348 = vmul.f32 %v94, %v4331
    %v4349 = vmul.f32 %v94, %v4332
    %v4350 = vmul.f32 %v98, %v4329
    %v4351 = vmul.f32 %v98, %v4330
    %v4352 = vmul.f32 %v98, %v4331
    %v4353 = vmul.f32 %v98, %v4332
    %v4354 = vmul.f32 %v102, %v4329
    %v4355 = vmul.f32 %v102, %v4330
    %v4356 = vmul.f32 %v102, %v4331
    %v4357 = vmul.f32 %v102, %v4332
    %v4358 = vsub.f32 %v4342, %v4338
    %v4359 = vsub.f32 %v4343, %v4339
    %v4360 = vsub.f32 %v4344, %v4340
    %v4361 = vsub.f32 %v4345, %v4341
    %v4362 = vsub.f32 %v4346, %v4338
    %v4363 = vsub.f32 %v4347, %v4339
    %v4364 = vsub.f32 %v4348, %v4340
    %v4365 = vsub.f32 %v4349, %v4341
    %v4366 = vsub.f32 %v4350, %v4338
    %v4367 = vsub.f32 %v4351, %v4339
    %v4368 = vsub.f32 %v4352, %v4340
    %v4369 = vsub.f32 %v4353, %v4341
    %v4370 = vsub.f32 %v4354, %v4338
    %v4371 = vsub.f32 %v4355, %v4339
    %v4372 = vsub.f32 %v4356, %v4340
    %v4373 = vsub.f32 %v4357, %v4341
    %v4374 = vmin.f32 %v4358, 0.0
    %v4375 = vmin.f32 %v4359, 0.0
    %v4376 = vmin.f32 %v4360, 0.0
    %v4377 = vmin.f32 %v4361, 0.0
    %v4378 = vmin.f32 %v4362, 0.0
    %v4379 = vmin.f32 %v4363, 0.0
    %v4380 = vmin.f32 %v4364, 0.0
    %v4381 = vmin.f32 %v4365, 0.0
    %v4382 = vmin.f32 %v4366, 0.0
    %v4383 = vmin.f32 %v4367, 0.0
    %v4384 = vmin.f32 %v4368, 0.0
    %v4385 = vmin.f32 %v4369, 0.0
    %v4386 = vmin.f32 %v4370, 0.0
    %v4387 = vmin.f32 %v4371, 0.0
    %v4388 = vmin.f32 %v4372, 0.0
    %v4389 = vmin.f32 %v4373, 0.0
    %v4390 = vand.u32 2147483647, %v4358
    %v4391 = vand.u32 2147483647, %v4359
    %v4392 = vand.u32 2147483647, %v4360
    %v4393 = vand.u32 2147483647, %v4361
    %v4394 = vand.u32 2147483647, %v4362
    %v4395 = vand.u32 2147483647, %v4363
    %v4396 = vand.u32 2147483647, %v4364
    %v4397 = vand.u32 2147483647, %v4365
    %v4398 = vand.u32 2147483647, %v4366
    %v4399 = vand.u32 2147483647, %v4367
    %v4400 = vand.u32 2147483647, %v4368
    %v4401 = vand.u32 2147483647, %v4369
    %v4402 = vand.u32 2147483647, %v4370
    %v4403 = vand.u32 2147483647, %v4371
    %v4404 = vand.u32 2147483647, %v4372
    %v4405 = vand.u32 2147483647, %v4373
    %v4406 = vsub.f32 0.0, %v4390
    %v4407 = vsub.f32 0.0, %v4391
    %v4408 = vsub.f32 0.0, %v4392
    %v4409 = vsub.f32 0.0, %v4393
    %v4410 = vsub.f32 0.0, %v4394
    %v4411 = vsub.f32 0.0, %v4395
    %v4412 = vsub.f32 0.0, %v4396
    %v4413 = vsub.f32 0.0, %v4397
    %v4414 = vsub.f32 0.0, %v4398
    %v4415 = vsub.f32 0.0, %v4399
    %v4416 = vsub.f32 0.0, %v4400
    %v4417 = vsub.f32 0.0, %v4401
    %v4418 = vsub.f32 0.0, %v4402
    %v4419 = vsub.f32 0.0, %v4403
    %v4420 = vsub.f32 0.0, %v4404
    %v4421 = vsub.f32 0.0, %v4405
    %v4422 = vmul.f32 %v4406, 1.442695
    %v4423 = vpow.pop %v4422
    %v4424 = vmul.f32 %v4407, 1.442695
    %v4425 = vpow.pop %v4424
    %v4426 = vmul.f32 %v4408, 1.442695
    %v4427 = vpow.pop %v4426
    %v4428 = vmul.f32 %v4409, 1.442695
    %v4429 = vpow.pop %v4428
    %v4430 = vmul.f32 %v4410, 1.442695
    %v4431 = vpow.pop %v4430
    %v4432 = vmul.f32 %v4411, 1.442695
    %v4433 = vpow.pop %v4432
    %v4434 = vmul.f32 %v4412, 1.442695
    %v4435 = vpow.pop %v4434
    %v4436 = vmul.f32 %v4413, 1.442695
    %v4437 = vpow.pop %v4436
    %v4438 = vmul.f32 %v4414, 1.442695
    %v4439 = vpow.pop %v4438
    %v4440 = vmul.f32 %v4415, 1.442695
    %v4441 = vpow.pop %v4440
    %v4442 = vmul.f32 %v4416, 1.442695
    %v4443 = vpow.pop %v4442
    %v4444 = vmul.f32 %v4417, 1.442695
    %v4445 = vpow.pop %v4444
    %v4446 = vmul.f32 %v4418, 1.442695
    %v4447 = vpow.pop %v4446
    %v4448 = vmul.f32 %v4419, 1.442695
    %v4449 = vpow.pop %v4448
    %v4450 = vmul.f32 %v4420, 1.442695
    %v4451 = vpow.pop %v4450
    %v4452 = vmul.f32 %v4421, 1.442695
    %v4453 = vpow.pop %v4452
    %v4454 = vadd.f32 %v4423, 1.0
    %v4455 = vadd.f32 %v4425, 1.0
    %v4456 = vadd.f32 %v4427, 1.0
    %v4457 = vadd.f32 %v4429, 1.0
    %v4458 = vadd.f32 %v4431, 1.0
    %v4459 = vadd.f32 %v4433, 1.0
    %v4460 = vadd.f32 %v4435, 1.0
    %v4461 = vadd.f32 %v4437, 1.0
    %v4462 = vadd.f32 %v4439, 1.0
    %v4463 = vadd.f32 %v4441, 1.0
    %v4464 = vadd.f32 %v4443, 1.0
    %v4465 = vadd.f32 %v4445, 1.0
    %v4466 = vadd.f32 %v4447, 1.0
    %v4467 = vadd.f32 %v4449, 1.0
    %v4468 = vadd.f32 %v4451, 1.0
    %v4469 = vadd.f32 %v4453, 1.0
    %v4470 = vlog2.pop %v4454
    %v4471 = vmul.f32 %v4470, 0.6931472
    %v4472 = vlog2.pop %v4455
    %v4473 = vmul.f32 %v4472, 0.6931472
    %v4474 = vlog2.pop %v4456
    %v4475 = vmul.f32 %v4474, 0.6931472
    %v4476 = vlog2.pop %v4457
    %v4477 = vmul.f32 %v4476, 0.6931472
    %v4478 = vlog2.pop %v4458
    %v4479 = vmul.f32 %v4478, 0.6931472
    %v4480 = vlog2.pop %v4459
    %v4481 = vmul.f32 %v4480, 0.6931472
    %v4482 = vlog2.pop %v4460
    %v4483 = vmul.f32 %v4482, 0.6931472
    %v4484 = vlog2.pop %v4461
    %v4485 = vmul.f32 %v4484, 0.6931472
    %v4486 = vlog2.pop %v4462
    %v4487 = vmul.f32 %v4486, 0.6931472
    %v4488 = vlog2.pop %v4463
    %v4489 = vmul.f32 %v4488, 0.6931472
    %v4490 = vlog2.pop %v4464
    %v4491 = vmul.f32 %v4490, 0.6931472
    %v4492 = vlog2.pop %v4465
    %v4493 = vmul.f32 %v4492, 0.6931472
    %v4494 = vlog2.pop %v4466
    %v4495 = vmul.f32 %v4494, 0.6931472
    %v4496 = vlog2.pop %v4467
    %v4497 = vmul.f32 %v4496, 0.6931472
    %v4498 = vlog2.pop %v4468
    %v4499 = vmul.f32 %v4498, 0.6931472
    %v4500 = vlog2.pop %v4469
    %v4501 = vmul.f32 %v4500, 0.6931472
    %v4502 = vsub.f32 %v4374, %v4471
    %v4503 = vsub.f32 %v4375, %v4473
    %v4504 = vsub.f32 %v4376, %v4475
    %v4505 = vsub.f32 %v4377, %v4477
    %v4506 = vsub.f32 %v4378, %v4479
    %v4507 = vsub.f32 %v4379, %v4481
    %v4508 = vsub.f32 %v4380, %v4483
    %v4509 = vsub.f32 %v4381, %v4485
    %v4510 = vsub.f32 %v4382, %v4487
    %v4511 = vsub.f32 %v4383, %v4489
    %v4512 = vsub.f32 %v4384, %v4491
    %v4513 = vsub.f32 %v4385, %v4493
    %v4514 = vsub.f32 %v4386, %v4495
    %v4515 = vsub.f32 %v4387, %v4497
    %v4516 = vsub.f32 %v4388, %v4499
    %v4517 = vsub.f32 %v4389, %v4501
    %4518 = vadd.xlane.f32.xlu0 %v4502
    %v4519 = vpop.xlane.xlu0 %4518
    %4520 = vadd.xlane.f32.xlu0 %v4503
    %v4521 = vpop.xlane.xlu0 %4520
    %4522 = vadd.xlane.f32.xlu0 %v4504
    %v4523 = vpop.xlane.xlu0 %4522
    %4524 = vadd.xlane.f32.xlu0 %v4505
    %v4525 = vpop.xlane.xlu0 %4524
    %4526 = vadd.xlane.f32.xlu0 %v4506
    %v4527 = vpop.xlane.xlu0 %4526
    %4528 = vadd.xlane.f32.xlu0 %v4507
    %v4529 = vpop.xlane.xlu0 %4528
    %4530 = vadd.xlane.f32.xlu0 %v4508
    %v4531 = vpop.xlane.xlu0 %4530
    %4532 = vadd.xlane.f32.xlu0 %v4509
    %v4533 = vpop.xlane.xlu0 %4532
    %4534 = vadd.xlane.f32.xlu0 %v4510
    %v4535 = vpop.xlane.xlu0 %4534
    %4536 = vadd.xlane.f32.xlu0 %v4511
    %v4537 = vpop.xlane.xlu0 %4536
    %4538 = vadd.xlane.f32.xlu0 %v4512
    %v4539 = vpop.xlane.xlu0 %4538
    %4540 = vadd.xlane.f32.xlu0 %v4513
    %v4541 = vpop.xlane.xlu0 %4540
    %4542 = vadd.xlane.f32.xlu0 %v4514
    %v4543 = vpop.xlane.xlu0 %4542
    %4544 = vadd.xlane.f32.xlu0 %v4515
    %v4545 = vpop.xlane.xlu0 %4544
    %4546 = vadd.xlane.f32.xlu0 %v4516
    %v4547 = vpop.xlane.xlu0 %4546
    %4548 = vadd.xlane.f32.xlu0 %v4517
    %v4549 = vpop.xlane.xlu0 %4548
    %v4550 = vmul.f32 %v4519, 1.442695
    %v4551 = vpow.pop %v4550
    %v4552 = vmul.f32 %v4521, 1.442695
    %v4553 = vpow.pop %v4552
    %v4554 = vmul.f32 %v4523, 1.442695
    %v4555 = vpow.pop %v4554
    %v4556 = vmul.f32 %v4525, 1.442695
    %v4557 = vpow.pop %v4556
    %v4558 = vmul.f32 %v4527, 1.442695
    %v4559 = vpow.pop %v4558
    %v4560 = vmul.f32 %v4529, 1.442695
    %v4561 = vpow.pop %v4560
    %v4562 = vmul.f32 %v4531, 1.442695
    %v4563 = vpow.pop %v4562
    %v4564 = vmul.f32 %v4533, 1.442695
    %v4565 = vpow.pop %v4564
    %v4566 = vmul.f32 %v4535, 1.442695
    %v4567 = vpow.pop %v4566
    %v4568 = vmul.f32 %v4537, 1.442695
    %v4569 = vpow.pop %v4568
    %v4570 = vmul.f32 %v4539, 1.442695
    %v4571 = vpow.pop %v4570
    %v4572 = vmul.f32 %v4541, 1.442695
    %v4573 = vpow.pop %v4572
    %v4574 = vmul.f32 %v4543, 1.442695
    %v4575 = vpow.pop %v4574
    %v4576 = vmul.f32 %v4545, 1.442695
    %v4577 = vpow.pop %v4576
    %v4578 = vmul.f32 %v4547, 1.442695
    %v4579 = vpow.pop %v4578
    %v4580 = vmul.f32 %v4549, 1.442695
    %v4581 = vpow.pop %v4580
    %v4582 = vadd.f32 %v4551, 0.0
    %v4583 = vadd.f32 %v4553, 0.0
    %v4584 = vadd.f32 %v4555, 0.0
    %v4585 = vadd.f32 %v4557, 0.0
    %v4586 = vadd.f32 %v4559, 0.0
    %v4587 = vadd.f32 %v4561, 0.0
    %v4588 = vadd.f32 %v4563, 0.0
    %v4589 = vadd.f32 %v4565, 0.0
    %v4590 = vadd.f32 %v4567, 0.0
    %v4591 = vadd.f32 %v4569, 0.0
    %v4592 = vadd.f32 %v4571, 0.0
    %v4593 = vadd.f32 %v4573, 0.0
    %v4594 = vadd.f32 %v4575, 0.0
    %v4595 = vadd.f32 %v4577, 0.0
    %v4596 = vadd.f32 %v4579, 0.0
    %v4597 = vadd.f32 %v4581, 0.0
    %s4598 = scalar_lea.vmem [#allocation8], 496
    %v4599 = vld [vmem:[%s4598] sm:$0xf]
    %v4600 = vld [vmem:[%s4598 + $0x4] sm:$0xf]
    %v4601 = vld [vmem:[%s4598 + $0x8] sm:$0xf]
    %v4602 = vld [vmem:[%s4598 + $0xc] sm:$0xf]
    %v4603 = vunpack.c.l.bf16 %v4599
    %v4604 = vunpack.c.l.bf16 %v4600
    %v4605 = vunpack.c.l.bf16 %v4601
    %v4606 = vunpack.c.l.bf16 %v4602
    %s4607 = scalar_lea.vmem [#allocation8], 576
    %v4608 = vld [vmem:[%s4607] sm:$0xf]
    %v4609 = vld [vmem:[%s4607 + $0x4] sm:$0xf]
    %v4610 = vld [vmem:[%s4607 + $0x8] sm:$0xf]
    %v4611 = vld [vmem:[%s4607 + $0xc] sm:$0xf]
    %v4612 = vunpack.c.l.bf16 %v4608
    %v4613 = vunpack.c.l.bf16 %v4609
    %v4614 = vunpack.c.l.bf16 %v4610
    %v4615 = vunpack.c.l.bf16 %v4611
    %v4616 = vmul.f32 %v90, %v4603
    %v4617 = vmul.f32 %v90, %v4604
    %v4618 = vmul.f32 %v90, %v4605
    %v4619 = vmul.f32 %v90, %v4606
    %v4620 = vmul.f32 %v94, %v4603
    %v4621 = vmul.f32 %v94, %v4604
    %v4622 = vmul.f32 %v94, %v4605
    %v4623 = vmul.f32 %v94, %v4606
    %v4624 = vmul.f32 %v98, %v4603
    %v4625 = vmul.f32 %v98, %v4604
    %v4626 = vmul.f32 %v98, %v4605
    %v4627 = vmul.f32 %v98, %v4606
    %v4628 = vmul.f32 %v102, %v4603
    %v4629 = vmul.f32 %v102, %v4604
    %v4630 = vmul.f32 %v102, %v4605
    %v4631 = vmul.f32 %v102, %v4606
    %v4632 = vsub.f32 %v4616, %v4612
    %v4633 = vsub.f32 %v4617, %v4613
    %v4634 = vsub.f32 %v4618, %v4614
    %v4635 = vsub.f32 %v4619, %v4615
    %v4636 = vsub.f32 %v4620, %v4612
    %v4637 = vsub.f32 %v4621, %v4613
    %v4638 = vsub.f32 %v4622, %v4614
    %v4639 = vsub.f32 %v4623, %v4615
    %v4640 = vsub.f32 %v4624, %v4612
    %v4641 = vsub.f32 %v4625, %v4613
    %v4642 = vsub.f32 %v4626, %v4614
    %v4643 = vsub.f32 %v4627, %v4615
    %v4644 = vsub.f32 %v4628, %v4612
    %v4645 = vsub.f32 %v4629, %v4613
    %v4646 = vsub.f32 %v4630, %v4614
    %v4647 = vsub.f32 %v4631, %v4615
    %v4648 = vmin.f32 %v4632, 0.0
    %v4649 = vmin.f32 %v4633, 0.0
    %v4650 = vmin.f32 %v4634, 0.0
    %v4651 = vmin.f32 %v4635, 0.0
    %v4652 = vmin.f32 %v4636, 0.0
    %v4653 = vmin.f32 %v4637, 0.0
    %v4654 = vmin.f32 %v4638, 0.0
    %v4655 = vmin.f32 %v4639, 0.0
    %v4656 = vmin.f32 %v4640, 0.0
    %v4657 = vmin.f32 %v4641, 0.0
    %v4658 = vmin.f32 %v4642, 0.0
    %v4659 = vmin.f32 %v4643, 0.0
    %v4660 = vmin.f32 %v4644, 0.0
    %v4661 = vmin.f32 %v4645, 0.0
    %v4662 = vmin.f32 %v4646, 0.0
    %v4663 = vmin.f32 %v4647, 0.0
    %v4664 = vand.u32 2147483647, %v4632
    %v4665 = vand.u32 2147483647, %v4633
    %v4666 = vand.u32 2147483647, %v4634
    %v4667 = vand.u32 2147483647, %v4635
    %v4668 = vand.u32 2147483647, %v4636
    %v4669 = vand.u32 2147483647, %v4637
    %v4670 = vand.u32 2147483647, %v4638
    %v4671 = vand.u32 2147483647, %v4639
    %v4672 = vand.u32 2147483647, %v4640
    %v4673 = vand.u32 2147483647, %v4641
    %v4674 = vand.u32 2147483647, %v4642
    %v4675 = vand.u32 2147483647, %v4643
    %v4676 = vand.u32 2147483647, %v4644
    %v4677 = vand.u32 2147483647, %v4645
    %v4678 = vand.u32 2147483647, %v4646
    %v4679 = vand.u32 2147483647, %v4647
    %v4680 = vsub.f32 0.0, %v4664
    %v4681 = vsub.f32 0.0, %v4665
    %v4682 = vsub.f32 0.0, %v4666
    %v4683 = vsub.f32 0.0, %v4667
    %v4684 = vsub.f32 0.0, %v4668
    %v4685 = vsub.f32 0.0, %v4669
    %v4686 = vsub.f32 0.0, %v4670
    %v4687 = vsub.f32 0.0, %v4671
    %v4688 = vsub.f32 0.0, %v4672
    %v4689 = vsub.f32 0.0, %v4673
    %v4690 = vsub.f32 0.0, %v4674
    %v4691 = vsub.f32 0.0, %v4675
    %v4692 = vsub.f32 0.0, %v4676
    %v4693 = vsub.f32 0.0, %v4677
    %v4694 = vsub.f32 0.0, %v4678
    %v4695 = vsub.f32 0.0, %v4679
    %v4696 = vmul.f32 %v4680, 1.442695
    %v4697 = vpow.pop %v4696
    %v4698 = vmul.f32 %v4681, 1.442695
    %v4699 = vpow.pop %v4698
    %v4700 = vmul.f32 %v4682, 1.442695
    %v4701 = vpow.pop %v4700
    %v4702 = vmul.f32 %v4683, 1.442695
    %v4703 = vpow.pop %v4702
    %v4704 = vmul.f32 %v4684, 1.442695
    %v4705 = vpow.pop %v4704
    %v4706 = vmul.f32 %v4685, 1.442695
    %v4707 = vpow.pop %v4706
    %v4708 = vmul.f32 %v4686, 1.442695
    %v4709 = vpow.pop %v4708
    %v4710 = vmul.f32 %v4687, 1.442695
    %v4711 = vpow.pop %v4710
    %v4712 = vmul.f32 %v4688, 1.442695
    %v4713 = vpow.pop %v4712
    %v4714 = vmul.f32 %v4689, 1.442695
    %v4715 = vpow.pop %v4714
    %v4716 = vmul.f32 %v4690, 1.442695
    %v4717 = vpow.pop %v4716
    %v4718 = vmul.f32 %v4691, 1.442695
    %v4719 = vpow.pop %v4718
    %v4720 = vmul.f32 %v4692, 1.442695
    %v4721 = vpow.pop %v4720
    %v4722 = vmul.f32 %v4693, 1.442695
    %v4723 = vpow.pop %v4722
    %v4724 = vmul.f32 %v4694, 1.442695
    %v4725 = vpow.pop %v4724
    %v4726 = vmul.f32 %v4695, 1.442695
    %v4727 = vpow.pop %v4726
    %v4728 = vadd.f32 %v4697, 1.0
    %v4729 = vadd.f32 %v4699, 1.0
    %v4730 = vadd.f32 %v4701, 1.0
    %v4731 = vadd.f32 %v4703, 1.0
    %v4732 = vadd.f32 %v4705, 1.0
    %v4733 = vadd.f32 %v4707, 1.0
    %v4734 = vadd.f32 %v4709, 1.0
    %v4735 = vadd.f32 %v4711, 1.0
    %v4736 = vadd.f32 %v4713, 1.0
    %v4737 = vadd.f32 %v4715, 1.0
    %v4738 = vadd.f32 %v4717, 1.0
    %v4739 = vadd.f32 %v4719, 1.0
    %v4740 = vadd.f32 %v4721, 1.0
    %v4741 = vadd.f32 %v4723, 1.0
    %v4742 = vadd.f32 %v4725, 1.0
    %v4743 = vadd.f32 %v4727, 1.0
    %v4744 = vlog2.pop %v4728
    %v4745 = vmul.f32 %v4744, 0.6931472
    %v4746 = vlog2.pop %v4729
    %v4747 = vmul.f32 %v4746, 0.6931472
    %v4748 = vlog2.pop %v4730
    %v4749 = vmul.f32 %v4748, 0.6931472
    %v4750 = vlog2.pop %v4731
    %v4751 = vmul.f32 %v4750, 0.6931472
    %v4752 = vlog2.pop %v4732
    %v4753 = vmul.f32 %v4752, 0.6931472
    %v4754 = vlog2.pop %v4733
    %v4755 = vmul.f32 %v4754, 0.6931472
    %v4756 = vlog2.pop %v4734
    %v4757 = vmul.f32 %v4756, 0.6931472
    %v4758 = vlog2.pop %v4735
    %v4759 = vmul.f32 %v4758, 0.6931472
    %v4760 = vlog2.pop %v4736
    %v4761 = vmul.f32 %v4760, 0.6931472
    %v4762 = vlog2.pop %v4737
    %v4763 = vmul.f32 %v4762, 0.6931472
    %v4764 = vlog2.pop %v4738
    %v4765 = vmul.f32 %v4764, 0.6931472
    %v4766 = vlog2.pop %v4739
    %v4767 = vmul.f32 %v4766, 0.6931472
    %v4768 = vlog2.pop %v4740
    %v4769 = vmul.f32 %v4768, 0.6931472
    %v4770 = vlog2.pop %v4741
    %v4771 = vmul.f32 %v4770, 0.6931472
    %v4772 = vlog2.pop %v4742
    %v4773 = vmul.f32 %v4772, 0.6931472
    %v4774 = vlog2.pop %v4743
    %v4775 = vmul.f32 %v4774, 0.6931472
    %v4776 = vsub.f32 %v4648, %v4745
    %v4777 = vsub.f32 %v4649, %v4747
    %v4778 = vsub.f32 %v4650, %v4749
    %v4779 = vsub.f32 %v4651, %v4751
    %v4780 = vsub.f32 %v4652, %v4753
    %v4781 = vsub.f32 %v4653, %v4755
    %v4782 = vsub.f32 %v4654, %v4757
    %v4783 = vsub.f32 %v4655, %v4759
    %v4784 = vsub.f32 %v4656, %v4761
    %v4785 = vsub.f32 %v4657, %v4763
    %v4786 = vsub.f32 %v4658, %v4765
    %v4787 = vsub.f32 %v4659, %v4767
    %v4788 = vsub.f32 %v4660, %v4769
    %v4789 = vsub.f32 %v4661, %v4771
    %v4790 = vsub.f32 %v4662, %v4773
    %v4791 = vsub.f32 %v4663, %v4775
    %4792 = vadd.xlane.f32.xlu0 %v4776
    %v4793 = vpop.xlane.xlu0 %4792
    %4794 = vadd.xlane.f32.xlu0 %v4777
    %v4795 = vpop.xlane.xlu0 %4794
    %4796 = vadd.xlane.f32.xlu0 %v4778
    %v4797 = vpop.xlane.xlu0 %4796
    %4798 = vadd.xlane.f32.xlu0 %v4779
    %v4799 = vpop.xlane.xlu0 %4798
    %4800 = vadd.xlane.f32.xlu0 %v4780
    %v4801 = vpop.xlane.xlu0 %4800
    %4802 = vadd.xlane.f32.xlu0 %v4781
    %v4803 = vpop.xlane.xlu0 %4802
    %4804 = vadd.xlane.f32.xlu0 %v4782
    %v4805 = vpop.xlane.xlu0 %4804
    %4806 = vadd.xlane.f32.xlu0 %v4783
    %v4807 = vpop.xlane.xlu0 %4806
    %4808 = vadd.xlane.f32.xlu0 %v4784
    %v4809 = vpop.xlane.xlu0 %4808
    %4810 = vadd.xlane.f32.xlu0 %v4785
    %v4811 = vpop.xlane.xlu0 %4810
    %4812 = vadd.xlane.f32.xlu0 %v4786
    %v4813 = vpop.xlane.xlu0 %4812
    %4814 = vadd.xlane.f32.xlu0 %v4787
    %v4815 = vpop.xlane.xlu0 %4814
    %4816 = vadd.xlane.f32.xlu0 %v4788
    %v4817 = vpop.xlane.xlu0 %4816
    %4818 = vadd.xlane.f32.xlu0 %v4789
    %v4819 = vpop.xlane.xlu0 %4818
    %4820 = vadd.xlane.f32.xlu0 %v4790
    %v4821 = vpop.xlane.xlu0 %4820
    %4822 = vadd.xlane.f32.xlu0 %v4791
    %v4823 = vpop.xlane.xlu0 %4822
    %v4824 = vmul.f32 %v4793, 1.442695
    %v4825 = vpow.pop %v4824
    %v4826 = vmul.f32 %v4795, 1.442695
    %v4827 = vpow.pop %v4826
    %v4828 = vmul.f32 %v4797, 1.442695
    %v4829 = vpow.pop %v4828
    %v4830 = vmul.f32 %v4799, 1.442695
    %v4831 = vpow.pop %v4830
    %v4832 = vmul.f32 %v4801, 1.442695
    %v4833 = vpow.pop %v4832
    %v4834 = vmul.f32 %v4803, 1.442695
    %v4835 = vpow.pop %v4834
    %v4836 = vmul.f32 %v4805, 1.442695
    %v4837 = vpow.pop %v4836
    %v4838 = vmul.f32 %v4807, 1.442695
    %v4839 = vpow.pop %v4838
    %v4840 = vmul.f32 %v4809, 1.442695
    %v4841 = vpow.pop %v4840
    %v4842 = vmul.f32 %v4811, 1.442695
    %v4843 = vpow.pop %v4842
    %v4844 = vmul.f32 %v4813, 1.442695
    %v4845 = vpow.pop %v4844
    %v4846 = vmul.f32 %v4815, 1.442695
    %v4847 = vpow.pop %v4846
    %v4848 = vmul.f32 %v4817, 1.442695
    %v4849 = vpow.pop %v4848
    %v4850 = vmul.f32 %v4819, 1.442695
    %v4851 = vpow.pop %v4850
    %v4852 = vmul.f32 %v4821, 1.442695
    %v4853 = vpow.pop %v4852
    %v4854 = vmul.f32 %v4823, 1.442695
    %v4855 = vpow.pop %v4854
    %v4856 = vadd.f32 %v4582, %v4825
    %v4857 = vadd.f32 %v4583, %v4827
    %v4858 = vadd.f32 %v4584, %v4829
    %v4859 = vadd.f32 %v4585, %v4831
    %v4860 = vadd.f32 %v4586, %v4833
    %v4861 = vadd.f32 %v4587, %v4835
    %v4862 = vadd.f32 %v4588, %v4837
    %v4863 = vadd.f32 %v4589, %v4839
    %v4864 = vadd.f32 %v4590, %v4841
    %v4865 = vadd.f32 %v4591, %v4843
    %v4866 = vadd.f32 %v4592, %v4845
    %v4867 = vadd.f32 %v4593, %v4847
    %v4868 = vadd.f32 %v4594, %v4849
    %v4869 = vadd.f32 %v4595, %v4851
    %v4870 = vadd.f32 %v4596, %v4853
    %v4871 = vadd.f32 %v4597, %v4855
    %s4872 = scalar_lea.vmem [#allocation8], 512
    %v4873 = vld [vmem:[%s4872] sm:$0xf]
    %v4874 = vld [vmem:[%s4872 + $0x4] sm:$0xf]
    %v4875 = vld [vmem:[%s4872 + $0x8] sm:$0xf]
    %v4876 = vld [vmem:[%s4872 + $0xc] sm:$0xf]
    %v4877 = vunpack.c.l.bf16 %v4873
    %v4878 = vunpack.c.l.bf16 %v4874
    %v4879 = vunpack.c.l.bf16 %v4875
    %v4880 = vunpack.c.l.bf16 %v4876
    %s4881 = scalar_lea.vmem [#allocation8], 592
    %v4882 = vld [vmem:[%s4881] sm:$0xf]
    %v4883 = vld [vmem:[%s4881 + $0x4] sm:$0xf]
    %v4884 = vld [vmem:[%s4881 + $0x8] sm:$0xf]
    %v4885 = vld [vmem:[%s4881 + $0xc] sm:$0xf]
    %v4886 = vunpack.c.l.bf16 %v4882
    %v4887 = vunpack.c.l.bf16 %v4883
    %v4888 = vunpack.c.l.bf16 %v4884
    %v4889 = vunpack.c.l.bf16 %v4885
    %v4890 = vmul.f32 %v90, %v4877
    %v4891 = vmul.f32 %v90, %v4878
    %v4892 = vmul.f32 %v90, %v4879
    %v4893 = vmul.f32 %v90, %v4880
    %v4894 = vmul.f32 %v94, %v4877
    %v4895 = vmul.f32 %v94, %v4878
    %v4896 = vmul.f32 %v94, %v4879
    %v4897 = vmul.f32 %v94, %v4880
    %v4898 = vmul.f32 %v98, %v4877
    %v4899 = vmul.f32 %v98, %v4878
    %v4900 = vmul.f32 %v98, %v4879
    %v4901 = vmul.f32 %v98, %v4880
    %v4902 = vmul.f32 %v102, %v4877
    %v4903 = vmul.f32 %v102, %v4878
    %v4904 = vmul.f32 %v102, %v4879
    %v4905 = vmul.f32 %v102, %v4880
    %v4906 = vsub.f32 %v4890, %v4886
    %v4907 = vsub.f32 %v4891, %v4887
    %v4908 = vsub.f32 %v4892, %v4888
    %v4909 = vsub.f32 %v4893, %v4889
    %v4910 = vsub.f32 %v4894, %v4886
    %v4911 = vsub.f32 %v4895, %v4887
    %v4912 = vsub.f32 %v4896, %v4888
    %v4913 = vsub.f32 %v4897, %v4889
    %v4914 = vsub.f32 %v4898, %v4886
    %v4915 = vsub.f32 %v4899, %v4887
    %v4916 = vsub.f32 %v4900, %v4888
    %v4917 = vsub.f32 %v4901, %v4889
    %v4918 = vsub.f32 %v4902, %v4886
    %v4919 = vsub.f32 %v4903, %v4887
    %v4920 = vsub.f32 %v4904, %v4888
    %v4921 = vsub.f32 %v4905, %v4889
    %v4922 = vmin.f32 %v4906, 0.0
    %v4923 = vmin.f32 %v4907, 0.0
    %v4924 = vmin.f32 %v4908, 0.0
    %v4925 = vmin.f32 %v4909, 0.0
    %v4926 = vmin.f32 %v4910, 0.0
    %v4927 = vmin.f32 %v4911, 0.0
    %v4928 = vmin.f32 %v4912, 0.0
    %v4929 = vmin.f32 %v4913, 0.0
    %v4930 = vmin.f32 %v4914, 0.0
    %v4931 = vmin.f32 %v4915, 0.0
    %v4932 = vmin.f32 %v4916, 0.0
    %v4933 = vmin.f32 %v4917, 0.0
    %v4934 = vmin.f32 %v4918, 0.0
    %v4935 = vmin.f32 %v4919, 0.0
    %v4936 = vmin.f32 %v4920, 0.0
    %v4937 = vmin.f32 %v4921, 0.0
    %v4938 = vand.u32 2147483647, %v4906
    %v4939 = vand.u32 2147483647, %v4907
    %v4940 = vand.u32 2147483647, %v4908
    %v4941 = vand.u32 2147483647, %v4909
    %v4942 = vand.u32 2147483647, %v4910
    %v4943 = vand.u32 2147483647, %v4911
    %v4944 = vand.u32 2147483647, %v4912
    %v4945 = vand.u32 2147483647, %v4913
    %v4946 = vand.u32 2147483647, %v4914
    %v4947 = vand.u32 2147483647, %v4915
    %v4948 = vand.u32 2147483647, %v4916
    %v4949 = vand.u32 2147483647, %v4917
    %v4950 = vand.u32 2147483647, %v4918
    %v4951 = vand.u32 2147483647, %v4919
    %v4952 = vand.u32 2147483647, %v4920
    %v4953 = vand.u32 2147483647, %v4921
    %v4954 = vsub.f32 0.0, %v4938
    %v4955 = vsub.f32 0.0, %v4939
    %v4956 = vsub.f32 0.0, %v4940
    %v4957 = vsub.f32 0.0, %v4941
    %v4958 = vsub.f32 0.0, %v4942
    %v4959 = vsub.f32 0.0, %v4943
    %v4960 = vsub.f32 0.0, %v4944
    %v4961 = vsub.f32 0.0, %v4945
    %v4962 = vsub.f32 0.0, %v4946
    %v4963 = vsub.f32 0.0, %v4947
    %v4964 = vsub.f32 0.0, %v4948
    %v4965 = vsub.f32 0.0, %v4949
    %v4966 = vsub.f32 0.0, %v4950
    %v4967 = vsub.f32 0.0, %v4951
    %v4968 = vsub.f32 0.0, %v4952
    %v4969 = vsub.f32 0.0, %v4953
    %v4970 = vmul.f32 %v4954, 1.442695
    %v4971 = vpow.pop %v4970
    %v4972 = vmul.f32 %v4955, 1.442695
    %v4973 = vpow.pop %v4972
    %v4974 = vmul.f32 %v4956, 1.442695
    %v4975 = vpow.pop %v4974
    %v4976 = vmul.f32 %v4957, 1.442695
    %v4977 = vpow.pop %v4976
    %v4978 = vmul.f32 %v4958, 1.442695
    %v4979 = vpow.pop %v4978
    %v4980 = vmul.f32 %v4959, 1.442695
    %v4981 = vpow.pop %v4980
    %v4982 = vmul.f32 %v4960, 1.442695
    %v4983 = vpow.pop %v4982
    %v4984 = vmul.f32 %v4961, 1.442695
    %v4985 = vpow.pop %v4984
    %v4986 = vmul.f32 %v4962, 1.442695
    %v4987 = vpow.pop %v4986
    %v4988 = vmul.f32 %v4963, 1.442695
    %v4989 = vpow.pop %v4988
    %v4990 = vmul.f32 %v4964, 1.442695
    %v4991 = vpow.pop %v4990
    %v4992 = vmul.f32 %v4965, 1.442695
    %v4993 = vpow.pop %v4992
    %v4994 = vmul.f32 %v4966, 1.442695
    %v4995 = vpow.pop %v4994
    %v4996 = vmul.f32 %v4967, 1.442695
    %v4997 = vpow.pop %v4996
    %v4998 = vmul.f32 %v4968, 1.442695
    %v4999 = vpow.pop %v4998
    %v5000 = vmul.f32 %v4969, 1.442695
    %v5001 = vpow.pop %v5000
    %v5002 = vadd.f32 %v4971, 1.0
    %v5003 = vadd.f32 %v4973, 1.0
    %v5004 = vadd.f32 %v4975, 1.0
    %v5005 = vadd.f32 %v4977, 1.0
    %v5006 = vadd.f32 %v4979, 1.0
    %v5007 = vadd.f32 %v4981, 1.0
    %v5008 = vadd.f32 %v4983, 1.0
    %v5009 = vadd.f32 %v4985, 1.0
    %v5010 = vadd.f32 %v4987, 1.0
    %v5011 = vadd.f32 %v4989, 1.0
    %v5012 = vadd.f32 %v4991, 1.0
    %v5013 = vadd.f32 %v4993, 1.0
    %v5014 = vadd.f32 %v4995, 1.0
    %v5015 = vadd.f32 %v4997, 1.0
    %v5016 = vadd.f32 %v4999, 1.0
    %v5017 = vadd.f32 %v5001, 1.0
    %v5018 = vlog2.pop %v5002
    %v5019 = vmul.f32 %v5018, 0.6931472
    %v5020 = vlog2.pop %v5003
    %v5021 = vmul.f32 %v5020, 0.6931472
    %v5022 = vlog2.pop %v5004
    %v5023 = vmul.f32 %v5022, 0.6931472
    %v5024 = vlog2.pop %v5005
    %v5025 = vmul.f32 %v5024, 0.6931472
    %v5026 = vlog2.pop %v5006
    %v5027 = vmul.f32 %v5026, 0.6931472
    %v5028 = vlog2.pop %v5007
    %v5029 = vmul.f32 %v5028, 0.6931472
    %v5030 = vlog2.pop %v5008
    %v5031 = vmul.f32 %v5030, 0.6931472
    %v5032 = vlog2.pop %v5009
    %v5033 = vmul.f32 %v5032, 0.6931472
    %v5034 = vlog2.pop %v5010
    %v5035 = vmul.f32 %v5034, 0.6931472
    %v5036 = vlog2.pop %v5011
    %v5037 = vmul.f32 %v5036, 0.6931472
    %v5038 = vlog2.pop %v5012
    %v5039 = vmul.f32 %v5038, 0.6931472
    %v5040 = vlog2.pop %v5013
    %v5041 = vmul.f32 %v5040, 0.6931472
    %v5042 = vlog2.pop %v5014
    %v5043 = vmul.f32 %v5042, 0.6931472
    %v5044 = vlog2.pop %v5015
    %v5045 = vmul.f32 %v5044, 0.6931472
    %v5046 = vlog2.pop %v5016
    %v5047 = vmul.f32 %v5046, 0.6931472
    %v5048 = vlog2.pop %v5017
    %v5049 = vmul.f32 %v5048, 0.6931472
    %v5050 = vsub.f32 %v4922, %v5019
    %v5051 = vsub.f32 %v4923, %v5021
    %v5052 = vsub.f32 %v4924, %v5023
    %v5053 = vsub.f32 %v4925, %v5025
    %v5054 = vsub.f32 %v4926, %v5027
    %v5055 = vsub.f32 %v4927, %v5029
    %v5056 = vsub.f32 %v4928, %v5031
    %v5057 = vsub.f32 %v4929, %v5033
    %v5058 = vsub.f32 %v4930, %v5035
    %v5059 = vsub.f32 %v4931, %v5037
    %v5060 = vsub.f32 %v4932, %v5039
    %v5061 = vsub.f32 %v4933, %v5041
    %v5062 = vsub.f32 %v4934, %v5043
    %v5063 = vsub.f32 %v4935, %v5045
    %v5064 = vsub.f32 %v4936, %v5047
    %v5065 = vsub.f32 %v4937, %v5049
    %5066 = vadd.xlane.f32.xlu0 %v5050
    %v5067 = vpop.xlane.xlu0 %5066
    %5068 = vadd.xlane.f32.xlu0 %v5051
    %v5069 = vpop.xlane.xlu0 %5068
    %5070 = vadd.xlane.f32.xlu0 %v5052
    %v5071 = vpop.xlane.xlu0 %5070
    %5072 = vadd.xlane.f32.xlu0 %v5053
    %v5073 = vpop.xlane.xlu0 %5072
    %5074 = vadd.xlane.f32.xlu0 %v5054
    %v5075 = vpop.xlane.xlu0 %5074
    %5076 = vadd.xlane.f32.xlu0 %v5055
    %v5077 = vpop.xlane.xlu0 %5076
    %5078 = vadd.xlane.f32.xlu0 %v5056
    %v5079 = vpop.xlane.xlu0 %5078
    %5080 = vadd.xlane.f32.xlu0 %v5057
    %v5081 = vpop.xlane.xlu0 %5080
    %5082 = vadd.xlane.f32.xlu0 %v5058
    %v5083 = vpop.xlane.xlu0 %5082
    %5084 = vadd.xlane.f32.xlu0 %v5059
    %v5085 = vpop.xlane.xlu0 %5084
    %5086 = vadd.xlane.f32.xlu0 %v5060
    %v5087 = vpop.xlane.xlu0 %5086
    %5088 = vadd.xlane.f32.xlu0 %v5061
    %v5089 = vpop.xlane.xlu0 %5088
    %5090 = vadd.xlane.f32.xlu0 %v5062
    %v5091 = vpop.xlane.xlu0 %5090
    %5092 = vadd.xlane.f32.xlu0 %v5063
    %v5093 = vpop.xlane.xlu0 %5092
    %5094 = vadd.xlane.f32.xlu0 %v5064
    %v5095 = vpop.xlane.xlu0 %5094
    %5096 = vadd.xlane.f32.xlu0 %v5065
    %v5097 = vpop.xlane.xlu0 %5096
    %v5098 = vmul.f32 %v5067, 1.442695
    %v5099 = vpow.pop %v5098
    %v5100 = vmul.f32 %v5069, 1.442695
    %v5101 = vpow.pop %v5100
    %v5102 = vmul.f32 %v5071, 1.442695
    %v5103 = vpow.pop %v5102
    %v5104 = vmul.f32 %v5073, 1.442695
    %v5105 = vpow.pop %v5104
    %v5106 = vmul.f32 %v5075, 1.442695
    %v5107 = vpow.pop %v5106
    %v5108 = vmul.f32 %v5077, 1.442695
    %v5109 = vpow.pop %v5108
    %v5110 = vmul.f32 %v5079, 1.442695
    %v5111 = vpow.pop %v5110
    %v5112 = vmul.f32 %v5081, 1.442695
    %v5113 = vpow.pop %v5112
    %v5114 = vmul.f32 %v5083, 1.442695
    %v5115 = vpow.pop %v5114
    %v5116 = vmul.f32 %v5085, 1.442695
    %v5117 = vpow.pop %v5116
    %v5118 = vmul.f32 %v5087, 1.442695
    %v5119 = vpow.pop %v5118
    %v5120 = vmul.f32 %v5089, 1.442695
    %v5121 = vpow.pop %v5120
    %v5122 = vmul.f32 %v5091, 1.442695
    %v5123 = vpow.pop %v5122
    %v5124 = vmul.f32 %v5093, 1.442695
    %v5125 = vpow.pop %v5124
    %v5126 = vmul.f32 %v5095, 1.442695
    %v5127 = vpow.pop %v5126
    %v5128 = vmul.f32 %v5097, 1.442695
    %v5129 = vpow.pop %v5128
    %v5130 = vadd.f32 %v4856, %v5099
    %v5131 = vadd.f32 %v4857, %v5101
    %v5132 = vadd.f32 %v4858, %v5103
    %v5133 = vadd.f32 %v4859, %v5105
    %v5134 = vadd.f32 %v4860, %v5107
    %v5135 = vadd.f32 %v4861, %v5109
    %v5136 = vadd.f32 %v4862, %v5111
    %v5137 = vadd.f32 %v4863, %v5113
    %v5138 = vadd.f32 %v4864, %v5115
    %v5139 = vadd.f32 %v4865, %v5117
    %v5140 = vadd.f32 %v4866, %v5119
    %v5141 = vadd.f32 %v4867, %v5121
    %v5142 = vadd.f32 %v4868, %v5123
    %v5143 = vadd.f32 %v4869, %v5125
    %v5144 = vadd.f32 %v4870, %v5127
    %v5145 = vadd.f32 %v4871, %v5129
    %s5146 = scalar_lea.vmem [#allocation8], 528
    %v5147 = vld [vmem:[%s5146] sm:$0xf]
    %v5148 = vld [vmem:[%s5146 + $0x4] sm:$0xf]
    %v5149 = vld [vmem:[%s5146 + $0x8] sm:$0xf]
    %v5150 = vld [vmem:[%s5146 + $0xc] sm:$0xf]
    %v5151 = vunpack.c.l.bf16 %v5147
    %v5152 = vunpack.c.l.bf16 %v5148
    %v5153 = vunpack.c.l.bf16 %v5149
    %v5154 = vunpack.c.l.bf16 %v5150
    %s5155 = scalar_lea.vmem [#allocation8], 608
    %v5156 = vld [vmem:[%s5155] sm:$0xf]
    %v5157 = vld [vmem:[%s5155 + $0x4] sm:$0xf]
    %v5158 = vld [vmem:[%s5155 + $0x8] sm:$0xf]
    %v5159 = vld [vmem:[%s5155 + $0xc] sm:$0xf]
    %v5160 = vunpack.c.l.bf16 %v5156
    %v5161 = vunpack.c.l.bf16 %v5157
    %v5162 = vunpack.c.l.bf16 %v5158
    %v5163 = vunpack.c.l.bf16 %v5159
    %v5164 = vmul.f32 %v90, %v5151
    %v5165 = vmul.f32 %v90, %v5152
    %v5166 = vmul.f32 %v90, %v5153
    %v5167 = vmul.f32 %v90, %v5154
    %v5168 = vmul.f32 %v94, %v5151
    %v5169 = vmul.f32 %v94, %v5152
    %v5170 = vmul.f32 %v94, %v5153
    %v5171 = vmul.f32 %v94, %v5154
    %v5172 = vmul.f32 %v98, %v5151
    %v5173 = vmul.f32 %v98, %v5152
    %v5174 = vmul.f32 %v98, %v5153
    %v5175 = vmul.f32 %v98, %v5154
    %v5176 = vmul.f32 %v102, %v5151
    %v5177 = vmul.f32 %v102, %v5152
    %v5178 = vmul.f32 %v102, %v5153
    %v5179 = vmul.f32 %v102, %v5154
    %v5180 = vsub.f32 %v5164, %v5160
    %v5181 = vsub.f32 %v5165, %v5161
    %v5182 = vsub.f32 %v5166, %v5162
    %v5183 = vsub.f32 %v5167, %v5163
    %v5184 = vsub.f32 %v5168, %v5160
    %v5185 = vsub.f32 %v5169, %v5161
    %v5186 = vsub.f32 %v5170, %v5162
    %v5187 = vsub.f32 %v5171, %v5163
    %v5188 = vsub.f32 %v5172, %v5160
    %v5189 = vsub.f32 %v5173, %v5161
    %v5190 = vsub.f32 %v5174, %v5162
    %v5191 = vsub.f32 %v5175, %v5163
    %v5192 = vsub.f32 %v5176, %v5160
    %v5193 = vsub.f32 %v5177, %v5161
    %v5194 = vsub.f32 %v5178, %v5162
    %v5195 = vsub.f32 %v5179, %v5163
    %v5196 = vmin.f32 %v5180, 0.0
    %v5197 = vmin.f32 %v5181, 0.0
    %v5198 = vmin.f32 %v5182, 0.0
    %v5199 = vmin.f32 %v5183, 0.0
    %v5200 = vmin.f32 %v5184, 0.0
    %v5201 = vmin.f32 %v5185, 0.0
    %v5202 = vmin.f32 %v5186, 0.0
    %v5203 = vmin.f32 %v5187, 0.0
    %v5204 = vmin.f32 %v5188, 0.0
    %v5205 = vmin.f32 %v5189, 0.0
    %v5206 = vmin.f32 %v5190, 0.0
    %v5207 = vmin.f32 %v5191, 0.0
    %v5208 = vmin.f32 %v5192, 0.0
    %v5209 = vmin.f32 %v5193, 0.0
    %v5210 = vmin.f32 %v5194, 0.0
    %v5211 = vmin.f32 %v5195, 0.0
    %v5212 = vand.u32 2147483647, %v5180
    %v5213 = vand.u32 2147483647, %v5181
    %v5214 = vand.u32 2147483647, %v5182
    %v5215 = vand.u32 2147483647, %v5183
    %v5216 = vand.u32 2147483647, %v5184
    %v5217 = vand.u32 2147483647, %v5185
    %v5218 = vand.u32 2147483647, %v5186
    %v5219 = vand.u32 2147483647, %v5187
    %v5220 = vand.u32 2147483647, %v5188
    %v5221 = vand.u32 2147483647, %v5189
    %v5222 = vand.u32 2147483647, %v5190
    %v5223 = vand.u32 2147483647, %v5191
    %v5224 = vand.u32 2147483647, %v5192
    %v5225 = vand.u32 2147483647, %v5193
    %v5226 = vand.u32 2147483647, %v5194
    %v5227 = vand.u32 2147483647, %v5195
    %v5228 = vsub.f32 0.0, %v5212
    %v5229 = vsub.f32 0.0, %v5213
    %v5230 = vsub.f32 0.0, %v5214
    %v5231 = vsub.f32 0.0, %v5215
    %v5232 = vsub.f32 0.0, %v5216
    %v5233 = vsub.f32 0.0, %v5217
    %v5234 = vsub.f32 0.0, %v5218
    %v5235 = vsub.f32 0.0, %v5219
    %v5236 = vsub.f32 0.0, %v5220
    %v5237 = vsub.f32 0.0, %v5221
    %v5238 = vsub.f32 0.0, %v5222
    %v5239 = vsub.f32 0.0, %v5223
    %v5240 = vsub.f32 0.0, %v5224
    %v5241 = vsub.f32 0.0, %v5225
    %v5242 = vsub.f32 0.0, %v5226
    %v5243 = vsub.f32 0.0, %v5227
    %v5244 = vmul.f32 %v5228, 1.442695
    %v5245 = vpow.pop %v5244
    %v5246 = vmul.f32 %v5229, 1.442695
    %v5247 = vpow.pop %v5246
    %v5248 = vmul.f32 %v5230, 1.442695
    %v5249 = vpow.pop %v5248
    %v5250 = vmul.f32 %v5231, 1.442695
    %v5251 = vpow.pop %v5250
    %v5252 = vmul.f32 %v5232, 1.442695
    %v5253 = vpow.pop %v5252
    %v5254 = vmul.f32 %v5233, 1.442695
    %v5255 = vpow.pop %v5254
    %v5256 = vmul.f32 %v5234, 1.442695
    %v5257 = vpow.pop %v5256
    %v5258 = vmul.f32 %v5235, 1.442695
    %v5259 = vpow.pop %v5258
    %v5260 = vmul.f32 %v5236, 1.442695
    %v5261 = vpow.pop %v5260
    %v5262 = vmul.f32 %v5237, 1.442695
    %v5263 = vpow.pop %v5262
    %v5264 = vmul.f32 %v5238, 1.442695
    %v5265 = vpow.pop %v5264
    %v5266 = vmul.f32 %v5239, 1.442695
    %v5267 = vpow.pop %v5266
    %v5268 = vmul.f32 %v5240, 1.442695
    %v5269 = vpow.pop %v5268
    %v5270 = vmul.f32 %v5241, 1.442695
    %v5271 = vpow.pop %v5270
    %v5272 = vmul.f32 %v5242, 1.442695
    %v5273 = vpow.pop %v5272
    %v5274 = vmul.f32 %v5243, 1.442695
    %v5275 = vpow.pop %v5274
    %v5276 = vadd.f32 %v5245, 1.0
    %v5277 = vadd.f32 %v5247, 1.0
    %v5278 = vadd.f32 %v5249, 1.0
    %v5279 = vadd.f32 %v5251, 1.0
    %v5280 = vadd.f32 %v5253, 1.0
    %v5281 = vadd.f32 %v5255, 1.0
    %v5282 = vadd.f32 %v5257, 1.0
    %v5283 = vadd.f32 %v5259, 1.0
    %v5284 = vadd.f32 %v5261, 1.0
    %v5285 = vadd.f32 %v5263, 1.0
    %v5286 = vadd.f32 %v5265, 1.0
    %v5287 = vadd.f32 %v5267, 1.0
    %v5288 = vadd.f32 %v5269, 1.0
    %v5289 = vadd.f32 %v5271, 1.0
    %v5290 = vadd.f32 %v5273, 1.0
    %v5291 = vadd.f32 %v5275, 1.0
    %v5292 = vlog2.pop %v5276
    %v5293 = vmul.f32 %v5292, 0.6931472
    %v5294 = vlog2.pop %v5277
    %v5295 = vmul.f32 %v5294, 0.6931472
    %v5296 = vlog2.pop %v5278
    %v5297 = vmul.f32 %v5296, 0.6931472
    %v5298 = vlog2.pop %v5279
    %v5299 = vmul.f32 %v5298, 0.6931472
    %v5300 = vlog2.pop %v5280
    %v5301 = vmul.f32 %v5300, 0.6931472
    %v5302 = vlog2.pop %v5281
    %v5303 = vmul.f32 %v5302, 0.6931472
    %v5304 = vlog2.pop %v5282
    %v5305 = vmul.f32 %v5304, 0.6931472
    %v5306 = vlog2.pop %v5283
    %v5307 = vmul.f32 %v5306, 0.6931472
    %v5308 = vlog2.pop %v5284
    %v5309 = vmul.f32 %v5308, 0.6931472
    %v5310 = vlog2.pop %v5285
    %v5311 = vmul.f32 %v5310, 0.6931472
    %v5312 = vlog2.pop %v5286
    %v5313 = vmul.f32 %v5312, 0.6931472
    %v5314 = vlog2.pop %v5287
    %v5315 = vmul.f32 %v5314, 0.6931472
    %v5316 = vlog2.pop %v5288
    %v5317 = vmul.f32 %v5316, 0.6931472
    %v5318 = vlog2.pop %v5289
    %v5319 = vmul.f32 %v5318, 0.6931472
    %v5320 = vlog2.pop %v5290
    %v5321 = vmul.f32 %v5320, 0.6931472
    %v5322 = vlog2.pop %v5291
    %v5323 = vmul.f32 %v5322, 0.6931472
    %v5324 = vsub.f32 %v5196, %v5293
    %v5325 = vsub.f32 %v5197, %v5295
    %v5326 = vsub.f32 %v5198, %v5297
    %v5327 = vsub.f32 %v5199, %v5299
    %v5328 = vsub.f32 %v5200, %v5301
    %v5329 = vsub.f32 %v5201, %v5303
    %v5330 = vsub.f32 %v5202, %v5305
    %v5331 = vsub.f32 %v5203, %v5307
    %v5332 = vsub.f32 %v5204, %v5309
    %v5333 = vsub.f32 %v5205, %v5311
    %v5334 = vsub.f32 %v5206, %v5313
    %v5335 = vsub.f32 %v5207, %v5315
    %v5336 = vsub.f32 %v5208, %v5317
    %v5337 = vsub.f32 %v5209, %v5319
    %v5338 = vsub.f32 %v5210, %v5321
    %v5339 = vsub.f32 %v5211, %v5323
    %5340 = vadd.xlane.f32.xlu0 %v5324
    %v5341 = vpop.xlane.xlu0 %5340
    %5342 = vadd.xlane.f32.xlu0 %v5325
    %v5343 = vpop.xlane.xlu0 %5342
    %5344 = vadd.xlane.f32.xlu0 %v5326
    %v5345 = vpop.xlane.xlu0 %5344
    %5346 = vadd.xlane.f32.xlu0 %v5327
    %v5347 = vpop.xlane.xlu0 %5346
    %5348 = vadd.xlane.f32.xlu0 %v5328
    %v5349 = vpop.xlane.xlu0 %5348
    %5350 = vadd.xlane.f32.xlu0 %v5329
    %v5351 = vpop.xlane.xlu0 %5350
    %5352 = vadd.xlane.f32.xlu0 %v5330
    %v5353 = vpop.xlane.xlu0 %5352
    %5354 = vadd.xlane.f32.xlu0 %v5331
    %v5355 = vpop.xlane.xlu0 %5354
    %5356 = vadd.xlane.f32.xlu0 %v5332
    %v5357 = vpop.xlane.xlu0 %5356
    %5358 = vadd.xlane.f32.xlu0 %v5333
    %v5359 = vpop.xlane.xlu0 %5358
    %5360 = vadd.xlane.f32.xlu0 %v5334
    %v5361 = vpop.xlane.xlu0 %5360
    %5362 = vadd.xlane.f32.xlu0 %v5335
    %v5363 = vpop.xlane.xlu0 %5362
    %5364 = vadd.xlane.f32.xlu0 %v5336
    %v5365 = vpop.xlane.xlu0 %5364
    %5366 = vadd.xlane.f32.xlu0 %v5337
    %v5367 = vpop.xlane.xlu0 %5366
    %5368 = vadd.xlane.f32.xlu0 %v5338
    %v5369 = vpop.xlane.xlu0 %5368
    %5370 = vadd.xlane.f32.xlu0 %v5339
    %v5371 = vpop.xlane.xlu0 %5370
    %v5372 = vmul.f32 %v5341, 1.442695
    %v5373 = vpow.pop %v5372
    %v5374 = vmul.f32 %v5343, 1.442695
    %v5375 = vpow.pop %v5374
    %v5376 = vmul.f32 %v5345, 1.442695
    %v5377 = vpow.pop %v5376
    %v5378 = vmul.f32 %v5347, 1.442695
    %v5379 = vpow.pop %v5378
    %v5380 = vmul.f32 %v5349, 1.442695
    %v5381 = vpow.pop %v5380
    %v5382 = vmul.f32 %v5351, 1.442695
    %v5383 = vpow.pop %v5382
    %v5384 = vmul.f32 %v5353, 1.442695
    %v5385 = vpow.pop %v5384
    %v5386 = vmul.f32 %v5355, 1.442695
    %v5387 = vpow.pop %v5386
    %v5388 = vmul.f32 %v5357, 1.442695
    %v5389 = vpow.pop %v5388
    %v5390 = vmul.f32 %v5359, 1.442695
    %v5391 = vpow.pop %v5390
    %v5392 = vmul.f32 %v5361, 1.442695
    %v5393 = vpow.pop %v5392
    %v5394 = vmul.f32 %v5363, 1.442695
    %v5395 = vpow.pop %v5394
    %v5396 = vmul.f32 %v5365, 1.442695
    %v5397 = vpow.pop %v5396
    %v5398 = vmul.f32 %v5367, 1.442695
    %v5399 = vpow.pop %v5398
    %v5400 = vmul.f32 %v5369, 1.442695
    %v5401 = vpow.pop %v5400
    %v5402 = vmul.f32 %v5371, 1.442695
    %v5403 = vpow.pop %v5402
    %v5404 = vadd.f32 %v5130, %v5373
    %v5405 = vadd.f32 %v5131, %v5375
    %v5406 = vadd.f32 %v5132, %v5377
    %v5407 = vadd.f32 %v5133, %v5379
    %v5408 = vadd.f32 %v5134, %v5381
    %v5409 = vadd.f32 %v5135, %v5383
    %v5410 = vadd.f32 %v5136, %v5385
    %v5411 = vadd.f32 %v5137, %v5387
    %v5412 = vadd.f32 %v5138, %v5389
    %v5413 = vadd.f32 %v5139, %v5391
    %v5414 = vadd.f32 %v5140, %v5393
    %v5415 = vadd.f32 %v5141, %v5395
    %v5416 = vadd.f32 %v5142, %v5397
    %v5417 = vadd.f32 %v5143, %v5399
    %v5418 = vadd.f32 %v5144, %v5401
    %v5419 = vadd.f32 %v5145, %v5403
    %s5420 = scalar_lea.vmem [#allocation8], 544
    %v5421 = vld [vmem:[%s5420] sm:$0xf]
    %v5422 = vld [vmem:[%s5420 + $0x4] sm:$0xf]
    %v5423 = vld [vmem:[%s5420 + $0x8] sm:$0xf]
    %v5424 = vld [vmem:[%s5420 + $0xc] sm:$0xf]
    %v5425 = vunpack.c.l.bf16 %v5421
    %v5426 = vunpack.c.l.bf16 %v5422
    %v5427 = vunpack.c.l.bf16 %v5423
    %v5428 = vunpack.c.l.bf16 %v5424
    %s5429 = scalar_lea.vmem [#allocation8], 624
    %v5430 = vld [vmem:[%s5429] sm:$0xf]
    %v5431 = vld [vmem:[%s5429 + $0x4] sm:$0xf]
    %v5432 = vld [vmem:[%s5429 + $0x8] sm:$0xf]
    %v5433 = vld [vmem:[%s5429 + $0xc] sm:$0xf]
    %v5434 = vunpack.c.l.bf16 %v5430
    %v5435 = vunpack.c.l.bf16 %v5431
    %v5436 = vunpack.c.l.bf16 %v5432
    %v5437 = vunpack.c.l.bf16 %v5433
    %v5438 = vmul.f32 %v90, %v5425
    %v5439 = vmul.f32 %v90, %v5426
    %v5440 = vmul.f32 %v90, %v5427
    %v5441 = vmul.f32 %v90, %v5428
    %v5442 = vmul.f32 %v94, %v5425
    %v5443 = vmul.f32 %v94, %v5426
    %v5444 = vmul.f32 %v94, %v5427
    %v5445 = vmul.f32 %v94, %v5428
    %v5446 = vmul.f32 %v98, %v5425
    %v5447 = vmul.f32 %v98, %v5426
    %v5448 = vmul.f32 %v98, %v5427
    %v5449 = vmul.f32 %v98, %v5428
    %v5450 = vmul.f32 %v102, %v5425
    %v5451 = vmul.f32 %v102, %v5426
    %v5452 = vmul.f32 %v102, %v5427
    %v5453 = vmul.f32 %v102, %v5428
    %v5454 = vsub.f32 %v5438, %v5434
    %v5455 = vsub.f32 %v5439, %v5435
    %v5456 = vsub.f32 %v5440, %v5436
    %v5457 = vsub.f32 %v5441, %v5437
    %v5458 = vsub.f32 %v5442, %v5434
    %v5459 = vsub.f32 %v5443, %v5435
    %v5460 = vsub.f32 %v5444, %v5436
    %v5461 = vsub.f32 %v5445, %v5437
    %v5462 = vsub.f32 %v5446, %v5434
    %v5463 = vsub.f32 %v5447, %v5435
    %v5464 = vsub.f32 %v5448, %v5436
    %v5465 = vsub.f32 %v5449, %v5437
    %v5466 = vsub.f32 %v5450, %v5434
    %v5467 = vsub.f32 %v5451, %v5435
    %v5468 = vsub.f32 %v5452, %v5436
    %v5469 = vsub.f32 %v5453, %v5437
    %v5470 = vmin.f32 %v5454, 0.0
    %v5471 = vmin.f32 %v5455, 0.0
    %v5472 = vmin.f32 %v5456, 0.0
    %v5473 = vmin.f32 %v5457, 0.0
    %v5474 = vmin.f32 %v5458, 0.0
    %v5475 = vmin.f32 %v5459, 0.0
    %v5476 = vmin.f32 %v5460, 0.0
    %v5477 = vmin.f32 %v5461, 0.0
    %v5478 = vmin.f32 %v5462, 0.0
    %v5479 = vmin.f32 %v5463, 0.0
    %v5480 = vmin.f32 %v5464, 0.0
    %v5481 = vmin.f32 %v5465, 0.0
    %v5482 = vmin.f32 %v5466, 0.0
    %v5483 = vmin.f32 %v5467, 0.0
    %v5484 = vmin.f32 %v5468, 0.0
    %v5485 = vmin.f32 %v5469, 0.0
    %v5486 = vand.u32 2147483647, %v5454
    %v5487 = vand.u32 2147483647, %v5455
    %v5488 = vand.u32 2147483647, %v5456
    %v5489 = vand.u32 2147483647, %v5457
    %v5490 = vand.u32 2147483647, %v5458
    %v5491 = vand.u32 2147483647, %v5459
    %v5492 = vand.u32 2147483647, %v5460
    %v5493 = vand.u32 2147483647, %v5461
    %v5494 = vand.u32 2147483647, %v5462
    %v5495 = vand.u32 2147483647, %v5463
    %v5496 = vand.u32 2147483647, %v5464
    %v5497 = vand.u32 2147483647, %v5465
    %v5498 = vand.u32 2147483647, %v5466
    %v5499 = vand.u32 2147483647, %v5467
    %v5500 = vand.u32 2147483647, %v5468
    %v5501 = vand.u32 2147483647, %v5469
    %v5502 = vsub.f32 0.0, %v5486
    %v5503 = vsub.f32 0.0, %v5487
    %v5504 = vsub.f32 0.0, %v5488
    %v5505 = vsub.f32 0.0, %v5489
    %v5506 = vsub.f32 0.0, %v5490
    %v5507 = vsub.f32 0.0, %v5491
    %v5508 = vsub.f32 0.0, %v5492
    %v5509 = vsub.f32 0.0, %v5493
    %v5510 = vsub.f32 0.0, %v5494
    %v5511 = vsub.f32 0.0, %v5495
    %v5512 = vsub.f32 0.0, %v5496
    %v5513 = vsub.f32 0.0, %v5497
    %v5514 = vsub.f32 0.0, %v5498
    %v5515 = vsub.f32 0.0, %v5499
    %v5516 = vsub.f32 0.0, %v5500
    %v5517 = vsub.f32 0.0, %v5501
    %v5518 = vmul.f32 %v5502, 1.442695
    %v5519 = vpow.pop %v5518
    %v5520 = vmul.f32 %v5503, 1.442695
    %v5521 = vpow.pop %v5520
    %v5522 = vmul.f32 %v5504, 1.442695
    %v5523 = vpow.pop %v5522
    %v5524 = vmul.f32 %v5505, 1.442695
    %v5525 = vpow.pop %v5524
    %v5526 = vmul.f32 %v5506, 1.442695
    %v5527 = vpow.pop %v5526
    %v5528 = vmul.f32 %v5507, 1.442695
    %v5529 = vpow.pop %v5528
    %v5530 = vmul.f32 %v5508, 1.442695
    %v5531 = vpow.pop %v5530
    %v5532 = vmul.f32 %v5509, 1.442695
    %v5533 = vpow.pop %v5532
    %v5534 = vmul.f32 %v5510, 1.442695
    %v5535 = vpow.pop %v5534
    %v5536 = vmul.f32 %v5511, 1.442695
    %v5537 = vpow.pop %v5536
    %v5538 = vmul.f32 %v5512, 1.442695
    %v5539 = vpow.pop %v5538
    %v5540 = vmul.f32 %v5513, 1.442695
    %v5541 = vpow.pop %v5540
    %v5542 = vmul.f32 %v5514, 1.442695
    %v5543 = vpow.pop %v5542
    %v5544 = vmul.f32 %v5515, 1.442695
    %v5545 = vpow.pop %v5544
    %v5546 = vmul.f32 %v5516, 1.442695
    %v5547 = vpow.pop %v5546
    %v5548 = vmul.f32 %v5517, 1.442695
    %v5549 = vpow.pop %v5548
    %v5550 = vadd.f32 %v5519, 1.0
    %v5551 = vadd.f32 %v5521, 1.0
    %v5552 = vadd.f32 %v5523, 1.0
    %v5553 = vadd.f32 %v5525, 1.0
    %v5554 = vadd.f32 %v5527, 1.0
    %v5555 = vadd.f32 %v5529, 1.0
    %v5556 = vadd.f32 %v5531, 1.0
    %v5557 = vadd.f32 %v5533, 1.0
    %v5558 = vadd.f32 %v5535, 1.0
    %v5559 = vadd.f32 %v5537, 1.0
    %v5560 = vadd.f32 %v5539, 1.0
    %v5561 = vadd.f32 %v5541, 1.0
    %v5562 = vadd.f32 %v5543, 1.0
    %v5563 = vadd.f32 %v5545, 1.0
    %v5564 = vadd.f32 %v5547, 1.0
    %v5565 = vadd.f32 %v5549, 1.0
    %v5566 = vlog2.pop %v5550
    %v5567 = vmul.f32 %v5566, 0.6931472
    %v5568 = vlog2.pop %v5551
    %v5569 = vmul.f32 %v5568, 0.6931472
    %v5570 = vlog2.pop %v5552
    %v5571 = vmul.f32 %v5570, 0.6931472
    %v5572 = vlog2.pop %v5553
    %v5573 = vmul.f32 %v5572, 0.6931472
    %v5574 = vlog2.pop %v5554
    %v5575 = vmul.f32 %v5574, 0.6931472
    %v5576 = vlog2.pop %v5555
    %v5577 = vmul.f32 %v5576, 0.6931472
    %v5578 = vlog2.pop %v5556
    %v5579 = vmul.f32 %v5578, 0.6931472
    %v5580 = vlog2.pop %v5557
    %v5581 = vmul.f32 %v5580, 0.6931472
    %v5582 = vlog2.pop %v5558
    %v5583 = vmul.f32 %v5582, 0.6931472
    %v5584 = vlog2.pop %v5559
    %v5585 = vmul.f32 %v5584, 0.6931472
    %v5586 = vlog2.pop %v5560
    %v5587 = vmul.f32 %v5586, 0.6931472
    %v5588 = vlog2.pop %v5561
    %v5589 = vmul.f32 %v5588, 0.6931472
    %v5590 = vlog2.pop %v5562
    %v5591 = vmul.f32 %v5590, 0.6931472
    %v5592 = vlog2.pop %v5563
    %v5593 = vmul.f32 %v5592, 0.6931472
    %v5594 = vlog2.pop %v5564
    %v5595 = vmul.f32 %v5594, 0.6931472
    %v5596 = vlog2.pop %v5565
    %v5597 = vmul.f32 %v5596, 0.6931472
    %v5598 = vsub.f32 %v5470, %v5567
    %v5599 = vsub.f32 %v5471, %v5569
    %v5600 = vsub.f32 %v5472, %v5571
    %v5601 = vsub.f32 %v5473, %v5573
    %v5602 = vsub.f32 %v5474, %v5575
    %v5603 = vsub.f32 %v5475, %v5577
    %v5604 = vsub.f32 %v5476, %v5579
    %v5605 = vsub.f32 %v5477, %v5581
    %v5606 = vsub.f32 %v5478, %v5583
    %v5607 = vsub.f32 %v5479, %v5585
    %v5608 = vsub.f32 %v5480, %v5587
    %v5609 = vsub.f32 %v5481, %v5589
    %v5610 = vsub.f32 %v5482, %v5591
    %v5611 = vsub.f32 %v5483, %v5593
    %v5612 = vsub.f32 %v5484, %v5595
    %v5613 = vsub.f32 %v5485, %v5597
    %5614 = vadd.xlane.f32.xlu0 %v5598
    %v5615 = vpop.xlane.xlu0 %5614
    %5616 = vadd.xlane.f32.xlu0 %v5599
    %v5617 = vpop.xlane.xlu0 %5616
    %5618 = vadd.xlane.f32.xlu0 %v5600
    %v5619 = vpop.xlane.xlu0 %5618
    %5620 = vadd.xlane.f32.xlu0 %v5601
    %v5621 = vpop.xlane.xlu0 %5620
    %5622 = vadd.xlane.f32.xlu0 %v5602
    %v5623 = vpop.xlane.xlu0 %5622
    %5624 = vadd.xlane.f32.xlu0 %v5603
    %v5625 = vpop.xlane.xlu0 %5624
    %5626 = vadd.xlane.f32.xlu0 %v5604
    %v5627 = vpop.xlane.xlu0 %5626
    %5628 = vadd.xlane.f32.xlu0 %v5605
    %v5629 = vpop.xlane.xlu0 %5628
    %5630 = vadd.xlane.f32.xlu0 %v5606
    %v5631 = vpop.xlane.xlu0 %5630
    %5632 = vadd.xlane.f32.xlu0 %v5607
    %v5633 = vpop.xlane.xlu0 %5632
    %5634 = vadd.xlane.f32.xlu0 %v5608
    %v5635 = vpop.xlane.xlu0 %5634
    %5636 = vadd.xlane.f32.xlu0 %v5609
    %v5637 = vpop.xlane.xlu0 %5636
    %5638 = vadd.xlane.f32.xlu0 %v5610
    %v5639 = vpop.xlane.xlu0 %5638
    %5640 = vadd.xlane.f32.xlu0 %v5611
    %v5641 = vpop.xlane.xlu0 %5640
    %5642 = vadd.xlane.f32.xlu0 %v5612
    %v5643 = vpop.xlane.xlu0 %5642
    %5644 = vadd.xlane.f32.xlu0 %v5613
    %v5645 = vpop.xlane.xlu0 %5644
    %v5646 = vmul.f32 %v5615, 1.442695
    %v5647 = vpow.pop %v5646
    %v5648 = vmul.f32 %v5617, 1.442695
    %v5649 = vpow.pop %v5648
    %v5650 = vmul.f32 %v5619, 1.442695
    %v5651 = vpow.pop %v5650
    %v5652 = vmul.f32 %v5621, 1.442695
    %v5653 = vpow.pop %v5652
    %v5654 = vmul.f32 %v5623, 1.442695
    %v5655 = vpow.pop %v5654
    %v5656 = vmul.f32 %v5625, 1.442695
    %v5657 = vpow.pop %v5656
    %v5658 = vmul.f32 %v5627, 1.442695
    %v5659 = vpow.pop %v5658
    %v5660 = vmul.f32 %v5629, 1.442695
    %v5661 = vpow.pop %v5660
    %v5662 = vmul.f32 %v5631, 1.442695
    %v5663 = vpow.pop %v5662
    %v5664 = vmul.f32 %v5633, 1.442695
    %v5665 = vpow.pop %v5664
    %v5666 = vmul.f32 %v5635, 1.442695
    %v5667 = vpow.pop %v5666
    %v5668 = vmul.f32 %v5637, 1.442695
    %v5669 = vpow.pop %v5668
    %v5670 = vmul.f32 %v5639, 1.442695
    %v5671 = vpow.pop %v5670
    %v5672 = vmul.f32 %v5641, 1.442695
    %v5673 = vpow.pop %v5672
    %v5674 = vmul.f32 %v5643, 1.442695
    %v5675 = vpow.pop %v5674
    %v5676 = vmul.f32 %v5645, 1.442695
    %v5677 = vpow.pop %v5676
    %v5678 = vadd.f32 %v5404, %v5647
    %v5679 = vadd.f32 %v5405, %v5649
    %v5680 = vadd.f32 %v5406, %v5651
    %v5681 = vadd.f32 %v5407, %v5653
    %v5682 = vadd.f32 %v5408, %v5655
    %v5683 = vadd.f32 %v5409, %v5657
    %v5684 = vadd.f32 %v5410, %v5659
    %v5685 = vadd.f32 %v5411, %v5661
    %v5686 = vadd.f32 %v5412, %v5663
    %v5687 = vadd.f32 %v5413, %v5665
    %v5688 = vadd.f32 %v5414, %v5667
    %v5689 = vadd.f32 %v5415, %v5669
    %v5690 = vadd.f32 %v5416, %v5671
    %v5691 = vadd.f32 %v5417, %v5673
    %v5692 = vadd.f32 %v5418, %v5675
    %v5693 = vadd.f32 %v5419, %v5677
    %s5694 = sld [smem:[#allocation2 + $0x3]]
    %s5695 = sld [smem:[#allocation7 + $0x3]]
    %v5696 = vstv %s5695
    %v5697 = vsub.f32 %v5678, %v5696
    %v5698 = vsub.f32 %v5679, %v5696
    %v5699 = vsub.f32 %v5680, %v5696
    %v5700 = vsub.f32 %v5681, %v5696
    %v5701 = vsub.f32 %v5682, %v5696
    %v5702 = vsub.f32 %v5683, %v5696
    %v5703 = vsub.f32 %v5684, %v5696
    %v5704 = vsub.f32 %v5685, %v5696
    %v5705 = vsub.f32 %v5686, %v5696
    %v5706 = vsub.f32 %v5687, %v5696
    %v5707 = vsub.f32 %v5688, %v5696
    %v5708 = vsub.f32 %v5689, %v5696
    %v5709 = vsub.f32 %v5690, %v5696
    %v5710 = vsub.f32 %v5691, %v5696
    %v5711 = vsub.f32 %v5692, %v5696
    %v5712 = vsub.f32 %v5693, %v5696
    %v5713 = vstv %s5694
    %v5714 = vmul.f32 %v5713, %v5697
    %v5715 = vmul.f32 %v5713, %v5698
    %v5716 = vmul.f32 %v5713, %v5699
    %v5717 = vmul.f32 %v5713, %v5700
    %v5718 = vmul.f32 %v5713, %v5701
    %v5719 = vmul.f32 %v5713, %v5702
    %v5720 = vmul.f32 %v5713, %v5703
    %v5721 = vmul.f32 %v5713, %v5704
    %v5722 = vmul.f32 %v5713, %v5705
    %v5723 = vmul.f32 %v5713, %v5706
    %v5724 = vmul.f32 %v5713, %v5707
    %v5725 = vmul.f32 %v5713, %v5708
    %v5726 = vmul.f32 %v5713, %v5709
    %v5727 = vmul.f32 %v5713, %v5710
    %v5728 = vmul.f32 %v5713, %v5711
    %v5729 = vmul.f32 %v5713, %v5712
    %v5730 = vxor.u32 %v1496, 2147483648
    %v5731 = vxor.u32 %v1497, 2147483648
    %v5732 = vxor.u32 %v1498, 2147483648
    %v5733 = vxor.u32 %v1499, 2147483648
    %v5734 = vxor.u32 %v1500, 2147483648
    %v5735 = vxor.u32 %v1501, 2147483648
    %v5736 = vxor.u32 %v1502, 2147483648
    %v5737 = vxor.u32 %v1503, 2147483648
    %v5738 = vxor.u32 %v1504, 2147483648
    %v5739 = vxor.u32 %v1505, 2147483648
    %v5740 = vxor.u32 %v1506, 2147483648
    %v5741 = vxor.u32 %v1507, 2147483648
    %v5742 = vxor.u32 %v1508, 2147483648
    %v5743 = vxor.u32 %v1509, 2147483648
    %v5744 = vxor.u32 %v1510, 2147483648
    %v5745 = vxor.u32 %v1511, 2147483648
    %v5746 = vmul.f32 %v5730, 1.442695
    %v5747 = vpow.pop %v5746
    %v5748 = vmul.f32 %v5731, 1.442695
    %v5749 = vpow.pop %v5748
    %v5750 = vmul.f32 %v5732, 1.442695
    %v5751 = vpow.pop %v5750
    %v5752 = vmul.f32 %v5733, 1.442695
    %v5753 = vpow.pop %v5752
    %v5754 = vmul.f32 %v5734, 1.442695
    %v5755 = vpow.pop %v5754
    %v5756 = vmul.f32 %v5735, 1.442695
    %v5757 = vpow.pop %v5756
    %v5758 = vmul.f32 %v5736, 1.442695
    %v5759 = vpow.pop %v5758
    %v5760 = vmul.f32 %v5737, 1.442695
    %v5761 = vpow.pop %v5760
    %v5762 = vmul.f32 %v5738, 1.442695
    %v5763 = vpow.pop %v5762
    %v5764 = vmul.f32 %v5739, 1.442695
    %v5765 = vpow.pop %v5764
    %v5766 = vmul.f32 %v5740, 1.442695
    %v5767 = vpow.pop %v5766
    %v5768 = vmul.f32 %v5741, 1.442695
    %v5769 = vpow.pop %v5768
    %v5770 = vmul.f32 %v5742, 1.442695
    %v5771 = vpow.pop %v5770
    %v5772 = vmul.f32 %v5743, 1.442695
    %v5773 = vpow.pop %v5772
    %v5774 = vmul.f32 %v5744, 1.442695
    %v5775 = vpow.pop %v5774
    %v5776 = vmul.f32 %v5745, 1.442695
    %v5777 = vpow.pop %v5776
    %v5778 = vadd.f32 %v5747, 1.0
    %v5779 = vadd.f32 %v5749, 1.0
    %v5780 = vadd.f32 %v5751, 1.0
    %v5781 = vadd.f32 %v5753, 1.0
    %v5782 = vadd.f32 %v5755, 1.0
    %v5783 = vadd.f32 %v5757, 1.0
    %v5784 = vadd.f32 %v5759, 1.0
    %v5785 = vadd.f32 %v5761, 1.0
    %v5786 = vadd.f32 %v5763, 1.0
    %v5787 = vadd.f32 %v5765, 1.0
    %v5788 = vadd.f32 %v5767, 1.0
    %v5789 = vadd.f32 %v5769, 1.0
    %v5790 = vadd.f32 %v5771, 1.0
    %v5791 = vadd.f32 %v5773, 1.0
    %v5792 = vadd.f32 %v5775, 1.0
    %v5793 = vadd.f32 %v5777, 1.0
    %v5794 = vrcp.pop %v5778
    %v5795 = vmul.f32 1.0, %v5794
    %v5796 = vrcp.pop %v5779
    %v5797 = vmul.f32 1.0, %v5796
    %v5798 = vrcp.pop %v5780
    %v5799 = vmul.f32 1.0, %v5798
    %v5800 = vrcp.pop %v5781
    %v5801 = vmul.f32 1.0, %v5800
    %v5802 = vrcp.pop %v5782
    %v5803 = vmul.f32 1.0, %v5802
    %v5804 = vrcp.pop %v5783
    %v5805 = vmul.f32 1.0, %v5804
    %v5806 = vrcp.pop %v5784
    %v5807 = vmul.f32 1.0, %v5806
    %v5808 = vrcp.pop %v5785
    %v5809 = vmul.f32 1.0, %v5808
    %v5810 = vrcp.pop %v5786
    %v5811 = vmul.f32 1.0, %v5810
    %v5812 = vrcp.pop %v5787
    %v5813 = vmul.f32 1.0, %v5812
    %v5814 = vrcp.pop %v5788
    %v5815 = vmul.f32 1.0, %v5814
    %v5816 = vrcp.pop %v5789
    %v5817 = vmul.f32 1.0, %v5816
    %v5818 = vrcp.pop %v5790
    %v5819 = vmul.f32 1.0, %v5818
    %v5820 = vrcp.pop %v5791
    %v5821 = vmul.f32 1.0, %v5820
    %v5822 = vrcp.pop %v5792
    %v5823 = vmul.f32 1.0, %v5822
    %v5824 = vrcp.pop %v5793
    %v5825 = vmul.f32 1.0, %v5824
    %v5826 = vxor.u32 %v2902, 2147483648
    %v5827 = vxor.u32 %v2903, 2147483648
    %v5828 = vxor.u32 %v2904, 2147483648
    %v5829 = vxor.u32 %v2905, 2147483648
    %v5830 = vxor.u32 %v2906, 2147483648
    %v5831 = vxor.u32 %v2907, 2147483648
    %v5832 = vxor.u32 %v2908, 2147483648
    %v5833 = vxor.u32 %v2909, 2147483648
    %v5834 = vxor.u32 %v2910, 2147483648
    %v5835 = vxor.u32 %v2911, 2147483648
    %v5836 = vxor.u32 %v2912, 2147483648
    %v5837 = vxor.u32 %v2913, 2147483648
    %v5838 = vxor.u32 %v2914, 2147483648
    %v5839 = vxor.u32 %v2915, 2147483648
    %v5840 = vxor.u32 %v2916, 2147483648
    %v5841 = vxor.u32 %v2917, 2147483648
    %v5842 = vmul.f32 %v5826, 1.442695
    %v5843 = vpow.pop %v5842
    %v5844 = vmul.f32 %v5827, 1.442695
    %v5845 = vpow.pop %v5844
    %v5846 = vmul.f32 %v5828, 1.442695
    %v5847 = vpow.pop %v5846
    %v5848 = vmul.f32 %v5829, 1.442695
    %v5849 = vpow.pop %v5848
    %v5850 = vmul.f32 %v5830, 1.442695
    %v5851 = vpow.pop %v5850
    %v5852 = vmul.f32 %v5831, 1.442695
    %v5853 = vpow.pop %v5852
    %v5854 = vmul.f32 %v5832, 1.442695
    %v5855 = vpow.pop %v5854
    %v5856 = vmul.f32 %v5833, 1.442695
    %v5857 = vpow.pop %v5856
    %v5858 = vmul.f32 %v5834, 1.442695
    %v5859 = vpow.pop %v5858
    %v5860 = vmul.f32 %v5835, 1.442695
    %v5861 = vpow.pop %v5860
    %v5862 = vmul.f32 %v5836, 1.442695
    %v5863 = vpow.pop %v5862
    %v5864 = vmul.f32 %v5837, 1.442695
    %v5865 = vpow.pop %v5864
    %v5866 = vmul.f32 %v5838, 1.442695
    %v5867 = vpow.pop %v5866
    %v5868 = vmul.f32 %v5839, 1.442695
    %v5869 = vpow.pop %v5868
    %v5870 = vmul.f32 %v5840, 1.442695
    %v5871 = vpow.pop %v5870
    %v5872 = vmul.f32 %v5841, 1.442695
    %v5873 = vpow.pop %v5872
    %v5874 = vadd.f32 %v5843, 1.0
    %v5875 = vadd.f32 %v5845, 1.0
    %v5876 = vadd.f32 %v5847, 1.0
    %v5877 = vadd.f32 %v5849, 1.0
    %v5878 = vadd.f32 %v5851, 1.0
    %v5879 = vadd.f32 %v5853, 1.0
    %v5880 = vadd.f32 %v5855, 1.0
    %v5881 = vadd.f32 %v5857, 1.0
    %v5882 = vadd.f32 %v5859, 1.0
    %v5883 = vadd.f32 %v5861, 1.0
    %v5884 = vadd.f32 %v5863, 1.0
    %v5885 = vadd.f32 %v5865, 1.0
    %v5886 = vadd.f32 %v5867, 1.0
    %v5887 = vadd.f32 %v5869, 1.0
    %v5888 = vadd.f32 %v5871, 1.0
    %v5889 = vadd.f32 %v5873, 1.0
    %v5890 = vrcp.pop %v5874
    %v5891 = vmul.f32 1.0, %v5890
    %v5892 = vrcp.pop %v5875
    %v5893 = vmul.f32 1.0, %v5892
    %v5894 = vrcp.pop %v5876
    %v5895 = vmul.f32 1.0, %v5894
    %v5896 = vrcp.pop %v5877
    %v5897 = vmul.f32 1.0, %v5896
    %v5898 = vrcp.pop %v5878
    %v5899 = vmul.f32 1.0, %v5898
    %v5900 = vrcp.pop %v5879
    %v5901 = vmul.f32 1.0, %v5900
    %v5902 = vrcp.pop %v5880
    %v5903 = vmul.f32 1.0, %v5902
    %v5904 = vrcp.pop %v5881
    %v5905 = vmul.f32 1.0, %v5904
    %v5906 = vrcp.pop %v5882
    %v5907 = vmul.f32 1.0, %v5906
    %v5908 = vrcp.pop %v5883
    %v5909 = vmul.f32 1.0, %v5908
    %v5910 = vrcp.pop %v5884
    %v5911 = vmul.f32 1.0, %v5910
    %v5912 = vrcp.pop %v5885
    %v5913 = vmul.f32 1.0, %v5912
    %v5914 = vrcp.pop %v5886
    %v5915 = vmul.f32 1.0, %v5914
    %v5916 = vrcp.pop %v5887
    %v5917 = vmul.f32 1.0, %v5916
    %v5918 = vrcp.pop %v5888
    %v5919 = vmul.f32 1.0, %v5918
    %v5920 = vrcp.pop %v5889
    %v5921 = vmul.f32 1.0, %v5920
    %v5922 = vtanh.pop %v4308
    %v5923 = vtanh.pop %v4309
    %v5924 = vtanh.pop %v4310
    %v5925 = vtanh.pop %v4311
    %v5926 = vtanh.pop %v4312
    %v5927 = vtanh.pop %v4313
    %v5928 = vtanh.pop %v4314
    %v5929 = vtanh.pop %v4315
    %v5930 = vtanh.pop %v4316
    %v5931 = vtanh.pop %v4317
    %v5932 = vtanh.pop %v4318
    %v5933 = vtanh.pop %v4319
    %v5934 = vtanh.pop %v4320
    %v5935 = vtanh.pop %v4321
    %v5936 = vtanh.pop %v4322
    %v5937 = vtanh.pop %v4323
    %v5938 = vxor.u32 %v5714, 2147483648
    %v5939 = vxor.u32 %v5715, 2147483648
    %v5940 = vxor.u32 %v5716, 2147483648
    %v5941 = vxor.u32 %v5717, 2147483648
    %v5942 = vxor.u32 %v5718, 2147483648
    %v5943 = vxor.u32 %v5719, 2147483648
    %v5944 = vxor.u32 %v5720, 2147483648
    %v5945 = vxor.u32 %v5721, 2147483648
    %v5946 = vxor.u32 %v5722, 2147483648
    %v5947 = vxor.u32 %v5723, 2147483648
    %v5948 = vxor.u32 %v5724, 2147483648
    %v5949 = vxor.u32 %v5725, 2147483648
    %v5950 = vxor.u32 %v5726, 2147483648
    %v5951 = vxor.u32 %v5727, 2147483648
    %v5952 = vxor.u32 %v5728, 2147483648
    %v5953 = vxor.u32 %v5729, 2147483648
    %v5954 = vmul.f32 %v5938, 1.442695
    %v5955 = vpow.pop %v5954
    %v5956 = vmul.f32 %v5939, 1.442695
    %v5957 = vpow.pop %v5956
    %v5958 = vmul.f32 %v5940, 1.442695
    %v5959 = vpow.pop %v5958
    %v5960 = vmul.f32 %v5941, 1.442695
    %v5961 = vpow.pop %v5960
    %v5962 = vmul.f32 %v5942, 1.442695
    %v5963 = vpow.pop %v5962
    %v5964 = vmul.f32 %v5943, 1.442695
    %v5965 = vpow.pop %v5964
    %v5966 = vmul.f32 %v5944, 1.442695
    %v5967 = vpow.pop %v5966
    %v5968 = vmul.f32 %v5945, 1.442695
    %v5969 = vpow.pop %v5968
    %v5970 = vmul.f32 %v5946, 1.442695
    %v5971 = vpow.pop %v5970
    %v5972 = vmul.f32 %v5947, 1.442695
    %v5973 = vpow.pop %v5972
    %v5974 = vmul.f32 %v5948, 1.442695
    %v5975 = vpow.pop %v5974
    %v5976 = vmul.f32 %v5949, 1.442695
    %v5977 = vpow.pop %v5976
    %v5978 = vmul.f32 %v5950, 1.442695
    %v5979 = vpow.pop %v5978
    %v5980 = vmul.f32 %v5951, 1.442695
    %v5981 = vpow.pop %v5980
    %v5982 = vmul.f32 %v5952, 1.442695
    %v5983 = vpow.pop %v5982
    %v5984 = vmul.f32 %v5953, 1.442695
    %v5985 = vpow.pop %v5984
    %v5986 = vadd.f32 %v5955, 1.0
    %v5987 = vadd.f32 %v5957, 1.0
    %v5988 = vadd.f32 %v5959, 1.0
    %v5989 = vadd.f32 %v5961, 1.0
    %v5990 = vadd.f32 %v5963, 1.0
    %v5991 = vadd.f32 %v5965, 1.0
    %v5992 = vadd.f32 %v5967, 1.0
    %v5993 = vadd.f32 %v5969, 1.0
    %v5994 = vadd.f32 %v5971, 1.0
    %v5995 = vadd.f32 %v5973, 1.0
    %v5996 = vadd.f32 %v5975, 1.0
    %v5997 = vadd.f32 %v5977, 1.0
    %v5998 = vadd.f32 %v5979, 1.0
    %v5999 = vadd.f32 %v5981, 1.0
    %v6000 = vadd.f32 %v5983, 1.0
    %v6001 = vadd.f32 %v5985, 1.0
    %v6002 = vrcp.pop %v5986
    %v6003 = vmul.f32 1.0, %v6002
    %v6004 = vrcp.pop %v5987
    %v6005 = vmul.f32 1.0, %v6004
    %v6006 = vrcp.pop %v5988
    %v6007 = vmul.f32 1.0, %v6006
    %v6008 = vrcp.pop %v5989
    %v6009 = vmul.f32 1.0, %v6008
    %v6010 = vrcp.pop %v5990
    %v6011 = vmul.f32 1.0, %v6010
    %v6012 = vrcp.pop %v5991
    %v6013 = vmul.f32 1.0, %v6012
    %v6014 = vrcp.pop %v5992
    %v6015 = vmul.f32 1.0, %v6014
    %v6016 = vrcp.pop %v5993
    %v6017 = vmul.f32 1.0, %v6016
    %v6018 = vrcp.pop %v5994
    %v6019 = vmul.f32 1.0, %v6018
    %v6020 = vrcp.pop %v5995
    %v6021 = vmul.f32 1.0, %v6020
    %v6022 = vrcp.pop %v5996
    %v6023 = vmul.f32 1.0, %v6022
    %v6024 = vrcp.pop %v5997
    %v6025 = vmul.f32 1.0, %v6024
    %v6026 = vrcp.pop %v5998
    %v6027 = vmul.f32 1.0, %v6026
    %v6028 = vrcp.pop %v5999
    %v6029 = vmul.f32 1.0, %v6028
    %v6030 = vrcp.pop %v6000
    %v6031 = vmul.f32 1.0, %v6030
    %v6032 = vrcp.pop %v6001
    %v6033 = vmul.f32 1.0, %v6032
    %v6034 = vld [vmem:[%s3] sm:$0xf]
    %v6036 = vlaneseq
    %v6037 = vshrl.u32 %v6036, 7
    %v6038 = vsub.s32 0, %v6037
    %v6039 = vrot.slane %v6034, %v6038
    %6041 = vbcast.lane.b32.xlu0 %v6039, 256
    %v6042 = vpop.permute.xlu0 %6041
    %s6044 = sor.u32 256, 8
    %6045 = vbcast.lane.b32.xlu0 %v6039, %s6044
    %v6046 = vpop.permute.xlu0 %6045
    %s6048 = sor.u32 256, 16
    %6049 = vbcast.lane.b32.xlu0 %v6039, %s6048
    %v6050 = vpop.permute.xlu0 %6049
    %s6052 = sor.u32 256, 24
    %6053 = vbcast.lane.b32.xlu0 %v6039, %s6052
    %v6054 = vpop.permute.xlu0 %6053
    %v6055 = vlaneseq
    %v6056 = vshrl.u32 %v6055, 7
    %v6057 = vsub.s32 1, %v6056
    %v6058 = vrot.slane %v6034, %v6057
    %6060 = vbcast.lane.b32.xlu0 %v6058, 256
    %v6061 = vpop.permute.xlu0 %6060
    %s6063 = sor.u32 256, 8
    %6064 = vbcast.lane.b32.xlu0 %v6058, %s6063
    %v6065 = vpop.permute.xlu0 %6064
    %s6067 = sor.u32 256, 16
    %6068 = vbcast.lane.b32.xlu0 %v6058, %s6067
    %v6069 = vpop.permute.xlu0 %6068
    %s6071 = sor.u32 256, 24
    %6072 = vbcast.lane.b32.xlu0 %v6058, %s6071
    %v6073 = vpop.permute.xlu0 %6072
    %v6074 = vlaneseq
    %v6075 = vshrl.u32 %v6074, 7
    %v6076 = vsub.s32 2, %v6075
    %v6077 = vrot.slane %v6034, %v6076
    %6079 = vbcast.lane.b32.xlu0 %v6077, 256
    %v6080 = vpop.permute.xlu0 %6079
    %s6082 = sor.u32 256, 8
    %6083 = vbcast.lane.b32.xlu0 %v6077, %s6082
    %v6084 = vpop.permute.xlu0 %6083
    %s6086 = sor.u32 256, 16
    %6087 = vbcast.lane.b32.xlu0 %v6077, %s6086
    %v6088 = vpop.permute.xlu0 %6087
    %s6090 = sor.u32 256, 24
    %6091 = vbcast.lane.b32.xlu0 %v6077, %s6090
    %v6092 = vpop.permute.xlu0 %6091
    %v6093 = vlaneseq
    %v6094 = vshrl.u32 %v6093, 7
    %v6095 = vsub.s32 3, %v6094
    %v6096 = vrot.slane %v6034, %v6095
    %6098 = vbcast.lane.b32.xlu0 %v6096, 256
    %v6099 = vpop.permute.xlu0 %6098
    %s6101 = sor.u32 256, 8
    %6102 = vbcast.lane.b32.xlu0 %v6096, %s6101
    %v6103 = vpop.permute.xlu0 %6102
    %s6105 = sor.u32 256, 16
    %6106 = vbcast.lane.b32.xlu0 %v6096, %s6105
    %v6107 = vpop.permute.xlu0 %6106
    %s6109 = sor.u32 256, 24
    %6110 = vbcast.lane.b32.xlu0 %v6096, %s6109
    %v6111 = vpop.permute.xlu0 %6110
    %v6128 = vmul.f32 %v5795, %v6042
    %v6129 = vmul.f32 %v5797, %v6046
    %v6130 = vmul.f32 %v5799, %v6050
    %v6131 = vmul.f32 %v5801, %v6054
    %v6132 = vmul.f32 %v5803, %v6061
    %v6133 = vmul.f32 %v5805, %v6065
    %v6134 = vmul.f32 %v5807, %v6069
    %v6135 = vmul.f32 %v5809, %v6073
    %v6136 = vmul.f32 %v5811, %v6080
    %v6137 = vmul.f32 %v5813, %v6084
    %v6138 = vmul.f32 %v5815, %v6088
    %v6139 = vmul.f32 %v5817, %v6092
    %v6140 = vmul.f32 %v5819, %v6099
    %v6141 = vmul.f32 %v5821, %v6103
    %v6142 = vmul.f32 %v5823, %v6107
    %v6143 = vmul.f32 %v5825, %v6111
    %v6144 = vmul.f32 %v5891, %v5922
    %v6145 = vmul.f32 %v5893, %v5923
    %v6146 = vmul.f32 %v5895, %v5924
    %v6147 = vmul.f32 %v5897, %v5925
    %v6148 = vmul.f32 %v5899, %v5926
    %v6149 = vmul.f32 %v5901, %v5927
    %v6150 = vmul.f32 %v5903, %v5928
    %v6151 = vmul.f32 %v5905, %v5929
    %v6152 = vmul.f32 %v5907, %v5930
    %v6153 = vmul.f32 %v5909, %v5931
    %v6154 = vmul.f32 %v5911, %v5932
    %v6155 = vmul.f32 %v5913, %v5933
    %v6156 = vmul.f32 %v5915, %v5934
    %v6157 = vmul.f32 %v5917, %v5935
    %v6158 = vmul.f32 %v5919, %v5936
    %v6159 = vmul.f32 %v5921, %v5937
    %v6160 = vadd.f32 %v6128, %v6144
    %v6161 = vadd.f32 %v6129, %v6145
    %v6162 = vadd.f32 %v6130, %v6146
    %v6163 = vadd.f32 %v6131, %v6147
    %v6164 = vadd.f32 %v6132, %v6148
    %v6165 = vadd.f32 %v6133, %v6149
    %v6166 = vadd.f32 %v6134, %v6150
    %v6167 = vadd.f32 %v6135, %v6151
    %v6168 = vadd.f32 %v6136, %v6152
    %v6169 = vadd.f32 %v6137, %v6153
    %v6170 = vadd.f32 %v6138, %v6154
    %v6171 = vadd.f32 %v6139, %v6155
    %v6172 = vadd.f32 %v6140, %v6156
    %v6173 = vadd.f32 %v6141, %v6157
    %v6174 = vadd.f32 %v6142, %v6158
    %v6175 = vadd.f32 %v6143, %v6159
    %6192 = vset.pattern.permute.xlu0 0
    %6193 = vperm.xlu0 %6192, %v6160
    %v6194 = vpop.permute.xlu0 %6193
    %6195 = vset.pattern.permute.xlu0 0
    %6196 = vperm.xlu0 %6195, %v6161
    %v6197 = vpop.permute.xlu0 %6196
    %6198 = vset.pattern.permute.xlu0 0
    %6199 = vperm.xlu0 %6198, %v6162
    %v6200 = vpop.permute.xlu0 %6199
    %6201 = vset.pattern.permute.xlu0 0
    %6202 = vperm.xlu0 %6201, %v6163
    %v6203 = vpop.permute.xlu0 %6202
    %6204 = vset.pattern.permute.xlu0 0
    %6205 = vperm.xlu0 %6204, %v6164
    %v6206 = vpop.permute.xlu0 %6205
    %6207 = vset.pattern.permute.xlu0 0
    %6208 = vperm.xlu0 %6207, %v6165
    %v6209 = vpop.permute.xlu0 %6208
    %6210 = vset.pattern.permute.xlu0 0
    %6211 = vperm.xlu0 %6210, %v6166
    %v6212 = vpop.permute.xlu0 %6211
    %6213 = vset.pattern.permute.xlu0 0
    %6214 = vperm.xlu0 %6213, %v6167
    %v6215 = vpop.permute.xlu0 %6214
    %6216 = vset.pattern.permute.xlu0 0
    %6217 = vperm.xlu0 %6216, %v6168
    %v6218 = vpop.permute.xlu0 %6217
    %6219 = vset.pattern.permute.xlu0 0
    %6220 = vperm.xlu0 %6219, %v6169
    %v6221 = vpop.permute.xlu0 %6220
    %6222 = vset.pattern.permute.xlu0 0
    %6223 = vperm.xlu0 %6222, %v6170
    %v6224 = vpop.permute.xlu0 %6223
    %6225 = vset.pattern.permute.xlu0 0
    %6226 = vperm.xlu0 %6225, %v6171
    %v6227 = vpop.permute.xlu0 %6226
    %6228 = vset.pattern.permute.xlu0 0
    %6229 = vperm.xlu0 %6228, %v6172
    %v6230 = vpop.permute.xlu0 %6229
    %6231 = vset.pattern.permute.xlu0 0
    %6232 = vperm.xlu0 %6231, %v6173
    %v6233 = vpop.permute.xlu0 %6232
    %6234 = vset.pattern.permute.xlu0 0
    %6235 = vperm.xlu0 %6234, %v6174
    %v6236 = vpop.permute.xlu0 %6235
    %6237 = vset.pattern.permute.xlu0 0
    %6238 = vperm.xlu0 %6237, %v6175
    %v6239 = vpop.permute.xlu0 %6238
    %v6240 = vlaneseq
    %v6241 = vand.u32 %v6240, 127
    %v6242 = vlaneseq
    %v6243 = vshrl.u32 %v6242, 7
    %v6244 = vsub.s32 %v6241, %v6243
    %v6245 = vrot.slane %v6194, %v6244
    %v6246 = vadd.s32 %v6241, 4294967288
    %v6247 = vlaneseq
    %v6248 = vshrl.u32 %v6247, 7
    %v6249 = vsub.s32 %v6246, %v6248
    %v6250 = vrot.slane %v6197, %v6249
    %vm6251 = vcmask 130112
    %v6252 = vsel %vm6251, %v6250, %v6245
    %v6253 = vadd.s32 %v6241, 4294967280
    %v6254 = vlaneseq
    %v6255 = vshrl.u32 %v6254, 7
    %v6256 = vsub.s32 %v6253, %v6255
    %v6257 = vrot.slane %v6200, %v6256
    %vm6258 = vcmask 195712
    %v6259 = vsel %vm6258, %v6257, %v6252
    %v6260 = vadd.s32 %v6241, 4294967272
    %v6261 = vlaneseq
    %v6262 = vshrl.u32 %v6261, 7
    %v6263 = vsub.s32 %v6260, %v6262
    %v6264 = vrot.slane %v6203, %v6263
    %vm6265 = vcmask 261312
    %v6266 = vsel %vm6265, %v6264, %v6259
    %v6267 = vlaneseq
    %v6268 = vshrl.u32 %v6267, 7
    %v6269 = vsub.s32 %v6241, %v6268
    %v6270 = vrot.slane %v6206, %v6269
    %v6271 = vlaneseq
    %v6272 = vshrl.u32 %v6271, 7
    %v6273 = vsub.s32 %v6246, %v6272
    %v6274 = vrot.slane %v6209, %v6273
    %v6275 = vsel %vm6251, %v6274, %v6270
    %v6276 = vlaneseq
    %v6277 = vshrl.u32 %v6276, 7
    %v6278 = vsub.s32 %v6253, %v6277
    %v6279 = vrot.slane %v6212, %v6278
    %v6280 = vsel %vm6258, %v6279, %v6275
    %v6281 = vlaneseq
    %v6282 = vshrl.u32 %v6281, 7
    %v6283 = vsub.s32 %v6260, %v6282
    %v6284 = vrot.slane %v6215, %v6283
    %v6285 = vsel %vm6265, %v6284, %v6280
    %v6286 = vlaneseq
    %v6287 = vshrl.u32 %v6286, 7
    %v6288 = vsub.s32 %v6241, %v6287
    %v6289 = vrot.slane %v6218, %v6288
    %v6290 = vlaneseq
    %v6291 = vshrl.u32 %v6290, 7
    %v6292 = vsub.s32 %v6246, %v6291
    %v6293 = vrot.slane %v6221, %v6292
    %v6294 = vsel %vm6251, %v6293, %v6289
    %v6295 = vlaneseq
    %v6296 = vshrl.u32 %v6295, 7
    %v6297 = vsub.s32 %v6253, %v6296
    %v6298 = vrot.slane %v6224, %v6297
    %v6299 = vsel %vm6258, %v6298, %v6294
    %v6300 = vlaneseq
    %v6301 = vshrl.u32 %v6300, 7
    %v6302 = vsub.s32 %v6260, %v6301
    %v6303 = vrot.slane %v6227, %v6302
    %v6304 = vsel %vm6265, %v6303, %v6299
    %v6305 = vlaneseq
    %v6306 = vshrl.u32 %v6305, 7
    %v6307 = vsub.s32 %v6241, %v6306
    %v6308 = vrot.slane %v6230, %v6307
    %v6309 = vlaneseq
    %v6310 = vshrl.u32 %v6309, 7
    %v6311 = vsub.s32 %v6246, %v6310
    %v6312 = vrot.slane %v6233, %v6311
    %v6313 = vsel %vm6251, %v6312, %v6308
    %v6314 = vlaneseq
    %v6315 = vshrl.u32 %v6314, 7
    %v6316 = vsub.s32 %v6253, %v6315
    %v6317 = vrot.slane %v6236, %v6316
    %v6318 = vsel %vm6258, %v6317, %v6313
    %v6319 = vlaneseq
    %v6320 = vshrl.u32 %v6319, 7
    %v6321 = vsub.s32 %v6260, %v6320
    %v6322 = vrot.slane %v6239, %v6321
    %v6323 = vsel %vm6265, %v6322, %v6318
    %vm6324 = vcmask 1041409
    %v6325 = vsel %vm6324, %v6285, %v6266
    %vm6326 = vcmask 1042434
    %v6327 = vsel %vm6326, %v6304, %v6325
    %vm6328 = vcmask 1043459
    %v6329 = vsel %vm6328, %v6323, %v6327
    %vm6331 = vcmask 257024
    %6332 = vst.msk [vmem:[#allocation10] sm:$0xf] %vm6331, %v6329
    %v6333 = vtanh.pop %v6160
    %v6334 = vtanh.pop %v6161
    %v6335 = vtanh.pop %v6162
    %v6336 = vtanh.pop %v6163
    %v6337 = vtanh.pop %v6164
    %v6338 = vtanh.pop %v6165
    %v6339 = vtanh.pop %v6166
    %v6340 = vtanh.pop %v6167
    %v6341 = vtanh.pop %v6168
    %v6342 = vtanh.pop %v6169
    %v6343 = vtanh.pop %v6170
    %v6344 = vtanh.pop %v6171
    %v6345 = vtanh.pop %v6172
    %v6346 = vtanh.pop %v6173
    %v6347 = vtanh.pop %v6174
    %v6348 = vtanh.pop %v6175
    %v6349 = vmul.f32 %v6003, %v6333
    %v6350 = vmul.f32 %v6005, %v6334
    %v6351 = vmul.f32 %v6007, %v6335
    %v6352 = vmul.f32 %v6009, %v6336
    %v6353 = vmul.f32 %v6011, %v6337
    %v6354 = vmul.f32 %v6013, %v6338
    %v6355 = vmul.f32 %v6015, %v6339
    %v6356 = vmul.f32 %v6017, %v6340
    %v6357 = vmul.f32 %v6019, %v6341
    %v6358 = vmul.f32 %v6021, %v6342
    %v6359 = vmul.f32 %v6023, %v6343
    %v6360 = vmul.f32 %v6025, %v6344
    %v6361 = vmul.f32 %v6027, %v6345
    %v6362 = vmul.f32 %v6029, %v6346
    %v6363 = vmul.f32 %v6031, %v6347
    %v6364 = vmul.f32 %v6033, %v6348
    %6381 = vset.pattern.permute.xlu0 0
    %6382 = vperm.xlu0 %6381, %v6349
    %v6383 = vpop.permute.xlu0 %6382
    %6384 = vset.pattern.permute.xlu0 0
    %6385 = vperm.xlu0 %6384, %v6350
    %v6386 = vpop.permute.xlu0 %6385
    %6387 = vset.pattern.permute.xlu0 0
    %6388 = vperm.xlu0 %6387, %v6351
    %v6389 = vpop.permute.xlu0 %6388
    %6390 = vset.pattern.permute.xlu0 0
    %6391 = vperm.xlu0 %6390, %v6352
    %v6392 = vpop.permute.xlu0 %6391
    %6393 = vset.pattern.permute.xlu0 0
    %6394 = vperm.xlu0 %6393, %v6353
    %v6395 = vpop.permute.xlu0 %6394
    %6396 = vset.pattern.permute.xlu0 0
    %6397 = vperm.xlu0 %6396, %v6354
    %v6398 = vpop.permute.xlu0 %6397
    %6399 = vset.pattern.permute.xlu0 0
    %6400 = vperm.xlu0 %6399, %v6355
    %v6401 = vpop.permute.xlu0 %6400
    %6402 = vset.pattern.permute.xlu0 0
    %6403 = vperm.xlu0 %6402, %v6356
    %v6404 = vpop.permute.xlu0 %6403
    %6405 = vset.pattern.permute.xlu0 0
    %6406 = vperm.xlu0 %6405, %v6357
    %v6407 = vpop.permute.xlu0 %6406
    %6408 = vset.pattern.permute.xlu0 0
    %6409 = vperm.xlu0 %6408, %v6358
    %v6410 = vpop.permute.xlu0 %6409
    %6411 = vset.pattern.permute.xlu0 0
    %6412 = vperm.xlu0 %6411, %v6359
    %v6413 = vpop.permute.xlu0 %6412
    %6414 = vset.pattern.permute.xlu0 0
    %6415 = vperm.xlu0 %6414, %v6360
    %v6416 = vpop.permute.xlu0 %6415
    %6417 = vset.pattern.permute.xlu0 0
    %6418 = vperm.xlu0 %6417, %v6361
    %v6419 = vpop.permute.xlu0 %6418
    %6420 = vset.pattern.permute.xlu0 0
    %6421 = vperm.xlu0 %6420, %v6362
    %v6422 = vpop.permute.xlu0 %6421
    %6423 = vset.pattern.permute.xlu0 0
    %6424 = vperm.xlu0 %6423, %v6363
    %v6425 = vpop.permute.xlu0 %6424
    %6426 = vset.pattern.permute.xlu0 0
    %6427 = vperm.xlu0 %6426, %v6364
    %v6428 = vpop.permute.xlu0 %6427
    %v6429 = vlaneseq
    %v6430 = vshrl.u32 %v6429, 7
    %v6431 = vsub.s32 %v6241, %v6430
    %v6432 = vrot.slane %v6383, %v6431
    %v6433 = vlaneseq
    %v6434 = vshrl.u32 %v6433, 7
    %v6435 = vsub.s32 %v6246, %v6434
    %v6436 = vrot.slane %v6386, %v6435
    %v6437 = vsel %vm6251, %v6436, %v6432
    %v6438 = vlaneseq
    %v6439 = vshrl.u32 %v6438, 7
    %v6440 = vsub.s32 %v6253, %v6439
    %v6441 = vrot.slane %v6389, %v6440
    %v6442 = vsel %vm6258, %v6441, %v6437
    %v6443 = vlaneseq
    %v6444 = vshrl.u32 %v6443, 7
    %v6445 = vsub.s32 %v6260, %v6444
    %v6446 = vrot.slane %v6392, %v6445
    %v6447 = vsel %vm6265, %v6446, %v6442
    %v6448 = vlaneseq
    %v6449 = vshrl.u32 %v6448, 7
    %v6450 = vsub.s32 %v6241, %v6449
    %v6451 = vrot.slane %v6395, %v6450
    %v6452 = vlaneseq
    %v6453 = vshrl.u32 %v6452, 7
    %v6454 = vsub.s32 %v6246, %v6453
    %v6455 = vrot.slane %v6398, %v6454
    %v6456 = vsel %vm6251, %v6455, %v6451
    %v6457 = vlaneseq
    %v6458 = vshrl.u32 %v6457, 7
    %v6459 = vsub.s32 %v6253, %v6458
    %v6460 = vrot.slane %v6401, %v6459
    %v6461 = vsel %vm6258, %v6460, %v6456
    %v6462 = vlaneseq
    %v6463 = vshrl.u32 %v6462, 7
    %v6464 = vsub.s32 %v6260, %v6463
    %v6465 = vrot.slane %v6404, %v6464
    %v6466 = vsel %vm6265, %v6465, %v6461
    %v6467 = vlaneseq
    %v6468 = vshrl.u32 %v6467, 7
    %v6469 = vsub.s32 %v6241, %v6468
    %v6470 = vrot.slane %v6407, %v6469
    %v6471 = vlaneseq
    %v6472 = vshrl.u32 %v6471, 7
    %v6473 = vsub.s32 %v6246, %v6472
    %v6474 = vrot.slane %v6410, %v6473
    %v6475 = vsel %vm6251, %v6474, %v6470
    %v6476 = vlaneseq
    %v6477 = vshrl.u32 %v6476, 7
    %v6478 = vsub.s32 %v6253, %v6477
    %v6479 = vrot.slane %v6413, %v6478
    %v6480 = vsel %vm6258, %v6479, %v6475
    %v6481 = vlaneseq
    %v6482 = vshrl.u32 %v6481, 7
    %v6483 = vsub.s32 %v6260, %v6482
    %v6484 = vrot.slane %v6416, %v6483
    %v6485 = vsel %vm6265, %v6484, %v6480
    %v6486 = vlaneseq
    %v6487 = vshrl.u32 %v6486, 7
    %v6488 = vsub.s32 %v6241, %v6487
    %v6489 = vrot.slane %v6419, %v6488
    %v6490 = vlaneseq
    %v6491 = vshrl.u32 %v6490, 7
    %v6492 = vsub.s32 %v6246, %v6491
    %v6493 = vrot.slane %v6422, %v6492
    %v6494 = vsel %vm6251, %v6493, %v6489
    %v6495 = vlaneseq
    %v6496 = vshrl.u32 %v6495, 7
    %v6497 = vsub.s32 %v6253, %v6496
    %v6498 = vrot.slane %v6425, %v6497
    %v6499 = vsel %vm6258, %v6498, %v6494
    %v6500 = vlaneseq
    %v6501 = vshrl.u32 %v6500, 7
    %v6502 = vsub.s32 %v6260, %v6501
    %v6503 = vrot.slane %v6428, %v6502
    %v6504 = vsel %vm6265, %v6503, %v6499
    %v6505 = vsel %vm6324, %v6466, %v6447
    %v6506 = vsel %vm6326, %v6485, %v6505
    %v6507 = vsel %vm6328, %v6504, %v6506
    %6509 = vst.msk [vmem:[#allocation9] sm:$0xf] %vm6331, %v6507
    // Predicated region
    $region34: #{tpu_custom_call.1} parent=1 // pred_check
      _
    $region35: #{tpu_custom_call.1} parent=1 // pred_check_branch
      %6511 = sbr.rel (0) target = $region37
    $region36: #{tpu_custom_call.1} parent=1 // pred_region
      %s6513 = ssub.s32 64, 64
      %6514 = vsyncadd [#allocation4], %s6513
      %s6516 = sshll.u32 [#allocation9], 4
      %s6517 = int_to_ptr.vmem [resolvable:$true] %s6516
      %6519 = dma.vmem_to_hbm [thread:$0]  %s6517, 64, %s5, [#allocation4]
    $region37: #{tpu_custom_call.1} parent=1 // pred_fallthru
      _
    // Predicated region
    $region38: #{tpu_custom_call.1} parent=1 // pred_check
      _
    $region39: #{tpu_custom_call.1} parent=1 // pred_check_branch
      %6521 = sbr.rel (0) target = $region41
    $region40: #{tpu_custom_call.1} parent=1 // pred_region
      %s6523 = ssub.s32 64, 64
      %6524 = vsyncadd [#allocation11], %s6523
      %s6526 = sshll.u32 [#allocation10], 4
      %s6527 = int_to_ptr.vmem [resolvable:$true] %s6526
      %6529 = dma.vmem_to_hbm [thread:$0]  %s6527, 64, %s6, [#allocation11]
    $region41: #{tpu_custom_call.1} parent=1 // pred_fallthru
      _
    // Predicated region
    $region42: #{tpu_custom_call.1} parent=1 // pred_check
      _
    $region43: #{tpu_custom_call.1} parent=1 // pred_check_branch
      %6531 = sbr.rel (0) target = $region45
    $region44: #{tpu_custom_call.1} parent=1 // pred_region
      %6532 = dma.done [#allocation4], 64
    $region45: #{tpu_custom_call.1} parent=1 // pred_fallthru
      _
    // Predicated region
    $region46: #{tpu_custom_call.1} parent=1 // pred_check
      _
    $region47: #{tpu_custom_call.1} parent=1 // pred_check_branch
      %6534 = sbr.rel (0) target = $region49
    $region48: #{tpu_custom_call.1} parent=1 // pred_region
      %6535 = dma.done [#allocation11], 64
    $region49: #{tpu_custom_call.1} parent=1 // pred_fallthru
      _
    %6536 = vsyncpa [#allocation3], 1
    %6537 = vsyncpa [#allocation4], 1
    %6538 = vsyncpa [#allocation11], 1
    %6539 = vsyncpa [#allocation5], 1
    %6540 = vsyncpa [#allocation6], 1

</llo_original>
